<compile_context>
chip_gen: v5e
topology: v5e:2x2
jax: 0.10.0
libtpu: 0.0.40
codegen_flags: <defaults>
</compile_context>

<pallas_src>
import jax
import jax.numpy as jnp
from jax import lax
from jax.experimental import pallas as pl
from jax.experimental.pallas import tpu as pltpu


def _round_up(x, m):
    return ((x + m - 1) // m) * m


def make_decoder_kernel(num_layers, seq_len, Bp, Ep, Hp, Vp):
    nl = num_layers
    f32 = jnp.float32
    bf16 = jnp.bfloat16

    def sigmoid(x):
        # exp lowers to the EUP; the reciprocal is kept exact (approx=False)
        # so the greedy argmax feedback path matches the reference trajectory.
        return pl.reciprocal(1.0 + jnp.exp(-x), approx=False)

    def kernel(tf_ref, feat_ref, cap_ref, emb_ref, *rest):
        # rest = [w_fused_0, b_0, ..., w_fused_{L-1}, b_{L-1}, w_lin, b_lin, out]
        w_refs = [rest[2 * l] for l in range(nl)]        # ((in_p+Hp), 4*Hp) bf16
        b_refs = [rest[2 * l + 1] for l in range(nl)]    # (Bp, 4*Hp) f32, pre-broadcast
        w_lin_ref = rest[2 * nl]                         # (Hp, Vp) bf16
        b_lin_ref = rest[2 * nl + 1]                     # (Bp, Vp) f32, -1e30 on pad lanes
        out_ref = rest[2 * nl + 2]                       # (S, Bp, Vp) f32

        def gates_to_state(gates, c):
            i = sigmoid(gates[:, 0 * Hp:1 * Hp])
            f = sigmoid(gates[:, 1 * Hp:2 * Hp])
            g = jnp.tanh(gates[:, 2 * Hp:3 * Hp])
            o = sigmoid(gates[:, 3 * Hp:4 * Hp])
            c_new = f * c + i * g
            return o * jnp.tanh(c_new), c_new

        # ---- priming step: LSTM(features) with zero initial state. ---------
        # h = c = 0, so only the Wi slab of the fused weight is needed and the
        # f-gate / f*c term is skipped entirely.
        hs, cs = [], []
        x = feat_ref[...]                                # (Bp, Ep) f32
        for l in range(nl):
            in_rows = Ep if l == 0 else Hp
            gates = jnp.dot(x.astype(bf16), w_refs[l][0:in_rows, :],
                            preferred_element_type=f32) + b_refs[l][...]
            i = sigmoid(gates[:, 0 * Hp:1 * Hp])
            g = jnp.tanh(gates[:, 2 * Hp:3 * Hp])
            o = sigmoid(gates[:, 3 * Hp:4 * Hp])
            c = i * g
            h = o * jnp.tanh(c)
            hs.append(h)
            cs.append(c)
            x = h

        # One int32 vreg, hoisted out of the loop (no per-iter broadcast).
        vocab_iota = lax.broadcasted_iota(jnp.int32, (Bp, Vp), 1)

        def step(t, carry):
            hs, cs, x = carry
            hs, cs = list(hs), list(cs)
            for l in range(nl):
                # Fused [x, h] @ [Wi; Wh]: one MXU dot per layer per step.
                xh = jnp.concatenate([x, hs[l]], axis=1).astype(bf16)
                gates = jnp.dot(xh, w_refs[l][...],
                                preferred_element_type=f32) + b_refs[l][...]
                h_new, c_new = gates_to_state(gates, cs[l])
                hs[l], cs[l] = h_new, c_new
                x = h_new

            logits = jnp.dot(x.astype(bf16), w_lin_ref[...],
                             preferred_element_type=f32) + b_lin_ref[...]
            out_ref[t] = logits                          # lane-dense (Bp, Vp) store

            # Next decoder input: teacher-forced caption embedding vs greedy
            # argmax embedding.  Blend weight is exactly 0 or 1 so the unused
            # branch contributes exactly nothing.
            cap_next = cap_ref[t + 1]                    # (Bp, Ep) f32
            maxv = jnp.max(logits, axis=-1, keepdims=True)
            idx = jnp.min(jnp.where(logits == maxv, vocab_iota, Vp),
                          axis=-1, keepdims=True)        # first-max; -1e30 pad bias
            onehot = (vocab_iota == idx).astype(bf16)    # guarantees idx < vocab
            # TODO(synk): for very large vocab, tile Vp and replace this
            # one-hot matmul with a per-row dynamic-index gather from emb_ref.
            greedy = jnp.dot(onehot, emb_ref[...], preferred_element_type=f32)
            w = tf_ref[t].astype(f32)                    # SMEM scalar, 0 or 1
            x_next = w * cap_next + (1.0 - w) * greedy
            return tuple(hs), tuple(cs), x_next

        # Short, fixed trip count -> unroll for LLO scheduler visibility.
        lax.fori_loop(0, seq_len, step, (tuple(hs), tuple(cs), cap_ref[0]),
                      unroll=True)

    return kernel


def decoder_rnn_forward(params, features, captions, tf_decisions):
    """Pallas implementation of DecoderRNN.forward(features, captions)."""
    f32 = jnp.float32
    bf16 = jnp.bfloat16
    B, E = features.shape
    S = captions.shape[1] - 1
    V = params["embed"].shape[0]
    H = params["w_lin_t"].shape[0]
    L = len(params["layers"])

    Bp = max(8, _round_up(B, 8))
    Ep = _round_up(E, 128)
    Hp = _round_up(H, 128)
    Vp = _round_up(V, 128)

    # ---- pad / re-layout parameters (bf16 weights, (8,128)-aligned) --------
    def pad2(x, rows, cols):
        return jnp.pad(x, ((0, rows - x.shape[0]), (0, cols - x.shape[1])))

    layer_inputs = []
    for l, (wi, wh, b) in enumerate(params["layers"]):
        in_p = Ep if l == 0 else Hp
        r_i, r_h = wi.shape[0], wh.shape[0]
        # Fused [Wi; Wh] -> ((in_p + Hp), 4*Hp): Wi rows at sublane offset 0,
        # Wh rows at offset in_p; every gate slab starts on a 128-lane boundary.
        w_f = jnp.zeros((in_p + Hp, 4 * Hp), bf16)
        b_row = jnp.zeros((4 * Hp,), f32)
        for k in range(4):
            w_f = w_f.at[:r_i, k * Hp:k * Hp + H].set(
                wi[:, k * H:(k + 1) * H].astype(bf16))
            w_f = w_f.at[in_p:in_p + r_h, k * Hp:k * Hp + H].set(
                wh[:, k * H:(k + 1) * H].astype(bf16))
            b_row = b_row.at[k * Hp:k * Hp + H].set(
                b[k * H:(k + 1) * H].astype(f32))
        b_bc = jnp.tile(b_row[None, :], (Bp, 1))         # bias broadcast on host
        layer_inputs += [w_f, b_bc]

    w_lin_p = pad2(params["w_lin_t"].astype(bf16), Hp, Vp)
    b_lin_row = jnp.full((Vp,), -1e30, f32).at[:V].set(params["b_lin"].astype(f32))
    b_lin_p = jnp.tile(b_lin_row[None, :], (Bp, 1))      # -1e30 masks padded vocab
    embed_p = pad2(params["embed"].astype(bf16), Vp, Ep)
    feat_p = pad2(features.astype(f32), Bp, Ep)

    # Caption-token embeddings (data-independent gather) in plain JAX, time-major.
    cap = params["embed"].astype(f32)[captions]          # (B, S+1, E)
    cap = jnp.pad(cap, ((0, Bp - B), (0, 0), (0, Ep - E)))
    cap = jnp.transpose(cap, (1, 0, 2))                  # (S+1, Bp, Ep)

    # Teacher-forcing decision pre-ANDed with "t < seq_len - 1".
    tf_flags = jnp.logical_and(
        tf_decisions, jnp.arange(S) < S - 1).astype(jnp.int32)

    kernel = make_decoder_kernel(L, S, Bp, Ep, Hp, Vp)

    vmem = pl.BlockSpec(memory_space=pltpu.MemorySpace.VMEM)   # resident, single copy
    smem = pl.BlockSpec(memory_space=pltpu.MemorySpace.SMEM)
    in_specs = [smem, vmem, vmem, vmem] + [vmem] * (2 * L) + [vmem, vmem]

    # ---- generation-aware VMEM budget (v7x: 64 MiB, v5e/v6e: 128 MiB) ------
    def _nbytes(a):
        return a.size * a.dtype.itemsize
    resident = (_nbytes(feat_p) + _nbytes(cap) + _nbytes(embed_p)
                + sum(_nbytes(a) for a in layer_inputs)
                + _nbytes(w_lin_p) + _nbytes(b_lin_p)
                + S * Bp * Vp * 4)                       # full logits output block
    try:
        vmem_cap = int(pltpu.get_tpu_info().vmem_capacity_bytes)
    except Exception:  # no device / attribute -> conservative fallback
        vmem_cap = 64 << 20
    vmem_limit = int(min(max(2 * resident + (4 << 20), 16 << 20),
                         vmem_cap - (8 << 20)))

    out = pl.pallas_call(
        kernel,
        out_shape=jax.ShapeDtypeStruct((S, Bp, Vp), f32),
        in_specs=in_specs,
        out_specs=pl.BlockSpec(memory_space=pltpu.MemorySpace.VMEM),
        compiler_params=pltpu.CompilerParams(vmem_limit_bytes=vmem_limit),
    )(tf_flags, feat_p, cap, embed_p, *layer_inputs, w_lin_p, b_lin_p)

    # (S, Bp, Vp) -> (B, S, V): strip padding, back to PyTorch's batch-first.
    return jnp.transpose(out[:, :B, :V], (1, 0, 2))


def decoder_rnn_reference(params, features, captions, tf_decisions):
    """Pure-JAX reference with the kernel's precision policy (weights stored
    bf16, matmul operands bf16, f32 accumulation, f32 element-wise math)."""
    f32 = jnp.float32
    bf16 = jnp.bfloat16
    embed = params["embed"].astype(f32)
    H = params["w_lin_t"].shape[0]
    B = features.shape[0]
    S = captions.shape[1] - 1
    tf = jnp.logical_and(tf_decisions, jnp.arange(S) < S - 1).astype(f32)

    def sigmoid(x):
        return 1.0 / (1.0 + jnp.exp(-x))

    def cell(x, h, c, wi, wh, b):
        g = (jnp.dot(x.astype(bf16), wi, preferred_element_type=f32)
             + jnp.dot(h.astype(bf16), wh, preferred_element_type=f32)
             + b.astype(f32))
        i = sigmoid(g[:, :H])
        f = sigmoid(g[:, H:2 * H])
        gg = jnp.tanh(g[:, 2 * H:3 * H])
        o = sigmoid(g[:, 3 * H:])
        c2 = f * c + i * gg
        return o * jnp.tanh(c2), c2

    hs = [jnp.zeros((B, H), f32) for _ in params["layers"]]
    cs = [jnp.zeros((B, H), f32) for _ in params["layers"]]
    x = features.astype(f32)
    for l, (wi, wh, b) in enumerate(params["layers"]):
        hs[l], cs[l] = cell(x, hs[l], cs[l], wi, wh, b)
        x = hs[l]

    b_lin = params["b_lin"].astype(f32)
    outs = []
    x_in = embed[captions[:, 0]]
    for t in range(S):
        x = x_in
        for l, (wi, wh, b) in enumerate(params["layers"]):
            hs[l], cs[l] = cell(x, hs[l], cs[l], wi, wh, b)
            x = hs[l]
        logits = jnp.dot(x.astype(bf16), params["w_lin_t"],
                         preferred_element_type=f32) + b_lin
        outs.append(logits)
        idx = jnp.argmax(logits, axis=-1)
        arg_emb = embed[idx]
        cap_emb = embed[captions[:, t + 1]]
        w = tf[t]
        x_in = w * cap_emb + (1.0 - w) * arg_emb
    return jnp.stack(outs, axis=1)


if __name__ == "__main__":
    embed_size, hidden_size, vocab_size, num_layers = 16, 32, 32, 2
    B, cap_len = 2, 9                       # seq_len = 8
    seq_len = cap_len - 1

    key = jax.random.PRNGKey(0)
    keys = jax.random.split(key, 16)
    ki = iter(keys)

    bf16 = jnp.bfloat16
    params = {"embed": jax.random.normal(next(ki), (vocab_size, embed_size),
                                         jnp.float32).astype(bf16)}
    layers = []
    for l in range(num_layers):
        in_sz = embed_size if l == 0 else hidden_size
        wi = (0.1 * jax.random.normal(next(ki), (in_sz, 4 * hidden_size))).astype(bf16)
        wh = (0.1 * jax.random.normal(next(ki), (hidden_size, 4 * hidden_size))).astype(bf16)
        b = 0.1 * jax.random.normal(next(ki), (4 * hidden_size,), jnp.float32)
        layers.append((wi, wh, b))
    params["layers"] = layers
    params["w_lin_t"] = (0.1 * jax.random.normal(
        next(ki), (hidden_size, vocab_size))).astype(bf16)
    params["b_lin"] = 0.1 * jax.random.normal(next(ki), (vocab_size,), jnp.float32)

    features = jax.random.normal(next(ki), (B, embed_size), jnp.float32)
    captions = jax.random.randint(next(ki), (B, cap_len), 0, vocab_size,
                                  dtype=jnp.int32)
    # Deterministic stand-in for Python random.random() < teacher_forcing_ratio.
    tf_decisions = jax.random.uniform(next(ki), (seq_len,)) < 0.5

    out = decoder_rnn_forward(params, features, captions, tf_decisions)
    out = jax.block_until_ready(out)

    ref = decoder_rnn_reference(params, features, captions, tf_decisions)
    assert out.shape == (B, seq_len, vocab_size)
    assert bool(jnp.all(jnp.isfinite(out)))
    assert jnp.allclose(out, ref, atol=2e-3, rtol=2e-3)

    print("KERNEL_OK")
</pallas_src>

<mosaic_0001>
module attributes {stable_mosaic.version = 11 : i64} {
  func.func @kernel(%arg0: memref<8xi32, #tpu.memory_space<smem>>, %arg1: memref<8x128xf32, #tpu.memory_space<vmem>>, %arg2: memref<9x8x128xf32, #tpu.memory_space<vmem>>, %arg3: memref<128x128xbf16, #tpu.memory_space<vmem>>, %arg4: memref<256x512xbf16, #tpu.memory_space<vmem>>, %arg5: memref<8x512xf32, #tpu.memory_space<vmem>>, %arg6: memref<256x512xbf16, #tpu.memory_space<vmem>>, %arg7: memref<8x512xf32, #tpu.memory_space<vmem>>, %arg8: memref<128x128xbf16, #tpu.memory_space<vmem>>, %arg9: memref<8x128xf32, #tpu.memory_space<vmem>>, %arg10: memref<8x8x128xf32, #tpu.memory_space<vmem>>) attributes {dimension_semantics = [], scalar_prefetch = 0 : i64, scratch_operands = 0 : i64, tpu.core_type = #tpu.core_type<tc>} {
    %c0 = arith.constant 0 : index
    %c0_0 = arith.constant 0 : index
    %0 = vector.load %arg1[%c0, %c0_0] : memref<8x128xf32, #tpu.memory_space<vmem>>, vector<8x128xf32>
    %1 = arith.truncf %0 : vector<8x128xf32> to vector<8x128xbf16>
    %c0_1 = arith.constant 0 : index
    %c0_2 = arith.constant 0 : index
    %2 = vector.load %arg4[%c0_1, %c0_2] : memref<256x512xbf16, #tpu.memory_space<vmem>>, vector<128x512xbf16>
    %cst = arith.constant dense<0.000000e+00> : vector<8x512xf32>
    %3 = tpu.matmul %1, %2, %cst {dimension_numbers = #tpu.dot_dimension_numbers<[1], [0], [0], [1], [0, 0, 1, 1], [], []>} : vector<8x128xbf16>, vector<128x512xbf16>, vector<8x512xf32> -> vector<8x512xf32>
    %c0_3 = arith.constant 0 : index
    %c0_4 = arith.constant 0 : index
    %4 = vector.load %arg5[%c0_3, %c0_4] : memref<8x512xf32, #tpu.memory_space<vmem>>, vector<8x512xf32>
    %5 = arith.addf %3, %4 : vector<8x512xf32>
    %6 = vector.extract_strided_slice %5 {offsets = [0, 0], sizes = [8, 128], strides = [1, 1]} : vector<8x512xf32> to vector<8x128xf32>
    %cst_5 = arith.constant 0.000000e+00 : f32
    %7 = vector.broadcast %cst_5 : f32 to vector<8x128xf32>
    %8 = arith.subf %7, %6 : vector<8x128xf32>
    %9 = math.exp %8 : vector<8x128xf32>
    %cst_6 = arith.constant 1.000000e+00 : f32
    %10 = vector.broadcast %cst_6 : f32 to vector<8x128xf32>
    %11 = arith.addf %10, %9 : vector<8x128xf32>
    %12 = tpu.reciprocal %11 : vector<8x128xf32> -> vector<8x128xf32>
    %13 = vector.extract_strided_slice %5 {offsets = [0, 256], sizes = [8, 128], strides = [1, 1]} : vector<8x512xf32> to vector<8x128xf32>
    %14 = math.tanh %13 : vector<8x128xf32>
    %15 = vector.extract_strided_slice %5 {offsets = [0, 384], sizes = [8, 128], strides = [1, 1]} : vector<8x512xf32> to vector<8x128xf32>
    %cst_7 = arith.constant 0.000000e+00 : f32
    %16 = vector.broadcast %cst_7 : f32 to vector<8x128xf32>
    %17 = arith.subf %16, %15 : vector<8x128xf32>
    %18 = math.exp %17 : vector<8x128xf32>
    %cst_8 = arith.constant 1.000000e+00 : f32
    %19 = vector.broadcast %cst_8 : f32 to vector<8x128xf32>
    %20 = arith.addf %19, %18 : vector<8x128xf32>
    %21 = tpu.reciprocal %20 : vector<8x128xf32> -> vector<8x128xf32>
    %22 = arith.mulf %12, %14 : vector<8x128xf32>
    %23 = math.tanh %22 : vector<8x128xf32>
    %24 = arith.mulf %21, %23 : vector<8x128xf32>
    %25 = arith.truncf %24 : vector<8x128xf32> to vector<8x128xbf16>
    %c0_9 = arith.constant 0 : index
    %c0_10 = arith.constant 0 : index
    %26 = vector.load %arg6[%c0_9, %c0_10] : memref<256x512xbf16, #tpu.memory_space<vmem>>, vector<128x512xbf16>
    %cst_11 = arith.constant dense<0.000000e+00> : vector<8x512xf32>
    %27 = tpu.matmul %25, %26, %cst_11 {dimension_numbers = #tpu.dot_dimension_numbers<[1], [0], [0], [1], [0, 0, 1, 1], [], []>} : vector<8x128xbf16>, vector<128x512xbf16>, vector<8x512xf32> -> vector<8x512xf32>
    %c0_12 = arith.constant 0 : index
    %c0_13 = arith.constant 0 : index
    %28 = vector.load %arg7[%c0_12, %c0_13] : memref<8x512xf32, #tpu.memory_space<vmem>>, vector<8x512xf32>
    %29 = arith.addf %27, %28 : vector<8x512xf32>
    %30 = vector.extract_strided_slice %29 {offsets = [0, 0], sizes = [8, 128], strides = [1, 1]} : vector<8x512xf32> to vector<8x128xf32>
    %cst_14 = arith.constant 0.000000e+00 : f32
    %31 = vector.broadcast %cst_14 : f32 to vector<8x128xf32>
    %32 = arith.subf %31, %30 : vector<8x128xf32>
    %33 = math.exp %32 : vector<8x128xf32>
    %cst_15 = arith.constant 1.000000e+00 : f32
    %34 = vector.broadcast %cst_15 : f32 to vector<8x128xf32>
    %35 = arith.addf %34, %33 : vector<8x128xf32>
    %36 = tpu.reciprocal %35 : vector<8x128xf32> -> vector<8x128xf32>
    %37 = vector.extract_strided_slice %29 {offsets = [0, 256], sizes = [8, 128], strides = [1, 1]} : vector<8x512xf32> to vector<8x128xf32>
    %38 = math.tanh %37 : vector<8x128xf32>
    %39 = vector.extract_strided_slice %29 {offsets = [0, 384], sizes = [8, 128], strides = [1, 1]} : vector<8x512xf32> to vector<8x128xf32>
    %cst_16 = arith.constant 0.000000e+00 : f32
    %40 = vector.broadcast %cst_16 : f32 to vector<8x128xf32>
    %41 = arith.subf %40, %39 : vector<8x128xf32>
    %42 = math.exp %41 : vector<8x128xf32>
    %cst_17 = arith.constant 1.000000e+00 : f32
    %43 = vector.broadcast %cst_17 : f32 to vector<8x128xf32>
    %44 = arith.addf %43, %42 : vector<8x128xf32>
    %45 = tpu.reciprocal %44 : vector<8x128xf32> -> vector<8x128xf32>
    %46 = arith.mulf %36, %38 : vector<8x128xf32>
    %47 = math.tanh %46 : vector<8x128xf32>
    %48 = arith.mulf %45, %47 : vector<8x128xf32>
    %49 = tpu.iota {dimensions = array<i32: 1>} : vector<8x128xi32>
    %c0_18 = arith.constant 0 : index
    %c0_19 = arith.constant 0 : index
    %c0_20 = arith.constant 0 : index
    %50 = vector.load %arg2[%c0_18, %c0_19, %c0_20] : memref<9x8x128xf32, #tpu.memory_space<vmem>>, vector<1x8x128xf32>
    %51 = vector.shape_cast %50 : vector<1x8x128xf32> to vector<8x128xf32>
    %c0_i32 = arith.constant 0 : i32
    %52 = tpu.concatenate %51, %24 in 1 : vector<8x128xf32>, vector<8x128xf32> -> vector<8x256xf32>
    %53 = arith.truncf %52 : vector<8x256xf32> to vector<8x256xbf16>
    %c0_21 = arith.constant 0 : index
    %c0_22 = arith.constant 0 : index
    %54 = vector.load %arg4[%c0_21, %c0_22] : memref<256x512xbf16, #tpu.memory_space<vmem>>, vector<256x512xbf16>
    %cst_23 = arith.constant dense<0.000000e+00> : vector<8x512xf32>
    %55 = tpu.matmul %53, %54, %cst_23 {dimension_numbers = #tpu.dot_dimension_numbers<[1], [0], [0], [1], [0, 0, 1, 1], [], []>} : vector<8x256xbf16>, vector<256x512xbf16>, vector<8x512xf32> -> vector<8x512xf32>
    %c0_24 = arith.constant 0 : index
    %c0_25 = arith.constant 0 : index
    %56 = vector.load %arg5[%c0_24, %c0_25] : memref<8x512xf32, #tpu.memory_space<vmem>>, vector<8x512xf32>
    %57 = arith.addf %55, %56 : vector<8x512xf32>
    %58 = vector.extract_strided_slice %57 {offsets = [0, 0], sizes = [8, 128], strides = [1, 1]} : vector<8x512xf32> to vector<8x128xf32>
    %cst_26 = arith.constant 0.000000e+00 : f32
    %59 = vector.broadcast %cst_26 : f32 to vector<8x128xf32>
    %60 = arith.subf %59, %58 : vector<8x128xf32>
    %61 = math.exp %60 : vector<8x128xf32>
    %cst_27 = arith.constant 1.000000e+00 : f32
    %62 = vector.broadcast %cst_27 : f32 to vector<8x128xf32>
    %63 = arith.addf %62, %61 : vector<8x128xf32>
    %64 = tpu.reciprocal %63 : vector<8x128xf32> -> vector<8x128xf32>
    %65 = vector.extract_strided_slice %57 {offsets = [0, 128], sizes = [8, 128], strides = [1, 1]} : vector<8x512xf32> to vector<8x128xf32>
    %cst_28 = arith.constant 0.000000e+00 : f32
    %66 = vector.broadcast %cst_28 : f32 to vector<8x128xf32>
    %67 = arith.subf %66, %65 : vector<8x128xf32>
    %68 = math.exp %67 : vector<8x128xf32>
    %cst_29 = arith.constant 1.000000e+00 : f32
    %69 = vector.broadcast %cst_29 : f32 to vector<8x128xf32>
    %70 = arith.addf %69, %68 : vector<8x128xf32>
    %71 = tpu.reciprocal %70 : vector<8x128xf32> -> vector<8x128xf32>
    %72 = vector.extract_strided_slice %57 {offsets = [0, 256], sizes = [8, 128], strides = [1, 1]} : vector<8x512xf32> to vector<8x128xf32>
    %73 = math.tanh %72 : vector<8x128xf32>
    %74 = vector.extract_strided_slice %57 {offsets = [0, 384], sizes = [8, 128], strides = [1, 1]} : vector<8x512xf32> to vector<8x128xf32>
    %cst_30 = arith.constant 0.000000e+00 : f32
    %75 = vector.broadcast %cst_30 : f32 to vector<8x128xf32>
    %76 = arith.subf %75, %74 : vector<8x128xf32>
    %77 = math.exp %76 : vector<8x128xf32>
    %cst_31 = arith.constant 1.000000e+00 : f32
    %78 = vector.broadcast %cst_31 : f32 to vector<8x128xf32>
    %79 = arith.addf %78, %77 : vector<8x128xf32>
    %80 = tpu.reciprocal %79 : vector<8x128xf32> -> vector<8x128xf32>
    %81 = arith.mulf %71, %22 : vector<8x128xf32>
    %82 = arith.mulf %64, %73 : vector<8x128xf32>
    %83 = arith.addf %81, %82 : vector<8x128xf32>
    %84 = math.tanh %83 : vector<8x128xf32>
    %85 = arith.mulf %80, %84 : vector<8x128xf32>
    %86 = tpu.concatenate %85, %48 in 1 : vector<8x128xf32>, vector<8x128xf32> -> vector<8x256xf32>
    %87 = arith.truncf %86 : vector<8x256xf32> to vector<8x256xbf16>
    %c0_32 = arith.constant 0 : index
    %c0_33 = arith.constant 0 : index
    %88 = vector.load %arg6[%c0_32, %c0_33] : memref<256x512xbf16, #tpu.memory_space<vmem>>, vector<256x512xbf16>
    %cst_34 = arith.constant dense<0.000000e+00> : vector<8x512xf32>
    %89 = tpu.matmul %87, %88, %cst_34 {dimension_numbers = #tpu.dot_dimension_numbers<[1], [0], [0], [1], [0, 0, 1, 1], [], []>} : vector<8x256xbf16>, vector<256x512xbf16>, vector<8x512xf32> -> vector<8x512xf32>
    %c0_35 = arith.constant 0 : index
    %c0_36 = arith.constant 0 : index
    %90 = vector.load %arg7[%c0_35, %c0_36] : memref<8x512xf32, #tpu.memory_space<vmem>>, vector<8x512xf32>
    %91 = arith.addf %89, %90 : vector<8x512xf32>
    %92 = vector.extract_strided_slice %91 {offsets = [0, 0], sizes = [8, 128], strides = [1, 1]} : vector<8x512xf32> to vector<8x128xf32>
    %cst_37 = arith.constant 0.000000e+00 : f32
    %93 = vector.broadcast %cst_37 : f32 to vector<8x128xf32>
    %94 = arith.subf %93, %92 : vector<8x128xf32>
    %95 = math.exp %94 : vector<8x128xf32>
    %cst_38 = arith.constant 1.000000e+00 : f32
    %96 = vector.broadcast %cst_38 : f32 to vector<8x128xf32>
    %97 = arith.addf %96, %95 : vector<8x128xf32>
    %98 = tpu.reciprocal %97 : vector<8x128xf32> -> vector<8x128xf32>
    %99 = vector.extract_strided_slice %91 {offsets = [0, 128], sizes = [8, 128], strides = [1, 1]} : vector<8x512xf32> to vector<8x128xf32>
    %cst_39 = arith.constant 0.000000e+00 : f32
    %100 = vector.broadcast %cst_39 : f32 to vector<8x128xf32>
    %101 = arith.subf %100, %99 : vector<8x128xf32>
    %102 = math.exp %101 : vector<8x128xf32>
    %cst_40 = arith.constant 1.000000e+00 : f32
    %103 = vector.broadcast %cst_40 : f32 to vector<8x128xf32>
    %104 = arith.addf %103, %102 : vector<8x128xf32>
    %105 = tpu.reciprocal %104 : vector<8x128xf32> -> vector<8x128xf32>
    %106 = vector.extract_strided_slice %91 {offsets = [0, 256], sizes = [8, 128], strides = [1, 1]} : vector<8x512xf32> to vector<8x128xf32>
    %107 = math.tanh %106 : vector<8x128xf32>
    %108 = vector.extract_strided_slice %91 {offsets = [0, 384], sizes = [8, 128], strides = [1, 1]} : vector<8x512xf32> to vector<8x128xf32>
    %cst_41 = arith.constant 0.000000e+00 : f32
    %109 = vector.broadcast %cst_41 : f32 to vector<8x128xf32>
    %110 = arith.subf %109, %108 : vector<8x128xf32>
    %111 = math.exp %110 : vector<8x128xf32>
    %cst_42 = arith.constant 1.000000e+00 : f32
    %112 = vector.broadcast %cst_42 : f32 to vector<8x128xf32>
    %113 = arith.addf %112, %111 : vector<8x128xf32>
    %114 = tpu.reciprocal %113 : vector<8x128xf32> -> vector<8x128xf32>
    %115 = arith.mulf %105, %46 : vector<8x128xf32>
    %116 = arith.mulf %98, %107 : vector<8x128xf32>
    %117 = arith.addf %115, %116 : vector<8x128xf32>
    %118 = math.tanh %117 : vector<8x128xf32>
    %119 = arith.mulf %114, %118 : vector<8x128xf32>
    %120 = arith.truncf %119 : vector<8x128xf32> to vector<8x128xbf16>
    %c0_43 = arith.constant 0 : index
    %c0_44 = arith.constant 0 : index
    %121 = vector.load %arg8[%c0_43, %c0_44] : memref<128x128xbf16, #tpu.memory_space<vmem>>, vector<128x128xbf16>
    %cst_45 = arith.constant dense<0.000000e+00> : vector<8x128xf32>
    %122 = tpu.matmul %120, %121, %cst_45 {dimension_numbers = #tpu.dot_dimension_numbers<[1], [0], [0], [1], [0, 0, 1, 1], [], []>} : vector<8x128xbf16>, vector<128x128xbf16>, vector<8x128xf32> -> vector<8x128xf32>
    %c0_46 = arith.constant 0 : index
    %c0_47 = arith.constant 0 : index
    %123 = vector.load %arg9[%c0_46, %c0_47] : memref<8x128xf32, #tpu.memory_space<vmem>>, vector<8x128xf32>
    %124 = arith.addf %122, %123 : vector<8x128xf32>
    %125 = arith.index_cast %c0_i32 : i32 to index
    %c0_48 = arith.constant 0 : index
    %c0_49 = arith.constant 0 : index
    %126 = vector.load %arg10[%125, %c0_48, %c0_49] : memref<8x8x128xf32, #tpu.memory_space<vmem>>, vector<1x8x128xf32>
    %127 = vector.shape_cast %126 : vector<1x8x128xf32> to vector<8x128xf32>
    %128 = vector.shape_cast %124 : vector<8x128xf32> to vector<1x8x128xf32>
    tpu.vector_store %arg10[%125, %c0_48, %c0_49], %128 {strides = array<i32>} : memref<8x8x128xf32, #tpu.memory_space<vmem>>, vector<1x8x128xf32>,
    %c1_i32 = arith.constant 1 : i32
    %129 = arith.addi %c0_i32, %c1_i32 : i32
    %130 = arith.index_cast %129 : i32 to index
    %c0_50 = arith.constant 0 : index
    %c0_51 = arith.constant 0 : index
    %131 = vector.load %arg2[%130, %c0_50, %c0_51] : memref<9x8x128xf32, #tpu.memory_space<vmem>>, vector<1x8x128xf32>
    %132 = vector.shape_cast %131 : vector<1x8x128xf32> to vector<8x128xf32>
    %cst_52 = arith.constant dense<0xFF800000> : vector<8xf32>
    %133 = vector.multi_reduction <maximumf>, %124, %cst_52 [1] : vector<8x128xf32> to vector<8xf32>
    %134 = vector.shape_cast %133 : vector<8xf32> to vector<8x1xf32>
    %135 = vector.broadcast %134 : vector<8x1xf32> to vector<8x128xf32>
    %136 = arith.cmpf oeq, %124, %135 : vector<8x128xf32>
    %c128_i32 = arith.constant 128 : i32
    %137 = vector.broadcast %c128_i32 : i32 to vector<8x128xi32>
    %138 = arith.select %136, %49, %137 : vector<8x128xi1>, vector<8x128xi32>
    %cst_53 = arith.constant dense<2147483647> : vector<8xi32>
    %139 = vector.multi_reduction <minsi>, %138, %cst_53 [1] : vector<8x128xi32> to vector<8xi32>
    %140 = vector.shape_cast %139 : vector<8xi32> to vector<8x1xi32>
    %141 = vector.broadcast %140 : vector<8x1xi32> to vector<8x128xi32>
    %142 = arith.cmpi eq, %49, %141 : vector<8x128xi32>
    %143 = arith.extui %142 : vector<8x128xi1> to vector<8x128xi32>
    %144 = arith.sitofp %143 : vector<8x128xi32> to vector<8x128xf32>
    %145 = arith.truncf %144 : vector<8x128xf32> to vector<8x128xbf16>
    %c0_54 = arith.constant 0 : index
    %c0_55 = arith.constant 0 : index
    %146 = vector.load %arg3[%c0_54, %c0_55] : memref<128x128xbf16, #tpu.memory_space<vmem>>, vector<128x128xbf16>
    %cst_56 = arith.constant dense<0.000000e+00> : vector<8x128xf32>
    %147 = tpu.matmul %145, %146, %cst_56 {dimension_numbers = #tpu.dot_dimension_numbers<[1], [0], [0], [1], [0, 0, 1, 1], [], []>} : vector<8x128xbf16>, vector<128x128xbf16>, vector<8x128xf32> -> vector<8x128xf32>
    %148 = arith.index_cast %c0_i32 : i32 to index
    %149 = memref.load %arg0[%148] : memref<8xi32, #tpu.memory_space<smem>>
    %150 = arith.sitofp %149 : i32 to f32
    %151 = vector.broadcast %150 : f32 to vector<8x128xf32>
    %152 = arith.mulf %151, %132 : vector<8x128xf32>
    %cst_57 = arith.constant 1.000000e+00 : f32
    %153 = arith.subf %cst_57, %150 : f32
    %154 = vector.broadcast %153 : f32 to vector<8x128xf32>
    %155 = arith.mulf %154, %147 : vector<8x128xf32>
    %156 = arith.addf %152, %155 : vector<8x128xf32>
    %c1_i32_58 = arith.constant 1 : i32
    %157 = tpu.concatenate %156, %85 in 1 : vector<8x128xf32>, vector<8x128xf32> -> vector<8x256xf32>
    %158 = arith.truncf %157 : vector<8x256xf32> to vector<8x256xbf16>
    %c0_59 = arith.constant 0 : index
    %c0_60 = arith.constant 0 : index
    %159 = vector.load %arg4[%c0_59, %c0_60] : memref<256x512xbf16, #tpu.memory_space<vmem>>, vector<256x512xbf16>
    %cst_61 = arith.constant dense<0.000000e+00> : vector<8x512xf32>
    %160 = tpu.matmul %158, %159, %cst_61 {dimension_numbers = #tpu.dot_dimension_numbers<[1], [0], [0], [1], [0, 0, 1, 1], [], []>} : vector<8x256xbf16>, vector<256x512xbf16>, vector<8x512xf32> -> vector<8x512xf32>
    %c0_62 = arith.constant 0 : index
    %c0_63 = arith.constant 0 : index
    %161 = vector.load %arg5[%c0_62, %c0_63] : memref<8x512xf32, #tpu.memory_space<vmem>>, vector<8x512xf32>
    %162 = arith.addf %160, %161 : vector<8x512xf32>
    %163 = vector.extract_strided_slice %162 {offsets = [0, 0], sizes = [8, 128], strides = [1, 1]} : vector<8x512xf32> to vector<8x128xf32>
    %cst_64 = arith.constant 0.000000e+00 : f32
    %164 = vector.broadcast %cst_64 : f32 to vector<8x128xf32>
    %165 = arith.subf %164, %163 : vector<8x128xf32>
    %166 = math.exp %165 : vector<8x128xf32>
    %cst_65 = arith.constant 1.000000e+00 : f32
    %167 = vector.broadcast %cst_65 : f32 to vector<8x128xf32>
    %168 = arith.addf %167, %166 : vector<8x128xf32>
    %169 = tpu.reciprocal %168 : vector<8x128xf32> -> vector<8x128xf32>
    %170 = vector.extract_strided_slice %162 {offsets = [0, 128], sizes = [8, 128], strides = [1, 1]} : vector<8x512xf32> to vector<8x128xf32>
    %cst_66 = arith.constant 0.000000e+00 : f32
    %171 = vector.broadcast %cst_66 : f32 to vector<8x128xf32>
    %172 = arith.subf %171, %170 : vector<8x128xf32>
    %173 = math.exp %172 : vector<8x128xf32>
    %cst_67 = arith.constant 1.000000e+00 : f32
    %174 = vector.broadcast %cst_67 : f32 to vector<8x128xf32>
    %175 = arith.addf %174, %173 : vector<8x128xf32>
    %176 = tpu.reciprocal %175 : vector<8x128xf32> -> vector<8x128xf32>
    %177 = vector.extract_strided_slice %162 {offsets = [0, 256], sizes = [8, 128], strides = [1, 1]} : vector<8x512xf32> to vector<8x128xf32>
    %178 = math.tanh %177 : vector<8x128xf32>
    %179 = vector.extract_strided_slice %162 {offsets = [0, 384], sizes = [8, 128], strides = [1, 1]} : vector<8x512xf32> to vector<8x128xf32>
    %cst_68 = arith.constant 0.000000e+00 : f32
    %180 = vector.broadcast %cst_68 : f32 to vector<8x128xf32>
    %181 = arith.subf %180, %179 : vector<8x128xf32>
    %182 = math.exp %181 : vector<8x128xf32>
    %cst_69 = arith.constant 1.000000e+00 : f32
    %183 = vector.broadcast %cst_69 : f32 to vector<8x128xf32>
    %184 = arith.addf %183, %182 : vector<8x128xf32>
    %185 = tpu.reciprocal %184 : vector<8x128xf32> -> vector<8x128xf32>
    %186 = arith.mulf %176, %83 : vector<8x128xf32>
    %187 = arith.mulf %169, %178 : vector<8x128xf32>
    %188 = arith.addf %186, %187 : vector<8x128xf32>
    %189 = math.tanh %188 : vector<8x128xf32>
    %190 = arith.mulf %185, %189 : vector<8x128xf32>
    %191 = tpu.concatenate %190, %119 in 1 : vector<8x128xf32>, vector<8x128xf32> -> vector<8x256xf32>
    %192 = arith.truncf %191 : vector<8x256xf32> to vector<8x256xbf16>
    %c0_70 = arith.constant 0 : index
    %c0_71 = arith.constant 0 : index
    %193 = vector.load %arg6[%c0_70, %c0_71] : memref<256x512xbf16, #tpu.memory_space<vmem>>, vector<256x512xbf16>
    %cst_72 = arith.constant dense<0.000000e+00> : vector<8x512xf32>
    %194 = tpu.matmul %192, %193, %cst_72 {dimension_numbers = #tpu.dot_dimension_numbers<[1], [0], [0], [1], [0, 0, 1, 1], [], []>} : vector<8x256xbf16>, vector<256x512xbf16>, vector<8x512xf32> -> vector<8x512xf32>
    %c0_73 = arith.constant 0 : index
    %c0_74 = arith.constant 0 : index
    %195 = vector.load %arg7[%c0_73, %c0_74] : memref<8x512xf32, #tpu.memory_space<vmem>>, vector<8x512xf32>
    %196 = arith.addf %194, %195 : vector<8x512xf32>
    %197 = vector.extract_strided_slice %196 {offsets = [0, 0], sizes = [8, 128], strides = [1, 1]} : vector<8x512xf32> to vector<8x128xf32>
    %cst_75 = arith.constant 0.000000e+00 : f32
    %198 = vector.broadcast %cst_75 : f32 to vector<8x128xf32>
    %199 = arith.subf %198, %197 : vector<8x128xf32>
    %200 = math.exp %199 : vector<8x128xf32>
    %cst_76 = arith.constant 1.000000e+00 : f32
    %201 = vector.broadcast %cst_76 : f32 to vector<8x128xf32>
    %202 = arith.addf %201, %200 : vector<8x128xf32>
    %203 = tpu.reciprocal %202 : vector<8x128xf32> -> vector<8x128xf32>
    %204 = vector.extract_strided_slice %196 {offsets = [0, 128], sizes = [8, 128], strides = [1, 1]} : vector<8x512xf32> to vector<8x128xf32>
    %cst_77 = arith.constant 0.000000e+00 : f32
    %205 = vector.broadcast %cst_77 : f32 to vector<8x128xf32>
    %206 = arith.subf %205, %204 : vector<8x128xf32>
    %207 = math.exp %206 : vector<8x128xf32>
    %cst_78 = arith.constant 1.000000e+00 : f32
    %208 = vector.broadcast %cst_78 : f32 to vector<8x128xf32>
    %209 = arith.addf %208, %207 : vector<8x128xf32>
    %210 = tpu.reciprocal %209 : vector<8x128xf32> -> vector<8x128xf32>
    %211 = vector.extract_strided_slice %196 {offsets = [0, 256], sizes = [8, 128], strides = [1, 1]} : vector<8x512xf32> to vector<8x128xf32>
    %212 = math.tanh %211 : vector<8x128xf32>
    %213 = vector.extract_strided_slice %196 {offsets = [0, 384], sizes = [8, 128], strides = [1, 1]} : vector<8x512xf32> to vector<8x128xf32>
    %cst_79 = arith.constant 0.000000e+00 : f32
    %214 = vector.broadcast %cst_79 : f32 to vector<8x128xf32>
    %215 = arith.subf %214, %213 : vector<8x128xf32>
    %216 = math.exp %215 : vector<8x128xf32>
    %cst_80 = arith.constant 1.000000e+00 : f32
    %217 = vector.broadcast %cst_80 : f32 to vector<8x128xf32>
    %218 = arith.addf %217, %216 : vector<8x128xf32>
    %219 = tpu.reciprocal %218 : vector<8x128xf32> -> vector<8x128xf32>
    %220 = arith.mulf %210, %117 : vector<8x128xf32>
    %221 = arith.mulf %203, %212 : vector<8x128xf32>
    %222 = arith.addf %220, %221 : vector<8x128xf32>
    %223 = math.tanh %222 : vector<8x128xf32>
    %224 = arith.mulf %219, %223 : vector<8x128xf32>
    %225 = arith.truncf %224 : vector<8x128xf32> to vector<8x128xbf16>
    %c0_81 = arith.constant 0 : index
    %c0_82 = arith.constant 0 : index
    %226 = vector.load %arg8[%c0_81, %c0_82] : memref<128x128xbf16, #tpu.memory_space<vmem>>, vector<128x128xbf16>
    %cst_83 = arith.constant dense<0.000000e+00> : vector<8x128xf32>
    %227 = tpu.matmul %225, %226, %cst_83 {dimension_numbers = #tpu.dot_dimension_numbers<[1], [0], [0], [1], [0, 0, 1, 1], [], []>} : vector<8x128xbf16>, vector<128x128xbf16>, vector<8x128xf32> -> vector<8x128xf32>
    %c0_84 = arith.constant 0 : index
    %c0_85 = arith.constant 0 : index
    %228 = vector.load %arg9[%c0_84, %c0_85] : memref<8x128xf32, #tpu.memory_space<vmem>>, vector<8x128xf32>
    %229 = arith.addf %227, %228 : vector<8x128xf32>
    %230 = arith.index_cast %c1_i32_58 : i32 to index
    %c0_86 = arith.constant 0 : index
    %c0_87 = arith.constant 0 : index
    %231 = vector.load %arg10[%230, %c0_86, %c0_87] : memref<8x8x128xf32, #tpu.memory_space<vmem>>, vector<1x8x128xf32>
    %232 = vector.shape_cast %231 : vector<1x8x128xf32> to vector<8x128xf32>
    %233 = vector.shape_cast %229 : vector<8x128xf32> to vector<1x8x128xf32>
    tpu.vector_store %arg10[%230, %c0_86, %c0_87], %233 {strides = array<i32>} : memref<8x8x128xf32, #tpu.memory_space<vmem>>, vector<1x8x128xf32>,
    %c1_i32_88 = arith.constant 1 : i32
    %234 = arith.addi %c1_i32_58, %c1_i32_88 : i32
    %235 = arith.index_cast %234 : i32 to index
    %c0_89 = arith.constant 0 : index
    %c0_90 = arith.constant 0 : index
    %236 = vector.load %arg2[%235, %c0_89, %c0_90] : memref<9x8x128xf32, #tpu.memory_space<vmem>>, vector<1x8x128xf32>
    %237 = vector.shape_cast %236 : vector<1x8x128xf32> to vector<8x128xf32>
    %cst_91 = arith.constant dense<0xFF800000> : vector<8xf32>
    %238 = vector.multi_reduction <maximumf>, %229, %cst_91 [1] : vector<8x128xf32> to vector<8xf32>
    %239 = vector.shape_cast %238 : vector<8xf32> to vector<8x1xf32>
    %240 = vector.broadcast %239 : vector<8x1xf32> to vector<8x128xf32>
    %241 = arith.cmpf oeq, %229, %240 : vector<8x128xf32>
    %c128_i32_92 = arith.constant 128 : i32
    %242 = vector.broadcast %c128_i32_92 : i32 to vector<8x128xi32>
    %243 = arith.select %241, %49, %242 : vector<8x128xi1>, vector<8x128xi32>
    %cst_93 = arith.constant dense<2147483647> : vector<8xi32>
    %244 = vector.multi_reduction <minsi>, %243, %cst_93 [1] : vector<8x128xi32> to vector<8xi32>
    %245 = vector.shape_cast %244 : vector<8xi32> to vector<8x1xi32>
    %246 = vector.broadcast %245 : vector<8x1xi32> to vector<8x128xi32>
    %247 = arith.cmpi eq, %49, %246 : vector<8x128xi32>
    %248 = arith.extui %247 : vector<8x128xi1> to vector<8x128xi32>
    %249 = arith.sitofp %248 : vector<8x128xi32> to vector<8x128xf32>
    %250 = arith.truncf %249 : vector<8x128xf32> to vector<8x128xbf16>
    %c0_94 = arith.constant 0 : index
    %c0_95 = arith.constant 0 : index
    %251 = vector.load %arg3[%c0_94, %c0_95] : memref<128x128xbf16, #tpu.memory_space<vmem>>, vector<128x128xbf16>
    %cst_96 = arith.constant dense<0.000000e+00> : vector<8x128xf32>
    %252 = tpu.matmul %250, %251, %cst_96 {dimension_numbers = #tpu.dot_dimension_numbers<[1], [0], [0], [1], [0, 0, 1, 1], [], []>} : vector<8x128xbf16>, vector<128x128xbf16>, vector<8x128xf32> -> vector<8x128xf32>
    %253 = arith.index_cast %c1_i32_58 : i32 to index
    %254 = memref.load %arg0[%253] : memref<8xi32, #tpu.memory_space<smem>>
    %255 = arith.sitofp %254 : i32 to f32
    %256 = vector.broadcast %255 : f32 to vector<8x128xf32>
    %257 = arith.mulf %256, %237 : vector<8x128xf32>
    %cst_97 = arith.constant 1.000000e+00 : f32
    %258 = arith.subf %cst_97, %255 : f32
    %259 = vector.broadcast %258 : f32 to vector<8x128xf32>
    %260 = arith.mulf %259, %252 : vector<8x128xf32>
    %261 = arith.addf %257, %260 : vector<8x128xf32>
    %c2_i32 = arith.constant 2 : i32
    %262 = tpu.concatenate %261, %190 in 1 : vector<8x128xf32>, vector<8x128xf32> -> vector<8x256xf32>
    %263 = arith.truncf %262 : vector<8x256xf32> to vector<8x256xbf16>
    %c0_98 = arith.constant 0 : index
    %c0_99 = arith.constant 0 : index
    %264 = vector.load %arg4[%c0_98, %c0_99] : memref<256x512xbf16, #tpu.memory_space<vmem>>, vector<256x512xbf16>
    %cst_100 = arith.constant dense<0.000000e+00> : vector<8x512xf32>
    %265 = tpu.matmul %263, %264, %cst_100 {dimension_numbers = #tpu.dot_dimension_numbers<[1], [0], [0], [1], [0, 0, 1, 1], [], []>} : vector<8x256xbf16>, vector<256x512xbf16>, vector<8x512xf32> -> vector<8x512xf32>
    %c0_101 = arith.constant 0 : index
    %c0_102 = arith.constant 0 : index
    %266 = vector.load %arg5[%c0_101, %c0_102] : memref<8x512xf32, #tpu.memory_space<vmem>>, vector<8x512xf32>
    %267 = arith.addf %265, %266 : vector<8x512xf32>
    %268 = vector.extract_strided_slice %267 {offsets = [0, 0], sizes = [8, 128], strides = [1, 1]} : vector<8x512xf32> to vector<8x128xf32>
    %cst_103 = arith.constant 0.000000e+00 : f32
    %269 = vector.broadcast %cst_103 : f32 to vector<8x128xf32>
    %270 = arith.subf %269, %268 : vector<8x128xf32>
    %271 = math.exp %270 : vector<8x128xf32>
    %cst_104 = arith.constant 1.000000e+00 : f32
    %272 = vector.broadcast %cst_104 : f32 to vector<8x128xf32>
    %273 = arith.addf %272, %271 : vector<8x128xf32>
    %274 = tpu.reciprocal %273 : vector<8x128xf32> -> vector<8x128xf32>
    %275 = vector.extract_strided_slice %267 {offsets = [0, 128], sizes = [8, 128], strides = [1, 1]} : vector<8x512xf32> to vector<8x128xf32>
    %cst_105 = arith.constant 0.000000e+00 : f32
    %276 = vector.broadcast %cst_105 : f32 to vector<8x128xf32>
    %277 = arith.subf %276, %275 : vector<8x128xf32>
    %278 = math.exp %277 : vector<8x128xf32>
    %cst_106 = arith.constant 1.000000e+00 : f32
    %279 = vector.broadcast %cst_106 : f32 to vector<8x128xf32>
    %280 = arith.addf %279, %278 : vector<8x128xf32>
    %281 = tpu.reciprocal %280 : vector<8x128xf32> -> vector<8x128xf32>
    %282 = vector.extract_strided_slice %267 {offsets = [0, 256], sizes = [8, 128], strides = [1, 1]} : vector<8x512xf32> to vector<8x128xf32>
    %283 = math.tanh %282 : vector<8x128xf32>
    %284 = vector.extract_strided_slice %267 {offsets = [0, 384], sizes = [8, 128], strides = [1, 1]} : vector<8x512xf32> to vector<8x128xf32>
    %cst_107 = arith.constant 0.000000e+00 : f32
    %285 = vector.broadcast %cst_107 : f32 to vector<8x128xf32>
    %286 = arith.subf %285, %284 : vector<8x128xf32>
    %287 = math.exp %286 : vector<8x128xf32>
    %cst_108 = arith.constant 1.000000e+00 : f32
    %288 = vector.broadcast %cst_108 : f32 to vector<8x128xf32>
    %289 = arith.addf %288, %287 : vector<8x128xf32>
    %290 = tpu.reciprocal %289 : vector<8x128xf32> -> vector<8x128xf32>
    %291 = arith.mulf %281, %188 : vector<8x128xf32>
    %292 = arith.mulf %274, %283 : vector<8x128xf32>
    %293 = arith.addf %291, %292 : vector<8x128xf32>
    %294 = math.tanh %293 : vector<8x128xf32>
    %295 = arith.mulf %290, %294 : vector<8x128xf32>
    %296 = tpu.concatenate %295, %224 in 1 : vector<8x128xf32>, vector<8x128xf32> -> vector<8x256xf32>
    %297 = arith.truncf %296 : vector<8x256xf32> to vector<8x256xbf16>
    %c0_109 = arith.constant 0 : index
    %c0_110 = arith.constant 0 : index
    %298 = vector.load %arg6[%c0_109, %c0_110] : memref<256x512xbf16, #tpu.memory_space<vmem>>, vector<256x512xbf16>
    %cst_111 = arith.constant dense<0.000000e+00> : vector<8x512xf32>
    %299 = tpu.matmul %297, %298, %cst_111 {dimension_numbers = #tpu.dot_dimension_numbers<[1], [0], [0], [1], [0, 0, 1, 1], [], []>} : vector<8x256xbf16>, vector<256x512xbf16>, vector<8x512xf32> -> vector<8x512xf32>
    %c0_112 = arith.constant 0 : index
    %c0_113 = arith.constant 0 : index
    %300 = vector.load %arg7[%c0_112, %c0_113] : memref<8x512xf32, #tpu.memory_space<vmem>>, vector<8x512xf32>
    %301 = arith.addf %299, %300 : vector<8x512xf32>
    %302 = vector.extract_strided_slice %301 {offsets = [0, 0], sizes = [8, 128], strides = [1, 1]} : vector<8x512xf32> to vector<8x128xf32>
    %cst_114 = arith.constant 0.000000e+00 : f32
    %303 = vector.broadcast %cst_114 : f32 to vector<8x128xf32>
    %304 = arith.subf %303, %302 : vector<8x128xf32>
    %305 = math.exp %304 : vector<8x128xf32>
    %cst_115 = arith.constant 1.000000e+00 : f32
    %306 = vector.broadcast %cst_115 : f32 to vector<8x128xf32>
    %307 = arith.addf %306, %305 : vector<8x128xf32>
    %308 = tpu.reciprocal %307 : vector<8x128xf32> -> vector<8x128xf32>
    %309 = vector.extract_strided_slice %301 {offsets = [0, 128], sizes = [8, 128], strides = [1, 1]} : vector<8x512xf32> to vector<8x128xf32>
    %cst_116 = arith.constant 0.000000e+00 : f32
    %310 = vector.broadcast %cst_116 : f32 to vector<8x128xf32>
    %311 = arith.subf %310, %309 : vector<8x128xf32>
    %312 = math.exp %311 : vector<8x128xf32>
    %cst_117 = arith.constant 1.000000e+00 : f32
    %313 = vector.broadcast %cst_117 : f32 to vector<8x128xf32>
    %314 = arith.addf %313, %312 : vector<8x128xf32>
    %315 = tpu.reciprocal %314 : vector<8x128xf32> -> vector<8x128xf32>
    %316 = vector.extract_strided_slice %301 {offsets = [0, 256], sizes = [8, 128], strides = [1, 1]} : vector<8x512xf32> to vector<8x128xf32>
    %317 = math.tanh %316 : vector<8x128xf32>
    %318 = vector.extract_strided_slice %301 {offsets = [0, 384], sizes = [8, 128], strides = [1, 1]} : vector<8x512xf32> to vector<8x128xf32>
    %cst_118 = arith.constant 0.000000e+00 : f32
    %319 = vector.broadcast %cst_118 : f32 to vector<8x128xf32>
    %320 = arith.subf %319, %318 : vector<8x128xf32>
    %321 = math.exp %320 : vector<8x128xf32>
    %cst_119 = arith.constant 1.000000e+00 : f32
    %322 = vector.broadcast %cst_119 : f32 to vector<8x128xf32>
    %323 = arith.addf %322, %321 : vector<8x128xf32>
    %324 = tpu.reciprocal %323 : vector<8x128xf32> -> vector<8x128xf32>
    %325 = arith.mulf %315, %222 : vector<8x128xf32>
    %326 = arith.mulf %308, %317 : vector<8x128xf32>
    %327 = arith.addf %325, %326 : vector<8x128xf32>
    %328 = math.tanh %327 : vector<8x128xf32>
    %329 = arith.mulf %324, %328 : vector<8x128xf32>
    %330 = arith.truncf %329 : vector<8x128xf32> to vector<8x128xbf16>
    %c0_120 = arith.constant 0 : index
    %c0_121 = arith.constant 0 : index
    %331 = vector.load %arg8[%c0_120, %c0_121] : memref<128x128xbf16, #tpu.memory_space<vmem>>, vector<128x128xbf16>
    %cst_122 = arith.constant dense<0.000000e+00> : vector<8x128xf32>
    %332 = tpu.matmul %330, %331, %cst_122 {dimension_numbers = #tpu.dot_dimension_numbers<[1], [0], [0], [1], [0, 0, 1, 1], [], []>} : vector<8x128xbf16>, vector<128x128xbf16>, vector<8x128xf32> -> vector<8x128xf32>
    %c0_123 = arith.constant 0 : index
    %c0_124 = arith.constant 0 : index
    %333 = vector.load %arg9[%c0_123, %c0_124] : memref<8x128xf32, #tpu.memory_space<vmem>>, vector<8x128xf32>
    %334 = arith.addf %332, %333 : vector<8x128xf32>
    %335 = arith.index_cast %c2_i32 : i32 to index
    %c0_125 = arith.constant 0 : index
    %c0_126 = arith.constant 0 : index
    %336 = vector.load %arg10[%335, %c0_125, %c0_126] : memref<8x8x128xf32, #tpu.memory_space<vmem>>, vector<1x8x128xf32>
    %337 = vector.shape_cast %336 : vector<1x8x128xf32> to vector<8x128xf32>
    %338 = vector.shape_cast %334 : vector<8x128xf32> to vector<1x8x128xf32>
    tpu.vector_store %arg10[%335, %c0_125, %c0_126], %338 {strides = array<i32>} : memref<8x8x128xf32, #tpu.memory_space<vmem>>, vector<1x8x128xf32>,
    %c1_i32_127 = arith.constant 1 : i32
    %339 = arith.addi %c2_i32, %c1_i32_127 : i32
    %340 = arith.index_cast %339 : i32 to index
    %c0_128 = arith.constant 0 : index
    %c0_129 = arith.constant 0 : index
    %341 = vector.load %arg2[%340, %c0_128, %c0_129] : memref<9x8x128xf32, #tpu.memory_space<vmem>>, vector<1x8x128xf32>
    %342 = vector.shape_cast %341 : vector<1x8x128xf32> to vector<8x128xf32>
    %cst_130 = arith.constant dense<0xFF800000> : vector<8xf32>
    %343 = vector.multi_reduction <maximumf>, %334, %cst_130 [1] : vector<8x128xf32> to vector<8xf32>
    %344 = vector.shape_cast %343 : vector<8xf32> to vector<8x1xf32>
    %345 = vector.broadcast %344 : vector<8x1xf32> to vector<8x128xf32>
    %346 = arith.cmpf oeq, %334, %345 : vector<8x128xf32>
    %c128_i32_131 = arith.constant 128 : i32
    %347 = vector.broadcast %c128_i32_131 : i32 to vector<8x128xi32>
    %348 = arith.select %346, %49, %347 : vector<8x128xi1>, vector<8x128xi32>
    %cst_132 = arith.constant dense<2147483647> : vector<8xi32>
    %349 = vector.multi_reduction <minsi>, %348, %cst_132 [1] : vector<8x128xi32> to vector<8xi32>
    %350 = vector.shape_cast %349 : vector<8xi32> to vector<8x1xi32>
    %351 = vector.broadcast %350 : vector<8x1xi32> to vector<8x128xi32>
    %352 = arith.cmpi eq, %49, %351 : vector<8x128xi32>
    %353 = arith.extui %352 : vector<8x128xi1> to vector<8x128xi32>
    %354 = arith.sitofp %353 : vector<8x128xi32> to vector<8x128xf32>
    %355 = arith.truncf %354 : vector<8x128xf32> to vector<8x128xbf16>
    %c0_133 = arith.constant 0 : index
    %c0_134 = arith.constant 0 : index
    %356 = vector.load %arg3[%c0_133, %c0_134] : memref<128x128xbf16, #tpu.memory_space<vmem>>, vector<128x128xbf16>
    %cst_135 = arith.constant dense<0.000000e+00> : vector<8x128xf32>
    %357 = tpu.matmul %355, %356, %cst_135 {dimension_numbers = #tpu.dot_dimension_numbers<[1], [0], [0], [1], [0, 0, 1, 1], [], []>} : vector<8x128xbf16>, vector<128x128xbf16>, vector<8x128xf32> -> vector<8x128xf32>
    %358 = arith.index_cast %c2_i32 : i32 to index
    %359 = memref.load %arg0[%358] : memref<8xi32, #tpu.memory_space<smem>>
    %360 = arith.sitofp %359 : i32 to f32
    %361 = vector.broadcast %360 : f32 to vector<8x128xf32>
    %362 = arith.mulf %361, %342 : vector<8x128xf32>
    %cst_136 = arith.constant 1.000000e+00 : f32
    %363 = arith.subf %cst_136, %360 : f32
    %364 = vector.broadcast %363 : f32 to vector<8x128xf32>
    %365 = arith.mulf %364, %357 : vector<8x128xf32>
    %366 = arith.addf %362, %365 : vector<8x128xf32>
    %c3_i32 = arith.constant 3 : i32
    %367 = tpu.concatenate %366, %295 in 1 : vector<8x128xf32>, vector<8x128xf32> -> vector<8x256xf32>
    %368 = arith.truncf %367 : vector<8x256xf32> to vector<8x256xbf16>
    %c0_137 = arith.constant 0 : index
    %c0_138 = arith.constant 0 : index
    %369 = vector.load %arg4[%c0_137, %c0_138] : memref<256x512xbf16, #tpu.memory_space<vmem>>, vector<256x512xbf16>
    %cst_139 = arith.constant dense<0.000000e+00> : vector<8x512xf32>
    %370 = tpu.matmul %368, %369, %cst_139 {dimension_numbers = #tpu.dot_dimension_numbers<[1], [0], [0], [1], [0, 0, 1, 1], [], []>} : vector<8x256xbf16>, vector<256x512xbf16>, vector<8x512xf32> -> vector<8x512xf32>
    %c0_140 = arith.constant 0 : index
    %c0_141 = arith.constant 0 : index
    %371 = vector.load %arg5[%c0_140, %c0_141] : memref<8x512xf32, #tpu.memory_space<vmem>>, vector<8x512xf32>
    %372 = arith.addf %370, %371 : vector<8x512xf32>
    %373 = vector.extract_strided_slice %372 {offsets = [0, 0], sizes = [8, 128], strides = [1, 1]} : vector<8x512xf32> to vector<8x128xf32>
    %cst_142 = arith.constant 0.000000e+00 : f32
    %374 = vector.broadcast %cst_142 : f32 to vector<8x128xf32>
    %375 = arith.subf %374, %373 : vector<8x128xf32>
    %376 = math.exp %375 : vector<8x128xf32>
    %cst_143 = arith.constant 1.000000e+00 : f32
    %377 = vector.broadcast %cst_143 : f32 to vector<8x128xf32>
    %378 = arith.addf %377, %376 : vector<8x128xf32>
    %379 = tpu.reciprocal %378 : vector<8x128xf32> -> vector<8x128xf32>
    %380 = vector.extract_strided_slice %372 {offsets = [0, 128], sizes = [8, 128], strides = [1, 1]} : vector<8x512xf32> to vector<8x128xf32>
    %cst_144 = arith.constant 0.000000e+00 : f32
    %381 = vector.broadcast %cst_144 : f32 to vector<8x128xf32>
    %382 = arith.subf %381, %380 : vector<8x128xf32>
    %383 = math.exp %382 : vector<8x128xf32>
    %cst_145 = arith.constant 1.000000e+00 : f32
    %384 = vector.broadcast %cst_145 : f32 to vector<8x128xf32>
    %385 = arith.addf %384, %383 : vector<8x128xf32>
    %386 = tpu.reciprocal %385 : vector<8x128xf32> -> vector<8x128xf32>
    %387 = vector.extract_strided_slice %372 {offsets = [0, 256], sizes = [8, 128], strides = [1, 1]} : vector<8x512xf32> to vector<8x128xf32>
    %388 = math.tanh %387 : vector<8x128xf32>
    %389 = vector.extract_strided_slice %372 {offsets = [0, 384], sizes = [8, 128], strides = [1, 1]} : vector<8x512xf32> to vector<8x128xf32>
    %cst_146 = arith.constant 0.000000e+00 : f32
    %390 = vector.broadcast %cst_146 : f32 to vector<8x128xf32>
    %391 = arith.subf %390, %389 : vector<8x128xf32>
    %392 = math.exp %391 : vector<8x128xf32>
    %cst_147 = arith.constant 1.000000e+00 : f32
    %393 = vector.broadcast %cst_147 : f32 to vector<8x128xf32>
    %394 = arith.addf %393, %392 : vector<8x128xf32>
    %395 = tpu.reciprocal %394 : vector<8x128xf32> -> vector<8x128xf32>
    %396 = arith.mulf %386, %293 : vector<8x128xf32>
    %397 = arith.mulf %379, %388 : vector<8x128xf32>
    %398 = arith.addf %396, %397 : vector<8x128xf32>
    %399 = math.tanh %398 : vector<8x128xf32>
    %400 = arith.mulf %395, %399 : vector<8x128xf32>
    %401 = tpu.concatenate %400, %329 in 1 : vector<8x128xf32>, vector<8x128xf32> -> vector<8x256xf32>
    %402 = arith.truncf %401 : vector<8x256xf32> to vector<8x256xbf16>
    %c0_148 = arith.constant 0 : index
    %c0_149 = arith.constant 0 : index
    %403 = vector.load %arg6[%c0_148, %c0_149] : memref<256x512xbf16, #tpu.memory_space<vmem>>, vector<256x512xbf16>
    %cst_150 = arith.constant dense<0.000000e+00> : vector<8x512xf32>
    %404 = tpu.matmul %402, %403, %cst_150 {dimension_numbers = #tpu.dot_dimension_numbers<[1], [0], [0], [1], [0, 0, 1, 1], [], []>} : vector<8x256xbf16>, vector<256x512xbf16>, vector<8x512xf32> -> vector<8x512xf32>
    %c0_151 = arith.constant 0 : index
    %c0_152 = arith.constant 0 : index
    %405 = vector.load %arg7[%c0_151, %c0_152] : memref<8x512xf32, #tpu.memory_space<vmem>>, vector<8x512xf32>
    %406 = arith.addf %404, %405 : vector<8x512xf32>
    %407 = vector.extract_strided_slice %406 {offsets = [0, 0], sizes = [8, 128], strides = [1, 1]} : vector<8x512xf32> to vector<8x128xf32>
    %cst_153 = arith.constant 0.000000e+00 : f32
    %408 = vector.broadcast %cst_153 : f32 to vector<8x128xf32>
    %409 = arith.subf %408, %407 : vector<8x128xf32>
    %410 = math.exp %409 : vector<8x128xf32>
    %cst_154 = arith.constant 1.000000e+00 : f32
    %411 = vector.broadcast %cst_154 : f32 to vector<8x128xf32>
    %412 = arith.addf %411, %410 : vector<8x128xf32>
    %413 = tpu.reciprocal %412 : vector<8x128xf32> -> vector<8x128xf32>
    %414 = vector.extract_strided_slice %406 {offsets = [0, 128], sizes = [8, 128], strides = [1, 1]} : vector<8x512xf32> to vector<8x128xf32>
    %cst_155 = arith.constant 0.000000e+00 : f32
    %415 = vector.broadcast %cst_155 : f32 to vector<8x128xf32>
    %416 = arith.subf %415, %414 : vector<8x128xf32>
    %417 = math.exp %416 : vector<8x128xf32>
    %cst_156 = arith.constant 1.000000e+00 : f32
    %418 = vector.broadcast %cst_156 : f32 to vector<8x128xf32>
    %419 = arith.addf %418, %417 : vector<8x128xf32>
    %420 = tpu.reciprocal %419 : vector<8x128xf32> -> vector<8x128xf32>
    %421 = vector.extract_strided_slice %406 {offsets = [0, 256], sizes = [8, 128], strides = [1, 1]} : vector<8x512xf32> to vector<8x128xf32>
    %422 = math.tanh %421 : vector<8x128xf32>
    %423 = vector.extract_strided_slice %406 {offsets = [0, 384], sizes = [8, 128], strides = [1, 1]} : vector<8x512xf32> to vector<8x128xf32>
    %cst_157 = arith.constant 0.000000e+00 : f32
    %424 = vector.broadcast %cst_157 : f32 to vector<8x128xf32>
    %425 = arith.subf %424, %423 : vector<8x128xf32>
    %426 = math.exp %425 : vector<8x128xf32>
    %cst_158 = arith.constant 1.000000e+00 : f32
    %427 = vector.broadcast %cst_158 : f32 to vector<8x128xf32>
    %428 = arith.addf %427, %426 : vector<8x128xf32>
    %429 = tpu.reciprocal %428 : vector<8x128xf32> -> vector<8x128xf32>
    %430 = arith.mulf %420, %327 : vector<8x128xf32>
    %431 = arith.mulf %413, %422 : vector<8x128xf32>
    %432 = arith.addf %430, %431 : vector<8x128xf32>
    %433 = math.tanh %432 : vector<8x128xf32>
    %434 = arith.mulf %429, %433 : vector<8x128xf32>
    %435 = arith.truncf %434 : vector<8x128xf32> to vector<8x128xbf16>
    %c0_159 = arith.constant 0 : index
    %c0_160 = arith.constant 0 : index
    %436 = vector.load %arg8[%c0_159, %c0_160] : memref<128x128xbf16, #tpu.memory_space<vmem>>, vector<128x128xbf16>
    %cst_161 = arith.constant dense<0.000000e+00> : vector<8x128xf32>
    %437 = tpu.matmul %435, %436, %cst_161 {dimension_numbers = #tpu.dot_dimension_numbers<[1], [0], [0], [1], [0, 0, 1, 1], [], []>} : vector<8x128xbf16>, vector<128x128xbf16>, vector<8x128xf32> -> vector<8x128xf32>
    %c0_162 = arith.constant 0 : index
    %c0_163 = arith.constant 0 : index
    %438 = vector.load %arg9[%c0_162, %c0_163] : memref<8x128xf32, #tpu.memory_space<vmem>>, vector<8x128xf32>
    %439 = arith.addf %437, %438 : vector<8x128xf32>
    %440 = arith.index_cast %c3_i32 : i32 to index
    %c0_164 = arith.constant 0 : index
    %c0_165 = arith.constant 0 : index
    %441 = vector.load %arg10[%440, %c0_164, %c0_165] : memref<8x8x128xf32, #tpu.memory_space<vmem>>, vector<1x8x128xf32>
    %442 = vector.shape_cast %441 : vector<1x8x128xf32> to vector<8x128xf32>
    %443 = vector.shape_cast %439 : vector<8x128xf32> to vector<1x8x128xf32>
    tpu.vector_store %arg10[%440, %c0_164, %c0_165], %443 {strides = array<i32>} : memref<8x8x128xf32, #tpu.memory_space<vmem>>, vector<1x8x128xf32>,
    %c1_i32_166 = arith.constant 1 : i32
    %444 = arith.addi %c3_i32, %c1_i32_166 : i32
    %445 = arith.index_cast %444 : i32 to index
    %c0_167 = arith.constant 0 : index
    %c0_168 = arith.constant 0 : index
    %446 = vector.load %arg2[%445, %c0_167, %c0_168] : memref<9x8x128xf32, #tpu.memory_space<vmem>>, vector<1x8x128xf32>
    %447 = vector.shape_cast %446 : vector<1x8x128xf32> to vector<8x128xf32>
    %cst_169 = arith.constant dense<0xFF800000> : vector<8xf32>
    %448 = vector.multi_reduction <maximumf>, %439, %cst_169 [1] : vector<8x128xf32> to vector<8xf32>
    %449 = vector.shape_cast %448 : vector<8xf32> to vector<8x1xf32>
    %450 = vector.broadcast %449 : vector<8x1xf32> to vector<8x128xf32>
    %451 = arith.cmpf oeq, %439, %450 : vector<8x128xf32>
    %c128_i32_170 = arith.constant 128 : i32
    %452 = vector.broadcast %c128_i32_170 : i32 to vector<8x128xi32>
    %453 = arith.select %451, %49, %452 : vector<8x128xi1>, vector<8x128xi32>
    %cst_171 = arith.constant dense<2147483647> : vector<8xi32>
    %454 = vector.multi_reduction <minsi>, %453, %cst_171 [1] : vector<8x128xi32> to vector<8xi32>
    %455 = vector.shape_cast %454 : vector<8xi32> to vector<8x1xi32>
    %456 = vector.broadcast %455 : vector<8x1xi32> to vector<8x128xi32>
    %457 = arith.cmpi eq, %49, %456 : vector<8x128xi32>
    %458 = arith.extui %457 : vector<8x128xi1> to vector<8x128xi32>
    %459 = arith.sitofp %458 : vector<8x128xi32> to vector<8x128xf32>
    %460 = arith.truncf %459 : vector<8x128xf32> to vector<8x128xbf16>
    %c0_172 = arith.constant 0 : index
    %c0_173 = arith.constant 0 : index
    %461 = vector.load %arg3[%c0_172, %c0_173] : memref<128x128xbf16, #tpu.memory_space<vmem>>, vector<128x128xbf16>
    %cst_174 = arith.constant dense<0.000000e+00> : vector<8x128xf32>
    %462 = tpu.matmul %460, %461, %cst_174 {dimension_numbers = #tpu.dot_dimension_numbers<[1], [0], [0], [1], [0, 0, 1, 1], [], []>} : vector<8x128xbf16>, vector<128x128xbf16>, vector<8x128xf32> -> vector<8x128xf32>
    %463 = arith.index_cast %c3_i32 : i32 to index
    %464 = memref.load %arg0[%463] : memref<8xi32, #tpu.memory_space<smem>>
    %465 = arith.sitofp %464 : i32 to f32
    %466 = vector.broadcast %465 : f32 to vector<8x128xf32>
    %467 = arith.mulf %466, %447 : vector<8x128xf32>
    %cst_175 = arith.constant 1.000000e+00 : f32
    %468 = arith.subf %cst_175, %465 : f32
    %469 = vector.broadcast %468 : f32 to vector<8x128xf32>
    %470 = arith.mulf %469, %462 : vector<8x128xf32>
    %471 = arith.addf %467, %470 : vector<8x128xf32>
    %c4_i32 = arith.constant 4 : i32
    %472 = tpu.concatenate %471, %400 in 1 : vector<8x128xf32>, vector<8x128xf32> -> vector<8x256xf32>
    %473 = arith.truncf %472 : vector<8x256xf32> to vector<8x256xbf16>
    %c0_176 = arith.constant 0 : index
    %c0_177 = arith.constant 0 : index
    %474 = vector.load %arg4[%c0_176, %c0_177] : memref<256x512xbf16, #tpu.memory_space<vmem>>, vector<256x512xbf16>
    %cst_178 = arith.constant dense<0.000000e+00> : vector<8x512xf32>
    %475 = tpu.matmul %473, %474, %cst_178 {dimension_numbers = #tpu.dot_dimension_numbers<[1], [0], [0], [1], [0, 0, 1, 1], [], []>} : vector<8x256xbf16>, vector<256x512xbf16>, vector<8x512xf32> -> vector<8x512xf32>
    %c0_179 = arith.constant 0 : index
    %c0_180 = arith.constant 0 : index
    %476 = vector.load %arg5[%c0_179, %c0_180] : memref<8x512xf32, #tpu.memory_space<vmem>>, vector<8x512xf32>
    %477 = arith.addf %475, %476 : vector<8x512xf32>
    %478 = vector.extract_strided_slice %477 {offsets = [0, 0], sizes = [8, 128], strides = [1, 1]} : vector<8x512xf32> to vector<8x128xf32>
    %cst_181 = arith.constant 0.000000e+00 : f32
    %479 = vector.broadcast %cst_181 : f32 to vector<8x128xf32>
    %480 = arith.subf %479, %478 : vector<8x128xf32>
    %481 = math.exp %480 : vector<8x128xf32>
    %cst_182 = arith.constant 1.000000e+00 : f32
    %482 = vector.broadcast %cst_182 : f32 to vector<8x128xf32>
    %483 = arith.addf %482, %481 : vector<8x128xf32>
    %484 = tpu.reciprocal %483 : vector<8x128xf32> -> vector<8x128xf32>
    %485 = vector.extract_strided_slice %477 {offsets = [0, 128], sizes = [8, 128], strides = [1, 1]} : vector<8x512xf32> to vector<8x128xf32>
    %cst_183 = arith.constant 0.000000e+00 : f32
    %486 = vector.broadcast %cst_183 : f32 to vector<8x128xf32>
    %487 = arith.subf %486, %485 : vector<8x128xf32>
    %488 = math.exp %487 : vector<8x128xf32>
    %cst_184 = arith.constant 1.000000e+00 : f32
    %489 = vector.broadcast %cst_184 : f32 to vector<8x128xf32>
    %490 = arith.addf %489, %488 : vector<8x128xf32>
    %491 = tpu.reciprocal %490 : vector<8x128xf32> -> vector<8x128xf32>
    %492 = vector.extract_strided_slice %477 {offsets = [0, 256], sizes = [8, 128], strides = [1, 1]} : vector<8x512xf32> to vector<8x128xf32>
    %493 = math.tanh %492 : vector<8x128xf32>
    %494 = vector.extract_strided_slice %477 {offsets = [0, 384], sizes = [8, 128], strides = [1, 1]} : vector<8x512xf32> to vector<8x128xf32>
    %cst_185 = arith.constant 0.000000e+00 : f32
    %495 = vector.broadcast %cst_185 : f32 to vector<8x128xf32>
    %496 = arith.subf %495, %494 : vector<8x128xf32>
    %497 = math.exp %496 : vector<8x128xf32>
    %cst_186 = arith.constant 1.000000e+00 : f32
    %498 = vector.broadcast %cst_186 : f32 to vector<8x128xf32>
    %499 = arith.addf %498, %497 : vector<8x128xf32>
    %500 = tpu.reciprocal %499 : vector<8x128xf32> -> vector<8x128xf32>
    %501 = arith.mulf %491, %398 : vector<8x128xf32>
    %502 = arith.mulf %484, %493 : vector<8x128xf32>
    %503 = arith.addf %501, %502 : vector<8x128xf32>
    %504 = math.tanh %503 : vector<8x128xf32>
    %505 = arith.mulf %500, %504 : vector<8x128xf32>
    %506 = tpu.concatenate %505, %434 in 1 : vector<8x128xf32>, vector<8x128xf32> -> vector<8x256xf32>
    %507 = arith.truncf %506 : vector<8x256xf32> to vector<8x256xbf16>
    %c0_187 = arith.constant 0 : index
    %c0_188 = arith.constant 0 : index
    %508 = vector.load %arg6[%c0_187, %c0_188] : memref<256x512xbf16, #tpu.memory_space<vmem>>, vector<256x512xbf16>
    %cst_189 = arith.constant dense<0.000000e+00> : vector<8x512xf32>
    %509 = tpu.matmul %507, %508, %cst_189 {dimension_numbers = #tpu.dot_dimension_numbers<[1], [0], [0], [1], [0, 0, 1, 1], [], []>} : vector<8x256xbf16>, vector<256x512xbf16>, vector<8x512xf32> -> vector<8x512xf32>
    %c0_190 = arith.constant 0 : index
    %c0_191 = arith.constant 0 : index
    %510 = vector.load %arg7[%c0_190, %c0_191] : memref<8x512xf32, #tpu.memory_space<vmem>>, vector<8x512xf32>
    %511 = arith.addf %509, %510 : vector<8x512xf32>
    %512 = vector.extract_strided_slice %511 {offsets = [0, 0], sizes = [8, 128], strides = [1, 1]} : vector<8x512xf32> to vector<8x128xf32>
    %cst_192 = arith.constant 0.000000e+00 : f32
    %513 = vector.broadcast %cst_192 : f32 to vector<8x128xf32>
    %514 = arith.subf %513, %512 : vector<8x128xf32>
    %515 = math.exp %514 : vector<8x128xf32>
    %cst_193 = arith.constant 1.000000e+00 : f32
    %516 = vector.broadcast %cst_193 : f32 to vector<8x128xf32>
    %517 = arith.addf %516, %515 : vector<8x128xf32>
    %518 = tpu.reciprocal %517 : vector<8x128xf32> -> vector<8x128xf32>
    %519 = vector.extract_strided_slice %511 {offsets = [0, 128], sizes = [8, 128], strides = [1, 1]} : vector<8x512xf32> to vector<8x128xf32>
    %cst_194 = arith.constant 0.000000e+00 : f32
    %520 = vector.broadcast %cst_194 : f32 to vector<8x128xf32>
    %521 = arith.subf %520, %519 : vector<8x128xf32>
    %522 = math.exp %521 : vector<8x128xf32>
    %cst_195 = arith.constant 1.000000e+00 : f32
    %523 = vector.broadcast %cst_195 : f32 to vector<8x128xf32>
    %524 = arith.addf %523, %522 : vector<8x128xf32>
    %525 = tpu.reciprocal %524 : vector<8x128xf32> -> vector<8x128xf32>
    %526 = vector.extract_strided_slice %511 {offsets = [0, 256], sizes = [8, 128], strides = [1, 1]} : vector<8x512xf32> to vector<8x128xf32>
    %527 = math.tanh %526 : vector<8x128xf32>
    %528 = vector.extract_strided_slice %511 {offsets = [0, 384], sizes = [8, 128], strides = [1, 1]} : vector<8x512xf32> to vector<8x128xf32>
    %cst_196 = arith.constant 0.000000e+00 : f32
    %529 = vector.broadcast %cst_196 : f32 to vector<8x128xf32>
    %530 = arith.subf %529, %528 : vector<8x128xf32>
    %531 = math.exp %530 : vector<8x128xf32>
    %cst_197 = arith.constant 1.000000e+00 : f32
    %532 = vector.broadcast %cst_197 : f32 to vector<8x128xf32>
    %533 = arith.addf %532, %531 : vector<8x128xf32>
    %534 = tpu.reciprocal %533 : vector<8x128xf32> -> vector<8x128xf32>
    %535 = arith.mulf %525, %432 : vector<8x128xf32>
    %536 = arith.mulf %518, %527 : vector<8x128xf32>
    %537 = arith.addf %535, %536 : vector<8x128xf32>
    %538 = math.tanh %537 : vector<8x128xf32>
    %539 = arith.mulf %534, %538 : vector<8x128xf32>
    %540 = arith.truncf %539 : vector<8x128xf32> to vector<8x128xbf16>
    %c0_198 = arith.constant 0 : index
    %c0_199 = arith.constant 0 : index
    %541 = vector.load %arg8[%c0_198, %c0_199] : memref<128x128xbf16, #tpu.memory_space<vmem>>, vector<128x128xbf16>
    %cst_200 = arith.constant dense<0.000000e+00> : vector<8x128xf32>
    %542 = tpu.matmul %540, %541, %cst_200 {dimension_numbers = #tpu.dot_dimension_numbers<[1], [0], [0], [1], [0, 0, 1, 1], [], []>} : vector<8x128xbf16>, vector<128x128xbf16>, vector<8x128xf32> -> vector<8x128xf32>
    %c0_201 = arith.constant 0 : index
    %c0_202 = arith.constant 0 : index
    %543 = vector.load %arg9[%c0_201, %c0_202] : memref<8x128xf32, #tpu.memory_space<vmem>>, vector<8x128xf32>
    %544 = arith.addf %542, %543 : vector<8x128xf32>
    %545 = arith.index_cast %c4_i32 : i32 to index
    %c0_203 = arith.constant 0 : index
    %c0_204 = arith.constant 0 : index
    %546 = vector.load %arg10[%545, %c0_203, %c0_204] : memref<8x8x128xf32, #tpu.memory_space<vmem>>, vector<1x8x128xf32>
    %547 = vector.shape_cast %546 : vector<1x8x128xf32> to vector<8x128xf32>
    %548 = vector.shape_cast %544 : vector<8x128xf32> to vector<1x8x128xf32>
    tpu.vector_store %arg10[%545, %c0_203, %c0_204], %548 {strides = array<i32>} : memref<8x8x128xf32, #tpu.memory_space<vmem>>, vector<1x8x128xf32>,
    %c1_i32_205 = arith.constant 1 : i32
    %549 = arith.addi %c4_i32, %c1_i32_205 : i32
    %550 = arith.index_cast %549 : i32 to index
    %c0_206 = arith.constant 0 : index
    %c0_207 = arith.constant 0 : index
    %551 = vector.load %arg2[%550, %c0_206, %c0_207] : memref<9x8x128xf32, #tpu.memory_space<vmem>>, vector<1x8x128xf32>
    %552 = vector.shape_cast %551 : vector<1x8x128xf32> to vector<8x128xf32>
    %cst_208 = arith.constant dense<0xFF800000> : vector<8xf32>
    %553 = vector.multi_reduction <maximumf>, %544, %cst_208 [1] : vector<8x128xf32> to vector<8xf32>
    %554 = vector.shape_cast %553 : vector<8xf32> to vector<8x1xf32>
    %555 = vector.broadcast %554 : vector<8x1xf32> to vector<8x128xf32>
    %556 = arith.cmpf oeq, %544, %555 : vector<8x128xf32>
    %c128_i32_209 = arith.constant 128 : i32
    %557 = vector.broadcast %c128_i32_209 : i32 to vector<8x128xi32>
    %558 = arith.select %556, %49, %557 : vector<8x128xi1>, vector<8x128xi32>
    %cst_210 = arith.constant dense<2147483647> : vector<8xi32>
    %559 = vector.multi_reduction <minsi>, %558, %cst_210 [1] : vector<8x128xi32> to vector<8xi32>
    %560 = vector.shape_cast %559 : vector<8xi32> to vector<8x1xi32>
    %561 = vector.broadcast %560 : vector<8x1xi32> to vector<8x128xi32>
    %562 = arith.cmpi eq, %49, %561 : vector<8x128xi32>
    %563 = arith.extui %562 : vector<8x128xi1> to vector<8x128xi32>
    %564 = arith.sitofp %563 : vector<8x128xi32> to vector<8x128xf32>
    %565 = arith.truncf %564 : vector<8x128xf32> to vector<8x128xbf16>
    %c0_211 = arith.constant 0 : index
    %c0_212 = arith.constant 0 : index
    %566 = vector.load %arg3[%c0_211, %c0_212] : memref<128x128xbf16, #tpu.memory_space<vmem>>, vector<128x128xbf16>
    %cst_213 = arith.constant dense<0.000000e+00> : vector<8x128xf32>
    %567 = tpu.matmul %565, %566, %cst_213 {dimension_numbers = #tpu.dot_dimension_numbers<[1], [0], [0], [1], [0, 0, 1, 1], [], []>} : vector<8x128xbf16>, vector<128x128xbf16>, vector<8x128xf32> -> vector<8x128xf32>
    %568 = arith.index_cast %c4_i32 : i32 to index
    %569 = memref.load %arg0[%568] : memref<8xi32, #tpu.memory_space<smem>>
    %570 = arith.sitofp %569 : i32 to f32
    %571 = vector.broadcast %570 : f32 to vector<8x128xf32>
    %572 = arith.mulf %571, %552 : vector<8x128xf32>
    %cst_214 = arith.constant 1.000000e+00 : f32
    %573 = arith.subf %cst_214, %570 : f32
    %574 = vector.broadcast %573 : f32 to vector<8x128xf32>
    %575 = arith.mulf %574, %567 : vector<8x128xf32>
    %576 = arith.addf %572, %575 : vector<8x128xf32>
    %c5_i32 = arith.constant 5 : i32
    %577 = tpu.concatenate %576, %505 in 1 : vector<8x128xf32>, vector<8x128xf32> -> vector<8x256xf32>
    %578 = arith.truncf %577 : vector<8x256xf32> to vector<8x256xbf16>
    %c0_215 = arith.constant 0 : index
    %c0_216 = arith.constant 0 : index
    %579 = vector.load %arg4[%c0_215, %c0_216] : memref<256x512xbf16, #tpu.memory_space<vmem>>, vector<256x512xbf16>
    %cst_217 = arith.constant dense<0.000000e+00> : vector<8x512xf32>
    %580 = tpu.matmul %578, %579, %cst_217 {dimension_numbers = #tpu.dot_dimension_numbers<[1], [0], [0], [1], [0, 0, 1, 1], [], []>} : vector<8x256xbf16>, vector<256x512xbf16>, vector<8x512xf32> -> vector<8x512xf32>
    %c0_218 = arith.constant 0 : index
    %c0_219 = arith.constant 0 : index
    %581 = vector.load %arg5[%c0_218, %c0_219] : memref<8x512xf32, #tpu.memory_space<vmem>>, vector<8x512xf32>
    %582 = arith.addf %580, %581 : vector<8x512xf32>
    %583 = vector.extract_strided_slice %582 {offsets = [0, 0], sizes = [8, 128], strides = [1, 1]} : vector<8x512xf32> to vector<8x128xf32>
    %cst_220 = arith.constant 0.000000e+00 : f32
    %584 = vector.broadcast %cst_220 : f32 to vector<8x128xf32>
    %585 = arith.subf %584, %583 : vector<8x128xf32>
    %586 = math.exp %585 : vector<8x128xf32>
    %cst_221 = arith.constant 1.000000e+00 : f32
    %587 = vector.broadcast %cst_221 : f32 to vector<8x128xf32>
    %588 = arith.addf %587, %586 : vector<8x128xf32>
    %589 = tpu.reciprocal %588 : vector<8x128xf32> -> vector<8x128xf32>
    %590 = vector.extract_strided_slice %582 {offsets = [0, 128], sizes = [8, 128], strides = [1, 1]} : vector<8x512xf32> to vector<8x128xf32>
    %cst_222 = arith.constant 0.000000e+00 : f32
    %591 = vector.broadcast %cst_222 : f32 to vector<8x128xf32>
    %592 = arith.subf %591, %590 : vector<8x128xf32>
    %593 = math.exp %592 : vector<8x128xf32>
    %cst_223 = arith.constant 1.000000e+00 : f32
    %594 = vector.broadcast %cst_223 : f32 to vector<8x128xf32>
    %595 = arith.addf %594, %593 : vector<8x128xf32>
    %596 = tpu.reciprocal %595 : vector<8x128xf32> -> vector<8x128xf32>
    %597 = vector.extract_strided_slice %582 {offsets = [0, 256], sizes = [8, 128], strides = [1, 1]} : vector<8x512xf32> to vector<8x128xf32>
    %598 = math.tanh %597 : vector<8x128xf32>
    %599 = vector.extract_strided_slice %582 {offsets = [0, 384], sizes = [8, 128], strides = [1, 1]} : vector<8x512xf32> to vector<8x128xf32>
    %cst_224 = arith.constant 0.000000e+00 : f32
    %600 = vector.broadcast %cst_224 : f32 to vector<8x128xf32>
    %601 = arith.subf %600, %599 : vector<8x128xf32>
    %602 = math.exp %601 : vector<8x128xf32>
    %cst_225 = arith.constant 1.000000e+00 : f32
    %603 = vector.broadcast %cst_225 : f32 to vector<8x128xf32>
    %604 = arith.addf %603, %602 : vector<8x128xf32>
    %605 = tpu.reciprocal %604 : vector<8x128xf32> -> vector<8x128xf32>
    %606 = arith.mulf %596, %503 : vector<8x128xf32>
    %607 = arith.mulf %589, %598 : vector<8x128xf32>
    %608 = arith.addf %606, %607 : vector<8x128xf32>
    %609 = math.tanh %608 : vector<8x128xf32>
    %610 = arith.mulf %605, %609 : vector<8x128xf32>
    %611 = tpu.concatenate %610, %539 in 1 : vector<8x128xf32>, vector<8x128xf32> -> vector<8x256xf32>
    %612 = arith.truncf %611 : vector<8x256xf32> to vector<8x256xbf16>
    %c0_226 = arith.constant 0 : index
    %c0_227 = arith.constant 0 : index
    %613 = vector.load %arg6[%c0_226, %c0_227] : memref<256x512xbf16, #tpu.memory_space<vmem>>, vector<256x512xbf16>
    %cst_228 = arith.constant dense<0.000000e+00> : vector<8x512xf32>
    %614 = tpu.matmul %612, %613, %cst_228 {dimension_numbers = #tpu.dot_dimension_numbers<[1], [0], [0], [1], [0, 0, 1, 1], [], []>} : vector<8x256xbf16>, vector<256x512xbf16>, vector<8x512xf32> -> vector<8x512xf32>
    %c0_229 = arith.constant 0 : index
    %c0_230 = arith.constant 0 : index
    %615 = vector.load %arg7[%c0_229, %c0_230] : memref<8x512xf32, #tpu.memory_space<vmem>>, vector<8x512xf32>
    %616 = arith.addf %614, %615 : vector<8x512xf32>
    %617 = vector.extract_strided_slice %616 {offsets = [0, 0], sizes = [8, 128], strides = [1, 1]} : vector<8x512xf32> to vector<8x128xf32>
    %cst_231 = arith.constant 0.000000e+00 : f32
    %618 = vector.broadcast %cst_231 : f32 to vector<8x128xf32>
    %619 = arith.subf %618, %617 : vector<8x128xf32>
    %620 = math.exp %619 : vector<8x128xf32>
    %cst_232 = arith.constant 1.000000e+00 : f32
    %621 = vector.broadcast %cst_232 : f32 to vector<8x128xf32>
    %622 = arith.addf %621, %620 : vector<8x128xf32>
    %623 = tpu.reciprocal %622 : vector<8x128xf32> -> vector<8x128xf32>
    %624 = vector.extract_strided_slice %616 {offsets = [0, 128], sizes = [8, 128], strides = [1, 1]} : vector<8x512xf32> to vector<8x128xf32>
    %cst_233 = arith.constant 0.000000e+00 : f32
    %625 = vector.broadcast %cst_233 : f32 to vector<8x128xf32>
    %626 = arith.subf %625, %624 : vector<8x128xf32>
    %627 = math.exp %626 : vector<8x128xf32>
    %cst_234 = arith.constant 1.000000e+00 : f32
    %628 = vector.broadcast %cst_234 : f32 to vector<8x128xf32>
    %629 = arith.addf %628, %627 : vector<8x128xf32>
    %630 = tpu.reciprocal %629 : vector<8x128xf32> -> vector<8x128xf32>
    %631 = vector.extract_strided_slice %616 {offsets = [0, 256], sizes = [8, 128], strides = [1, 1]} : vector<8x512xf32> to vector<8x128xf32>
    %632 = math.tanh %631 : vector<8x128xf32>
    %633 = vector.extract_strided_slice %616 {offsets = [0, 384], sizes = [8, 128], strides = [1, 1]} : vector<8x512xf32> to vector<8x128xf32>
    %cst_235 = arith.constant 0.000000e+00 : f32
    %634 = vector.broadcast %cst_235 : f32 to vector<8x128xf32>
    %635 = arith.subf %634, %633 : vector<8x128xf32>
    %636 = math.exp %635 : vector<8x128xf32>
    %cst_236 = arith.constant 1.000000e+00 : f32
    %637 = vector.broadcast %cst_236 : f32 to vector<8x128xf32>
    %638 = arith.addf %637, %636 : vector<8x128xf32>
    %639 = tpu.reciprocal %638 : vector<8x128xf32> -> vector<8x128xf32>
    %640 = arith.mulf %630, %537 : vector<8x128xf32>
    %641 = arith.mulf %623, %632 : vector<8x128xf32>
    %642 = arith.addf %640, %641 : vector<8x128xf32>
    %643 = math.tanh %642 : vector<8x128xf32>
    %644 = arith.mulf %639, %643 : vector<8x128xf32>
    %645 = arith.truncf %644 : vector<8x128xf32> to vector<8x128xbf16>
    %c0_237 = arith.constant 0 : index
    %c0_238 = arith.constant 0 : index
    %646 = vector.load %arg8[%c0_237, %c0_238] : memref<128x128xbf16, #tpu.memory_space<vmem>>, vector<128x128xbf16>
    %cst_239 = arith.constant dense<0.000000e+00> : vector<8x128xf32>
    %647 = tpu.matmul %645, %646, %cst_239 {dimension_numbers = #tpu.dot_dimension_numbers<[1], [0], [0], [1], [0, 0, 1, 1], [], []>} : vector<8x128xbf16>, vector<128x128xbf16>, vector<8x128xf32> -> vector<8x128xf32>
    %c0_240 = arith.constant 0 : index
    %c0_241 = arith.constant 0 : index
    %648 = vector.load %arg9[%c0_240, %c0_241] : memref<8x128xf32, #tpu.memory_space<vmem>>, vector<8x128xf32>
    %649 = arith.addf %647, %648 : vector<8x128xf32>
    %650 = arith.index_cast %c5_i32 : i32 to index
    %c0_242 = arith.constant 0 : index
    %c0_243 = arith.constant 0 : index
    %651 = vector.load %arg10[%650, %c0_242, %c0_243] : memref<8x8x128xf32, #tpu.memory_space<vmem>>, vector<1x8x128xf32>
    %652 = vector.shape_cast %651 : vector<1x8x128xf32> to vector<8x128xf32>
    %653 = vector.shape_cast %649 : vector<8x128xf32> to vector<1x8x128xf32>
    tpu.vector_store %arg10[%650, %c0_242, %c0_243], %653 {strides = array<i32>} : memref<8x8x128xf32, #tpu.memory_space<vmem>>, vector<1x8x128xf32>,
    %c1_i32_244 = arith.constant 1 : i32
    %654 = arith.addi %c5_i32, %c1_i32_244 : i32
    %655 = arith.index_cast %654 : i32 to index
    %c0_245 = arith.constant 0 : index
    %c0_246 = arith.constant 0 : index
    %656 = vector.load %arg2[%655, %c0_245, %c0_246] : memref<9x8x128xf32, #tpu.memory_space<vmem>>, vector<1x8x128xf32>
    %657 = vector.shape_cast %656 : vector<1x8x128xf32> to vector<8x128xf32>
    %cst_247 = arith.constant dense<0xFF800000> : vector<8xf32>
    %658 = vector.multi_reduction <maximumf>, %649, %cst_247 [1] : vector<8x128xf32> to vector<8xf32>
    %659 = vector.shape_cast %658 : vector<8xf32> to vector<8x1xf32>
    %660 = vector.broadcast %659 : vector<8x1xf32> to vector<8x128xf32>
    %661 = arith.cmpf oeq, %649, %660 : vector<8x128xf32>
    %c128_i32_248 = arith.constant 128 : i32
    %662 = vector.broadcast %c128_i32_248 : i32 to vector<8x128xi32>
    %663 = arith.select %661, %49, %662 : vector<8x128xi1>, vector<8x128xi32>
    %cst_249 = arith.constant dense<2147483647> : vector<8xi32>
    %664 = vector.multi_reduction <minsi>, %663, %cst_249 [1] : vector<8x128xi32> to vector<8xi32>
    %665 = vector.shape_cast %664 : vector<8xi32> to vector<8x1xi32>
    %666 = vector.broadcast %665 : vector<8x1xi32> to vector<8x128xi32>
    %667 = arith.cmpi eq, %49, %666 : vector<8x128xi32>
    %668 = arith.extui %667 : vector<8x128xi1> to vector<8x128xi32>
    %669 = arith.sitofp %668 : vector<8x128xi32> to vector<8x128xf32>
    %670 = arith.truncf %669 : vector<8x128xf32> to vector<8x128xbf16>
    %c0_250 = arith.constant 0 : index
    %c0_251 = arith.constant 0 : index
    %671 = vector.load %arg3[%c0_250, %c0_251] : memref<128x128xbf16, #tpu.memory_space<vmem>>, vector<128x128xbf16>
    %cst_252 = arith.constant dense<0.000000e+00> : vector<8x128xf32>
    %672 = tpu.matmul %670, %671, %cst_252 {dimension_numbers = #tpu.dot_dimension_numbers<[1], [0], [0], [1], [0, 0, 1, 1], [], []>} : vector<8x128xbf16>, vector<128x128xbf16>, vector<8x128xf32> -> vector<8x128xf32>
    %673 = arith.index_cast %c5_i32 : i32 to index
    %674 = memref.load %arg0[%673] : memref<8xi32, #tpu.memory_space<smem>>
    %675 = arith.sitofp %674 : i32 to f32
    %676 = vector.broadcast %675 : f32 to vector<8x128xf32>
    %677 = arith.mulf %676, %657 : vector<8x128xf32>
    %cst_253 = arith.constant 1.000000e+00 : f32
    %678 = arith.subf %cst_253, %675 : f32
    %679 = vector.broadcast %678 : f32 to vector<8x128xf32>
    %680 = arith.mulf %679, %672 : vector<8x128xf32>
    %681 = arith.addf %677, %680 : vector<8x128xf32>
    %c6_i32 = arith.constant 6 : i32
    %682 = tpu.concatenate %681, %610 in 1 : vector<8x128xf32>, vector<8x128xf32> -> vector<8x256xf32>
    %683 = arith.truncf %682 : vector<8x256xf32> to vector<8x256xbf16>
    %c0_254 = arith.constant 0 : index
    %c0_255 = arith.constant 0 : index
    %684 = vector.load %arg4[%c0_254, %c0_255] : memref<256x512xbf16, #tpu.memory_space<vmem>>, vector<256x512xbf16>
    %cst_256 = arith.constant dense<0.000000e+00> : vector<8x512xf32>
    %685 = tpu.matmul %683, %684, %cst_256 {dimension_numbers = #tpu.dot_dimension_numbers<[1], [0], [0], [1], [0, 0, 1, 1], [], []>} : vector<8x256xbf16>, vector<256x512xbf16>, vector<8x512xf32> -> vector<8x512xf32>
    %c0_257 = arith.constant 0 : index
    %c0_258 = arith.constant 0 : index
    %686 = vector.load %arg5[%c0_257, %c0_258] : memref<8x512xf32, #tpu.memory_space<vmem>>, vector<8x512xf32>
    %687 = arith.addf %685, %686 : vector<8x512xf32>
    %688 = vector.extract_strided_slice %687 {offsets = [0, 0], sizes = [8, 128], strides = [1, 1]} : vector<8x512xf32> to vector<8x128xf32>
    %cst_259 = arith.constant 0.000000e+00 : f32
    %689 = vector.broadcast %cst_259 : f32 to vector<8x128xf32>
    %690 = arith.subf %689, %688 : vector<8x128xf32>
    %691 = math.exp %690 : vector<8x128xf32>
    %cst_260 = arith.constant 1.000000e+00 : f32
    %692 = vector.broadcast %cst_260 : f32 to vector<8x128xf32>
    %693 = arith.addf %692, %691 : vector<8x128xf32>
    %694 = tpu.reciprocal %693 : vector<8x128xf32> -> vector<8x128xf32>
    %695 = vector.extract_strided_slice %687 {offsets = [0, 128], sizes = [8, 128], strides = [1, 1]} : vector<8x512xf32> to vector<8x128xf32>
    %cst_261 = arith.constant 0.000000e+00 : f32
    %696 = vector.broadcast %cst_261 : f32 to vector<8x128xf32>
    %697 = arith.subf %696, %695 : vector<8x128xf32>
    %698 = math.exp %697 : vector<8x128xf32>
    %cst_262 = arith.constant 1.000000e+00 : f32
    %699 = vector.broadcast %cst_262 : f32 to vector<8x128xf32>
    %700 = arith.addf %699, %698 : vector<8x128xf32>
    %701 = tpu.reciprocal %700 : vector<8x128xf32> -> vector<8x128xf32>
    %702 = vector.extract_strided_slice %687 {offsets = [0, 256], sizes = [8, 128], strides = [1, 1]} : vector<8x512xf32> to vector<8x128xf32>
    %703 = math.tanh %702 : vector<8x128xf32>
    %704 = vector.extract_strided_slice %687 {offsets = [0, 384], sizes = [8, 128], strides = [1, 1]} : vector<8x512xf32> to vector<8x128xf32>
    %cst_263 = arith.constant 0.000000e+00 : f32
    %705 = vector.broadcast %cst_263 : f32 to vector<8x128xf32>
    %706 = arith.subf %705, %704 : vector<8x128xf32>
    %707 = math.exp %706 : vector<8x128xf32>
    %cst_264 = arith.constant 1.000000e+00 : f32
    %708 = vector.broadcast %cst_264 : f32 to vector<8x128xf32>
    %709 = arith.addf %708, %707 : vector<8x128xf32>
    %710 = tpu.reciprocal %709 : vector<8x128xf32> -> vector<8x128xf32>
    %711 = arith.mulf %701, %608 : vector<8x128xf32>
    %712 = arith.mulf %694, %703 : vector<8x128xf32>
    %713 = arith.addf %711, %712 : vector<8x128xf32>
    %714 = math.tanh %713 : vector<8x128xf32>
    %715 = arith.mulf %710, %714 : vector<8x128xf32>
    %716 = tpu.concatenate %715, %644 in 1 : vector<8x128xf32>, vector<8x128xf32> -> vector<8x256xf32>
    %717 = arith.truncf %716 : vector<8x256xf32> to vector<8x256xbf16>
    %c0_265 = arith.constant 0 : index
    %c0_266 = arith.constant 0 : index
    %718 = vector.load %arg6[%c0_265, %c0_266] : memref<256x512xbf16, #tpu.memory_space<vmem>>, vector<256x512xbf16>
    %cst_267 = arith.constant dense<0.000000e+00> : vector<8x512xf32>
    %719 = tpu.matmul %717, %718, %cst_267 {dimension_numbers = #tpu.dot_dimension_numbers<[1], [0], [0], [1], [0, 0, 1, 1], [], []>} : vector<8x256xbf16>, vector<256x512xbf16>, vector<8x512xf32> -> vector<8x512xf32>
    %c0_268 = arith.constant 0 : index
    %c0_269 = arith.constant 0 : index
    %720 = vector.load %arg7[%c0_268, %c0_269] : memref<8x512xf32, #tpu.memory_space<vmem>>, vector<8x512xf32>
    %721 = arith.addf %719, %720 : vector<8x512xf32>
    %722 = vector.extract_strided_slice %721 {offsets = [0, 0], sizes = [8, 128], strides = [1, 1]} : vector<8x512xf32> to vector<8x128xf32>
    %cst_270 = arith.constant 0.000000e+00 : f32
    %723 = vector.broadcast %cst_270 : f32 to vector<8x128xf32>
    %724 = arith.subf %723, %722 : vector<8x128xf32>
    %725 = math.exp %724 : vector<8x128xf32>
    %cst_271 = arith.constant 1.000000e+00 : f32
    %726 = vector.broadcast %cst_271 : f32 to vector<8x128xf32>
    %727 = arith.addf %726, %725 : vector<8x128xf32>
    %728 = tpu.reciprocal %727 : vector<8x128xf32> -> vector<8x128xf32>
    %729 = vector.extract_strided_slice %721 {offsets = [0, 128], sizes = [8, 128], strides = [1, 1]} : vector<8x512xf32> to vector<8x128xf32>
    %cst_272 = arith.constant 0.000000e+00 : f32
    %730 = vector.broadcast %cst_272 : f32 to vector<8x128xf32>
    %731 = arith.subf %730, %729 : vector<8x128xf32>
    %732 = math.exp %731 : vector<8x128xf32>
    %cst_273 = arith.constant 1.000000e+00 : f32
    %733 = vector.broadcast %cst_273 : f32 to vector<8x128xf32>
    %734 = arith.addf %733, %732 : vector<8x128xf32>
    %735 = tpu.reciprocal %734 : vector<8x128xf32> -> vector<8x128xf32>
    %736 = vector.extract_strided_slice %721 {offsets = [0, 256], sizes = [8, 128], strides = [1, 1]} : vector<8x512xf32> to vector<8x128xf32>
    %737 = math.tanh %736 : vector<8x128xf32>
    %738 = vector.extract_strided_slice %721 {offsets = [0, 384], sizes = [8, 128], strides = [1, 1]} : vector<8x512xf32> to vector<8x128xf32>
    %cst_274 = arith.constant 0.000000e+00 : f32
    %739 = vector.broadcast %cst_274 : f32 to vector<8x128xf32>
    %740 = arith.subf %739, %738 : vector<8x128xf32>
    %741 = math.exp %740 : vector<8x128xf32>
    %cst_275 = arith.constant 1.000000e+00 : f32
    %742 = vector.broadcast %cst_275 : f32 to vector<8x128xf32>
    %743 = arith.addf %742, %741 : vector<8x128xf32>
    %744 = tpu.reciprocal %743 : vector<8x128xf32> -> vector<8x128xf32>
    %745 = arith.mulf %735, %642 : vector<8x128xf32>
    %746 = arith.mulf %728, %737 : vector<8x128xf32>
    %747 = arith.addf %745, %746 : vector<8x128xf32>
    %748 = math.tanh %747 : vector<8x128xf32>
    %749 = arith.mulf %744, %748 : vector<8x128xf32>
    %750 = arith.truncf %749 : vector<8x128xf32> to vector<8x128xbf16>
    %c0_276 = arith.constant 0 : index
    %c0_277 = arith.constant 0 : index
    %751 = vector.load %arg8[%c0_276, %c0_277] : memref<128x128xbf16, #tpu.memory_space<vmem>>, vector<128x128xbf16>
    %cst_278 = arith.constant dense<0.000000e+00> : vector<8x128xf32>
    %752 = tpu.matmul %750, %751, %cst_278 {dimension_numbers = #tpu.dot_dimension_numbers<[1], [0], [0], [1], [0, 0, 1, 1], [], []>} : vector<8x128xbf16>, vector<128x128xbf16>, vector<8x128xf32> -> vector<8x128xf32>
    %c0_279 = arith.constant 0 : index
    %c0_280 = arith.constant 0 : index
    %753 = vector.load %arg9[%c0_279, %c0_280] : memref<8x128xf32, #tpu.memory_space<vmem>>, vector<8x128xf32>
    %754 = arith.addf %752, %753 : vector<8x128xf32>
    %755 = arith.index_cast %c6_i32 : i32 to index
    %c0_281 = arith.constant 0 : index
    %c0_282 = arith.constant 0 : index
    %756 = vector.load %arg10[%755, %c0_281, %c0_282] : memref<8x8x128xf32, #tpu.memory_space<vmem>>, vector<1x8x128xf32>
    %757 = vector.shape_cast %756 : vector<1x8x128xf32> to vector<8x128xf32>
    %758 = vector.shape_cast %754 : vector<8x128xf32> to vector<1x8x128xf32>
    tpu.vector_store %arg10[%755, %c0_281, %c0_282], %758 {strides = array<i32>} : memref<8x8x128xf32, #tpu.memory_space<vmem>>, vector<1x8x128xf32>,
    %c1_i32_283 = arith.constant 1 : i32
    %759 = arith.addi %c6_i32, %c1_i32_283 : i32
    %760 = arith.index_cast %759 : i32 to index
    %c0_284 = arith.constant 0 : index
    %c0_285 = arith.constant 0 : index
    %761 = vector.load %arg2[%760, %c0_284, %c0_285] : memref<9x8x128xf32, #tpu.memory_space<vmem>>, vector<1x8x128xf32>
    %762 = vector.shape_cast %761 : vector<1x8x128xf32> to vector<8x128xf32>
    %cst_286 = arith.constant dense<0xFF800000> : vector<8xf32>
    %763 = vector.multi_reduction <maximumf>, %754, %cst_286 [1] : vector<8x128xf32> to vector<8xf32>
    %764 = vector.shape_cast %763 : vector<8xf32> to vector<8x1xf32>
    %765 = vector.broadcast %764 : vector<8x1xf32> to vector<8x128xf32>
    %766 = arith.cmpf oeq, %754, %765 : vector<8x128xf32>
    %c128_i32_287 = arith.constant 128 : i32
    %767 = vector.broadcast %c128_i32_287 : i32 to vector<8x128xi32>
    %768 = arith.select %766, %49, %767 : vector<8x128xi1>, vector<8x128xi32>
    %cst_288 = arith.constant dense<2147483647> : vector<8xi32>
    %769 = vector.multi_reduction <minsi>, %768, %cst_288 [1] : vector<8x128xi32> to vector<8xi32>
    %770 = vector.shape_cast %769 : vector<8xi32> to vector<8x1xi32>
    %771 = vector.broadcast %770 : vector<8x1xi32> to vector<8x128xi32>
    %772 = arith.cmpi eq, %49, %771 : vector<8x128xi32>
    %773 = arith.extui %772 : vector<8x128xi1> to vector<8x128xi32>
    %774 = arith.sitofp %773 : vector<8x128xi32> to vector<8x128xf32>
    %775 = arith.truncf %774 : vector<8x128xf32> to vector<8x128xbf16>
    %c0_289 = arith.constant 0 : index
    %c0_290 = arith.constant 0 : index
    %776 = vector.load %arg3[%c0_289, %c0_290] : memref<128x128xbf16, #tpu.memory_space<vmem>>, vector<128x128xbf16>
    %cst_291 = arith.constant dense<0.000000e+00> : vector<8x128xf32>
    %777 = tpu.matmul %775, %776, %cst_291 {dimension_numbers = #tpu.dot_dimension_numbers<[1], [0], [0], [1], [0, 0, 1, 1], [], []>} : vector<8x128xbf16>, vector<128x128xbf16>, vector<8x128xf32> -> vector<8x128xf32>
    %778 = arith.index_cast %c6_i32 : i32 to index
    %779 = memref.load %arg0[%778] : memref<8xi32, #tpu.memory_space<smem>>
    %780 = arith.sitofp %779 : i32 to f32
    %781 = vector.broadcast %780 : f32 to vector<8x128xf32>
    %782 = arith.mulf %781, %762 : vector<8x128xf32>
    %cst_292 = arith.constant 1.000000e+00 : f32
    %783 = arith.subf %cst_292, %780 : f32
    %784 = vector.broadcast %783 : f32 to vector<8x128xf32>
    %785 = arith.mulf %784, %777 : vector<8x128xf32>
    %786 = arith.addf %782, %785 : vector<8x128xf32>
    %c7_i32 = arith.constant 7 : i32
    %787 = tpu.concatenate %786, %715 in 1 : vector<8x128xf32>, vector<8x128xf32> -> vector<8x256xf32>
    %788 = arith.truncf %787 : vector<8x256xf32> to vector<8x256xbf16>
    %c0_293 = arith.constant 0 : index
    %c0_294 = arith.constant 0 : index
    %789 = vector.load %arg4[%c0_293, %c0_294] : memref<256x512xbf16, #tpu.memory_space<vmem>>, vector<256x512xbf16>
    %cst_295 = arith.constant dense<0.000000e+00> : vector<8x512xf32>
    %790 = tpu.matmul %788, %789, %cst_295 {dimension_numbers = #tpu.dot_dimension_numbers<[1], [0], [0], [1], [0, 0, 1, 1], [], []>} : vector<8x256xbf16>, vector<256x512xbf16>, vector<8x512xf32> -> vector<8x512xf32>
    %c0_296 = arith.constant 0 : index
    %c0_297 = arith.constant 0 : index
    %791 = vector.load %arg5[%c0_296, %c0_297] : memref<8x512xf32, #tpu.memory_space<vmem>>, vector<8x512xf32>
    %792 = arith.addf %790, %791 : vector<8x512xf32>
    %793 = vector.extract_strided_slice %792 {offsets = [0, 0], sizes = [8, 128], strides = [1, 1]} : vector<8x512xf32> to vector<8x128xf32>
    %cst_298 = arith.constant 0.000000e+00 : f32
    %794 = vector.broadcast %cst_298 : f32 to vector<8x128xf32>
    %795 = arith.subf %794, %793 : vector<8x128xf32>
    %796 = math.exp %795 : vector<8x128xf32>
    %cst_299 = arith.constant 1.000000e+00 : f32
    %797 = vector.broadcast %cst_299 : f32 to vector<8x128xf32>
    %798 = arith.addf %797, %796 : vector<8x128xf32>
    %799 = tpu.reciprocal %798 : vector<8x128xf32> -> vector<8x128xf32>
    %800 = vector.extract_strided_slice %792 {offsets = [0, 128], sizes = [8, 128], strides = [1, 1]} : vector<8x512xf32> to vector<8x128xf32>
    %cst_300 = arith.constant 0.000000e+00 : f32
    %801 = vector.broadcast %cst_300 : f32 to vector<8x128xf32>
    %802 = arith.subf %801, %800 : vector<8x128xf32>
    %803 = math.exp %802 : vector<8x128xf32>
    %cst_301 = arith.constant 1.000000e+00 : f32
    %804 = vector.broadcast %cst_301 : f32 to vector<8x128xf32>
    %805 = arith.addf %804, %803 : vector<8x128xf32>
    %806 = tpu.reciprocal %805 : vector<8x128xf32> -> vector<8x128xf32>
    %807 = vector.extract_strided_slice %792 {offsets = [0, 256], sizes = [8, 128], strides = [1, 1]} : vector<8x512xf32> to vector<8x128xf32>
    %808 = math.tanh %807 : vector<8x128xf32>
    %809 = vector.extract_strided_slice %792 {offsets = [0, 384], sizes = [8, 128], strides = [1, 1]} : vector<8x512xf32> to vector<8x128xf32>
    %cst_302 = arith.constant 0.000000e+00 : f32
    %810 = vector.broadcast %cst_302 : f32 to vector<8x128xf32>
    %811 = arith.subf %810, %809 : vector<8x128xf32>
    %812 = math.exp %811 : vector<8x128xf32>
    %cst_303 = arith.constant 1.000000e+00 : f32
    %813 = vector.broadcast %cst_303 : f32 to vector<8x128xf32>
    %814 = arith.addf %813, %812 : vector<8x128xf32>
    %815 = tpu.reciprocal %814 : vector<8x128xf32> -> vector<8x128xf32>
    %816 = arith.mulf %806, %713 : vector<8x128xf32>
    %817 = arith.mulf %799, %808 : vector<8x128xf32>
    %818 = arith.addf %816, %817 : vector<8x128xf32>
    %819 = math.tanh %818 : vector<8x128xf32>
    %820 = arith.mulf %815, %819 : vector<8x128xf32>
    %821 = tpu.concatenate %820, %749 in 1 : vector<8x128xf32>, vector<8x128xf32> -> vector<8x256xf32>
    %822 = arith.truncf %821 : vector<8x256xf32> to vector<8x256xbf16>
    %c0_304 = arith.constant 0 : index
    %c0_305 = arith.constant 0 : index
    %823 = vector.load %arg6[%c0_304, %c0_305] : memref<256x512xbf16, #tpu.memory_space<vmem>>, vector<256x512xbf16>
    %cst_306 = arith.constant dense<0.000000e+00> : vector<8x512xf32>
    %824 = tpu.matmul %822, %823, %cst_306 {dimension_numbers = #tpu.dot_dimension_numbers<[1], [0], [0], [1], [0, 0, 1, 1], [], []>} : vector<8x256xbf16>, vector<256x512xbf16>, vector<8x512xf32> -> vector<8x512xf32>
    %c0_307 = arith.constant 0 : index
    %c0_308 = arith.constant 0 : index
    %825 = vector.load %arg7[%c0_307, %c0_308] : memref<8x512xf32, #tpu.memory_space<vmem>>, vector<8x512xf32>
    %826 = arith.addf %824, %825 : vector<8x512xf32>
    %827 = vector.extract_strided_slice %826 {offsets = [0, 0], sizes = [8, 128], strides = [1, 1]} : vector<8x512xf32> to vector<8x128xf32>
    %cst_309 = arith.constant 0.000000e+00 : f32
    %828 = vector.broadcast %cst_309 : f32 to vector<8x128xf32>
    %829 = arith.subf %828, %827 : vector<8x128xf32>
    %830 = math.exp %829 : vector<8x128xf32>
    %cst_310 = arith.constant 1.000000e+00 : f32
    %831 = vector.broadcast %cst_310 : f32 to vector<8x128xf32>
    %832 = arith.addf %831, %830 : vector<8x128xf32>
    %833 = tpu.reciprocal %832 : vector<8x128xf32> -> vector<8x128xf32>
    %834 = vector.extract_strided_slice %826 {offsets = [0, 128], sizes = [8, 128], strides = [1, 1]} : vector<8x512xf32> to vector<8x128xf32>
    %cst_311 = arith.constant 0.000000e+00 : f32
    %835 = vector.broadcast %cst_311 : f32 to vector<8x128xf32>
    %836 = arith.subf %835, %834 : vector<8x128xf32>
    %837 = math.exp %836 : vector<8x128xf32>
    %cst_312 = arith.constant 1.000000e+00 : f32
    %838 = vector.broadcast %cst_312 : f32 to vector<8x128xf32>
    %839 = arith.addf %838, %837 : vector<8x128xf32>
    %840 = tpu.reciprocal %839 : vector<8x128xf32> -> vector<8x128xf32>
    %841 = vector.extract_strided_slice %826 {offsets = [0, 256], sizes = [8, 128], strides = [1, 1]} : vector<8x512xf32> to vector<8x128xf32>
    %842 = math.tanh %841 : vector<8x128xf32>
    %843 = vector.extract_strided_slice %826 {offsets = [0, 384], sizes = [8, 128], strides = [1, 1]} : vector<8x512xf32> to vector<8x128xf32>
    %cst_313 = arith.constant 0.000000e+00 : f32
    %844 = vector.broadcast %cst_313 : f32 to vector<8x128xf32>
    %845 = arith.subf %844, %843 : vector<8x128xf32>
    %846 = math.exp %845 : vector<8x128xf32>
    %cst_314 = arith.constant 1.000000e+00 : f32
    %847 = vector.broadcast %cst_314 : f32 to vector<8x128xf32>
    %848 = arith.addf %847, %846 : vector<8x128xf32>
    %849 = tpu.reciprocal %848 : vector<8x128xf32> -> vector<8x128xf32>
    %850 = arith.mulf %840, %747 : vector<8x128xf32>
    %851 = arith.mulf %833, %842 : vector<8x128xf32>
    %852 = arith.addf %850, %851 : vector<8x128xf32>
    %853 = math.tanh %852 : vector<8x128xf32>
    %854 = arith.mulf %849, %853 : vector<8x128xf32>
    %855 = arith.truncf %854 : vector<8x128xf32> to vector<8x128xbf16>
    %c0_315 = arith.constant 0 : index
    %c0_316 = arith.constant 0 : index
    %856 = vector.load %arg8[%c0_315, %c0_316] : memref<128x128xbf16, #tpu.memory_space<vmem>>, vector<128x128xbf16>
    %cst_317 = arith.constant dense<0.000000e+00> : vector<8x128xf32>
    %857 = tpu.matmul %855, %856, %cst_317 {dimension_numbers = #tpu.dot_dimension_numbers<[1], [0], [0], [1], [0, 0, 1, 1], [], []>} : vector<8x128xbf16>, vector<128x128xbf16>, vector<8x128xf32> -> vector<8x128xf32>
    %c0_318 = arith.constant 0 : index
    %c0_319 = arith.constant 0 : index
    %858 = vector.load %arg9[%c0_318, %c0_319] : memref<8x128xf32, #tpu.memory_space<vmem>>, vector<8x128xf32>
    %859 = arith.addf %857, %858 : vector<8x128xf32>
    %860 = arith.index_cast %c7_i32 : i32 to index
    %c0_320 = arith.constant 0 : index
    %c0_321 = arith.constant 0 : index
    %861 = vector.load %arg10[%860, %c0_320, %c0_321] : memref<8x8x128xf32, #tpu.memory_space<vmem>>, vector<1x8x128xf32>
    %862 = vector.shape_cast %861 : vector<1x8x128xf32> to vector<8x128xf32>
    %863 = vector.shape_cast %859 : vector<8x128xf32> to vector<1x8x128xf32>
    tpu.vector_store %arg10[%860, %c0_320, %c0_321], %863 {strides = array<i32>} : memref<8x8x128xf32, #tpu.memory_space<vmem>>, vector<1x8x128xf32>,
    %c1_i32_322 = arith.constant 1 : i32
    %864 = arith.addi %c7_i32, %c1_i32_322 : i32
    %865 = arith.index_cast %864 : i32 to index
    %c0_323 = arith.constant 0 : index
    %c0_324 = arith.constant 0 : index
    %866 = vector.load %arg2[%865, %c0_323, %c0_324] : memref<9x8x128xf32, #tpu.memory_space<vmem>>, vector<1x8x128xf32>
    %867 = vector.shape_cast %866 : vector<1x8x128xf32> to vector<8x128xf32>
    %cst_325 = arith.constant dense<0xFF800000> : vector<8xf32>
    %868 = vector.multi_reduction <maximumf>, %859, %cst_325 [1] : vector<8x128xf32> to vector<8xf32>
    %869 = vector.shape_cast %868 : vector<8xf32> to vector<8x1xf32>
    %870 = vector.broadcast %869 : vector<8x1xf32> to vector<8x128xf32>
    %871 = arith.cmpf oeq, %859, %870 : vector<8x128xf32>
    %c128_i32_326 = arith.constant 128 : i32
    %872 = vector.broadcast %c128_i32_326 : i32 to vector<8x128xi32>
    %873 = arith.select %871, %49, %872 : vector<8x128xi1>, vector<8x128xi32>
    %cst_327 = arith.constant dense<2147483647> : vector<8xi32>
    %874 = vector.multi_reduction <minsi>, %873, %cst_327 [1] : vector<8x128xi32> to vector<8xi32>
    %875 = vector.shape_cast %874 : vector<8xi32> to vector<8x1xi32>
    %876 = vector.broadcast %875 : vector<8x1xi32> to vector<8x128xi32>
    %877 = arith.cmpi eq, %49, %876 : vector<8x128xi32>
    %878 = arith.extui %877 : vector<8x128xi1> to vector<8x128xi32>
    %879 = arith.sitofp %878 : vector<8x128xi32> to vector<8x128xf32>
    %880 = arith.truncf %879 : vector<8x128xf32> to vector<8x128xbf16>
    %c0_328 = arith.constant 0 : index
    %c0_329 = arith.constant 0 : index
    %881 = vector.load %arg3[%c0_328, %c0_329] : memref<128x128xbf16, #tpu.memory_space<vmem>>, vector<128x128xbf16>
    %cst_330 = arith.constant dense<0.000000e+00> : vector<8x128xf32>
    %882 = tpu.matmul %880, %881, %cst_330 {dimension_numbers = #tpu.dot_dimension_numbers<[1], [0], [0], [1], [0, 0, 1, 1], [], []>} : vector<8x128xbf16>, vector<128x128xbf16>, vector<8x128xf32> -> vector<8x128xf32>
    %883 = arith.index_cast %c7_i32 : i32 to index
    %884 = memref.load %arg0[%883] : memref<8xi32, #tpu.memory_space<smem>>
    %885 = arith.sitofp %884 : i32 to f32
    %886 = vector.broadcast %885 : f32 to vector<8x128xf32>
    %887 = arith.mulf %886, %867 : vector<8x128xf32>
    %cst_331 = arith.constant 1.000000e+00 : f32
    %888 = arith.subf %cst_331, %885 : f32
    %889 = vector.broadcast %888 : f32 to vector<8x128xf32>
    %890 = arith.mulf %889, %882 : vector<8x128xf32>
    %891 = arith.addf %887, %890 : vector<8x128xf32>
    %c8_i32 = arith.constant 8 : i32
    return
  }
}

</mosaic_0001>

<llo_original>
// kernel: tpu_custom_call.1
$region0: #{tpu_custom_call.1}
  #allocation0 [shape = 'u32[]', space=smem, size = 0x4, offset = 0x4, fixed_abs, tag = 'smem constant byte address 0x4 - core index']
  #allocation1 [shape = 'u32[72,128]{1,0:T(1,128)}', space=vmem, size = 0x9000, scoped, tag = 'internal scratch']
  %s0 = inlined_call_operand.hbm [shape: s32[8], index: 0, kind: input, shape index: {}]
  %s1 = inlined_call_operand.hbm [shape: f32[8,128], index: 1, kind: input, shape index: {}]
  %s2 = inlined_call_operand.hbm [shape: f32[9,8,128], index: 2, kind: input, shape index: {}]
  %s3 = inlined_call_operand.hbm [shape: bf16[128,128], index: 3, kind: input, shape index: {}]
  %s4 = inlined_call_operand.hbm [shape: bf16[256,512], index: 4, kind: input, shape index: {}]
  %s5 = inlined_call_operand.hbm [shape: f32[8,512], index: 5, kind: input, shape index: {}]
  %s6 = inlined_call_operand.hbm [shape: bf16[256,512], index: 6, kind: input, shape index: {}]
  %s7 = inlined_call_operand.hbm [shape: f32[8,512], index: 7, kind: input, shape index: {}]
  %s8 = inlined_call_operand.hbm [shape: bf16[128,128], index: 8, kind: input, shape index: {}]
  %s9 = inlined_call_operand.vmem [shape: f32[8,128], index: 9, kind: input, shape index: {}]
  %s10 = inlined_call_operand.hbm [shape: f32[8,8,128], index: 10, kind: output, shape index: {}]
  %s11 = sld [smem:[#allocation0]]
  $region86: #{tpu_custom_call.1} parent=0
    _
  %s13 = ssub.s32 1, %s11
  %s14 = scalar_select 0, %s13, %s11
  $region1: #{tpu_custom_call.1} parent=0
    #allocation2 [shape = 'u8[512]{0}', space=smem, size = 0x200, scoped, tag = 'input window, operand 0, single buffered']
    #allocation3 [shape = 's32[1]{0}', space=sflag, size = 0x4, scoped, tag = 'scoped memory for tpu_custom_call.1']
    #allocation4 [shape = 's32[1]{0}', space=sflag, size = 0x4, scoped, tag = 'scoped memory for tpu_custom_call.1']
    #allocation5 [shape = 's32[1]{0}', space=sflag, size = 0x4, scoped, tag = 'scoped memory for tpu_custom_call.1']
    #allocation6 [shape = 'u8[4096]{0}', space=vmem, size = 0x1000, scoped, tag = 'input window, operand 1, single buffered']
    #allocation7 [shape = 'u8[36864]{0}', space=vmem, size = 0x9000, scoped, tag = 'input window, operand 2, single buffered']
    #allocation8 [shape = 's32[1]{0}', space=sflag, size = 0x4, scoped, tag = 'scoped memory for tpu_custom_call.1']
    #allocation9 [shape = 'u8[32768]{0}', space=vmem, size = 0x8000, scoped, tag = 'input window, operand 3, single buffered']
    #allocation10 [shape = 'u8[262144]{0}', space=vmem, size = 0x40000, scoped, tag = 'input window, operand 4, single buffered']
    #allocation11 [shape = 's32[1]{0}', space=sflag, size = 0x4, scoped, tag = 'scoped memory for tpu_custom_call.1']
    #allocation12 [shape = 'u8[16384]{0}', space=vmem, size = 0x4000, scoped, tag = 'input window, operand 5, single buffered']
    #allocation13 [shape = 'u8[262144]{0}', space=vmem, size = 0x40000, scoped, tag = 'input window, operand 6, single buffered']
    #allocation14 [shape = 's32[1]{0}', space=sflag, size = 0x4, scoped, tag = 'scoped memory for tpu_custom_call.1']
    #allocation15 [shape = 'u8[16384]{0}', space=vmem, size = 0x4000, scoped, tag = 'input window, operand 7, single buffered']
    #allocation16 [shape = 'u8[32768]{0}', space=vmem, size = 0x8000, scoped, tag = 'input window, operand 8, single buffered']
    #allocation17 [shape = 's32[1]{0}', space=sflag, size = 0x4, scoped, tag = 'scoped memory for tpu_custom_call.1']
    #allocation18 [shape = 'u8[32768]{0}', space=vmem, size = 0x8000, scoped, tag = 'output window, operand 0, single buffered']
    %15 = vsyncpa [#allocation5], 0
    %16 = vsyncpa [#allocation3], 0
    %17 = vsyncpa [#allocation8], 0
    %18 = vsyncpa [#allocation11], 0
    %19 = vsyncpa [#allocation14], 0
    %20 = vsyncpa [#allocation17], 0
    %21 = vsyncpa [#allocation4], 0
    // Predicated region
    $region2: #{tpu_custom_call.1} parent=1 // pred_check
      _
    $region3: #{tpu_custom_call.1} parent=1 // pred_check_branch
      %23 = sbr.rel (0) target = $region5
    $region4: #{tpu_custom_call.1} parent=1 // pred_region
      %25 = vsyncadd [#allocation5], 0
      %s27 = sshll.u32 %s0, 4
      %s28 = int_to_ptr.hbm [resolvable:$true] %s27
      %30 = dma.hbm_to_smem %s28, 16, [#allocation2], [#allocation5]
    $region5: #{tpu_custom_call.1} parent=1 // pred_fallthru
      _
    // Predicated region
    $region6: #{tpu_custom_call.1} parent=1 // pred_check
      _
    $region7: #{tpu_custom_call.1} parent=1 // pred_check_branch
      %32 = sbr.rel (0) target = $region9
    $region8: #{tpu_custom_call.1} parent=1 // pred_region
      %34 = vsyncadd [#allocation3], 0
      %s36 = sshll.u32 %s1, 4
      %s37 = int_to_ptr.hbm [resolvable:$true] %s36
      %s38 = sshll.u32 [#allocation6], 4
      %s39 = int_to_ptr.vmem [resolvable:$true] %s38
      %41 = dma.hbm_to_vmem [thread:$0]  %s37, 128, %s39, [#allocation3]
    $region9: #{tpu_custom_call.1} parent=1 // pred_fallthru
      _
    // Predicated region
    $region10: #{tpu_custom_call.1} parent=1 // pred_check
      _
    $region11: #{tpu_custom_call.1} parent=1 // pred_check_branch
      %43 = sbr.rel (0) target = $region13
    $region12: #{tpu_custom_call.1} parent=1 // pred_region
      %45 = vsyncadd [#allocation8], 0
      %s46 = sshll.u32 %s2, 4
      %s47 = int_to_ptr.hbm [resolvable:$true] %s46
      %s48 = sshll.u32 [#allocation7], 4
      %s49 = int_to_ptr.vmem [resolvable:$true] %s48
      %54 = dma.hbm_to_vmem [thread:$0]  %s47, 1152, %s49, [#allocation8], 128, 128, 8
    $region13: #{tpu_custom_call.1} parent=1 // pred_fallthru
      _
    // Predicated region
    $region14: #{tpu_custom_call.1} parent=1 // pred_check
      _
    $region15: #{tpu_custom_call.1} parent=1 // pred_check_branch
      %56 = sbr.rel (0) target = $region17
    $region16: #{tpu_custom_call.1} parent=1 // pred_region
      %58 = vsyncadd [#allocation8], 0
      %s59 = sshll.u32 %s3, 4
      %s60 = int_to_ptr.hbm [resolvable:$true] %s59
      %s61 = sshll.u32 [#allocation9], 4
      %s62 = int_to_ptr.vmem [resolvable:$true] %s61
      %67 = dma.hbm_to_vmem [thread:$0]  %s60, 1024, %s62, [#allocation8], 64, 64, 4
    $region17: #{tpu_custom_call.1} parent=1 // pred_fallthru
      _
    // Predicated region
    $region18: #{tpu_custom_call.1} parent=1 // pred_check
      _
    $region19: #{tpu_custom_call.1} parent=1 // pred_check_branch
      %69 = sbr.rel (0) target = $region21
    $region20: #{tpu_custom_call.1} parent=1 // pred_region
      %71 = vsyncadd [#allocation11], 0
      %s72 = sshll.u32 %s4, 4
      %s73 = int_to_ptr.hbm [resolvable:$true] %s72
      %s74 = sshll.u32 [#allocation10], 4
      %s75 = int_to_ptr.vmem [resolvable:$true] %s74
      %80 = dma.hbm_to_vmem [thread:$0]  %s73, 8192, %s75, [#allocation11], 256, 256, 16
    $region21: #{tpu_custom_call.1} parent=1 // pred_fallthru
      _
    // Predicated region
    $region22: #{tpu_custom_call.1} parent=1 // pred_check
      _
    $region23: #{tpu_custom_call.1} parent=1 // pred_check_branch
      %82 = sbr.rel (0) target = $region25
    $region24: #{tpu_custom_call.1} parent=1 // pred_region
      %84 = vsyncadd [#allocation11], 0
      %s86 = sshll.u32 %s5, 4
      %s87 = int_to_ptr.hbm [resolvable:$true] %s86
      %s88 = sshll.u32 [#allocation12], 4
      %s89 = int_to_ptr.vmem [resolvable:$true] %s88
      %91 = dma.hbm_to_vmem [thread:$0]  %s87, 512, %s89, [#allocation11]
    $region25: #{tpu_custom_call.1} parent=1 // pred_fallthru
      _
    // Predicated region
    $region26: #{tpu_custom_call.1} parent=1 // pred_check
      _
    $region27: #{tpu_custom_call.1} parent=1 // pred_check_branch
      %93 = sbr.rel (0) target = $region29
    $region28: #{tpu_custom_call.1} parent=1 // pred_region
      %95 = vsyncadd [#allocation14], 0
      %s96 = sshll.u32 %s6, 4
      %s97 = int_to_ptr.hbm [resolvable:$true] %s96
      %s98 = sshll.u32 [#allocation13], 4
      %s99 = int_to_ptr.vmem [resolvable:$true] %s98
      %104 = dma.hbm_to_vmem [thread:$0]  %s97, 8192, %s99, [#allocation14], 256, 256, 16
    $region29: #{tpu_custom_call.1} parent=1 // pred_fallthru
      _
    // Predicated region
    $region30: #{tpu_custom_call.1} parent=1 // pred_check
      _
    $region31: #{tpu_custom_call.1} parent=1 // pred_check_branch
      %106 = sbr.rel (0) target = $region33
    $region32: #{tpu_custom_call.1} parent=1 // pred_region
      %108 = vsyncadd [#allocation14], 0
      %s110 = sshll.u32 %s7, 4
      %s111 = int_to_ptr.hbm [resolvable:$true] %s110
      %s112 = sshll.u32 [#allocation15], 4
      %s113 = int_to_ptr.vmem [resolvable:$true] %s112
      %115 = dma.hbm_to_vmem [thread:$0]  %s111, 512, %s113, [#allocation14]
    $region33: #{tpu_custom_call.1} parent=1 // pred_fallthru
      _
    // Predicated region
    $region34: #{tpu_custom_call.1} parent=1 // pred_check
      _
    $region35: #{tpu_custom_call.1} parent=1 // pred_check_branch
      %117 = sbr.rel (0) target = $region37
    $region36: #{tpu_custom_call.1} parent=1 // pred_region
      %119 = vsyncadd [#allocation17], 0
      %s120 = sshll.u32 %s8, 4
      %s121 = int_to_ptr.hbm [resolvable:$true] %s120
      %s122 = sshll.u32 [#allocation16], 4
      %s123 = int_to_ptr.vmem [resolvable:$true] %s122
      %128 = dma.hbm_to_vmem [thread:$0]  %s121, 1024, %s123, [#allocation17], 64, 64, 4
    $region37: #{tpu_custom_call.1} parent=1 // pred_fallthru
      _
    // Predicated region
    $region38: #{tpu_custom_call.1} parent=1 // pred_check
      _
    $region39: #{tpu_custom_call.1} parent=1 // pred_check_branch
      %130 = sbr.rel (0) target = $region41
    $region40: #{tpu_custom_call.1} parent=1 // pred_region
      _
    $region41: #{tpu_custom_call.1} parent=1 // pred_fallthru
      _
    // Predicated region
    $region42: #{tpu_custom_call.1} parent=1 // pred_check
      _
    $region43: #{tpu_custom_call.1} parent=1 // pred_check_branch
      %132 = sbr.rel (0) target = $region45
    $region44: #{tpu_custom_call.1} parent=1 // pred_region
      %134 = dma.done [#allocation5], 16
    $region45: #{tpu_custom_call.1} parent=1 // pred_fallthru
      _
    // Predicated region
    $region46: #{tpu_custom_call.1} parent=1 // pred_check
      _
    $region47: #{tpu_custom_call.1} parent=1 // pred_check_branch
      %136 = sbr.rel (0) target = $region49
    $region48: #{tpu_custom_call.1} parent=1 // pred_region
      %138 = dma.done [#allocation3], 128
    $region49: #{tpu_custom_call.1} parent=1 // pred_fallthru
      _
    // Predicated region
    $region50: #{tpu_custom_call.1} parent=1 // pred_check
      _
    $region51: #{tpu_custom_call.1} parent=1 // pred_check_branch
      %140 = sbr.rel (0) target = $region53
    $region52: #{tpu_custom_call.1} parent=1 // pred_region
      %142 = dma.done [#allocation8], 1152
    $region53: #{tpu_custom_call.1} parent=1 // pred_fallthru
      _
    // Predicated region
    $region54: #{tpu_custom_call.1} parent=1 // pred_check
      _
    $region55: #{tpu_custom_call.1} parent=1 // pred_check_branch
      %144 = sbr.rel (0) target = $region57
    $region56: #{tpu_custom_call.1} parent=1 // pred_region
      %146 = dma.done [#allocation8], 1024
    $region57: #{tpu_custom_call.1} parent=1 // pred_fallthru
      _
    // Predicated region
    $region58: #{tpu_custom_call.1} parent=1 // pred_check
      _
    $region59: #{tpu_custom_call.1} parent=1 // pred_check_branch
      %148 = sbr.rel (0) target = $region61
    $region60: #{tpu_custom_call.1} parent=1 // pred_region
      %150 = dma.done [#allocation11], 8192
    $region61: #{tpu_custom_call.1} parent=1 // pred_fallthru
      _
    // Predicated region
    $region62: #{tpu_custom_call.1} parent=1 // pred_check
      _
    $region63: #{tpu_custom_call.1} parent=1 // pred_check_branch
      %152 = sbr.rel (0) target = $region65
    $region64: #{tpu_custom_call.1} parent=1 // pred_region
      %154 = dma.done [#allocation11], 512
    $region65: #{tpu_custom_call.1} parent=1 // pred_fallthru
      _
    // Predicated region
    $region66: #{tpu_custom_call.1} parent=1 // pred_check
      _
    $region67: #{tpu_custom_call.1} parent=1 // pred_check_branch
      %156 = sbr.rel (0) target = $region69
    $region68: #{tpu_custom_call.1} parent=1 // pred_region
      %158 = dma.done [#allocation14], 8192
    $region69: #{tpu_custom_call.1} parent=1 // pred_fallthru
      _
    // Predicated region
    $region70: #{tpu_custom_call.1} parent=1 // pred_check
      _
    $region71: #{tpu_custom_call.1} parent=1 // pred_check_branch
      %160 = sbr.rel (0) target = $region73
    $region72: #{tpu_custom_call.1} parent=1 // pred_region
      %162 = dma.done [#allocation14], 512
    $region73: #{tpu_custom_call.1} parent=1 // pred_fallthru
      _
    // Predicated region
    $region74: #{tpu_custom_call.1} parent=1 // pred_check
      _
    $region75: #{tpu_custom_call.1} parent=1 // pred_check_branch
      %164 = sbr.rel (0) target = $region77
    $region76: #{tpu_custom_call.1} parent=1 // pred_region
      %166 = dma.done [#allocation17], 1024
    $region77: #{tpu_custom_call.1} parent=1 // pred_fallthru
      _
    %167 = sfence
    %v168 = vld [vmem:[#allocation6] sm:$0xff]
    %v169 = vpack.c.bf16 %v168, %v168
    %v170 = vld [vmem:[#allocation10] sm:$0xff]
    %v171 = vld [vmem:[#allocation10 + $0x8] sm:$0xff]
    %v172 = vld [vmem:[#allocation10 + $0x10] sm:$0xff]
    %v173 = vld [vmem:[#allocation10 + $0x18] sm:$0xff]
    %v174 = vld [vmem:[#allocation10 + $0x20] sm:$0xff]
    %v175 = vld [vmem:[#allocation10 + $0x28] sm:$0xff]
    %v176 = vld [vmem:[#allocation10 + $0x30] sm:$0xff]
    %v177 = vld [vmem:[#allocation10 + $0x38] sm:$0xff]
    %v178 = vld [vmem:[#allocation10 + $0x40] sm:$0xff]
    %v179 = vld [vmem:[#allocation10 + $0x48] sm:$0xff]
    %v180 = vld [vmem:[#allocation10 + $0x50] sm:$0xff]
    %v181 = vld [vmem:[#allocation10 + $0x58] sm:$0xff]
    %v182 = vld [vmem:[#allocation10 + $0x60] sm:$0xff]
    %v183 = vld [vmem:[#allocation10 + $0x68] sm:$0xff]
    %v184 = vld [vmem:[#allocation10 + $0x70] sm:$0xff]
    %v185 = vld [vmem:[#allocation10 + $0x78] sm:$0xff]
    %v186 = vld [vmem:[#allocation10 + $0x80] sm:$0xff]
    %v187 = vld [vmem:[#allocation10 + $0x88] sm:$0xff]
    %v188 = vld [vmem:[#allocation10 + $0x90] sm:$0xff]
    %v189 = vld [vmem:[#allocation10 + $0x98] sm:$0xff]
    %v190 = vld [vmem:[#allocation10 + $0xa0] sm:$0xff]
    %v191 = vld [vmem:[#allocation10 + $0xa8] sm:$0xff]
    %v192 = vld [vmem:[#allocation10 + $0xb0] sm:$0xff]
    %v193 = vld [vmem:[#allocation10 + $0xb8] sm:$0xff]
    %v194 = vld [vmem:[#allocation10 + $0xc0] sm:$0xff]
    %v195 = vld [vmem:[#allocation10 + $0xc8] sm:$0xff]
    %v196 = vld [vmem:[#allocation10 + $0xd0] sm:$0xff]
    %v197 = vld [vmem:[#allocation10 + $0xd8] sm:$0xff]
    %v198 = vld [vmem:[#allocation10 + $0xe0] sm:$0xff]
    %v199 = vld [vmem:[#allocation10 + $0xe8] sm:$0xff]
    %v200 = vld [vmem:[#allocation10 + $0xf0] sm:$0xff]
    %v201 = vld [vmem:[#allocation10 + $0xf8] sm:$0xff]
    %v202 = vld [vmem:[#allocation12] sm:$0xff]
    %v203 = vld [vmem:[#allocation12 + $0x8] sm:$0xff]
    %v204 = vld [vmem:[#allocation12 + $0x10] sm:$0xff]
    %v205 = vld [vmem:[#allocation12 + $0x18] sm:$0xff]
    %v238 = vunpack.c.l.b16 %v170
    %v239 = vunpack.c.l.b16 %v171
    %v240 = vunpack.c.h.b16 %v171
    %v241 = vunpack.c.l.b16 %v172
    %v242 = vunpack.c.l.b16 %v173
    %v243 = vunpack.c.h.b16 %v173
    %v244 = vunpack.c.l.b16 %v174
    %v245 = vunpack.c.l.b16 %v175
    %v246 = vunpack.c.h.b16 %v175
    %v247 = vunpack.c.l.b16 %v176
    %v248 = vunpack.c.l.b16 %v177
    %v249 = vunpack.c.h.b16 %v177
    %v250 = vunpack.c.l.b16 %v178
    %v251 = vunpack.c.l.b16 %v179
    %v252 = vunpack.c.h.b16 %v179
    %v253 = vunpack.c.l.b16 %v180
    %v254 = vunpack.c.l.b16 %v181
    %v255 = vunpack.c.h.b16 %v181
    %v256 = vunpack.c.l.b16 %v182
    %v257 = vunpack.c.l.b16 %v183
    %v258 = vunpack.c.h.b16 %v183
    %v259 = vunpack.c.l.b16 %v184
    %v260 = vunpack.c.l.b16 %v185
    %v261 = vunpack.c.h.b16 %v185
    %v262 = vunpack.c.l.b16 %v186
    %v263 = vunpack.c.l.b16 %v187
    %v264 = vunpack.c.h.b16 %v187
    %v265 = vunpack.c.l.b16 %v188
    %v266 = vunpack.c.l.b16 %v189
    %v267 = vunpack.c.h.b16 %v189
    %v268 = vunpack.c.l.b16 %v190
    %v269 = vunpack.c.l.b16 %v191
    %v270 = vunpack.c.h.b16 %v191
    %v271 = vunpack.c.l.b16 %v192
    %v272 = vunpack.c.l.b16 %v193
    %v273 = vunpack.c.h.b16 %v193
    %v274 = vunpack.c.l.b16 %v194
    %v275 = vunpack.c.l.b16 %v195
    %v276 = vunpack.c.h.b16 %v195
    %v277 = vunpack.c.l.b16 %v196
    %v278 = vunpack.c.l.b16 %v197
    %v279 = vunpack.c.h.b16 %v197
    %v280 = vunpack.c.l.b16 %v198
    %v281 = vunpack.c.l.b16 %v199
    %v282 = vunpack.c.h.b16 %v199
    %v283 = vunpack.c.l.b16 %v200
    %v284 = vunpack.c.l.b16 %v201
    %v285 = vunpack.c.h.b16 %v201
    %v286 = vpack.c.b16 %v241, %v238
    %v287 = vpack.c.b16 %v242, %v239
    %v288 = vpack.c.b16 %v243, %v240
    %v289 = vpack.c.b16 %v247, %v244
    %v290 = vpack.c.b16 %v248, %v245
    %v291 = vpack.c.b16 %v249, %v246
    %v292 = vpack.c.b16 %v253, %v250
    %v293 = vpack.c.b16 %v254, %v251
    %v294 = vpack.c.b16 %v255, %v252
    %v295 = vpack.c.b16 %v259, %v256
    %v296 = vpack.c.b16 %v260, %v257
    %v297 = vpack.c.b16 %v261, %v258
    %v298 = vpack.c.b16 %v265, %v262
    %v299 = vpack.c.b16 %v266, %v263
    %v300 = vpack.c.b16 %v267, %v264
    %v301 = vpack.c.b16 %v271, %v268
    %v302 = vpack.c.b16 %v272, %v269
    %v303 = vpack.c.b16 %v273, %v270
    %v304 = vpack.c.b16 %v277, %v274
    %v305 = vpack.c.b16 %v278, %v275
    %v306 = vpack.c.b16 %v279, %v276
    %v307 = vpack.c.b16 %v283, %v280
    %v308 = vpack.c.b16 %v284, %v281
    %v309 = vpack.c.b16 %v285, %v282
    %334 = vmatpush.bf16.msra.mxu0 %v307
    %335 = vmatpush.bf16.msra.mxu0 %v304
    %336 = vmatpush.bf16.msra.mxu0 %v301
    %337 = vmatpush.bf16.msra.mxu0 %v298
    %338 = vmatpush.bf16.msra.mxu0 %v295
    %339 = vmatpush.bf16.msra.mxu0 %v292
    %340 = vmatpush.bf16.msra.mxu0 %v289
    %341 = vmatpush.bf16.msra.mxu0 %v286
    %342 = vmatmul.bf16.gmra.mxu0 %v169
    %v343 = vpop.f32.mrf.mxu0
    %v344 = vadd.f32 %v202, %v343
    %v345 = vpop.f32.mrf.mxu0
    %346 = vdwg.mxu0
    %347 = vmatpush.bf16.msra.mxu0 %v308
    %348 = vmatpush.bf16.msra.mxu0 %v305
    %349 = vmatpush.bf16.msra.mxu0 %v302
    %350 = vmatpush.bf16.msra.mxu0 %v299
    %351 = vmatpush.bf16.msra.mxu0 %v296
    %352 = vmatpush.bf16.msra.mxu0 %v293
    %353 = vmatpush.bf16.msra.mxu0 %v290
    %354 = vmatpush.bf16.msra.mxu0 %v287
    %355 = vmatmul.bf16.gmra.mxu0 %v169
    %v356 = vpop.f32.mrf.mxu0
    %v357 = vadd.f32 %v204, %v356
    %v358 = vpop.f32.mrf.mxu0
    %359 = vdwg.mxu0
    %360 = vmatpush.bf16.msra.mxu0 %v309
    %361 = vmatpush.bf16.msra.mxu0 %v306
    %362 = vmatpush.bf16.msra.mxu0 %v303
    %363 = vmatpush.bf16.msra.mxu0 %v300
    %364 = vmatpush.bf16.msra.mxu0 %v297
    %365 = vmatpush.bf16.msra.mxu0 %v294
    %366 = vmatpush.bf16.msra.mxu0 %v291
    %367 = vmatpush.bf16.msra.mxu0 %v288
    %368 = vmatmul.bf16.gmra.mxu0 %v169
    %v369 = vpop.f32.mrf.mxu0
    %v370 = vadd.f32 %v205, %v369
    %v371 = vpop.f32.mrf.mxu0
    %372 = vdwg.mxu0
    %v373 = vsub.f32 0.0, %v344
    %v374 = vmul.f32 %v373, 1.442695
    %v375 = vpow.pop %v374
    %v376 = vadd.f32 %v375, 1.0
    %v377 = vrcp.pop %v376
    %v378 = vmul.f32 %v376, %v377
    %v379 = vsub.f32 1.0, %v378
    %v380 = vmul.f32 %v377, %v379
    %v381 = vadd.f32 %v377, %v380
    %vm382 = vweird.f32 %v376
    %vm383 = vweird.f32 %v377
    %vm384 = vmor %vm382, %vm383
    %v385 = vsel %vm384, %v377, %v381
    %v386 = vand.u32 2147483647, %v376
    %vm387 = vcmp.eq.f32.partialorder %v386, 8.507059e+37
    %v388 = vand.u32 %v376, 2147483648
    %v389 = vor.u32 1.1754944e-38, %v388
    %v390 = vsel %vm387, %v389, %v385
    %v391 = vtanh.pop %v357
    %v392 = vsub.f32 0.0, %v370
    %v393 = vmul.f32 %v392, 1.442695
    %v394 = vpow.pop %v393
    %v395 = vadd.f32 %v394, 1.0
    %v396 = vrcp.pop %v395
    %v397 = vmul.f32 %v395, %v396
    %v398 = vsub.f32 1.0, %v397
    %v399 = vmul.f32 %v396, %v398
    %v400 = vadd.f32 %v396, %v399
    %vm401 = vweird.f32 %v395
    %vm402 = vweird.f32 %v396
    %vm403 = vmor %vm401, %vm402
    %v404 = vsel %vm403, %v396, %v400
    %v405 = vand.u32 2147483647, %v395
    %vm406 = vcmp.eq.f32.partialorder %v405, 8.507059e+37
    %v407 = vand.u32 %v395, 2147483648
    %v408 = vor.u32 1.1754944e-38, %v407
    %v409 = vsel %vm406, %v408, %v404
    %v410 = vmul.f32 %v390, %v391
    %v411 = vtanh.pop %v410
    %v412 = vmul.f32 %v409, %v411
    %v413 = vpack.c.bf16 %v412, %v412
    %v414 = vld [vmem:[#allocation13] sm:$0xff]
    %v415 = vld [vmem:[#allocation13 + $0x8] sm:$0xff]
    %v416 = vld [vmem:[#allocation13 + $0x10] sm:$0xff]
    %v417 = vld [vmem:[#allocation13 + $0x18] sm:$0xff]
    %v418 = vld [vmem:[#allocation13 + $0x20] sm:$0xff]
    %v419 = vld [vmem:[#allocation13 + $0x28] sm:$0xff]
    %v420 = vld [vmem:[#allocation13 + $0x30] sm:$0xff]
    %v421 = vld [vmem:[#allocation13 + $0x38] sm:$0xff]
    %v422 = vld [vmem:[#allocation13 + $0x40] sm:$0xff]
    %v423 = vld [vmem:[#allocation13 + $0x48] sm:$0xff]
    %v424 = vld [vmem:[#allocation13 + $0x50] sm:$0xff]
    %v425 = vld [vmem:[#allocation13 + $0x58] sm:$0xff]
    %v426 = vld [vmem:[#allocation13 + $0x60] sm:$0xff]
    %v427 = vld [vmem:[#allocation13 + $0x68] sm:$0xff]
    %v428 = vld [vmem:[#allocation13 + $0x70] sm:$0xff]
    %v429 = vld [vmem:[#allocation13 + $0x78] sm:$0xff]
    %v430 = vld [vmem:[#allocation13 + $0x80] sm:$0xff]
    %v431 = vld [vmem:[#allocation13 + $0x88] sm:$0xff]
    %v432 = vld [vmem:[#allocation13 + $0x90] sm:$0xff]
    %v433 = vld [vmem:[#allocation13 + $0x98] sm:$0xff]
    %v434 = vld [vmem:[#allocation13 + $0xa0] sm:$0xff]
    %v435 = vld [vmem:[#allocation13 + $0xa8] sm:$0xff]
    %v436 = vld [vmem:[#allocation13 + $0xb0] sm:$0xff]
    %v437 = vld [vmem:[#allocation13 + $0xb8] sm:$0xff]
    %v438 = vld [vmem:[#allocation13 + $0xc0] sm:$0xff]
    %v439 = vld [vmem:[#allocation13 + $0xc8] sm:$0xff]
    %v440 = vld [vmem:[#allocation13 + $0xd0] sm:$0xff]
    %v441 = vld [vmem:[#allocation13 + $0xd8] sm:$0xff]
    %v442 = vld [vmem:[#allocation13 + $0xe0] sm:$0xff]
    %v443 = vld [vmem:[#allocation13 + $0xe8] sm:$0xff]
    %v444 = vld [vmem:[#allocation13 + $0xf0] sm:$0xff]
    %v445 = vld [vmem:[#allocation13 + $0xf8] sm:$0xff]
    %v446 = vld [vmem:[#allocation15] sm:$0xff]
    %v447 = vld [vmem:[#allocation15 + $0x8] sm:$0xff]
    %v448 = vld [vmem:[#allocation15 + $0x10] sm:$0xff]
    %v449 = vld [vmem:[#allocation15 + $0x18] sm:$0xff]
    %v482 = vunpack.c.l.b16 %v414
    %v483 = vunpack.c.l.b16 %v415
    %v484 = vunpack.c.h.b16 %v415
    %v485 = vunpack.c.l.b16 %v416
    %v486 = vunpack.c.l.b16 %v417
    %v487 = vunpack.c.h.b16 %v417
    %v488 = vunpack.c.l.b16 %v418
    %v489 = vunpack.c.l.b16 %v419
    %v490 = vunpack.c.h.b16 %v419
    %v491 = vunpack.c.l.b16 %v420
    %v492 = vunpack.c.l.b16 %v421
    %v493 = vunpack.c.h.b16 %v421
    %v494 = vunpack.c.l.b16 %v422
    %v495 = vunpack.c.l.b16 %v423
    %v496 = vunpack.c.h.b16 %v423
    %v497 = vunpack.c.l.b16 %v424
    %v498 = vunpack.c.l.b16 %v425
    %v499 = vunpack.c.h.b16 %v425
    %v500 = vunpack.c.l.b16 %v426
    %v501 = vunpack.c.l.b16 %v427
    %v502 = vunpack.c.h.b16 %v427
    %v503 = vunpack.c.l.b16 %v428
    %v504 = vunpack.c.l.b16 %v429
    %v505 = vunpack.c.h.b16 %v429
    %v506 = vunpack.c.l.b16 %v430
    %v507 = vunpack.c.l.b16 %v431
    %v508 = vunpack.c.h.b16 %v431
    %v509 = vunpack.c.l.b16 %v432
    %v510 = vunpack.c.l.b16 %v433
    %v511 = vunpack.c.h.b16 %v433
    %v512 = vunpack.c.l.b16 %v434
    %v513 = vunpack.c.l.b16 %v435
    %v514 = vunpack.c.h.b16 %v435
    %v515 = vunpack.c.l.b16 %v436
    %v516 = vunpack.c.l.b16 %v437
    %v517 = vunpack.c.h.b16 %v437
    %v518 = vunpack.c.l.b16 %v438
    %v519 = vunpack.c.l.b16 %v439
    %v520 = vunpack.c.h.b16 %v439
    %v521 = vunpack.c.l.b16 %v440
    %v522 = vunpack.c.l.b16 %v441
    %v523 = vunpack.c.h.b16 %v441
    %v524 = vunpack.c.l.b16 %v442
    %v525 = vunpack.c.l.b16 %v443
    %v526 = vunpack.c.h.b16 %v443
    %v527 = vunpack.c.l.b16 %v444
    %v528 = vunpack.c.l.b16 %v445
    %v529 = vunpack.c.h.b16 %v445
    %v530 = vpack.c.b16 %v485, %v482
    %v531 = vpack.c.b16 %v486, %v483
    %v532 = vpack.c.b16 %v487, %v484
    %v533 = vpack.c.b16 %v491, %v488
    %v534 = vpack.c.b16 %v492, %v489
    %v535 = vpack.c.b16 %v493, %v490
    %v536 = vpack.c.b16 %v497, %v494
    %v537 = vpack.c.b16 %v498, %v495
    %v538 = vpack.c.b16 %v499, %v496
    %v539 = vpack.c.b16 %v503, %v500
    %v540 = vpack.c.b16 %v504, %v501
    %v541 = vpack.c.b16 %v505, %v502
    %v542 = vpack.c.b16 %v509, %v506
    %v543 = vpack.c.b16 %v510, %v507
    %v544 = vpack.c.b16 %v511, %v508
    %v545 = vpack.c.b16 %v515, %v512
    %v546 = vpack.c.b16 %v516, %v513
    %v547 = vpack.c.b16 %v517, %v514
    %v548 = vpack.c.b16 %v521, %v518
    %v549 = vpack.c.b16 %v522, %v519
    %v550 = vpack.c.b16 %v523, %v520
    %v551 = vpack.c.b16 %v527, %v524
    %v552 = vpack.c.b16 %v528, %v525
    %v553 = vpack.c.b16 %v529, %v526
    %578 = vmatpush.bf16.msra.mxu0 %v551
    %579 = vmatpush.bf16.msra.mxu0 %v548
    %580 = vmatpush.bf16.msra.mxu0 %v545
    %581 = vmatpush.bf16.msra.mxu0 %v542
    %582 = vmatpush.bf16.msra.mxu0 %v539
    %583 = vmatpush.bf16.msra.mxu0 %v536
    %584 = vmatpush.bf16.msra.mxu0 %v533
    %585 = vmatpush.bf16.msra.mxu0 %v530
    %586 = vmatmul.bf16.gmra.mxu0 %v413
    %v587 = vpop.f32.mrf.mxu0
    %v588 = vadd.f32 %v446, %v587
    %v589 = vpop.f32.mrf.mxu0
    %590 = vdwg.mxu0
    %591 = vmatpush.bf16.msra.mxu0 %v552
    %592 = vmatpush.bf16.msra.mxu0 %v549
    %593 = vmatpush.bf16.msra.mxu0 %v546
    %594 = vmatpush.bf16.msra.mxu0 %v543
    %595 = vmatpush.bf16.msra.mxu0 %v540
    %596 = vmatpush.bf16.msra.mxu0 %v537
    %597 = vmatpush.bf16.msra.mxu0 %v534
    %598 = vmatpush.bf16.msra.mxu0 %v531
    %599 = vmatmul.bf16.gmra.mxu0 %v413
    %v600 = vpop.f32.mrf.mxu0
    %v601 = vadd.f32 %v448, %v600
    %v602 = vpop.f32.mrf.mxu0
    %603 = vdwg.mxu0
    %604 = vmatpush.bf16.msra.mxu0 %v553
    %605 = vmatpush.bf16.msra.mxu0 %v550
    %606 = vmatpush.bf16.msra.mxu0 %v547
    %607 = vmatpush.bf16.msra.mxu0 %v544
    %608 = vmatpush.bf16.msra.mxu0 %v541
    %609 = vmatpush.bf16.msra.mxu0 %v538
    %610 = vmatpush.bf16.msra.mxu0 %v535
    %611 = vmatpush.bf16.msra.mxu0 %v532
    %612 = vmatmul.bf16.gmra.mxu0 %v413
    %v613 = vpop.f32.mrf.mxu0
    %v614 = vadd.f32 %v449, %v613
    %v615 = vpop.f32.mrf.mxu0
    %616 = vdwg.mxu0
    %v617 = vsub.f32 0.0, %v588
    %v618 = vmul.f32 %v617, 1.442695
    %v619 = vpow.pop %v618
    %v620 = vadd.f32 %v619, 1.0
    %v621 = vrcp.pop %v620
    %v622 = vmul.f32 %v620, %v621
    %v623 = vsub.f32 1.0, %v622
    %v624 = vmul.f32 %v621, %v623
    %v625 = vadd.f32 %v621, %v624
    %vm626 = vweird.f32 %v620
    %vm627 = vweird.f32 %v621
    %vm628 = vmor %vm626, %vm627
    %v629 = vsel %vm628, %v621, %v625
    %v630 = vand.u32 2147483647, %v620
    %vm631 = vcmp.eq.f32.partialorder %v630, 8.507059e+37
    %v632 = vand.u32 %v620, 2147483648
    %v633 = vor.u32 1.1754944e-38, %v632
    %v634 = vsel %vm631, %v633, %v629
    %v635 = vtanh.pop %v601
    %v636 = vsub.f32 0.0, %v614
    %v637 = vmul.f32 %v636, 1.442695
    %v638 = vpow.pop %v637
    %v639 = vadd.f32 %v638, 1.0
    %v640 = vrcp.pop %v639
    %v641 = vmul.f32 %v639, %v640
    %v642 = vsub.f32 1.0, %v641
    %v643 = vmul.f32 %v640, %v642
    %v644 = vadd.f32 %v640, %v643
    %vm645 = vweird.f32 %v639
    %vm646 = vweird.f32 %v640
    %vm647 = vmor %vm645, %vm646
    %v648 = vsel %vm647, %v640, %v644
    %v649 = vand.u32 2147483647, %v639
    %vm650 = vcmp.eq.f32.partialorder %v649, 8.507059e+37
    %v651 = vand.u32 %v639, 2147483648
    %v652 = vor.u32 1.1754944e-38, %v651
    %v653 = vsel %vm650, %v652, %v648
    %v654 = vmul.f32 %v634, %v635
    %v655 = vtanh.pop %v654
    %v656 = vmul.f32 %v653, %v655
    %v657 = vlaneseq
    %v658 = vand.u32 %v657, 127
    %v659 = vld [vmem:[#allocation7] sm:$0xff]
    %v660 = vpack.c.bf16 %v659, %v659
    %v661 = vld [vmem:[#allocation10] sm:$0xff]
    %v662 = vld [vmem:[#allocation10 + $0x8] sm:$0xff]
    %v663 = vld [vmem:[#allocation10 + $0x10] sm:$0xff]
    %v664 = vld [vmem:[#allocation10 + $0x18] sm:$0xff]
    %v665 = vld [vmem:[#allocation10 + $0x20] sm:$0xff]
    %v666 = vld [vmem:[#allocation10 + $0x28] sm:$0xff]
    %v667 = vld [vmem:[#allocation10 + $0x30] sm:$0xff]
    %v668 = vld [vmem:[#allocation10 + $0x38] sm:$0xff]
    %v669 = vld [vmem:[#allocation10 + $0x40] sm:$0xff]
    %v670 = vld [vmem:[#allocation10 + $0x48] sm:$0xff]
    %v671 = vld [vmem:[#allocation10 + $0x50] sm:$0xff]
    %v672 = vld [vmem:[#allocation10 + $0x58] sm:$0xff]
    %v673 = vld [vmem:[#allocation10 + $0x60] sm:$0xff]
    %v674 = vld [vmem:[#allocation10 + $0x68] sm:$0xff]
    %v675 = vld [vmem:[#allocation10 + $0x70] sm:$0xff]
    %v676 = vld [vmem:[#allocation10 + $0x78] sm:$0xff]
    %v677 = vld [vmem:[#allocation10 + $0x80] sm:$0xff]
    %v678 = vld [vmem:[#allocation10 + $0x88] sm:$0xff]
    %v679 = vld [vmem:[#allocation10 + $0x90] sm:$0xff]
    %v680 = vld [vmem:[#allocation10 + $0x98] sm:$0xff]
    %v681 = vld [vmem:[#allocation10 + $0xa0] sm:$0xff]
    %v682 = vld [vmem:[#allocation10 + $0xa8] sm:$0xff]
    %v683 = vld [vmem:[#allocation10 + $0xb0] sm:$0xff]
    %v684 = vld [vmem:[#allocation10 + $0xb8] sm:$0xff]
    %v685 = vld [vmem:[#allocation10 + $0xc0] sm:$0xff]
    %v686 = vld [vmem:[#allocation10 + $0xc8] sm:$0xff]
    %v687 = vld [vmem:[#allocation10 + $0xd0] sm:$0xff]
    %v688 = vld [vmem:[#allocation10 + $0xd8] sm:$0xff]
    %v689 = vld [vmem:[#allocation10 + $0xe0] sm:$0xff]
    %v690 = vld [vmem:[#allocation10 + $0xe8] sm:$0xff]
    %v691 = vld [vmem:[#allocation10 + $0xf0] sm:$0xff]
    %v692 = vld [vmem:[#allocation10 + $0xf8] sm:$0xff]
    %v693 = vld [vmem:[#allocation10 + $0x100] sm:$0xff]
    %v694 = vld [vmem:[#allocation10 + $0x108] sm:$0xff]
    %v695 = vld [vmem:[#allocation10 + $0x110] sm:$0xff]
    %v696 = vld [vmem:[#allocation10 + $0x118] sm:$0xff]
    %v697 = vld [vmem:[#allocation10 + $0x120] sm:$0xff]
    %v698 = vld [vmem:[#allocation10 + $0x128] sm:$0xff]
    %v699 = vld [vmem:[#allocation10 + $0x130] sm:$0xff]
    %v700 = vld [vmem:[#allocation10 + $0x138] sm:$0xff]
    %v701 = vld [vmem:[#allocation10 + $0x140] sm:$0xff]
    %v702 = vld [vmem:[#allocation10 + $0x148] sm:$0xff]
    %v703 = vld [vmem:[#allocation10 + $0x150] sm:$0xff]
    %v704 = vld [vmem:[#allocation10 + $0x158] sm:$0xff]
    %v705 = vld [vmem:[#allocation10 + $0x160] sm:$0xff]
    %v706 = vld [vmem:[#allocation10 + $0x168] sm:$0xff]
    %v707 = vld [vmem:[#allocation10 + $0x170] sm:$0xff]
    %v708 = vld [vmem:[#allocation10 + $0x178] sm:$0xff]
    %v709 = vld [vmem:[#allocation10 + $0x180] sm:$0xff]
    %v710 = vld [vmem:[#allocation10 + $0x188] sm:$0xff]
    %v711 = vld [vmem:[#allocation10 + $0x190] sm:$0xff]
    %v712 = vld [vmem:[#allocation10 + $0x198] sm:$0xff]
    %v713 = vld [vmem:[#allocation10 + $0x1a0] sm:$0xff]
    %v714 = vld [vmem:[#allocation10 + $0x1a8] sm:$0xff]
    %v715 = vld [vmem:[#allocation10 + $0x1b0] sm:$0xff]
    %v716 = vld [vmem:[#allocation10 + $0x1b8] sm:$0xff]
    %v717 = vld [vmem:[#allocation10 + $0x1c0] sm:$0xff]
    %v718 = vld [vmem:[#allocation10 + $0x1c8] sm:$0xff]
    %v719 = vld [vmem:[#allocation10 + $0x1d0] sm:$0xff]
    %v720 = vld [vmem:[#allocation10 + $0x1d8] sm:$0xff]
    %v721 = vld [vmem:[#allocation10 + $0x1e0] sm:$0xff]
    %v722 = vld [vmem:[#allocation10 + $0x1e8] sm:$0xff]
    %v723 = vld [vmem:[#allocation10 + $0x1f0] sm:$0xff]
    %v724 = vld [vmem:[#allocation10 + $0x1f8] sm:$0xff]
    %v789 = vunpack.c.l.b16 %v661
    %v790 = vunpack.c.h.b16 %v661
    %v791 = vunpack.c.l.b16 %v662
    %v792 = vunpack.c.h.b16 %v662
    %v793 = vunpack.c.l.b16 %v663
    %v794 = vunpack.c.h.b16 %v663
    %v795 = vunpack.c.l.b16 %v664
    %v796 = vunpack.c.h.b16 %v664
    %v797 = vunpack.c.l.b16 %v665
    %v798 = vunpack.c.h.b16 %v665
    %v799 = vunpack.c.l.b16 %v666
    %v800 = vunpack.c.h.b16 %v666
    %v801 = vunpack.c.l.b16 %v667
    %v802 = vunpack.c.h.b16 %v667
    %v803 = vunpack.c.l.b16 %v668
    %v804 = vunpack.c.h.b16 %v668
    %v805 = vunpack.c.l.b16 %v669
    %v806 = vunpack.c.h.b16 %v669
    %v807 = vunpack.c.l.b16 %v670
    %v808 = vunpack.c.h.b16 %v670
    %v809 = vunpack.c.l.b16 %v671
    %v810 = vunpack.c.h.b16 %v671
    %v811 = vunpack.c.l.b16 %v672
    %v812 = vunpack.c.h.b16 %v672
    %v813 = vunpack.c.l.b16 %v673
    %v814 = vunpack.c.h.b16 %v673
    %v815 = vunpack.c.l.b16 %v674
    %v816 = vunpack.c.h.b16 %v674
    %v817 = vunpack.c.l.b16 %v675
    %v818 = vunpack.c.h.b16 %v675
    %v819 = vunpack.c.l.b16 %v676
    %v820 = vunpack.c.h.b16 %v676
    %v821 = vunpack.c.l.b16 %v677
    %v822 = vunpack.c.h.b16 %v677
    %v823 = vunpack.c.l.b16 %v678
    %v824 = vunpack.c.h.b16 %v678
    %v825 = vunpack.c.l.b16 %v679
    %v826 = vunpack.c.h.b16 %v679
    %v827 = vunpack.c.l.b16 %v680
    %v828 = vunpack.c.h.b16 %v680
    %v829 = vunpack.c.l.b16 %v681
    %v830 = vunpack.c.h.b16 %v681
    %v831 = vunpack.c.l.b16 %v682
    %v832 = vunpack.c.h.b16 %v682
    %v833 = vunpack.c.l.b16 %v683
    %v834 = vunpack.c.h.b16 %v683
    %v835 = vunpack.c.l.b16 %v684
    %v836 = vunpack.c.h.b16 %v684
    %v837 = vunpack.c.l.b16 %v685
    %v838 = vunpack.c.h.b16 %v685
    %v839 = vunpack.c.l.b16 %v686
    %v840 = vunpack.c.h.b16 %v686
    %v841 = vunpack.c.l.b16 %v687
    %v842 = vunpack.c.h.b16 %v687
    %v843 = vunpack.c.l.b16 %v688
    %v844 = vunpack.c.h.b16 %v688
    %v845 = vunpack.c.l.b16 %v689
    %v846 = vunpack.c.h.b16 %v689
    %v847 = vunpack.c.l.b16 %v690
    %v848 = vunpack.c.h.b16 %v690
    %v849 = vunpack.c.l.b16 %v691
    %v850 = vunpack.c.h.b16 %v691
    %v851 = vunpack.c.l.b16 %v692
    %v852 = vunpack.c.h.b16 %v692
    %v853 = vunpack.c.l.b16 %v693
    %v854 = vunpack.c.h.b16 %v693
    %v855 = vunpack.c.l.b16 %v694
    %v856 = vunpack.c.h.b16 %v694
    %v857 = vunpack.c.l.b16 %v695
    %v858 = vunpack.c.h.b16 %v695
    %v859 = vunpack.c.l.b16 %v696
    %v860 = vunpack.c.h.b16 %v696
    %v861 = vunpack.c.l.b16 %v697
    %v862 = vunpack.c.h.b16 %v697
    %v863 = vunpack.c.l.b16 %v698
    %v864 = vunpack.c.h.b16 %v698
    %v865 = vunpack.c.l.b16 %v699
    %v866 = vunpack.c.h.b16 %v699
    %v867 = vunpack.c.l.b16 %v700
    %v868 = vunpack.c.h.b16 %v700
    %v869 = vunpack.c.l.b16 %v701
    %v870 = vunpack.c.h.b16 %v701
    %v871 = vunpack.c.l.b16 %v702
    %v872 = vunpack.c.h.b16 %v702
    %v873 = vunpack.c.l.b16 %v703
    %v874 = vunpack.c.h.b16 %v703
    %v875 = vunpack.c.l.b16 %v704
    %v876 = vunpack.c.h.b16 %v704
    %v877 = vunpack.c.l.b16 %v705
    %v878 = vunpack.c.h.b16 %v705
    %v879 = vunpack.c.l.b16 %v706
    %v880 = vunpack.c.h.b16 %v706
    %v881 = vunpack.c.l.b16 %v707
    %v882 = vunpack.c.h.b16 %v707
    %v883 = vunpack.c.l.b16 %v708
    %v884 = vunpack.c.h.b16 %v708
    %v885 = vunpack.c.l.b16 %v709
    %v886 = vunpack.c.h.b16 %v709
    %v887 = vunpack.c.l.b16 %v710
    %v888 = vunpack.c.h.b16 %v710
    %v889 = vunpack.c.l.b16 %v711
    %v890 = vunpack.c.h.b16 %v711
    %v891 = vunpack.c.l.b16 %v712
    %v892 = vunpack.c.h.b16 %v712
    %v893 = vunpack.c.l.b16 %v713
    %v894 = vunpack.c.h.b16 %v713
    %v895 = vunpack.c.l.b16 %v714
    %v896 = vunpack.c.h.b16 %v714
    %v897 = vunpack.c.l.b16 %v715
    %v898 = vunpack.c.h.b16 %v715
    %v899 = vunpack.c.l.b16 %v716
    %v900 = vunpack.c.h.b16 %v716
    %v901 = vunpack.c.l.b16 %v717
    %v902 = vunpack.c.h.b16 %v717
    %v903 = vunpack.c.l.b16 %v718
    %v904 = vunpack.c.h.b16 %v718
    %v905 = vunpack.c.l.b16 %v719
    %v906 = vunpack.c.h.b16 %v719
    %v907 = vunpack.c.l.b16 %v720
    %v908 = vunpack.c.h.b16 %v720
    %v909 = vunpack.c.l.b16 %v721
    %v910 = vunpack.c.h.b16 %v721
    %v911 = vunpack.c.l.b16 %v722
    %v912 = vunpack.c.h.b16 %v722
    %v913 = vunpack.c.l.b16 %v723
    %v914 = vunpack.c.h.b16 %v723
    %v915 = vunpack.c.l.b16 %v724
    %v916 = vunpack.c.h.b16 %v724
    %v917 = vpack.c.b16 %v793, %v789
    %v918 = vpack.c.b16 %v794, %v790
    %v919 = vpack.c.b16 %v795, %v791
    %v920 = vpack.c.b16 %v796, %v792
    %v921 = vpack.c.b16 %v801, %v797
    %v922 = vpack.c.b16 %v802, %v798
    %v923 = vpack.c.b16 %v803, %v799
    %v924 = vpack.c.b16 %v804, %v800
    %v925 = vpack.c.b16 %v809, %v805
    %v926 = vpack.c.b16 %v810, %v806
    %v927 = vpack.c.b16 %v811, %v807
    %v928 = vpack.c.b16 %v812, %v808
    %v929 = vpack.c.b16 %v817, %v813
    %v930 = vpack.c.b16 %v818, %v814
    %v931 = vpack.c.b16 %v819, %v815
    %v932 = vpack.c.b16 %v820, %v816
    %v933 = vpack.c.b16 %v825, %v821
    %v934 = vpack.c.b16 %v826, %v822
    %v935 = vpack.c.b16 %v827, %v823
    %v936 = vpack.c.b16 %v828, %v824
    %v937 = vpack.c.b16 %v833, %v829
    %v938 = vpack.c.b16 %v834, %v830
    %v939 = vpack.c.b16 %v835, %v831
    %v940 = vpack.c.b16 %v836, %v832
    %v941 = vpack.c.b16 %v841, %v837
    %v942 = vpack.c.b16 %v842, %v838
    %v943 = vpack.c.b16 %v843, %v839
    %v944 = vpack.c.b16 %v844, %v840
    %v945 = vpack.c.b16 %v849, %v845
    %v946 = vpack.c.b16 %v850, %v846
    %v947 = vpack.c.b16 %v851, %v847
    %v948 = vpack.c.b16 %v852, %v848
    %v949 = vpack.c.b16 %v857, %v853
    %v950 = vpack.c.b16 %v858, %v854
    %v951 = vpack.c.b16 %v859, %v855
    %v952 = vpack.c.b16 %v860, %v856
    %v953 = vpack.c.b16 %v865, %v861
    %v954 = vpack.c.b16 %v866, %v862
    %v955 = vpack.c.b16 %v867, %v863
    %v956 = vpack.c.b16 %v868, %v864
    %v957 = vpack.c.b16 %v873, %v869
    %v958 = vpack.c.b16 %v874, %v870
    %v959 = vpack.c.b16 %v875, %v871
    %v960 = vpack.c.b16 %v876, %v872
    %v961 = vpack.c.b16 %v881, %v877
    %v962 = vpack.c.b16 %v882, %v878
    %v963 = vpack.c.b16 %v883, %v879
    %v964 = vpack.c.b16 %v884, %v880
    %v965 = vpack.c.b16 %v889, %v885
    %v966 = vpack.c.b16 %v890, %v886
    %v967 = vpack.c.b16 %v891, %v887
    %v968 = vpack.c.b16 %v892, %v888
    %v969 = vpack.c.b16 %v897, %v893
    %v970 = vpack.c.b16 %v898, %v894
    %v971 = vpack.c.b16 %v899, %v895
    %v972 = vpack.c.b16 %v900, %v896
    %v973 = vpack.c.b16 %v905, %v901
    %v974 = vpack.c.b16 %v906, %v902
    %v975 = vpack.c.b16 %v907, %v903
    %v976 = vpack.c.b16 %v908, %v904
    %v977 = vpack.c.b16 %v913, %v909
    %v978 = vpack.c.b16 %v914, %v910
    %v979 = vpack.c.b16 %v915, %v911
    %v980 = vpack.c.b16 %v916, %v912
    %1045 = vmatpush.bf16.msra.mxu0 %v945
    %1046 = vmatpush.bf16.msra.mxu0 %v941
    %1047 = vmatpush.bf16.msra.mxu0 %v937
    %1048 = vmatpush.bf16.msra.mxu0 %v933
    %1049 = vmatpush.bf16.msra.mxu0 %v929
    %1050 = vmatpush.bf16.msra.mxu0 %v925
    %1051 = vmatpush.bf16.msra.mxu0 %v921
    %1052 = vmatpush.bf16.msra.mxu0 %v917
    %1053 = vmatmul.bf16.gmra.mxu0 %v660
    %v1054 = vpop.f32.mrf.mxu0
    %v1055 = vadd.f32 %v202, %v1054
    %v1056 = vpop.f32.mrf.mxu0
    %1057 = vdwg.mxu0
    %1058 = vmatpush.bf16.msra.mxu0 %v977
    %1059 = vmatpush.bf16.msra.mxu0 %v973
    %1060 = vmatpush.bf16.msra.mxu0 %v969
    %1061 = vmatpush.bf16.msra.mxu0 %v965
    %1062 = vmatpush.bf16.msra.mxu0 %v961
    %1063 = vmatpush.bf16.msra.mxu0 %v957
    %1064 = vmatpush.bf16.msra.mxu0 %v953
    %1065 = vmatpush.bf16.msra.mxu0 %v949
    %1066 = vmatmul.bf16.gmra.mxu0 %v413
    %v1067 = vpop.f32.mrf.mxu0
    %v1068 = vadd.f32 %v1055, %v1067
    %v1069 = vpop.f32.mrf.mxu0
    %1070 = vdwg.mxu0
    %1071 = vmatpush.bf16.msra.mxu0 %v946
    %1072 = vmatpush.bf16.msra.mxu0 %v942
    %1073 = vmatpush.bf16.msra.mxu0 %v938
    %1074 = vmatpush.bf16.msra.mxu0 %v934
    %1075 = vmatpush.bf16.msra.mxu0 %v930
    %1076 = vmatpush.bf16.msra.mxu0 %v926
    %1077 = vmatpush.bf16.msra.mxu0 %v922
    %1078 = vmatpush.bf16.msra.mxu0 %v918
    %1079 = vmatmul.bf16.gmra.mxu0 %v660
    %v1080 = vpop.f32.mrf.mxu0
    %v1081 = vadd.f32 %v203, %v1080
    %v1082 = vpop.f32.mrf.mxu0
    %1083 = vdwg.mxu0
    %1084 = vmatpush.bf16.msra.mxu0 %v978
    %1085 = vmatpush.bf16.msra.mxu0 %v974
    %1086 = vmatpush.bf16.msra.mxu0 %v970
    %1087 = vmatpush.bf16.msra.mxu0 %v966
    %1088 = vmatpush.bf16.msra.mxu0 %v962
    %1089 = vmatpush.bf16.msra.mxu0 %v958
    %1090 = vmatpush.bf16.msra.mxu0 %v954
    %1091 = vmatpush.bf16.msra.mxu0 %v950
    %1092 = vmatmul.bf16.gmra.mxu0 %v413
    %v1093 = vpop.f32.mrf.mxu0
    %v1094 = vadd.f32 %v1081, %v1093
    %v1095 = vpop.f32.mrf.mxu0
    %1096 = vdwg.mxu0
    %1097 = vmatpush.bf16.msra.mxu0 %v947
    %1098 = vmatpush.bf16.msra.mxu0 %v943
    %1099 = vmatpush.bf16.msra.mxu0 %v939
    %1100 = vmatpush.bf16.msra.mxu0 %v935
    %1101 = vmatpush.bf16.msra.mxu0 %v931
    %1102 = vmatpush.bf16.msra.mxu0 %v927
    %1103 = vmatpush.bf16.msra.mxu0 %v923
    %1104 = vmatpush.bf16.msra.mxu0 %v919
    %1105 = vmatmul.bf16.gmra.mxu0 %v660
    %v1106 = vpop.f32.mrf.mxu0
    %v1107 = vadd.f32 %v204, %v1106
    %v1108 = vpop.f32.mrf.mxu0
    %1109 = vdwg.mxu0
    %1110 = vmatpush.bf16.msra.mxu0 %v979
    %1111 = vmatpush.bf16.msra.mxu0 %v975
    %1112 = vmatpush.bf16.msra.mxu0 %v971
    %1113 = vmatpush.bf16.msra.mxu0 %v967
    %1114 = vmatpush.bf16.msra.mxu0 %v963
    %1115 = vmatpush.bf16.msra.mxu0 %v959
    %1116 = vmatpush.bf16.msra.mxu0 %v955
    %1117 = vmatpush.bf16.msra.mxu0 %v951
    %1118 = vmatmul.bf16.gmra.mxu0 %v413
    %v1119 = vpop.f32.mrf.mxu0
    %v1120 = vadd.f32 %v1107, %v1119
    %v1121 = vpop.f32.mrf.mxu0
    %1122 = vdwg.mxu0
    %1123 = vmatpush.bf16.msra.mxu0 %v948
    %1124 = vmatpush.bf16.msra.mxu0 %v944
    %1125 = vmatpush.bf16.msra.mxu0 %v940
    %1126 = vmatpush.bf16.msra.mxu0 %v936
    %1127 = vmatpush.bf16.msra.mxu0 %v932
    %1128 = vmatpush.bf16.msra.mxu0 %v928
    %1129 = vmatpush.bf16.msra.mxu0 %v924
    %1130 = vmatpush.bf16.msra.mxu0 %v920
    %1131 = vmatmul.bf16.gmra.mxu0 %v660
    %v1132 = vpop.f32.mrf.mxu0
    %v1133 = vadd.f32 %v205, %v1132
    %v1134 = vpop.f32.mrf.mxu0
    %1135 = vdwg.mxu0
    %1136 = vmatpush.bf16.msra.mxu0 %v980
    %1137 = vmatpush.bf16.msra.mxu0 %v976
    %1138 = vmatpush.bf16.msra.mxu0 %v972
    %1139 = vmatpush.bf16.msra.mxu0 %v968
    %1140 = vmatpush.bf16.msra.mxu0 %v964
    %1141 = vmatpush.bf16.msra.mxu0 %v960
    %1142 = vmatpush.bf16.msra.mxu0 %v956
    %1143 = vmatpush.bf16.msra.mxu0 %v952
    %1144 = vmatmul.bf16.gmra.mxu0 %v413
    %v1145 = vpop.f32.mrf.mxu0
    %v1146 = vadd.f32 %v1133, %v1145
    %v1147 = vpop.f32.mrf.mxu0
    %1148 = vdwg.mxu0
    %v1149 = vsub.f32 0.0, %v1068
    %v1150 = vmul.f32 %v1149, 1.442695
    %v1151 = vpow.pop %v1150
    %v1152 = vadd.f32 %v1151, 1.0
    %v1153 = vrcp.pop %v1152
    %v1154 = vmul.f32 %v1152, %v1153
    %v1155 = vsub.f32 1.0, %v1154
    %v1156 = vmul.f32 %v1153, %v1155
    %v1157 = vadd.f32 %v1153, %v1156
    %vm1158 = vweird.f32 %v1152
    %vm1159 = vweird.f32 %v1153
    %vm1160 = vmor %vm1158, %vm1159
    %v1161 = vsel %vm1160, %v1153, %v1157
    %v1162 = vand.u32 2147483647, %v1152
    %vm1163 = vcmp.eq.f32.partialorder %v1162, 8.507059e+37
    %v1164 = vand.u32 %v1152, 2147483648
    %v1165 = vor.u32 1.1754944e-38, %v1164
    %v1166 = vsel %vm1163, %v1165, %v1161
    %v1167 = vsub.f32 0.0, %v1094
    %v1168 = vmul.f32 %v1167, 1.442695
    %v1169 = vpow.pop %v1168
    %v1170 = vadd.f32 %v1169, 1.0
    %v1171 = vrcp.pop %v1170
    %v1172 = vmul.f32 %v1170, %v1171
    %v1173 = vsub.f32 1.0, %v1172
    %v1174 = vmul.f32 %v1171, %v1173
    %v1175 = vadd.f32 %v1171, %v1174
    %vm1176 = vweird.f32 %v1170
    %vm1177 = vweird.f32 %v1171
    %vm1178 = vmor %vm1176, %vm1177
    %v1179 = vsel %vm1178, %v1171, %v1175
    %v1180 = vand.u32 2147483647, %v1170
    %vm1181 = vcmp.eq.f32.partialorder %v1180, 8.507059e+37
    %v1182 = vand.u32 %v1170, 2147483648
    %v1183 = vor.u32 1.1754944e-38, %v1182
    %v1184 = vsel %vm1181, %v1183, %v1179
    %v1185 = vtanh.pop %v1120
    %v1186 = vsub.f32 0.0, %v1146
    %v1187 = vmul.f32 %v1186, 1.442695
    %v1188 = vpow.pop %v1187
    %v1189 = vadd.f32 %v1188, 1.0
    %v1190 = vrcp.pop %v1189
    %v1191 = vmul.f32 %v1189, %v1190
    %v1192 = vsub.f32 1.0, %v1191
    %v1193 = vmul.f32 %v1190, %v1192
    %v1194 = vadd.f32 %v1190, %v1193
    %vm1195 = vweird.f32 %v1189
    %vm1196 = vweird.f32 %v1190
    %vm1197 = vmor %vm1195, %vm1196
    %v1198 = vsel %vm1197, %v1190, %v1194
    %v1199 = vand.u32 2147483647, %v1189
    %vm1200 = vcmp.eq.f32.partialorder %v1199, 8.507059e+37
    %v1201 = vand.u32 %v1189, 2147483648
    %v1202 = vor.u32 1.1754944e-38, %v1201
    %v1203 = vsel %vm1200, %v1202, %v1198
    %v1204 = vmul.f32 %v1184, %v410
    %v1205 = vmul.f32 %v1166, %v1185
    %v1206 = vadd.f32 %v1204, %v1205
    %v1207 = vtanh.pop %v1206
    %v1208 = vmul.f32 %v1203, %v1207
    %v1209 = vpack.c.bf16 %v1208, %v1208
    %v1210 = vpack.c.bf16 %v656, %v656
    %v1211 = vld [vmem:[#allocation13] sm:$0xff]
    %v1212 = vld [vmem:[#allocation13 + $0x8] sm:$0xff]
    %v1213 = vld [vmem:[#allocation13 + $0x10] sm:$0xff]
    %v1214 = vld [vmem:[#allocation13 + $0x18] sm:$0xff]
    %v1215 = vld [vmem:[#allocation13 + $0x20] sm:$0xff]
    %v1216 = vld [vmem:[#allocation13 + $0x28] sm:$0xff]
    %v1217 = vld [vmem:[#allocation13 + $0x30] sm:$0xff]
    %v1218 = vld [vmem:[#allocation13 + $0x38] sm:$0xff]
    %v1219 = vld [vmem:[#allocation13 + $0x40] sm:$0xff]
    %v1220 = vld [vmem:[#allocation13 + $0x48] sm:$0xff]
    %v1221 = vld [vmem:[#allocation13 + $0x50] sm:$0xff]
    %v1222 = vld [vmem:[#allocation13 + $0x58] sm:$0xff]
    %v1223 = vld [vmem:[#allocation13 + $0x60] sm:$0xff]
    %v1224 = vld [vmem:[#allocation13 + $0x68] sm:$0xff]
    %v1225 = vld [vmem:[#allocation13 + $0x70] sm:$0xff]
    %v1226 = vld [vmem:[#allocation13 + $0x78] sm:$0xff]
    %v1227 = vld [vmem:[#allocation13 + $0x80] sm:$0xff]
    %v1228 = vld [vmem:[#allocation13 + $0x88] sm:$0xff]
    %v1229 = vld [vmem:[#allocation13 + $0x90] sm:$0xff]
    %v1230 = vld [vmem:[#allocation13 + $0x98] sm:$0xff]
    %v1231 = vld [vmem:[#allocation13 + $0xa0] sm:$0xff]
    %v1232 = vld [vmem:[#allocation13 + $0xa8] sm:$0xff]
    %v1233 = vld [vmem:[#allocation13 + $0xb0] sm:$0xff]
    %v1234 = vld [vmem:[#allocation13 + $0xb8] sm:$0xff]
    %v1235 = vld [vmem:[#allocation13 + $0xc0] sm:$0xff]
    %v1236 = vld [vmem:[#allocation13 + $0xc8] sm:$0xff]
    %v1237 = vld [vmem:[#allocation13 + $0xd0] sm:$0xff]
    %v1238 = vld [vmem:[#allocation13 + $0xd8] sm:$0xff]
    %v1239 = vld [vmem:[#allocation13 + $0xe0] sm:$0xff]
    %v1240 = vld [vmem:[#allocation13 + $0xe8] sm:$0xff]
    %v1241 = vld [vmem:[#allocation13 + $0xf0] sm:$0xff]
    %v1242 = vld [vmem:[#allocation13 + $0xf8] sm:$0xff]
    %v1243 = vld [vmem:[#allocation13 + $0x100] sm:$0xff]
    %v1244 = vld [vmem:[#allocation13 + $0x108] sm:$0xff]
    %v1245 = vld [vmem:[#allocation13 + $0x110] sm:$0xff]
    %v1246 = vld [vmem:[#allocation13 + $0x118] sm:$0xff]
    %v1247 = vld [vmem:[#allocation13 + $0x120] sm:$0xff]
    %v1248 = vld [vmem:[#allocation13 + $0x128] sm:$0xff]
    %v1249 = vld [vmem:[#allocation13 + $0x130] sm:$0xff]
    %v1250 = vld [vmem:[#allocation13 + $0x138] sm:$0xff]
    %v1251 = vld [vmem:[#allocation13 + $0x140] sm:$0xff]
    %v1252 = vld [vmem:[#allocation13 + $0x148] sm:$0xff]
    %v1253 = vld [vmem:[#allocation13 + $0x150] sm:$0xff]
    %v1254 = vld [vmem:[#allocation13 + $0x158] sm:$0xff]
    %v1255 = vld [vmem:[#allocation13 + $0x160] sm:$0xff]
    %v1256 = vld [vmem:[#allocation13 + $0x168] sm:$0xff]
    %v1257 = vld [vmem:[#allocation13 + $0x170] sm:$0xff]
    %v1258 = vld [vmem:[#allocation13 + $0x178] sm:$0xff]
    %v1259 = vld [vmem:[#allocation13 + $0x180] sm:$0xff]
    %v1260 = vld [vmem:[#allocation13 + $0x188] sm:$0xff]
    %v1261 = vld [vmem:[#allocation13 + $0x190] sm:$0xff]
    %v1262 = vld [vmem:[#allocation13 + $0x198] sm:$0xff]
    %v1263 = vld [vmem:[#allocation13 + $0x1a0] sm:$0xff]
    %v1264 = vld [vmem:[#allocation13 + $0x1a8] sm:$0xff]
    %v1265 = vld [vmem:[#allocation13 + $0x1b0] sm:$0xff]
    %v1266 = vld [vmem:[#allocation13 + $0x1b8] sm:$0xff]
    %v1267 = vld [vmem:[#allocation13 + $0x1c0] sm:$0xff]
    %v1268 = vld [vmem:[#allocation13 + $0x1c8] sm:$0xff]
    %v1269 = vld [vmem:[#allocation13 + $0x1d0] sm:$0xff]
    %v1270 = vld [vmem:[#allocation13 + $0x1d8] sm:$0xff]
    %v1271 = vld [vmem:[#allocation13 + $0x1e0] sm:$0xff]
    %v1272 = vld [vmem:[#allocation13 + $0x1e8] sm:$0xff]
    %v1273 = vld [vmem:[#allocation13 + $0x1f0] sm:$0xff]
    %v1274 = vld [vmem:[#allocation13 + $0x1f8] sm:$0xff]
    %v1339 = vunpack.c.l.b16 %v1211
    %v1340 = vunpack.c.h.b16 %v1211
    %v1341 = vunpack.c.l.b16 %v1212
    %v1342 = vunpack.c.h.b16 %v1212
    %v1343 = vunpack.c.l.b16 %v1213
    %v1344 = vunpack.c.h.b16 %v1213
    %v1345 = vunpack.c.l.b16 %v1214
    %v1346 = vunpack.c.h.b16 %v1214
    %v1347 = vunpack.c.l.b16 %v1215
    %v1348 = vunpack.c.h.b16 %v1215
    %v1349 = vunpack.c.l.b16 %v1216
    %v1350 = vunpack.c.h.b16 %v1216
    %v1351 = vunpack.c.l.b16 %v1217
    %v1352 = vunpack.c.h.b16 %v1217
    %v1353 = vunpack.c.l.b16 %v1218
    %v1354 = vunpack.c.h.b16 %v1218
    %v1355 = vunpack.c.l.b16 %v1219
    %v1356 = vunpack.c.h.b16 %v1219
    %v1357 = vunpack.c.l.b16 %v1220
    %v1358 = vunpack.c.h.b16 %v1220
    %v1359 = vunpack.c.l.b16 %v1221
    %v1360 = vunpack.c.h.b16 %v1221
    %v1361 = vunpack.c.l.b16 %v1222
    %v1362 = vunpack.c.h.b16 %v1222
    %v1363 = vunpack.c.l.b16 %v1223
    %v1364 = vunpack.c.h.b16 %v1223
    %v1365 = vunpack.c.l.b16 %v1224
    %v1366 = vunpack.c.h.b16 %v1224
    %v1367 = vunpack.c.l.b16 %v1225
    %v1368 = vunpack.c.h.b16 %v1225
    %v1369 = vunpack.c.l.b16 %v1226
    %v1370 = vunpack.c.h.b16 %v1226
    %v1371 = vunpack.c.l.b16 %v1227
    %v1372 = vunpack.c.h.b16 %v1227
    %v1373 = vunpack.c.l.b16 %v1228
    %v1374 = vunpack.c.h.b16 %v1228
    %v1375 = vunpack.c.l.b16 %v1229
    %v1376 = vunpack.c.h.b16 %v1229
    %v1377 = vunpack.c.l.b16 %v1230
    %v1378 = vunpack.c.h.b16 %v1230
    %v1379 = vunpack.c.l.b16 %v1231
    %v1380 = vunpack.c.h.b16 %v1231
    %v1381 = vunpack.c.l.b16 %v1232
    %v1382 = vunpack.c.h.b16 %v1232
    %v1383 = vunpack.c.l.b16 %v1233
    %v1384 = vunpack.c.h.b16 %v1233
    %v1385 = vunpack.c.l.b16 %v1234
    %v1386 = vunpack.c.h.b16 %v1234
    %v1387 = vunpack.c.l.b16 %v1235
    %v1388 = vunpack.c.h.b16 %v1235
    %v1389 = vunpack.c.l.b16 %v1236
    %v1390 = vunpack.c.h.b16 %v1236
    %v1391 = vunpack.c.l.b16 %v1237
    %v1392 = vunpack.c.h.b16 %v1237
    %v1393 = vunpack.c.l.b16 %v1238
    %v1394 = vunpack.c.h.b16 %v1238
    %v1395 = vunpack.c.l.b16 %v1239
    %v1396 = vunpack.c.h.b16 %v1239
    %v1397 = vunpack.c.l.b16 %v1240
    %v1398 = vunpack.c.h.b16 %v1240
    %v1399 = vunpack.c.l.b16 %v1241
    %v1400 = vunpack.c.h.b16 %v1241
    %v1401 = vunpack.c.l.b16 %v1242
    %v1402 = vunpack.c.h.b16 %v1242
    %v1403 = vunpack.c.l.b16 %v1243
    %v1404 = vunpack.c.h.b16 %v1243
    %v1405 = vunpack.c.l.b16 %v1244
    %v1406 = vunpack.c.h.b16 %v1244
    %v1407 = vunpack.c.l.b16 %v1245
    %v1408 = vunpack.c.h.b16 %v1245
    %v1409 = vunpack.c.l.b16 %v1246
    %v1410 = vunpack.c.h.b16 %v1246
    %v1411 = vunpack.c.l.b16 %v1247
    %v1412 = vunpack.c.h.b16 %v1247
    %v1413 = vunpack.c.l.b16 %v1248
    %v1414 = vunpack.c.h.b16 %v1248
    %v1415 = vunpack.c.l.b16 %v1249
    %v1416 = vunpack.c.h.b16 %v1249
    %v1417 = vunpack.c.l.b16 %v1250
    %v1418 = vunpack.c.h.b16 %v1250
    %v1419 = vunpack.c.l.b16 %v1251
    %v1420 = vunpack.c.h.b16 %v1251
    %v1421 = vunpack.c.l.b16 %v1252
    %v1422 = vunpack.c.h.b16 %v1252
    %v1423 = vunpack.c.l.b16 %v1253
    %v1424 = vunpack.c.h.b16 %v1253
    %v1425 = vunpack.c.l.b16 %v1254
    %v1426 = vunpack.c.h.b16 %v1254
    %v1427 = vunpack.c.l.b16 %v1255
    %v1428 = vunpack.c.h.b16 %v1255
    %v1429 = vunpack.c.l.b16 %v1256
    %v1430 = vunpack.c.h.b16 %v1256
    %v1431 = vunpack.c.l.b16 %v1257
    %v1432 = vunpack.c.h.b16 %v1257
    %v1433 = vunpack.c.l.b16 %v1258
    %v1434 = vunpack.c.h.b16 %v1258
    %v1435 = vunpack.c.l.b16 %v1259
    %v1436 = vunpack.c.h.b16 %v1259
    %v1437 = vunpack.c.l.b16 %v1260
    %v1438 = vunpack.c.h.b16 %v1260
    %v1439 = vunpack.c.l.b16 %v1261
    %v1440 = vunpack.c.h.b16 %v1261
    %v1441 = vunpack.c.l.b16 %v1262
    %v1442 = vunpack.c.h.b16 %v1262
    %v1443 = vunpack.c.l.b16 %v1263
    %v1444 = vunpack.c.h.b16 %v1263
    %v1445 = vunpack.c.l.b16 %v1264
    %v1446 = vunpack.c.h.b16 %v1264
    %v1447 = vunpack.c.l.b16 %v1265
    %v1448 = vunpack.c.h.b16 %v1265
    %v1449 = vunpack.c.l.b16 %v1266
    %v1450 = vunpack.c.h.b16 %v1266
    %v1451 = vunpack.c.l.b16 %v1267
    %v1452 = vunpack.c.h.b16 %v1267
    %v1453 = vunpack.c.l.b16 %v1268
    %v1454 = vunpack.c.h.b16 %v1268
    %v1455 = vunpack.c.l.b16 %v1269
    %v1456 = vunpack.c.h.b16 %v1269
    %v1457 = vunpack.c.l.b16 %v1270
    %v1458 = vunpack.c.h.b16 %v1270
    %v1459 = vunpack.c.l.b16 %v1271
    %v1460 = vunpack.c.h.b16 %v1271
    %v1461 = vunpack.c.l.b16 %v1272
    %v1462 = vunpack.c.h.b16 %v1272
    %v1463 = vunpack.c.l.b16 %v1273
    %v1464 = vunpack.c.h.b16 %v1273
    %v1465 = vunpack.c.l.b16 %v1274
    %v1466 = vunpack.c.h.b16 %v1274
    %v1467 = vpack.c.b16 %v1343, %v1339
    %v1468 = vpack.c.b16 %v1344, %v1340
    %v1469 = vpack.c.b16 %v1345, %v1341
    %v1470 = vpack.c.b16 %v1346, %v1342
    %v1471 = vpack.c.b16 %v1351, %v1347
    %v1472 = vpack.c.b16 %v1352, %v1348
    %v1473 = vpack.c.b16 %v1353, %v1349
    %v1474 = vpack.c.b16 %v1354, %v1350
    %v1475 = vpack.c.b16 %v1359, %v1355
    %v1476 = vpack.c.b16 %v1360, %v1356
    %v1477 = vpack.c.b16 %v1361, %v1357
    %v1478 = vpack.c.b16 %v1362, %v1358
    %v1479 = vpack.c.b16 %v1367, %v1363
    %v1480 = vpack.c.b16 %v1368, %v1364
    %v1481 = vpack.c.b16 %v1369, %v1365
    %v1482 = vpack.c.b16 %v1370, %v1366
    %v1483 = vpack.c.b16 %v1375, %v1371
    %v1484 = vpack.c.b16 %v1376, %v1372
    %v1485 = vpack.c.b16 %v1377, %v1373
    %v1486 = vpack.c.b16 %v1378, %v1374
    %v1487 = vpack.c.b16 %v1383, %v1379
    %v1488 = vpack.c.b16 %v1384, %v1380
    %v1489 = vpack.c.b16 %v1385, %v1381
    %v1490 = vpack.c.b16 %v1386, %v1382
    %v1491 = vpack.c.b16 %v1391, %v1387
    %v1492 = vpack.c.b16 %v1392, %v1388
    %v1493 = vpack.c.b16 %v1393, %v1389
    %v1494 = vpack.c.b16 %v1394, %v1390
    %v1495 = vpack.c.b16 %v1399, %v1395
    %v1496 = vpack.c.b16 %v1400, %v1396
    %v1497 = vpack.c.b16 %v1401, %v1397
    %v1498 = vpack.c.b16 %v1402, %v1398
    %v1499 = vpack.c.b16 %v1407, %v1403
    %v1500 = vpack.c.b16 %v1408, %v1404
    %v1501 = vpack.c.b16 %v1409, %v1405
    %v1502 = vpack.c.b16 %v1410, %v1406
    %v1503 = vpack.c.b16 %v1415, %v1411
    %v1504 = vpack.c.b16 %v1416, %v1412
    %v1505 = vpack.c.b16 %v1417, %v1413
    %v1506 = vpack.c.b16 %v1418, %v1414
    %v1507 = vpack.c.b16 %v1423, %v1419
    %v1508 = vpack.c.b16 %v1424, %v1420
    %v1509 = vpack.c.b16 %v1425, %v1421
    %v1510 = vpack.c.b16 %v1426, %v1422
    %v1511 = vpack.c.b16 %v1431, %v1427
    %v1512 = vpack.c.b16 %v1432, %v1428
    %v1513 = vpack.c.b16 %v1433, %v1429
    %v1514 = vpack.c.b16 %v1434, %v1430
    %v1515 = vpack.c.b16 %v1439, %v1435
    %v1516 = vpack.c.b16 %v1440, %v1436
    %v1517 = vpack.c.b16 %v1441, %v1437
    %v1518 = vpack.c.b16 %v1442, %v1438
    %v1519 = vpack.c.b16 %v1447, %v1443
    %v1520 = vpack.c.b16 %v1448, %v1444
    %v1521 = vpack.c.b16 %v1449, %v1445
    %v1522 = vpack.c.b16 %v1450, %v1446
    %v1523 = vpack.c.b16 %v1455, %v1451
    %v1524 = vpack.c.b16 %v1456, %v1452
    %v1525 = vpack.c.b16 %v1457, %v1453
    %v1526 = vpack.c.b16 %v1458, %v1454
    %v1527 = vpack.c.b16 %v1463, %v1459
    %v1528 = vpack.c.b16 %v1464, %v1460
    %v1529 = vpack.c.b16 %v1465, %v1461
    %v1530 = vpack.c.b16 %v1466, %v1462
    %1595 = vmatpush.bf16.msra.mxu0 %v1495
    %1596 = vmatpush.bf16.msra.mxu0 %v1491
    %1597 = vmatpush.bf16.msra.mxu0 %v1487
    %1598 = vmatpush.bf16.msra.mxu0 %v1483
    %1599 = vmatpush.bf16.msra.mxu0 %v1479
    %1600 = vmatpush.bf16.msra.mxu0 %v1475
    %1601 = vmatpush.bf16.msra.mxu0 %v1471
    %1602 = vmatpush.bf16.msra.mxu0 %v1467
    %1603 = vmatmul.bf16.gmra.mxu0 %v1209
    %v1604 = vpop.f32.mrf.mxu0
    %v1605 = vadd.f32 %v446, %v1604
    %v1606 = vpop.f32.mrf.mxu0
    %1607 = vdwg.mxu0
    %1608 = vmatpush.bf16.msra.mxu0 %v1527
    %1609 = vmatpush.bf16.msra.mxu0 %v1523
    %1610 = vmatpush.bf16.msra.mxu0 %v1519
    %1611 = vmatpush.bf16.msra.mxu0 %v1515
    %1612 = vmatpush.bf16.msra.mxu0 %v1511
    %1613 = vmatpush.bf16.msra.mxu0 %v1507
    %1614 = vmatpush.bf16.msra.mxu0 %v1503
    %1615 = vmatpush.bf16.msra.mxu0 %v1499
    %1616 = vmatmul.bf16.gmra.mxu0 %v1210
    %v1617 = vpop.f32.mrf.mxu0
    %v1618 = vadd.f32 %v1605, %v1617
    %v1619 = vpop.f32.mrf.mxu0
    %1620 = vdwg.mxu0
    %1621 = vmatpush.bf16.msra.mxu0 %v1496
    %1622 = vmatpush.bf16.msra.mxu0 %v1492
    %1623 = vmatpush.bf16.msra.mxu0 %v1488
    %1624 = vmatpush.bf16.msra.mxu0 %v1484
    %1625 = vmatpush.bf16.msra.mxu0 %v1480
    %1626 = vmatpush.bf16.msra.mxu0 %v1476
    %1627 = vmatpush.bf16.msra.mxu0 %v1472
    %1628 = vmatpush.bf16.msra.mxu0 %v1468
    %1629 = vmatmul.bf16.gmra.mxu0 %v1209
    %v1630 = vpop.f32.mrf.mxu0
    %v1631 = vadd.f32 %v447, %v1630
    %v1632 = vpop.f32.mrf.mxu0
    %1633 = vdwg.mxu0
    %1634 = vmatpush.bf16.msra.mxu0 %v1528
    %1635 = vmatpush.bf16.msra.mxu0 %v1524
    %1636 = vmatpush.bf16.msra.mxu0 %v1520
    %1637 = vmatpush.bf16.msra.mxu0 %v1516
    %1638 = vmatpush.bf16.msra.mxu0 %v1512
    %1639 = vmatpush.bf16.msra.mxu0 %v1508
    %1640 = vmatpush.bf16.msra.mxu0 %v1504
    %1641 = vmatpush.bf16.msra.mxu0 %v1500
    %1642 = vmatmul.bf16.gmra.mxu0 %v1210
    %v1643 = vpop.f32.mrf.mxu0
    %v1644 = vadd.f32 %v1631, %v1643
    %v1645 = vpop.f32.mrf.mxu0
    %1646 = vdwg.mxu0
    %1647 = vmatpush.bf16.msra.mxu0 %v1497
    %1648 = vmatpush.bf16.msra.mxu0 %v1493
    %1649 = vmatpush.bf16.msra.mxu0 %v1489
    %1650 = vmatpush.bf16.msra.mxu0 %v1485
    %1651 = vmatpush.bf16.msra.mxu0 %v1481
    %1652 = vmatpush.bf16.msra.mxu0 %v1477
    %1653 = vmatpush.bf16.msra.mxu0 %v1473
    %1654 = vmatpush.bf16.msra.mxu0 %v1469
    %1655 = vmatmul.bf16.gmra.mxu0 %v1209
    %v1656 = vpop.f32.mrf.mxu0
    %v1657 = vadd.f32 %v448, %v1656
    %v1658 = vpop.f32.mrf.mxu0
    %1659 = vdwg.mxu0
    %1660 = vmatpush.bf16.msra.mxu0 %v1529
    %1661 = vmatpush.bf16.msra.mxu0 %v1525
    %1662 = vmatpush.bf16.msra.mxu0 %v1521
    %1663 = vmatpush.bf16.msra.mxu0 %v1517
    %1664 = vmatpush.bf16.msra.mxu0 %v1513
    %1665 = vmatpush.bf16.msra.mxu0 %v1509
    %1666 = vmatpush.bf16.msra.mxu0 %v1505
    %1667 = vmatpush.bf16.msra.mxu0 %v1501
    %1668 = vmatmul.bf16.gmra.mxu0 %v1210
    %v1669 = vpop.f32.mrf.mxu0
    %v1670 = vadd.f32 %v1657, %v1669
    %v1671 = vpop.f32.mrf.mxu0
    %1672 = vdwg.mxu0
    %1673 = vmatpush.bf16.msra.mxu0 %v1498
    %1674 = vmatpush.bf16.msra.mxu0 %v1494
    %1675 = vmatpush.bf16.msra.mxu0 %v1490
    %1676 = vmatpush.bf16.msra.mxu0 %v1486
    %1677 = vmatpush.bf16.msra.mxu0 %v1482
    %1678 = vmatpush.bf16.msra.mxu0 %v1478
    %1679 = vmatpush.bf16.msra.mxu0 %v1474
    %1680 = vmatpush.bf16.msra.mxu0 %v1470
    %1681 = vmatmul.bf16.gmra.mxu0 %v1209
    %v1682 = vpop.f32.mrf.mxu0
    %v1683 = vadd.f32 %v449, %v1682
    %v1684 = vpop.f32.mrf.mxu0
    %1685 = vdwg.mxu0
    %1686 = vmatpush.bf16.msra.mxu0 %v1530
    %1687 = vmatpush.bf16.msra.mxu0 %v1526
    %1688 = vmatpush.bf16.msra.mxu0 %v1522
    %1689 = vmatpush.bf16.msra.mxu0 %v1518
    %1690 = vmatpush.bf16.msra.mxu0 %v1514
    %1691 = vmatpush.bf16.msra.mxu0 %v1510
    %1692 = vmatpush.bf16.msra.mxu0 %v1506
    %1693 = vmatpush.bf16.msra.mxu0 %v1502
    %1694 = vmatmul.bf16.gmra.mxu0 %v1210
    %v1695 = vpop.f32.mrf.mxu0
    %v1696 = vadd.f32 %v1683, %v1695
    %v1697 = vpop.f32.mrf.mxu0
    %1698 = vdwg.mxu0
    %v1699 = vsub.f32 0.0, %v1618
    %v1700 = vmul.f32 %v1699, 1.442695
    %v1701 = vpow.pop %v1700
    %v1702 = vadd.f32 %v1701, 1.0
    %v1703 = vrcp.pop %v1702
    %v1704 = vmul.f32 %v1702, %v1703
    %v1705 = vsub.f32 1.0, %v1704
    %v1706 = vmul.f32 %v1703, %v1705
    %v1707 = vadd.f32 %v1703, %v1706
    %vm1708 = vweird.f32 %v1702
    %vm1709 = vweird.f32 %v1703
    %vm1710 = vmor %vm1708, %vm1709
    %v1711 = vsel %vm1710, %v1703, %v1707
    %v1712 = vand.u32 2147483647, %v1702
    %vm1713 = vcmp.eq.f32.partialorder %v1712, 8.507059e+37
    %v1714 = vand.u32 %v1702, 2147483648
    %v1715 = vor.u32 1.1754944e-38, %v1714
    %v1716 = vsel %vm1713, %v1715, %v1711
    %v1717 = vsub.f32 0.0, %v1644
    %v1718 = vmul.f32 %v1717, 1.442695
    %v1719 = vpow.pop %v1718
    %v1720 = vadd.f32 %v1719, 1.0
    %v1721 = vrcp.pop %v1720
    %v1722 = vmul.f32 %v1720, %v1721
    %v1723 = vsub.f32 1.0, %v1722
    %v1724 = vmul.f32 %v1721, %v1723
    %v1725 = vadd.f32 %v1721, %v1724
    %vm1726 = vweird.f32 %v1720
    %vm1727 = vweird.f32 %v1721
    %vm1728 = vmor %vm1726, %vm1727
    %v1729 = vsel %vm1728, %v1721, %v1725
    %v1730 = vand.u32 2147483647, %v1720
    %vm1731 = vcmp.eq.f32.partialorder %v1730, 8.507059e+37
    %v1732 = vand.u32 %v1720, 2147483648
    %v1733 = vor.u32 1.1754944e-38, %v1732
    %v1734 = vsel %vm1731, %v1733, %v1729
    %v1735 = vtanh.pop %v1670
    %v1736 = vsub.f32 0.0, %v1696
    %v1737 = vmul.f32 %v1736, 1.442695
    %v1738 = vpow.pop %v1737
    %v1739 = vadd.f32 %v1738, 1.0
    %v1740 = vrcp.pop %v1739
    %v1741 = vmul.f32 %v1739, %v1740
    %v1742 = vsub.f32 1.0, %v1741
    %v1743 = vmul.f32 %v1740, %v1742
    %v1744 = vadd.f32 %v1740, %v1743
    %vm1745 = vweird.f32 %v1739
    %vm1746 = vweird.f32 %v1740
    %vm1747 = vmor %vm1745, %vm1746
    %v1748 = vsel %vm1747, %v1740, %v1744
    %v1749 = vand.u32 2147483647, %v1739
    %vm1750 = vcmp.eq.f32.partialorder %v1749, 8.507059e+37
    %v1751 = vand.u32 %v1739, 2147483648
    %v1752 = vor.u32 1.1754944e-38, %v1751
    %v1753 = vsel %vm1750, %v1752, %v1748
    %v1754 = vmul.f32 %v1734, %v654
    %v1755 = vmul.f32 %v1716, %v1735
    %v1756 = vadd.f32 %v1754, %v1755
    %v1757 = vtanh.pop %v1756
    %v1758 = vmul.f32 %v1753, %v1757
    %v1759 = vpack.c.bf16 %v1758, %v1758
    %v1760 = vld [vmem:[#allocation16] sm:$0xf]
    %v1761 = vld [vmem:[#allocation16 + $0x4] sm:$0xf]
    %v1762 = vld [vmem:[#allocation16 + $0x8] sm:$0xf]
    %v1763 = vld [vmem:[#allocation16 + $0xc] sm:$0xf]
    %v1764 = vld [vmem:[#allocation16 + $0x10] sm:$0xf]
    %v1765 = vld [vmem:[#allocation16 + $0x14] sm:$0xf]
    %v1766 = vld [vmem:[#allocation16 + $0x18] sm:$0xf]
    %v1767 = vld [vmem:[#allocation16 + $0x1c] sm:$0xf]
    %v1768 = vld [vmem:[#allocation16 + $0x20] sm:$0xf]
    %v1769 = vld [vmem:[#allocation16 + $0x24] sm:$0xf]
    %v1770 = vld [vmem:[#allocation16 + $0x28] sm:$0xf]
    %v1771 = vld [vmem:[#allocation16 + $0x2c] sm:$0xf]
    %v1772 = vld [vmem:[#allocation16 + $0x30] sm:$0xf]
    %v1773 = vld [vmem:[#allocation16 + $0x34] sm:$0xf]
    %v1774 = vld [vmem:[#allocation16 + $0x38] sm:$0xf]
    %v1775 = vld [vmem:[#allocation16 + $0x3c] sm:$0xf]
    %v1776 = vld [vmem:[%s9] sm:$0xff]
    %v1793 = vunpack.c.l.b16 %v1760
    %v1794 = vunpack.c.l.b16 %v1761
    %v1795 = vunpack.c.l.b16 %v1762
    %v1796 = vunpack.c.l.b16 %v1763
    %v1797 = vunpack.c.l.b16 %v1764
    %v1798 = vunpack.c.l.b16 %v1765
    %v1799 = vunpack.c.l.b16 %v1766
    %v1800 = vunpack.c.l.b16 %v1767
    %v1801 = vunpack.c.l.b16 %v1768
    %v1802 = vunpack.c.l.b16 %v1769
    %v1803 = vunpack.c.l.b16 %v1770
    %v1804 = vunpack.c.l.b16 %v1771
    %v1805 = vunpack.c.l.b16 %v1772
    %v1806 = vunpack.c.l.b16 %v1773
    %v1807 = vunpack.c.l.b16 %v1774
    %v1808 = vunpack.c.l.b16 %v1775
    %v1809 = vpack.c.b16 %v1794, %v1793
    %v1810 = vpack.c.b16 %v1796, %v1795
    %v1811 = vpack.c.b16 %v1798, %v1797
    %v1812 = vpack.c.b16 %v1800, %v1799
    %v1813 = vpack.c.b16 %v1802, %v1801
    %v1814 = vpack.c.b16 %v1804, %v1803
    %v1815 = vpack.c.b16 %v1806, %v1805
    %v1816 = vpack.c.b16 %v1808, %v1807
    %1825 = vmatpush.bf16.msra.mxu0 %v1816
    %1826 = vmatpush.bf16.msra.mxu0 %v1815
    %1827 = vmatpush.bf16.msra.mxu0 %v1814
    %1828 = vmatpush.bf16.msra.mxu0 %v1813
    %1829 = vmatpush.bf16.msra.mxu0 %v1812
    %1830 = vmatpush.bf16.msra.mxu0 %v1811
    %1831 = vmatpush.bf16.msra.mxu0 %v1810
    %1832 = vmatpush.bf16.msra.mxu0 %v1809
    %1833 = vmatmul.bf16.gmra.mxu0 %v1759
    %v1834 = vpop.f32.mrf.mxu0
    %v1835 = vadd.f32 %v1776, %v1834
    %v1836 = vpop.f32.mrf.mxu0
    %1837 = vdwg.mxu0
    %1838 = vst [vmem:[#allocation18] sm:$0xff] %v1835
    %s1839 = scalar_lea.vmem [#allocation7], 8
    %v1840 = vld [vmem:[%s1839] sm:$0xff]
    %1841 = vmax.xlane.f32.xlu0 %v1835
    %v1842 = vpop.xlane.xlu0 %1841
    %vm1843 = vcmp.eq.f32.partialorder %v1835, %v1842
    %v1844 = vsel %vm1843, %v658, 128
    %v1845 = vand.u32 %v1844, 65535
    %v1846 = vshra.s32 %v1844, 16
    %v1847 = vcvt.s32.f32 %v1845
    %v1848 = vcvt.s32.f32 %v1846
    %1849 = vmin.xlane.f32.xlu0 %v1848
    %v1850 = vpop.xlane.xlu0 %1849
    %vm1851 = vcmp.eq.f32.partialorder %v1848, %v1850
    %v1852 = vsel %vm1851, %v1847, inf
    %1853 = vmin.xlane.f32.xlu0 %v1852
    %v1854 = vpop.xlane.xlu0 %1853
    %v1855 = vcvt.f32.s32 %v1854
    %v1856 = vcvt.f32.s32 %v1850
    %v1857 = vshll.u32 %v1856, 16
    %v1858 = vadd.s32 %v1857, %v1855
    %vm1859 = vcmp.eq.s32.totalorder %v658, %v1858
    %v1860 = vsel %vm1859, 1, 0
    %v1861 = vcvt.s32.f32 %v1860
    %v1862 = vpack.c.bf16 %v1861, %v1861
    %v1863 = vld [vmem:[#allocation9] sm:$0xf]
    %v1864 = vld [vmem:[#allocation9 + $0x4] sm:$0xf]
    %v1865 = vld [vmem:[#allocation9 + $0x8] sm:$0xf]
    %v1866 = vld [vmem:[#allocation9 + $0xc] sm:$0xf]
    %v1867 = vld [vmem:[#allocation9 + $0x10] sm:$0xf]
    %v1868 = vld [vmem:[#allocation9 + $0x14] sm:$0xf]
    %v1869 = vld [vmem:[#allocation9 + $0x18] sm:$0xf]
    %v1870 = vld [vmem:[#allocation9 + $0x1c] sm:$0xf]
    %v1871 = vld [vmem:[#allocation9 + $0x20] sm:$0xf]
    %v1872 = vld [vmem:[#allocation9 + $0x24] sm:$0xf]
    %v1873 = vld [vmem:[#allocation9 + $0x28] sm:$0xf]
    %v1874 = vld [vmem:[#allocation9 + $0x2c] sm:$0xf]
    %v1875 = vld [vmem:[#allocation9 + $0x30] sm:$0xf]
    %v1876 = vld [vmem:[#allocation9 + $0x34] sm:$0xf]
    %v1877 = vld [vmem:[#allocation9 + $0x38] sm:$0xf]
    %v1878 = vld [vmem:[#allocation9 + $0x3c] sm:$0xf]
    %v1895 = vunpack.c.l.b16 %v1863
    %v1896 = vunpack.c.l.b16 %v1864
    %v1897 = vunpack.c.l.b16 %v1865
    %v1898 = vunpack.c.l.b16 %v1866
    %v1899 = vunpack.c.l.b16 %v1867
    %v1900 = vunpack.c.l.b16 %v1868
    %v1901 = vunpack.c.l.b16 %v1869
    %v1902 = vunpack.c.l.b16 %v1870
    %v1903 = vunpack.c.l.b16 %v1871
    %v1904 = vunpack.c.l.b16 %v1872
    %v1905 = vunpack.c.l.b16 %v1873
    %v1906 = vunpack.c.l.b16 %v1874
    %v1907 = vunpack.c.l.b16 %v1875
    %v1908 = vunpack.c.l.b16 %v1876
    %v1909 = vunpack.c.l.b16 %v1877
    %v1910 = vunpack.c.l.b16 %v1878
    %v1911 = vpack.c.b16 %v1896, %v1895
    %v1912 = vpack.c.b16 %v1898, %v1897
    %v1913 = vpack.c.b16 %v1900, %v1899
    %v1914 = vpack.c.b16 %v1902, %v1901
    %v1915 = vpack.c.b16 %v1904, %v1903
    %v1916 = vpack.c.b16 %v1906, %v1905
    %v1917 = vpack.c.b16 %v1908, %v1907
    %v1918 = vpack.c.b16 %v1910, %v1909
    %1927 = vmatpush.bf16.msra.mxu0 %v1918
    %1928 = vmatpush.bf16.msra.mxu0 %v1917
    %1929 = vmatpush.bf16.msra.mxu0 %v1916
    %1930 = vmatpush.bf16.msra.mxu0 %v1915
    %1931 = vmatpush.bf16.msra.mxu0 %v1914
    %1932 = vmatpush.bf16.msra.mxu0 %v1913
    %1933 = vmatpush.bf16.msra.mxu0 %v1912
    %1934 = vmatpush.bf16.msra.mxu0 %v1911
    %1935 = vmatmul.bf16.gmra.mxu0 %v1862
    %v1936 = vpop.f32.mrf.mxu0
    %v1937 = vadd.f32 0.0, %v1936
    %v1938 = vpop.f32.mrf.mxu0
    %1939 = vdwg.mxu0
    %s1940 = sld [smem:[#allocation2]]
    %s1941 = scvt.s32.f32 %s1940
    %v1942 = vstv %s1941
    %v1943 = vmul.f32 %v1942, %v1840
    %s1944 = ssub.f32 1.0, %s1941
    %v1945 = vstv %s1944
    %v1946 = vmul.f32 %v1945, %v1937
    %v1947 = vadd.f32 %v1943, %v1946
    %v1948 = vpack.c.bf16 %v1947, %v1947
    %v1949 = vld [vmem:[#allocation10] sm:$0xff]
    %v1950 = vld [vmem:[#allocation10 + $0x8] sm:$0xff]
    %v1951 = vld [vmem:[#allocation10 + $0x10] sm:$0xff]
    %v1952 = vld [vmem:[#allocation10 + $0x18] sm:$0xff]
    %v1953 = vld [vmem:[#allocation10 + $0x20] sm:$0xff]
    %v1954 = vld [vmem:[#allocation10 + $0x28] sm:$0xff]
    %v1955 = vld [vmem:[#allocation10 + $0x30] sm:$0xff]
    %v1956 = vld [vmem:[#allocation10 + $0x38] sm:$0xff]
    %v1957 = vld [vmem:[#allocation10 + $0x40] sm:$0xff]
    %v1958 = vld [vmem:[#allocation10 + $0x48] sm:$0xff]
    %v1959 = vld [vmem:[#allocation10 + $0x50] sm:$0xff]
    %v1960 = vld [vmem:[#allocation10 + $0x58] sm:$0xff]
    %v1961 = vld [vmem:[#allocation10 + $0x60] sm:$0xff]
    %v1962 = vld [vmem:[#allocation10 + $0x68] sm:$0xff]
    %v1963 = vld [vmem:[#allocation10 + $0x70] sm:$0xff]
    %v1964 = vld [vmem:[#allocation10 + $0x78] sm:$0xff]
    %v1965 = vld [vmem:[#allocation10 + $0x80] sm:$0xff]
    %v1966 = vld [vmem:[#allocation10 + $0x88] sm:$0xff]
    %v1967 = vld [vmem:[#allocation10 + $0x90] sm:$0xff]
    %v1968 = vld [vmem:[#allocation10 + $0x98] sm:$0xff]
    %v1969 = vld [vmem:[#allocation10 + $0xa0] sm:$0xff]
    %v1970 = vld [vmem:[#allocation10 + $0xa8] sm:$0xff]
    %v1971 = vld [vmem:[#allocation10 + $0xb0] sm:$0xff]
    %v1972 = vld [vmem:[#allocation10 + $0xb8] sm:$0xff]
    %v1973 = vld [vmem:[#allocation10 + $0xc0] sm:$0xff]
    %v1974 = vld [vmem:[#allocation10 + $0xc8] sm:$0xff]
    %v1975 = vld [vmem:[#allocation10 + $0xd0] sm:$0xff]
    %v1976 = vld [vmem:[#allocation10 + $0xd8] sm:$0xff]
    %v1977 = vld [vmem:[#allocation10 + $0xe0] sm:$0xff]
    %v1978 = vld [vmem:[#allocation10 + $0xe8] sm:$0xff]
    %v1979 = vld [vmem:[#allocation10 + $0xf0] sm:$0xff]
    %v1980 = vld [vmem:[#allocation10 + $0xf8] sm:$0xff]
    %v1981 = vld [vmem:[#allocation10 + $0x100] sm:$0xff]
    %v1982 = vld [vmem:[#allocation10 + $0x108] sm:$0xff]
    %v1983 = vld [vmem:[#allocation10 + $0x110] sm:$0xff]
    %v1984 = vld [vmem:[#allocation10 + $0x118] sm:$0xff]
    %v1985 = vld [vmem:[#allocation10 + $0x120] sm:$0xff]
    %v1986 = vld [vmem:[#allocation10 + $0x128] sm:$0xff]
    %v1987 = vld [vmem:[#allocation10 + $0x130] sm:$0xff]
    %v1988 = vld [vmem:[#allocation10 + $0x138] sm:$0xff]
    %v1989 = vld [vmem:[#allocation10 + $0x140] sm:$0xff]
    %v1990 = vld [vmem:[#allocation10 + $0x148] sm:$0xff]
    %v1991 = vld [vmem:[#allocation10 + $0x150] sm:$0xff]
    %v1992 = vld [vmem:[#allocation10 + $0x158] sm:$0xff]
    %v1993 = vld [vmem:[#allocation10 + $0x160] sm:$0xff]
    %v1994 = vld [vmem:[#allocation10 + $0x168] sm:$0xff]
    %v1995 = vld [vmem:[#allocation10 + $0x170] sm:$0xff]
    %v1996 = vld [vmem:[#allocation10 + $0x178] sm:$0xff]
    %v1997 = vld [vmem:[#allocation10 + $0x180] sm:$0xff]
    %v1998 = vld [vmem:[#allocation10 + $0x188] sm:$0xff]
    %v1999 = vld [vmem:[#allocation10 + $0x190] sm:$0xff]
    %v2000 = vld [vmem:[#allocation10 + $0x198] sm:$0xff]
    %v2001 = vld [vmem:[#allocation10 + $0x1a0] sm:$0xff]
    %v2002 = vld [vmem:[#allocation10 + $0x1a8] sm:$0xff]
    %v2003 = vld [vmem:[#allocation10 + $0x1b0] sm:$0xff]
    %v2004 = vld [vmem:[#allocation10 + $0x1b8] sm:$0xff]
    %v2005 = vld [vmem:[#allocation10 + $0x1c0] sm:$0xff]
    %v2006 = vld [vmem:[#allocation10 + $0x1c8] sm:$0xff]
    %v2007 = vld [vmem:[#allocation10 + $0x1d0] sm:$0xff]
    %v2008 = vld [vmem:[#allocation10 + $0x1d8] sm:$0xff]
    %v2009 = vld [vmem:[#allocation10 + $0x1e0] sm:$0xff]
    %v2010 = vld [vmem:[#allocation10 + $0x1e8] sm:$0xff]
    %v2011 = vld [vmem:[#allocation10 + $0x1f0] sm:$0xff]
    %v2012 = vld [vmem:[#allocation10 + $0x1f8] sm:$0xff]
    %v2013 = vld [vmem:[#allocation12] sm:$0xff]
    %v2014 = vld [vmem:[#allocation12 + $0x8] sm:$0xff]
    %v2015 = vld [vmem:[#allocation12 + $0x10] sm:$0xff]
    %v2016 = vld [vmem:[#allocation12 + $0x18] sm:$0xff]
    %v2081 = vunpack.c.l.b16 %v1949
    %v2082 = vunpack.c.h.b16 %v1949
    %v2083 = vunpack.c.l.b16 %v1950
    %v2084 = vunpack.c.h.b16 %v1950
    %v2085 = vunpack.c.l.b16 %v1951
    %v2086 = vunpack.c.h.b16 %v1951
    %v2087 = vunpack.c.l.b16 %v1952
    %v2088 = vunpack.c.h.b16 %v1952
    %v2089 = vunpack.c.l.b16 %v1953
    %v2090 = vunpack.c.h.b16 %v1953
    %v2091 = vunpack.c.l.b16 %v1954
    %v2092 = vunpack.c.h.b16 %v1954
    %v2093 = vunpack.c.l.b16 %v1955
    %v2094 = vunpack.c.h.b16 %v1955
    %v2095 = vunpack.c.l.b16 %v1956
    %v2096 = vunpack.c.h.b16 %v1956
    %v2097 = vunpack.c.l.b16 %v1957
    %v2098 = vunpack.c.h.b16 %v1957
    %v2099 = vunpack.c.l.b16 %v1958
    %v2100 = vunpack.c.h.b16 %v1958
    %v2101 = vunpack.c.l.b16 %v1959
    %v2102 = vunpack.c.h.b16 %v1959
    %v2103 = vunpack.c.l.b16 %v1960
    %v2104 = vunpack.c.h.b16 %v1960
    %v2105 = vunpack.c.l.b16 %v1961
    %v2106 = vunpack.c.h.b16 %v1961
    %v2107 = vunpack.c.l.b16 %v1962
    %v2108 = vunpack.c.h.b16 %v1962
    %v2109 = vunpack.c.l.b16 %v1963
    %v2110 = vunpack.c.h.b16 %v1963
    %v2111 = vunpack.c.l.b16 %v1964
    %v2112 = vunpack.c.h.b16 %v1964
    %v2113 = vunpack.c.l.b16 %v1965
    %v2114 = vunpack.c.h.b16 %v1965
    %v2115 = vunpack.c.l.b16 %v1966
    %v2116 = vunpack.c.h.b16 %v1966
    %v2117 = vunpack.c.l.b16 %v1967
    %v2118 = vunpack.c.h.b16 %v1967
    %v2119 = vunpack.c.l.b16 %v1968
    %v2120 = vunpack.c.h.b16 %v1968
    %v2121 = vunpack.c.l.b16 %v1969
    %v2122 = vunpack.c.h.b16 %v1969
    %v2123 = vunpack.c.l.b16 %v1970
    %v2124 = vunpack.c.h.b16 %v1970
    %v2125 = vunpack.c.l.b16 %v1971
    %v2126 = vunpack.c.h.b16 %v1971
    %v2127 = vunpack.c.l.b16 %v1972
    %v2128 = vunpack.c.h.b16 %v1972
    %v2129 = vunpack.c.l.b16 %v1973
    %v2130 = vunpack.c.h.b16 %v1973
    %v2131 = vunpack.c.l.b16 %v1974
    %v2132 = vunpack.c.h.b16 %v1974
    %v2133 = vunpack.c.l.b16 %v1975
    %v2134 = vunpack.c.h.b16 %v1975
    %v2135 = vunpack.c.l.b16 %v1976
    %v2136 = vunpack.c.h.b16 %v1976
    %v2137 = vunpack.c.l.b16 %v1977
    %v2138 = vunpack.c.h.b16 %v1977
    %v2139 = vunpack.c.l.b16 %v1978
    %v2140 = vunpack.c.h.b16 %v1978
    %v2141 = vunpack.c.l.b16 %v1979
    %v2142 = vunpack.c.h.b16 %v1979
    %v2143 = vunpack.c.l.b16 %v1980
    %v2144 = vunpack.c.h.b16 %v1980
    %v2145 = vunpack.c.l.b16 %v1981
    %v2146 = vunpack.c.h.b16 %v1981
    %v2147 = vunpack.c.l.b16 %v1982
    %v2148 = vunpack.c.h.b16 %v1982
    %v2149 = vunpack.c.l.b16 %v1983
    %v2150 = vunpack.c.h.b16 %v1983
    %v2151 = vunpack.c.l.b16 %v1984
    %v2152 = vunpack.c.h.b16 %v1984
    %v2153 = vunpack.c.l.b16 %v1985
    %v2154 = vunpack.c.h.b16 %v1985
    %v2155 = vunpack.c.l.b16 %v1986
    %v2156 = vunpack.c.h.b16 %v1986
    %v2157 = vunpack.c.l.b16 %v1987
    %v2158 = vunpack.c.h.b16 %v1987
    %v2159 = vunpack.c.l.b16 %v1988
    %v2160 = vunpack.c.h.b16 %v1988
    %v2161 = vunpack.c.l.b16 %v1989
    %v2162 = vunpack.c.h.b16 %v1989
    %v2163 = vunpack.c.l.b16 %v1990
    %v2164 = vunpack.c.h.b16 %v1990
    %v2165 = vunpack.c.l.b16 %v1991
    %v2166 = vunpack.c.h.b16 %v1991
    %v2167 = vunpack.c.l.b16 %v1992
    %v2168 = vunpack.c.h.b16 %v1992
    %v2169 = vunpack.c.l.b16 %v1993
    %v2170 = vunpack.c.h.b16 %v1993
    %v2171 = vunpack.c.l.b16 %v1994
    %v2172 = vunpack.c.h.b16 %v1994
    %v2173 = vunpack.c.l.b16 %v1995
    %v2174 = vunpack.c.h.b16 %v1995
    %v2175 = vunpack.c.l.b16 %v1996
    %v2176 = vunpack.c.h.b16 %v1996
    %v2177 = vunpack.c.l.b16 %v1997
    %v2178 = vunpack.c.h.b16 %v1997
    %v2179 = vunpack.c.l.b16 %v1998
    %v2180 = vunpack.c.h.b16 %v1998
    %v2181 = vunpack.c.l.b16 %v1999
    %v2182 = vunpack.c.h.b16 %v1999
    %v2183 = vunpack.c.l.b16 %v2000
    %v2184 = vunpack.c.h.b16 %v2000
    %v2185 = vunpack.c.l.b16 %v2001
    %v2186 = vunpack.c.h.b16 %v2001
    %v2187 = vunpack.c.l.b16 %v2002
    %v2188 = vunpack.c.h.b16 %v2002
    %v2189 = vunpack.c.l.b16 %v2003
    %v2190 = vunpack.c.h.b16 %v2003
    %v2191 = vunpack.c.l.b16 %v2004
    %v2192 = vunpack.c.h.b16 %v2004
    %v2193 = vunpack.c.l.b16 %v2005
    %v2194 = vunpack.c.h.b16 %v2005
    %v2195 = vunpack.c.l.b16 %v2006
    %v2196 = vunpack.c.h.b16 %v2006
    %v2197 = vunpack.c.l.b16 %v2007
    %v2198 = vunpack.c.h.b16 %v2007
    %v2199 = vunpack.c.l.b16 %v2008
    %v2200 = vunpack.c.h.b16 %v2008
    %v2201 = vunpack.c.l.b16 %v2009
    %v2202 = vunpack.c.h.b16 %v2009
    %v2203 = vunpack.c.l.b16 %v2010
    %v2204 = vunpack.c.h.b16 %v2010
    %v2205 = vunpack.c.l.b16 %v2011
    %v2206 = vunpack.c.h.b16 %v2011
    %v2207 = vunpack.c.l.b16 %v2012
    %v2208 = vunpack.c.h.b16 %v2012
    %v2209 = vpack.c.b16 %v2085, %v2081
    %v2210 = vpack.c.b16 %v2086, %v2082
    %v2211 = vpack.c.b16 %v2087, %v2083
    %v2212 = vpack.c.b16 %v2088, %v2084
    %v2213 = vpack.c.b16 %v2093, %v2089
    %v2214 = vpack.c.b16 %v2094, %v2090
    %v2215 = vpack.c.b16 %v2095, %v2091
    %v2216 = vpack.c.b16 %v2096, %v2092
    %v2217 = vpack.c.b16 %v2101, %v2097
    %v2218 = vpack.c.b16 %v2102, %v2098
    %v2219 = vpack.c.b16 %v2103, %v2099
    %v2220 = vpack.c.b16 %v2104, %v2100
    %v2221 = vpack.c.b16 %v2109, %v2105
    %v2222 = vpack.c.b16 %v2110, %v2106
    %v2223 = vpack.c.b16 %v2111, %v2107
    %v2224 = vpack.c.b16 %v2112, %v2108
    %v2225 = vpack.c.b16 %v2117, %v2113
    %v2226 = vpack.c.b16 %v2118, %v2114
    %v2227 = vpack.c.b16 %v2119, %v2115
    %v2228 = vpack.c.b16 %v2120, %v2116
    %v2229 = vpack.c.b16 %v2125, %v2121
    %v2230 = vpack.c.b16 %v2126, %v2122
    %v2231 = vpack.c.b16 %v2127, %v2123
    %v2232 = vpack.c.b16 %v2128, %v2124
    %v2233 = vpack.c.b16 %v2133, %v2129
    %v2234 = vpack.c.b16 %v2134, %v2130
    %v2235 = vpack.c.b16 %v2135, %v2131
    %v2236 = vpack.c.b16 %v2136, %v2132
    %v2237 = vpack.c.b16 %v2141, %v2137
    %v2238 = vpack.c.b16 %v2142, %v2138
    %v2239 = vpack.c.b16 %v2143, %v2139
    %v2240 = vpack.c.b16 %v2144, %v2140
    %v2241 = vpack.c.b16 %v2149, %v2145
    %v2242 = vpack.c.b16 %v2150, %v2146
    %v2243 = vpack.c.b16 %v2151, %v2147
    %v2244 = vpack.c.b16 %v2152, %v2148
    %v2245 = vpack.c.b16 %v2157, %v2153
    %v2246 = vpack.c.b16 %v2158, %v2154
    %v2247 = vpack.c.b16 %v2159, %v2155
    %v2248 = vpack.c.b16 %v2160, %v2156
    %v2249 = vpack.c.b16 %v2165, %v2161
    %v2250 = vpack.c.b16 %v2166, %v2162
    %v2251 = vpack.c.b16 %v2167, %v2163
    %v2252 = vpack.c.b16 %v2168, %v2164
    %v2253 = vpack.c.b16 %v2173, %v2169
    %v2254 = vpack.c.b16 %v2174, %v2170
    %v2255 = vpack.c.b16 %v2175, %v2171
    %v2256 = vpack.c.b16 %v2176, %v2172
    %v2257 = vpack.c.b16 %v2181, %v2177
    %v2258 = vpack.c.b16 %v2182, %v2178
    %v2259 = vpack.c.b16 %v2183, %v2179
    %v2260 = vpack.c.b16 %v2184, %v2180
    %v2261 = vpack.c.b16 %v2189, %v2185
    %v2262 = vpack.c.b16 %v2190, %v2186
    %v2263 = vpack.c.b16 %v2191, %v2187
    %v2264 = vpack.c.b16 %v2192, %v2188
    %v2265 = vpack.c.b16 %v2197, %v2193
    %v2266 = vpack.c.b16 %v2198, %v2194
    %v2267 = vpack.c.b16 %v2199, %v2195
    %v2268 = vpack.c.b16 %v2200, %v2196
    %v2269 = vpack.c.b16 %v2205, %v2201
    %v2270 = vpack.c.b16 %v2206, %v2202
    %v2271 = vpack.c.b16 %v2207, %v2203
    %v2272 = vpack.c.b16 %v2208, %v2204
    %2337 = vmatpush.bf16.msra.mxu0 %v2237
    %2338 = vmatpush.bf16.msra.mxu0 %v2233
    %2339 = vmatpush.bf16.msra.mxu0 %v2229
    %2340 = vmatpush.bf16.msra.mxu0 %v2225
    %2341 = vmatpush.bf16.msra.mxu0 %v2221
    %2342 = vmatpush.bf16.msra.mxu0 %v2217
    %2343 = vmatpush.bf16.msra.mxu0 %v2213
    %2344 = vmatpush.bf16.msra.mxu0 %v2209
    %2345 = vmatmul.bf16.gmra.mxu0 %v1948
    %v2346 = vpop.f32.mrf.mxu0
    %v2347 = vadd.f32 %v2013, %v2346
    %v2348 = vpop.f32.mrf.mxu0
    %2349 = vdwg.mxu0
    %2350 = vmatpush.bf16.msra.mxu0 %v2269
    %2351 = vmatpush.bf16.msra.mxu0 %v2265
    %2352 = vmatpush.bf16.msra.mxu0 %v2261
    %2353 = vmatpush.bf16.msra.mxu0 %v2257
    %2354 = vmatpush.bf16.msra.mxu0 %v2253
    %2355 = vmatpush.bf16.msra.mxu0 %v2249
    %2356 = vmatpush.bf16.msra.mxu0 %v2245
    %2357 = vmatpush.bf16.msra.mxu0 %v2241
    %2358 = vmatmul.bf16.gmra.mxu0 %v1209
    %v2359 = vpop.f32.mrf.mxu0
    %v2360 = vadd.f32 %v2347, %v2359
    %v2361 = vpop.f32.mrf.mxu0
    %2362 = vdwg.mxu0
    %2363 = vmatpush.bf16.msra.mxu0 %v2238
    %2364 = vmatpush.bf16.msra.mxu0 %v2234
    %2365 = vmatpush.bf16.msra.mxu0 %v2230
    %2366 = vmatpush.bf16.msra.mxu0 %v2226
    %2367 = vmatpush.bf16.msra.mxu0 %v2222
    %2368 = vmatpush.bf16.msra.mxu0 %v2218
    %2369 = vmatpush.bf16.msra.mxu0 %v2214
    %2370 = vmatpush.bf16.msra.mxu0 %v2210
    %2371 = vmatmul.bf16.gmra.mxu0 %v1948
    %v2372 = vpop.f32.mrf.mxu0
    %v2373 = vadd.f32 %v2014, %v2372
    %v2374 = vpop.f32.mrf.mxu0
    %2375 = vdwg.mxu0
    %2376 = vmatpush.bf16.msra.mxu0 %v2270
    %2377 = vmatpush.bf16.msra.mxu0 %v2266
    %2378 = vmatpush.bf16.msra.mxu0 %v2262
    %2379 = vmatpush.bf16.msra.mxu0 %v2258
    %2380 = vmatpush.bf16.msra.mxu0 %v2254
    %2381 = vmatpush.bf16.msra.mxu0 %v2250
    %2382 = vmatpush.bf16.msra.mxu0 %v2246
    %2383 = vmatpush.bf16.msra.mxu0 %v2242
    %2384 = vmatmul.bf16.gmra.mxu0 %v1209
    %v2385 = vpop.f32.mrf.mxu0
    %v2386 = vadd.f32 %v2373, %v2385
    %v2387 = vpop.f32.mrf.mxu0
    %2388 = vdwg.mxu0
    %2389 = vmatpush.bf16.msra.mxu0 %v2239
    %2390 = vmatpush.bf16.msra.mxu0 %v2235
    %2391 = vmatpush.bf16.msra.mxu0 %v2231
    %2392 = vmatpush.bf16.msra.mxu0 %v2227
    %2393 = vmatpush.bf16.msra.mxu0 %v2223
    %2394 = vmatpush.bf16.msra.mxu0 %v2219
    %2395 = vmatpush.bf16.msra.mxu0 %v2215
    %2396 = vmatpush.bf16.msra.mxu0 %v2211
    %2397 = vmatmul.bf16.gmra.mxu0 %v1948
    %v2398 = vpop.f32.mrf.mxu0
    %v2399 = vadd.f32 %v2015, %v2398
    %v2400 = vpop.f32.mrf.mxu0
    %2401 = vdwg.mxu0
    %2402 = vmatpush.bf16.msra.mxu0 %v2271
    %2403 = vmatpush.bf16.msra.mxu0 %v2267
    %2404 = vmatpush.bf16.msra.mxu0 %v2263
    %2405 = vmatpush.bf16.msra.mxu0 %v2259
    %2406 = vmatpush.bf16.msra.mxu0 %v2255
    %2407 = vmatpush.bf16.msra.mxu0 %v2251
    %2408 = vmatpush.bf16.msra.mxu0 %v2247
    %2409 = vmatpush.bf16.msra.mxu0 %v2243
    %2410 = vmatmul.bf16.gmra.mxu0 %v1209
    %v2411 = vpop.f32.mrf.mxu0
    %v2412 = vadd.f32 %v2399, %v2411
    %v2413 = vpop.f32.mrf.mxu0
    %2414 = vdwg.mxu0
    %2415 = vmatpush.bf16.msra.mxu0 %v2240
    %2416 = vmatpush.bf16.msra.mxu0 %v2236
    %2417 = vmatpush.bf16.msra.mxu0 %v2232
    %2418 = vmatpush.bf16.msra.mxu0 %v2228
    %2419 = vmatpush.bf16.msra.mxu0 %v2224
    %2420 = vmatpush.bf16.msra.mxu0 %v2220
    %2421 = vmatpush.bf16.msra.mxu0 %v2216
    %2422 = vmatpush.bf16.msra.mxu0 %v2212
    %2423 = vmatmul.bf16.gmra.mxu0 %v1948
    %v2424 = vpop.f32.mrf.mxu0
    %v2425 = vadd.f32 %v2016, %v2424
    %v2426 = vpop.f32.mrf.mxu0
    %2427 = vdwg.mxu0
    %2428 = vmatpush.bf16.msra.mxu0 %v2272
    %2429 = vmatpush.bf16.msra.mxu0 %v2268
    %2430 = vmatpush.bf16.msra.mxu0 %v2264
    %2431 = vmatpush.bf16.msra.mxu0 %v2260
    %2432 = vmatpush.bf16.msra.mxu0 %v2256
    %2433 = vmatpush.bf16.msra.mxu0 %v2252
    %2434 = vmatpush.bf16.msra.mxu0 %v2248
    %2435 = vmatpush.bf16.msra.mxu0 %v2244
    %2436 = vmatmul.bf16.gmra.mxu0 %v1209
    %v2437 = vpop.f32.mrf.mxu0
    %v2438 = vadd.f32 %v2425, %v2437
    %v2439 = vpop.f32.mrf.mxu0
    %2440 = vdwg.mxu0
    %v2441 = vsub.f32 0.0, %v2360
    %v2442 = vmul.f32 %v2441, 1.442695
    %v2443 = vpow.pop %v2442
    %v2444 = vadd.f32 %v2443, 1.0
    %v2445 = vrcp.pop %v2444
    %v2446 = vmul.f32 %v2444, %v2445
    %v2447 = vsub.f32 1.0, %v2446
    %v2448 = vmul.f32 %v2445, %v2447
    %v2449 = vadd.f32 %v2445, %v2448
    %vm2450 = vweird.f32 %v2444
    %vm2451 = vweird.f32 %v2445
    %vm2452 = vmor %vm2450, %vm2451
    %v2453 = vsel %vm2452, %v2445, %v2449
    %v2454 = vand.u32 2147483647, %v2444
    %vm2455 = vcmp.eq.f32.partialorder %v2454, 8.507059e+37
    %v2456 = vand.u32 %v2444, 2147483648
    %v2457 = vor.u32 1.1754944e-38, %v2456
    %v2458 = vsel %vm2455, %v2457, %v2453
    %v2459 = vsub.f32 0.0, %v2386
    %v2460 = vmul.f32 %v2459, 1.442695
    %v2461 = vpow.pop %v2460
    %v2462 = vadd.f32 %v2461, 1.0
    %v2463 = vrcp.pop %v2462
    %v2464 = vmul.f32 %v2462, %v2463
    %v2465 = vsub.f32 1.0, %v2464
    %v2466 = vmul.f32 %v2463, %v2465
    %v2467 = vadd.f32 %v2463, %v2466
    %vm2468 = vweird.f32 %v2462
    %vm2469 = vweird.f32 %v2463
    %vm2470 = vmor %vm2468, %vm2469
    %v2471 = vsel %vm2470, %v2463, %v2467
    %v2472 = vand.u32 2147483647, %v2462
    %vm2473 = vcmp.eq.f32.partialorder %v2472, 8.507059e+37
    %v2474 = vand.u32 %v2462, 2147483648
    %v2475 = vor.u32 1.1754944e-38, %v2474
    %v2476 = vsel %vm2473, %v2475, %v2471
    %v2477 = vtanh.pop %v2412
    %v2478 = vsub.f32 0.0, %v2438
    %v2479 = vmul.f32 %v2478, 1.442695
    %v2480 = vpow.pop %v2479
    %v2481 = vadd.f32 %v2480, 1.0
    %v2482 = vrcp.pop %v2481
    %v2483 = vmul.f32 %v2481, %v2482
    %v2484 = vsub.f32 1.0, %v2483
    %v2485 = vmul.f32 %v2482, %v2484
    %v2486 = vadd.f32 %v2482, %v2485
    %vm2487 = vweird.f32 %v2481
    %vm2488 = vweird.f32 %v2482
    %vm2489 = vmor %vm2487, %vm2488
    %v2490 = vsel %vm2489, %v2482, %v2486
    %v2491 = vand.u32 2147483647, %v2481
    %vm2492 = vcmp.eq.f32.partialorder %v2491, 8.507059e+37
    %v2493 = vand.u32 %v2481, 2147483648
    %v2494 = vor.u32 1.1754944e-38, %v2493
    %v2495 = vsel %vm2492, %v2494, %v2490
    %v2496 = vmul.f32 %v2476, %v1206
    %v2497 = vmul.f32 %v2458, %v2477
    %v2498 = vadd.f32 %v2496, %v2497
    %v2499 = vtanh.pop %v2498
    %v2500 = vmul.f32 %v2495, %v2499
    %v2501 = vpack.c.bf16 %v2500, %v2500
    %v2502 = vld [vmem:[#allocation13] sm:$0xff]
    %v2503 = vld [vmem:[#allocation13 + $0x8] sm:$0xff]
    %v2504 = vld [vmem:[#allocation13 + $0x10] sm:$0xff]
    %v2505 = vld [vmem:[#allocation13 + $0x18] sm:$0xff]
    %v2506 = vld [vmem:[#allocation13 + $0x20] sm:$0xff]
    %v2507 = vld [vmem:[#allocation13 + $0x28] sm:$0xff]
    %v2508 = vld [vmem:[#allocation13 + $0x30] sm:$0xff]
    %v2509 = vld [vmem:[#allocation13 + $0x38] sm:$0xff]
    %v2510 = vld [vmem:[#allocation13 + $0x40] sm:$0xff]
    %v2511 = vld [vmem:[#allocation13 + $0x48] sm:$0xff]
    %v2512 = vld [vmem:[#allocation13 + $0x50] sm:$0xff]
    %v2513 = vld [vmem:[#allocation13 + $0x58] sm:$0xff]
    %v2514 = vld [vmem:[#allocation13 + $0x60] sm:$0xff]
    %v2515 = vld [vmem:[#allocation13 + $0x68] sm:$0xff]
    %v2516 = vld [vmem:[#allocation13 + $0x70] sm:$0xff]
    %v2517 = vld [vmem:[#allocation13 + $0x78] sm:$0xff]
    %v2518 = vld [vmem:[#allocation13 + $0x80] sm:$0xff]
    %v2519 = vld [vmem:[#allocation13 + $0x88] sm:$0xff]
    %v2520 = vld [vmem:[#allocation13 + $0x90] sm:$0xff]
    %v2521 = vld [vmem:[#allocation13 + $0x98] sm:$0xff]
    %v2522 = vld [vmem:[#allocation13 + $0xa0] sm:$0xff]
    %v2523 = vld [vmem:[#allocation13 + $0xa8] sm:$0xff]
    %v2524 = vld [vmem:[#allocation13 + $0xb0] sm:$0xff]
    %v2525 = vld [vmem:[#allocation13 + $0xb8] sm:$0xff]
    %v2526 = vld [vmem:[#allocation13 + $0xc0] sm:$0xff]
    %v2527 = vld [vmem:[#allocation13 + $0xc8] sm:$0xff]
    %v2528 = vld [vmem:[#allocation13 + $0xd0] sm:$0xff]
    %v2529 = vld [vmem:[#allocation13 + $0xd8] sm:$0xff]
    %v2530 = vld [vmem:[#allocation13 + $0xe0] sm:$0xff]
    %v2531 = vld [vmem:[#allocation13 + $0xe8] sm:$0xff]
    %v2532 = vld [vmem:[#allocation13 + $0xf0] sm:$0xff]
    %v2533 = vld [vmem:[#allocation13 + $0xf8] sm:$0xff]
    %v2534 = vld [vmem:[#allocation13 + $0x100] sm:$0xff]
    %v2535 = vld [vmem:[#allocation13 + $0x108] sm:$0xff]
    %v2536 = vld [vmem:[#allocation13 + $0x110] sm:$0xff]
    %v2537 = vld [vmem:[#allocation13 + $0x118] sm:$0xff]
    %v2538 = vld [vmem:[#allocation13 + $0x120] sm:$0xff]
    %v2539 = vld [vmem:[#allocation13 + $0x128] sm:$0xff]
    %v2540 = vld [vmem:[#allocation13 + $0x130] sm:$0xff]
    %v2541 = vld [vmem:[#allocation13 + $0x138] sm:$0xff]
    %v2542 = vld [vmem:[#allocation13 + $0x140] sm:$0xff]
    %v2543 = vld [vmem:[#allocation13 + $0x148] sm:$0xff]
    %v2544 = vld [vmem:[#allocation13 + $0x150] sm:$0xff]
    %v2545 = vld [vmem:[#allocation13 + $0x158] sm:$0xff]
    %v2546 = vld [vmem:[#allocation13 + $0x160] sm:$0xff]
    %v2547 = vld [vmem:[#allocation13 + $0x168] sm:$0xff]
    %v2548 = vld [vmem:[#allocation13 + $0x170] sm:$0xff]
    %v2549 = vld [vmem:[#allocation13 + $0x178] sm:$0xff]
    %v2550 = vld [vmem:[#allocation13 + $0x180] sm:$0xff]
    %v2551 = vld [vmem:[#allocation13 + $0x188] sm:$0xff]
    %v2552 = vld [vmem:[#allocation13 + $0x190] sm:$0xff]
    %v2553 = vld [vmem:[#allocation13 + $0x198] sm:$0xff]
    %v2554 = vld [vmem:[#allocation13 + $0x1a0] sm:$0xff]
    %v2555 = vld [vmem:[#allocation13 + $0x1a8] sm:$0xff]
    %v2556 = vld [vmem:[#allocation13 + $0x1b0] sm:$0xff]
    %v2557 = vld [vmem:[#allocation13 + $0x1b8] sm:$0xff]
    %v2558 = vld [vmem:[#allocation13 + $0x1c0] sm:$0xff]
    %v2559 = vld [vmem:[#allocation13 + $0x1c8] sm:$0xff]
    %v2560 = vld [vmem:[#allocation13 + $0x1d0] sm:$0xff]
    %v2561 = vld [vmem:[#allocation13 + $0x1d8] sm:$0xff]
    %v2562 = vld [vmem:[#allocation13 + $0x1e0] sm:$0xff]
    %v2563 = vld [vmem:[#allocation13 + $0x1e8] sm:$0xff]
    %v2564 = vld [vmem:[#allocation13 + $0x1f0] sm:$0xff]
    %v2565 = vld [vmem:[#allocation13 + $0x1f8] sm:$0xff]
    %v2566 = vld [vmem:[#allocation15] sm:$0xff]
    %v2567 = vld [vmem:[#allocation15 + $0x8] sm:$0xff]
    %v2568 = vld [vmem:[#allocation15 + $0x10] sm:$0xff]
    %v2569 = vld [vmem:[#allocation15 + $0x18] sm:$0xff]
    %v2634 = vunpack.c.l.b16 %v2502
    %v2635 = vunpack.c.h.b16 %v2502
    %v2636 = vunpack.c.l.b16 %v2503
    %v2637 = vunpack.c.h.b16 %v2503
    %v2638 = vunpack.c.l.b16 %v2504
    %v2639 = vunpack.c.h.b16 %v2504
    %v2640 = vunpack.c.l.b16 %v2505
    %v2641 = vunpack.c.h.b16 %v2505
    %v2642 = vunpack.c.l.b16 %v2506
    %v2643 = vunpack.c.h.b16 %v2506
    %v2644 = vunpack.c.l.b16 %v2507
    %v2645 = vunpack.c.h.b16 %v2507
    %v2646 = vunpack.c.l.b16 %v2508
    %v2647 = vunpack.c.h.b16 %v2508
    %v2648 = vunpack.c.l.b16 %v2509
    %v2649 = vunpack.c.h.b16 %v2509
    %v2650 = vunpack.c.l.b16 %v2510
    %v2651 = vunpack.c.h.b16 %v2510
    %v2652 = vunpack.c.l.b16 %v2511
    %v2653 = vunpack.c.h.b16 %v2511
    %v2654 = vunpack.c.l.b16 %v2512
    %v2655 = vunpack.c.h.b16 %v2512
    %v2656 = vunpack.c.l.b16 %v2513
    %v2657 = vunpack.c.h.b16 %v2513
    %v2658 = vunpack.c.l.b16 %v2514
    %v2659 = vunpack.c.h.b16 %v2514
    %v2660 = vunpack.c.l.b16 %v2515
    %v2661 = vunpack.c.h.b16 %v2515
    %v2662 = vunpack.c.l.b16 %v2516
    %v2663 = vunpack.c.h.b16 %v2516
    %v2664 = vunpack.c.l.b16 %v2517
    %v2665 = vunpack.c.h.b16 %v2517
    %v2666 = vunpack.c.l.b16 %v2518
    %v2667 = vunpack.c.h.b16 %v2518
    %v2668 = vunpack.c.l.b16 %v2519
    %v2669 = vunpack.c.h.b16 %v2519
    %v2670 = vunpack.c.l.b16 %v2520
    %v2671 = vunpack.c.h.b16 %v2520
    %v2672 = vunpack.c.l.b16 %v2521
    %v2673 = vunpack.c.h.b16 %v2521
    %v2674 = vunpack.c.l.b16 %v2522
    %v2675 = vunpack.c.h.b16 %v2522
    %v2676 = vunpack.c.l.b16 %v2523
    %v2677 = vunpack.c.h.b16 %v2523
    %v2678 = vunpack.c.l.b16 %v2524
    %v2679 = vunpack.c.h.b16 %v2524
    %v2680 = vunpack.c.l.b16 %v2525
    %v2681 = vunpack.c.h.b16 %v2525
    %v2682 = vunpack.c.l.b16 %v2526
    %v2683 = vunpack.c.h.b16 %v2526
    %v2684 = vunpack.c.l.b16 %v2527
    %v2685 = vunpack.c.h.b16 %v2527
    %v2686 = vunpack.c.l.b16 %v2528
    %v2687 = vunpack.c.h.b16 %v2528
    %v2688 = vunpack.c.l.b16 %v2529
    %v2689 = vunpack.c.h.b16 %v2529
    %v2690 = vunpack.c.l.b16 %v2530
    %v2691 = vunpack.c.h.b16 %v2530
    %v2692 = vunpack.c.l.b16 %v2531
    %v2693 = vunpack.c.h.b16 %v2531
    %v2694 = vunpack.c.l.b16 %v2532
    %v2695 = vunpack.c.h.b16 %v2532
    %v2696 = vunpack.c.l.b16 %v2533
    %v2697 = vunpack.c.h.b16 %v2533
    %v2698 = vunpack.c.l.b16 %v2534
    %v2699 = vunpack.c.h.b16 %v2534
    %v2700 = vunpack.c.l.b16 %v2535
    %v2701 = vunpack.c.h.b16 %v2535
    %v2702 = vunpack.c.l.b16 %v2536
    %v2703 = vunpack.c.h.b16 %v2536
    %v2704 = vunpack.c.l.b16 %v2537
    %v2705 = vunpack.c.h.b16 %v2537
    %v2706 = vunpack.c.l.b16 %v2538
    %v2707 = vunpack.c.h.b16 %v2538
    %v2708 = vunpack.c.l.b16 %v2539
    %v2709 = vunpack.c.h.b16 %v2539
    %v2710 = vunpack.c.l.b16 %v2540
    %v2711 = vunpack.c.h.b16 %v2540
    %v2712 = vunpack.c.l.b16 %v2541
    %v2713 = vunpack.c.h.b16 %v2541
    %v2714 = vunpack.c.l.b16 %v2542
    %v2715 = vunpack.c.h.b16 %v2542
    %v2716 = vunpack.c.l.b16 %v2543
    %v2717 = vunpack.c.h.b16 %v2543
    %v2718 = vunpack.c.l.b16 %v2544
    %v2719 = vunpack.c.h.b16 %v2544
    %v2720 = vunpack.c.l.b16 %v2545
    %v2721 = vunpack.c.h.b16 %v2545
    %v2722 = vunpack.c.l.b16 %v2546
    %v2723 = vunpack.c.h.b16 %v2546
    %v2724 = vunpack.c.l.b16 %v2547
    %v2725 = vunpack.c.h.b16 %v2547
    %v2726 = vunpack.c.l.b16 %v2548
    %v2727 = vunpack.c.h.b16 %v2548
    %v2728 = vunpack.c.l.b16 %v2549
    %v2729 = vunpack.c.h.b16 %v2549
    %v2730 = vunpack.c.l.b16 %v2550
    %v2731 = vunpack.c.h.b16 %v2550
    %v2732 = vunpack.c.l.b16 %v2551
    %v2733 = vunpack.c.h.b16 %v2551
    %v2734 = vunpack.c.l.b16 %v2552
    %v2735 = vunpack.c.h.b16 %v2552
    %v2736 = vunpack.c.l.b16 %v2553
    %v2737 = vunpack.c.h.b16 %v2553
    %v2738 = vunpack.c.l.b16 %v2554
    %v2739 = vunpack.c.h.b16 %v2554
    %v2740 = vunpack.c.l.b16 %v2555
    %v2741 = vunpack.c.h.b16 %v2555
    %v2742 = vunpack.c.l.b16 %v2556
    %v2743 = vunpack.c.h.b16 %v2556
    %v2744 = vunpack.c.l.b16 %v2557
    %v2745 = vunpack.c.h.b16 %v2557
    %v2746 = vunpack.c.l.b16 %v2558
    %v2747 = vunpack.c.h.b16 %v2558
    %v2748 = vunpack.c.l.b16 %v2559
    %v2749 = vunpack.c.h.b16 %v2559
    %v2750 = vunpack.c.l.b16 %v2560
    %v2751 = vunpack.c.h.b16 %v2560
    %v2752 = vunpack.c.l.b16 %v2561
    %v2753 = vunpack.c.h.b16 %v2561
    %v2754 = vunpack.c.l.b16 %v2562
    %v2755 = vunpack.c.h.b16 %v2562
    %v2756 = vunpack.c.l.b16 %v2563
    %v2757 = vunpack.c.h.b16 %v2563
    %v2758 = vunpack.c.l.b16 %v2564
    %v2759 = vunpack.c.h.b16 %v2564
    %v2760 = vunpack.c.l.b16 %v2565
    %v2761 = vunpack.c.h.b16 %v2565
    %v2762 = vpack.c.b16 %v2638, %v2634
    %v2763 = vpack.c.b16 %v2639, %v2635
    %v2764 = vpack.c.b16 %v2640, %v2636
    %v2765 = vpack.c.b16 %v2641, %v2637
    %v2766 = vpack.c.b16 %v2646, %v2642
    %v2767 = vpack.c.b16 %v2647, %v2643
    %v2768 = vpack.c.b16 %v2648, %v2644
    %v2769 = vpack.c.b16 %v2649, %v2645
    %v2770 = vpack.c.b16 %v2654, %v2650
    %v2771 = vpack.c.b16 %v2655, %v2651
    %v2772 = vpack.c.b16 %v2656, %v2652
    %v2773 = vpack.c.b16 %v2657, %v2653
    %v2774 = vpack.c.b16 %v2662, %v2658
    %v2775 = vpack.c.b16 %v2663, %v2659
    %v2776 = vpack.c.b16 %v2664, %v2660
    %v2777 = vpack.c.b16 %v2665, %v2661
    %v2778 = vpack.c.b16 %v2670, %v2666
    %v2779 = vpack.c.b16 %v2671, %v2667
    %v2780 = vpack.c.b16 %v2672, %v2668
    %v2781 = vpack.c.b16 %v2673, %v2669
    %v2782 = vpack.c.b16 %v2678, %v2674
    %v2783 = vpack.c.b16 %v2679, %v2675
    %v2784 = vpack.c.b16 %v2680, %v2676
    %v2785 = vpack.c.b16 %v2681, %v2677
    %v2786 = vpack.c.b16 %v2686, %v2682
    %v2787 = vpack.c.b16 %v2687, %v2683
    %v2788 = vpack.c.b16 %v2688, %v2684
    %v2789 = vpack.c.b16 %v2689, %v2685
    %v2790 = vpack.c.b16 %v2694, %v2690
    %v2791 = vpack.c.b16 %v2695, %v2691
    %v2792 = vpack.c.b16 %v2696, %v2692
    %v2793 = vpack.c.b16 %v2697, %v2693
    %v2794 = vpack.c.b16 %v2702, %v2698
    %v2795 = vpack.c.b16 %v2703, %v2699
    %v2796 = vpack.c.b16 %v2704, %v2700
    %v2797 = vpack.c.b16 %v2705, %v2701
    %v2798 = vpack.c.b16 %v2710, %v2706
    %v2799 = vpack.c.b16 %v2711, %v2707
    %v2800 = vpack.c.b16 %v2712, %v2708
    %v2801 = vpack.c.b16 %v2713, %v2709
    %v2802 = vpack.c.b16 %v2718, %v2714
    %v2803 = vpack.c.b16 %v2719, %v2715
    %v2804 = vpack.c.b16 %v2720, %v2716
    %v2805 = vpack.c.b16 %v2721, %v2717
    %v2806 = vpack.c.b16 %v2726, %v2722
    %v2807 = vpack.c.b16 %v2727, %v2723
    %v2808 = vpack.c.b16 %v2728, %v2724
    %v2809 = vpack.c.b16 %v2729, %v2725
    %v2810 = vpack.c.b16 %v2734, %v2730
    %v2811 = vpack.c.b16 %v2735, %v2731
    %v2812 = vpack.c.b16 %v2736, %v2732
    %v2813 = vpack.c.b16 %v2737, %v2733
    %v2814 = vpack.c.b16 %v2742, %v2738
    %v2815 = vpack.c.b16 %v2743, %v2739
    %v2816 = vpack.c.b16 %v2744, %v2740
    %v2817 = vpack.c.b16 %v2745, %v2741
    %v2818 = vpack.c.b16 %v2750, %v2746
    %v2819 = vpack.c.b16 %v2751, %v2747
    %v2820 = vpack.c.b16 %v2752, %v2748
    %v2821 = vpack.c.b16 %v2753, %v2749
    %v2822 = vpack.c.b16 %v2758, %v2754
    %v2823 = vpack.c.b16 %v2759, %v2755
    %v2824 = vpack.c.b16 %v2760, %v2756
    %v2825 = vpack.c.b16 %v2761, %v2757
    %2890 = vmatpush.bf16.msra.mxu0 %v2790
    %2891 = vmatpush.bf16.msra.mxu0 %v2786
    %2892 = vmatpush.bf16.msra.mxu0 %v2782
    %2893 = vmatpush.bf16.msra.mxu0 %v2778
    %2894 = vmatpush.bf16.msra.mxu0 %v2774
    %2895 = vmatpush.bf16.msra.mxu0 %v2770
    %2896 = vmatpush.bf16.msra.mxu0 %v2766
    %2897 = vmatpush.bf16.msra.mxu0 %v2762
    %2898 = vmatmul.bf16.gmra.mxu0 %v2501
    %v2899 = vpop.f32.mrf.mxu0
    %v2900 = vadd.f32 %v2566, %v2899
    %v2901 = vpop.f32.mrf.mxu0
    %2902 = vdwg.mxu0
    %2903 = vmatpush.bf16.msra.mxu0 %v2822
    %2904 = vmatpush.bf16.msra.mxu0 %v2818
    %2905 = vmatpush.bf16.msra.mxu0 %v2814
    %2906 = vmatpush.bf16.msra.mxu0 %v2810
    %2907 = vmatpush.bf16.msra.mxu0 %v2806
    %2908 = vmatpush.bf16.msra.mxu0 %v2802
    %2909 = vmatpush.bf16.msra.mxu0 %v2798
    %2910 = vmatpush.bf16.msra.mxu0 %v2794
    %2911 = vmatmul.bf16.gmra.mxu0 %v1759
    %v2912 = vpop.f32.mrf.mxu0
    %v2913 = vadd.f32 %v2900, %v2912
    %v2914 = vpop.f32.mrf.mxu0
    %2915 = vdwg.mxu0
    %2916 = vmatpush.bf16.msra.mxu0 %v2791
    %2917 = vmatpush.bf16.msra.mxu0 %v2787
    %2918 = vmatpush.bf16.msra.mxu0 %v2783
    %2919 = vmatpush.bf16.msra.mxu0 %v2779
    %2920 = vmatpush.bf16.msra.mxu0 %v2775
    %2921 = vmatpush.bf16.msra.mxu0 %v2771
    %2922 = vmatpush.bf16.msra.mxu0 %v2767
    %2923 = vmatpush.bf16.msra.mxu0 %v2763
    %2924 = vmatmul.bf16.gmra.mxu0 %v2501
    %v2925 = vpop.f32.mrf.mxu0
    %v2926 = vadd.f32 %v2567, %v2925
    %v2927 = vpop.f32.mrf.mxu0
    %2928 = vdwg.mxu0
    %2929 = vmatpush.bf16.msra.mxu0 %v2823
    %2930 = vmatpush.bf16.msra.mxu0 %v2819
    %2931 = vmatpush.bf16.msra.mxu0 %v2815
    %2932 = vmatpush.bf16.msra.mxu0 %v2811
    %2933 = vmatpush.bf16.msra.mxu0 %v2807
    %2934 = vmatpush.bf16.msra.mxu0 %v2803
    %2935 = vmatpush.bf16.msra.mxu0 %v2799
    %2936 = vmatpush.bf16.msra.mxu0 %v2795
    %2937 = vmatmul.bf16.gmra.mxu0 %v1759
    %v2938 = vpop.f32.mrf.mxu0
    %v2939 = vadd.f32 %v2926, %v2938
    %v2940 = vpop.f32.mrf.mxu0
    %2941 = vdwg.mxu0
    %2942 = vmatpush.bf16.msra.mxu0 %v2792
    %2943 = vmatpush.bf16.msra.mxu0 %v2788
    %2944 = vmatpush.bf16.msra.mxu0 %v2784
    %2945 = vmatpush.bf16.msra.mxu0 %v2780
    %2946 = vmatpush.bf16.msra.mxu0 %v2776
    %2947 = vmatpush.bf16.msra.mxu0 %v2772
    %2948 = vmatpush.bf16.msra.mxu0 %v2768
    %2949 = vmatpush.bf16.msra.mxu0 %v2764
    %2950 = vmatmul.bf16.gmra.mxu0 %v2501
    %v2951 = vpop.f32.mrf.mxu0
    %v2952 = vadd.f32 %v2568, %v2951
    %v2953 = vpop.f32.mrf.mxu0
    %2954 = vdwg.mxu0
    %2955 = vmatpush.bf16.msra.mxu0 %v2824
    %2956 = vmatpush.bf16.msra.mxu0 %v2820
    %2957 = vmatpush.bf16.msra.mxu0 %v2816
    %2958 = vmatpush.bf16.msra.mxu0 %v2812
    %2959 = vmatpush.bf16.msra.mxu0 %v2808
    %2960 = vmatpush.bf16.msra.mxu0 %v2804
    %2961 = vmatpush.bf16.msra.mxu0 %v2800
    %2962 = vmatpush.bf16.msra.mxu0 %v2796
    %2963 = vmatmul.bf16.gmra.mxu0 %v1759
    %v2964 = vpop.f32.mrf.mxu0
    %v2965 = vadd.f32 %v2952, %v2964
    %v2966 = vpop.f32.mrf.mxu0
    %2967 = vdwg.mxu0
    %2968 = vmatpush.bf16.msra.mxu0 %v2793
    %2969 = vmatpush.bf16.msra.mxu0 %v2789
    %2970 = vmatpush.bf16.msra.mxu0 %v2785
    %2971 = vmatpush.bf16.msra.mxu0 %v2781
    %2972 = vmatpush.bf16.msra.mxu0 %v2777
    %2973 = vmatpush.bf16.msra.mxu0 %v2773
    %2974 = vmatpush.bf16.msra.mxu0 %v2769
    %2975 = vmatpush.bf16.msra.mxu0 %v2765
    %2976 = vmatmul.bf16.gmra.mxu0 %v2501
    %v2977 = vpop.f32.mrf.mxu0
    %v2978 = vadd.f32 %v2569, %v2977
    %v2979 = vpop.f32.mrf.mxu0
    %2980 = vdwg.mxu0
    %2981 = vmatpush.bf16.msra.mxu0 %v2825
    %2982 = vmatpush.bf16.msra.mxu0 %v2821
    %2983 = vmatpush.bf16.msra.mxu0 %v2817
    %2984 = vmatpush.bf16.msra.mxu0 %v2813
    %2985 = vmatpush.bf16.msra.mxu0 %v2809
    %2986 = vmatpush.bf16.msra.mxu0 %v2805
    %2987 = vmatpush.bf16.msra.mxu0 %v2801
    %2988 = vmatpush.bf16.msra.mxu0 %v2797
    %2989 = vmatmul.bf16.gmra.mxu0 %v1759
    %v2990 = vpop.f32.mrf.mxu0
    %v2991 = vadd.f32 %v2978, %v2990
    %v2992 = vpop.f32.mrf.mxu0
    %2993 = vdwg.mxu0
    %v2994 = vsub.f32 0.0, %v2913
    %v2995 = vmul.f32 %v2994, 1.442695
    %v2996 = vpow.pop %v2995
    %v2997 = vadd.f32 %v2996, 1.0
    %v2998 = vrcp.pop %v2997
    %v2999 = vmul.f32 %v2997, %v2998
    %v3000 = vsub.f32 1.0, %v2999
    %v3001 = vmul.f32 %v2998, %v3000
    %v3002 = vadd.f32 %v2998, %v3001
    %vm3003 = vweird.f32 %v2997
    %vm3004 = vweird.f32 %v2998
    %vm3005 = vmor %vm3003, %vm3004
    %v3006 = vsel %vm3005, %v2998, %v3002
    %v3007 = vand.u32 2147483647, %v2997
    %vm3008 = vcmp.eq.f32.partialorder %v3007, 8.507059e+37
    %v3009 = vand.u32 %v2997, 2147483648
    %v3010 = vor.u32 1.1754944e-38, %v3009
    %v3011 = vsel %vm3008, %v3010, %v3006
    %v3012 = vsub.f32 0.0, %v2939
    %v3013 = vmul.f32 %v3012, 1.442695
    %v3014 = vpow.pop %v3013
    %v3015 = vadd.f32 %v3014, 1.0
    %v3016 = vrcp.pop %v3015
    %v3017 = vmul.f32 %v3015, %v3016
    %v3018 = vsub.f32 1.0, %v3017
    %v3019 = vmul.f32 %v3016, %v3018
    %v3020 = vadd.f32 %v3016, %v3019
    %vm3021 = vweird.f32 %v3015
    %vm3022 = vweird.f32 %v3016
    %vm3023 = vmor %vm3021, %vm3022
    %v3024 = vsel %vm3023, %v3016, %v3020
    %v3025 = vand.u32 2147483647, %v3015
    %vm3026 = vcmp.eq.f32.partialorder %v3025, 8.507059e+37
    %v3027 = vand.u32 %v3015, 2147483648
    %v3028 = vor.u32 1.1754944e-38, %v3027
    %v3029 = vsel %vm3026, %v3028, %v3024
    %v3030 = vtanh.pop %v2965
    %v3031 = vsub.f32 0.0, %v2991
    %v3032 = vmul.f32 %v3031, 1.442695
    %v3033 = vpow.pop %v3032
    %v3034 = vadd.f32 %v3033, 1.0
    %v3035 = vrcp.pop %v3034
    %v3036 = vmul.f32 %v3034, %v3035
    %v3037 = vsub.f32 1.0, %v3036
    %v3038 = vmul.f32 %v3035, %v3037
    %v3039 = vadd.f32 %v3035, %v3038
    %vm3040 = vweird.f32 %v3034
    %vm3041 = vweird.f32 %v3035
    %vm3042 = vmor %vm3040, %vm3041
    %v3043 = vsel %vm3042, %v3035, %v3039
    %v3044 = vand.u32 2147483647, %v3034
    %vm3045 = vcmp.eq.f32.partialorder %v3044, 8.507059e+37
    %v3046 = vand.u32 %v3034, 2147483648
    %v3047 = vor.u32 1.1754944e-38, %v3046
    %v3048 = vsel %vm3045, %v3047, %v3043
    %v3049 = vmul.f32 %v3029, %v1756
    %v3050 = vmul.f32 %v3011, %v3030
    %v3051 = vadd.f32 %v3049, %v3050
    %v3052 = vtanh.pop %v3051
    %v3053 = vmul.f32 %v3048, %v3052
    %v3054 = vpack.c.bf16 %v3053, %v3053
    %v3055 = vld [vmem:[#allocation16] sm:$0xf]
    %v3056 = vld [vmem:[#allocation16 + $0x4] sm:$0xf]
    %v3057 = vld [vmem:[#allocation16 + $0x8] sm:$0xf]
    %v3058 = vld [vmem:[#allocation16 + $0xc] sm:$0xf]
    %v3059 = vld [vmem:[#allocation16 + $0x10] sm:$0xf]
    %v3060 = vld [vmem:[#allocation16 + $0x14] sm:$0xf]
    %v3061 = vld [vmem:[#allocation16 + $0x18] sm:$0xf]
    %v3062 = vld [vmem:[#allocation16 + $0x1c] sm:$0xf]
    %v3063 = vld [vmem:[#allocation16 + $0x20] sm:$0xf]
    %v3064 = vld [vmem:[#allocation16 + $0x24] sm:$0xf]
    %v3065 = vld [vmem:[#allocation16 + $0x28] sm:$0xf]
    %v3066 = vld [vmem:[#allocation16 + $0x2c] sm:$0xf]
    %v3067 = vld [vmem:[#allocation16 + $0x30] sm:$0xf]
    %v3068 = vld [vmem:[#allocation16 + $0x34] sm:$0xf]
    %v3069 = vld [vmem:[#allocation16 + $0x38] sm:$0xf]
    %v3070 = vld [vmem:[#allocation16 + $0x3c] sm:$0xf]
    %v3071 = vld [vmem:[%s9] sm:$0xff]
    %v3088 = vunpack.c.l.b16 %v3055
    %v3089 = vunpack.c.l.b16 %v3056
    %v3090 = vunpack.c.l.b16 %v3057
    %v3091 = vunpack.c.l.b16 %v3058
    %v3092 = vunpack.c.l.b16 %v3059
    %v3093 = vunpack.c.l.b16 %v3060
    %v3094 = vunpack.c.l.b16 %v3061
    %v3095 = vunpack.c.l.b16 %v3062
    %v3096 = vunpack.c.l.b16 %v3063
    %v3097 = vunpack.c.l.b16 %v3064
    %v3098 = vunpack.c.l.b16 %v3065
    %v3099 = vunpack.c.l.b16 %v3066
    %v3100 = vunpack.c.l.b16 %v3067
    %v3101 = vunpack.c.l.b16 %v3068
    %v3102 = vunpack.c.l.b16 %v3069
    %v3103 = vunpack.c.l.b16 %v3070
    %v3104 = vpack.c.b16 %v3089, %v3088
    %v3105 = vpack.c.b16 %v3091, %v3090
    %v3106 = vpack.c.b16 %v3093, %v3092
    %v3107 = vpack.c.b16 %v3095, %v3094
    %v3108 = vpack.c.b16 %v3097, %v3096
    %v3109 = vpack.c.b16 %v3099, %v3098
    %v3110 = vpack.c.b16 %v3101, %v3100
    %v3111 = vpack.c.b16 %v3103, %v3102
    %3120 = vmatpush.bf16.msra.mxu0 %v3111
    %3121 = vmatpush.bf16.msra.mxu0 %v3110
    %3122 = vmatpush.bf16.msra.mxu0 %v3109
    %3123 = vmatpush.bf16.msra.mxu0 %v3108
    %3124 = vmatpush.bf16.msra.mxu0 %v3107
    %3125 = vmatpush.bf16.msra.mxu0 %v3106
    %3126 = vmatpush.bf16.msra.mxu0 %v3105
    %3127 = vmatpush.bf16.msra.mxu0 %v3104
    %3128 = vmatmul.bf16.gmra.mxu0 %v3054
    %v3129 = vpop.f32.mrf.mxu0
    %v3130 = vadd.f32 %v3071, %v3129
    %v3131 = vpop.f32.mrf.mxu0
    %3132 = vdwg.mxu0
    %s3133 = scalar_lea.vmem [#allocation18], 8
    %3134 = vst [vmem:[%s3133] sm:$0xff] %v3130
    %s3135 = scalar_lea.vmem [#allocation7], 16
    %v3136 = vld [vmem:[%s3135] sm:$0xff]
    %3137 = vmax.xlane.f32.xlu0 %v3130
    %v3138 = vpop.xlane.xlu0 %3137
    %vm3139 = vcmp.eq.f32.partialorder %v3130, %v3138
    %v3140 = vsel %vm3139, %v658, 128
    %v3141 = vand.u32 %v3140, 65535
    %v3142 = vshra.s32 %v3140, 16
    %v3143 = vcvt.s32.f32 %v3141
    %v3144 = vcvt.s32.f32 %v3142
    %3145 = vmin.xlane.f32.xlu0 %v3144
    %v3146 = vpop.xlane.xlu0 %3145
    %vm3147 = vcmp.eq.f32.partialorder %v3144, %v3146
    %v3148 = vsel %vm3147, %v3143, inf
    %3149 = vmin.xlane.f32.xlu0 %v3148
    %v3150 = vpop.xlane.xlu0 %3149
    %v3151 = vcvt.f32.s32 %v3150
    %v3152 = vcvt.f32.s32 %v3146
    %v3153 = vshll.u32 %v3152, 16
    %v3154 = vadd.s32 %v3153, %v3151
    %vm3155 = vcmp.eq.s32.totalorder %v658, %v3154
    %v3156 = vsel %vm3155, 1, 0
    %v3157 = vcvt.s32.f32 %v3156
    %v3158 = vpack.c.bf16 %v3157, %v3157
    %v3159 = vld [vmem:[#allocation9] sm:$0xf]
    %v3160 = vld [vmem:[#allocation9 + $0x4] sm:$0xf]
    %v3161 = vld [vmem:[#allocation9 + $0x8] sm:$0xf]
    %v3162 = vld [vmem:[#allocation9 + $0xc] sm:$0xf]
    %v3163 = vld [vmem:[#allocation9 + $0x10] sm:$0xf]
    %v3164 = vld [vmem:[#allocation9 + $0x14] sm:$0xf]
    %v3165 = vld [vmem:[#allocation9 + $0x18] sm:$0xf]
    %v3166 = vld [vmem:[#allocation9 + $0x1c] sm:$0xf]
    %v3167 = vld [vmem:[#allocation9 + $0x20] sm:$0xf]
    %v3168 = vld [vmem:[#allocation9 + $0x24] sm:$0xf]
    %v3169 = vld [vmem:[#allocation9 + $0x28] sm:$0xf]
    %v3170 = vld [vmem:[#allocation9 + $0x2c] sm:$0xf]
    %v3171 = vld [vmem:[#allocation9 + $0x30] sm:$0xf]
    %v3172 = vld [vmem:[#allocation9 + $0x34] sm:$0xf]
    %v3173 = vld [vmem:[#allocation9 + $0x38] sm:$0xf]
    %v3174 = vld [vmem:[#allocation9 + $0x3c] sm:$0xf]
    %v3191 = vunpack.c.l.b16 %v3159
    %v3192 = vunpack.c.l.b16 %v3160
    %v3193 = vunpack.c.l.b16 %v3161
    %v3194 = vunpack.c.l.b16 %v3162
    %v3195 = vunpack.c.l.b16 %v3163
    %v3196 = vunpack.c.l.b16 %v3164
    %v3197 = vunpack.c.l.b16 %v3165
    %v3198 = vunpack.c.l.b16 %v3166
    %v3199 = vunpack.c.l.b16 %v3167
    %v3200 = vunpack.c.l.b16 %v3168
    %v3201 = vunpack.c.l.b16 %v3169
    %v3202 = vunpack.c.l.b16 %v3170
    %v3203 = vunpack.c.l.b16 %v3171
    %v3204 = vunpack.c.l.b16 %v3172
    %v3205 = vunpack.c.l.b16 %v3173
    %v3206 = vunpack.c.l.b16 %v3174
    %v3207 = vpack.c.b16 %v3192, %v3191
    %v3208 = vpack.c.b16 %v3194, %v3193
    %v3209 = vpack.c.b16 %v3196, %v3195
    %v3210 = vpack.c.b16 %v3198, %v3197
    %v3211 = vpack.c.b16 %v3200, %v3199
    %v3212 = vpack.c.b16 %v3202, %v3201
    %v3213 = vpack.c.b16 %v3204, %v3203
    %v3214 = vpack.c.b16 %v3206, %v3205
    %3223 = vmatpush.bf16.msra.mxu0 %v3214
    %3224 = vmatpush.bf16.msra.mxu0 %v3213
    %3225 = vmatpush.bf16.msra.mxu0 %v3212
    %3226 = vmatpush.bf16.msra.mxu0 %v3211
    %3227 = vmatpush.bf16.msra.mxu0 %v3210
    %3228 = vmatpush.bf16.msra.mxu0 %v3209
    %3229 = vmatpush.bf16.msra.mxu0 %v3208
    %3230 = vmatpush.bf16.msra.mxu0 %v3207
    %3231 = vmatmul.bf16.gmra.mxu0 %v3158
    %v3232 = vpop.f32.mrf.mxu0
    %v3233 = vadd.f32 0.0, %v3232
    %v3234 = vpop.f32.mrf.mxu0
    %3235 = vdwg.mxu0
    %s3236 = sld [smem:[#allocation2 + $0x1]]
    %s3237 = scvt.s32.f32 %s3236
    %v3238 = vstv %s3237
    %v3239 = vmul.f32 %v3238, %v3136
    %s3240 = ssub.f32 1.0, %s3237
    %v3241 = vstv %s3240
    %v3242 = vmul.f32 %v3241, %v3233
    %v3243 = vadd.f32 %v3239, %v3242
    %v3244 = vpack.c.bf16 %v3243, %v3243
    %v3245 = vld [vmem:[#allocation10] sm:$0xff]
    %v3246 = vld [vmem:[#allocation10 + $0x8] sm:$0xff]
    %v3247 = vld [vmem:[#allocation10 + $0x10] sm:$0xff]
    %v3248 = vld [vmem:[#allocation10 + $0x18] sm:$0xff]
    %v3249 = vld [vmem:[#allocation10 + $0x20] sm:$0xff]
    %v3250 = vld [vmem:[#allocation10 + $0x28] sm:$0xff]
    %v3251 = vld [vmem:[#allocation10 + $0x30] sm:$0xff]
    %v3252 = vld [vmem:[#allocation10 + $0x38] sm:$0xff]
    %v3253 = vld [vmem:[#allocation10 + $0x40] sm:$0xff]
    %v3254 = vld [vmem:[#allocation10 + $0x48] sm:$0xff]
    %v3255 = vld [vmem:[#allocation10 + $0x50] sm:$0xff]
    %v3256 = vld [vmem:[#allocation10 + $0x58] sm:$0xff]
    %v3257 = vld [vmem:[#allocation10 + $0x60] sm:$0xff]
    %v3258 = vld [vmem:[#allocation10 + $0x68] sm:$0xff]
    %v3259 = vld [vmem:[#allocation10 + $0x70] sm:$0xff]
    %v3260 = vld [vmem:[#allocation10 + $0x78] sm:$0xff]
    %v3261 = vld [vmem:[#allocation10 + $0x80] sm:$0xff]
    %v3262 = vld [vmem:[#allocation10 + $0x88] sm:$0xff]
    %v3263 = vld [vmem:[#allocation10 + $0x90] sm:$0xff]
    %v3264 = vld [vmem:[#allocation10 + $0x98] sm:$0xff]
    %v3265 = vld [vmem:[#allocation10 + $0xa0] sm:$0xff]
    %v3266 = vld [vmem:[#allocation10 + $0xa8] sm:$0xff]
    %v3267 = vld [vmem:[#allocation10 + $0xb0] sm:$0xff]
    %v3268 = vld [vmem:[#allocation10 + $0xb8] sm:$0xff]
    %v3269 = vld [vmem:[#allocation10 + $0xc0] sm:$0xff]
    %v3270 = vld [vmem:[#allocation10 + $0xc8] sm:$0xff]
    %v3271 = vld [vmem:[#allocation10 + $0xd0] sm:$0xff]
    %v3272 = vld [vmem:[#allocation10 + $0xd8] sm:$0xff]
    %v3273 = vld [vmem:[#allocation10 + $0xe0] sm:$0xff]
    %v3274 = vld [vmem:[#allocation10 + $0xe8] sm:$0xff]
    %v3275 = vld [vmem:[#allocation10 + $0xf0] sm:$0xff]
    %v3276 = vld [vmem:[#allocation10 + $0xf8] sm:$0xff]
    %v3277 = vld [vmem:[#allocation10 + $0x100] sm:$0xff]
    %v3278 = vld [vmem:[#allocation10 + $0x108] sm:$0xff]
    %v3279 = vld [vmem:[#allocation10 + $0x110] sm:$0xff]
    %v3280 = vld [vmem:[#allocation10 + $0x118] sm:$0xff]
    %v3281 = vld [vmem:[#allocation10 + $0x120] sm:$0xff]
    %v3282 = vld [vmem:[#allocation10 + $0x128] sm:$0xff]
    %v3283 = vld [vmem:[#allocation10 + $0x130] sm:$0xff]
    %v3284 = vld [vmem:[#allocation10 + $0x138] sm:$0xff]
    %v3285 = vld [vmem:[#allocation10 + $0x140] sm:$0xff]
    %v3286 = vld [vmem:[#allocation10 + $0x148] sm:$0xff]
    %v3287 = vld [vmem:[#allocation10 + $0x150] sm:$0xff]
    %v3288 = vld [vmem:[#allocation10 + $0x158] sm:$0xff]
    %v3289 = vld [vmem:[#allocation10 + $0x160] sm:$0xff]
    %v3290 = vld [vmem:[#allocation10 + $0x168] sm:$0xff]
    %v3291 = vld [vmem:[#allocation10 + $0x170] sm:$0xff]
    %v3292 = vld [vmem:[#allocation10 + $0x178] sm:$0xff]
    %v3293 = vld [vmem:[#allocation10 + $0x180] sm:$0xff]
    %v3294 = vld [vmem:[#allocation10 + $0x188] sm:$0xff]
    %v3295 = vld [vmem:[#allocation10 + $0x190] sm:$0xff]
    %v3296 = vld [vmem:[#allocation10 + $0x198] sm:$0xff]
    %v3297 = vld [vmem:[#allocation10 + $0x1a0] sm:$0xff]
    %v3298 = vld [vmem:[#allocation10 + $0x1a8] sm:$0xff]
    %v3299 = vld [vmem:[#allocation10 + $0x1b0] sm:$0xff]
    %v3300 = vld [vmem:[#allocation10 + $0x1b8] sm:$0xff]
    %v3301 = vld [vmem:[#allocation10 + $0x1c0] sm:$0xff]
    %v3302 = vld [vmem:[#allocation10 + $0x1c8] sm:$0xff]
    %v3303 = vld [vmem:[#allocation10 + $0x1d0] sm:$0xff]
    %v3304 = vld [vmem:[#allocation10 + $0x1d8] sm:$0xff]
    %v3305 = vld [vmem:[#allocation10 + $0x1e0] sm:$0xff]
    %v3306 = vld [vmem:[#allocation10 + $0x1e8] sm:$0xff]
    %v3307 = vld [vmem:[#allocation10 + $0x1f0] sm:$0xff]
    %v3308 = vld [vmem:[#allocation10 + $0x1f8] sm:$0xff]
    %v3309 = vld [vmem:[#allocation12] sm:$0xff]
    %v3310 = vld [vmem:[#allocation12 + $0x8] sm:$0xff]
    %v3311 = vld [vmem:[#allocation12 + $0x10] sm:$0xff]
    %v3312 = vld [vmem:[#allocation12 + $0x18] sm:$0xff]
    %v3377 = vunpack.c.l.b16 %v3245
    %v3378 = vunpack.c.h.b16 %v3245
    %v3379 = vunpack.c.l.b16 %v3246
    %v3380 = vunpack.c.h.b16 %v3246
    %v3381 = vunpack.c.l.b16 %v3247
    %v3382 = vunpack.c.h.b16 %v3247
    %v3383 = vunpack.c.l.b16 %v3248
    %v3384 = vunpack.c.h.b16 %v3248
    %v3385 = vunpack.c.l.b16 %v3249
    %v3386 = vunpack.c.h.b16 %v3249
    %v3387 = vunpack.c.l.b16 %v3250
    %v3388 = vunpack.c.h.b16 %v3250
    %v3389 = vunpack.c.l.b16 %v3251
    %v3390 = vunpack.c.h.b16 %v3251
    %v3391 = vunpack.c.l.b16 %v3252
    %v3392 = vunpack.c.h.b16 %v3252
    %v3393 = vunpack.c.l.b16 %v3253
    %v3394 = vunpack.c.h.b16 %v3253
    %v3395 = vunpack.c.l.b16 %v3254
    %v3396 = vunpack.c.h.b16 %v3254
    %v3397 = vunpack.c.l.b16 %v3255
    %v3398 = vunpack.c.h.b16 %v3255
    %v3399 = vunpack.c.l.b16 %v3256
    %v3400 = vunpack.c.h.b16 %v3256
    %v3401 = vunpack.c.l.b16 %v3257
    %v3402 = vunpack.c.h.b16 %v3257
    %v3403 = vunpack.c.l.b16 %v3258
    %v3404 = vunpack.c.h.b16 %v3258
    %v3405 = vunpack.c.l.b16 %v3259
    %v3406 = vunpack.c.h.b16 %v3259
    %v3407 = vunpack.c.l.b16 %v3260
    %v3408 = vunpack.c.h.b16 %v3260
    %v3409 = vunpack.c.l.b16 %v3261
    %v3410 = vunpack.c.h.b16 %v3261
    %v3411 = vunpack.c.l.b16 %v3262
    %v3412 = vunpack.c.h.b16 %v3262
    %v3413 = vunpack.c.l.b16 %v3263
    %v3414 = vunpack.c.h.b16 %v3263
    %v3415 = vunpack.c.l.b16 %v3264
    %v3416 = vunpack.c.h.b16 %v3264
    %v3417 = vunpack.c.l.b16 %v3265
    %v3418 = vunpack.c.h.b16 %v3265
    %v3419 = vunpack.c.l.b16 %v3266
    %v3420 = vunpack.c.h.b16 %v3266
    %v3421 = vunpack.c.l.b16 %v3267
    %v3422 = vunpack.c.h.b16 %v3267
    %v3423 = vunpack.c.l.b16 %v3268
    %v3424 = vunpack.c.h.b16 %v3268
    %v3425 = vunpack.c.l.b16 %v3269
    %v3426 = vunpack.c.h.b16 %v3269
    %v3427 = vunpack.c.l.b16 %v3270
    %v3428 = vunpack.c.h.b16 %v3270
    %v3429 = vunpack.c.l.b16 %v3271
    %v3430 = vunpack.c.h.b16 %v3271
    %v3431 = vunpack.c.l.b16 %v3272
    %v3432 = vunpack.c.h.b16 %v3272
    %v3433 = vunpack.c.l.b16 %v3273
    %v3434 = vunpack.c.h.b16 %v3273
    %v3435 = vunpack.c.l.b16 %v3274
    %v3436 = vunpack.c.h.b16 %v3274
    %v3437 = vunpack.c.l.b16 %v3275
    %v3438 = vunpack.c.h.b16 %v3275
    %v3439 = vunpack.c.l.b16 %v3276
    %v3440 = vunpack.c.h.b16 %v3276
    %v3441 = vunpack.c.l.b16 %v3277
    %v3442 = vunpack.c.h.b16 %v3277
    %v3443 = vunpack.c.l.b16 %v3278
    %v3444 = vunpack.c.h.b16 %v3278
    %v3445 = vunpack.c.l.b16 %v3279
    %v3446 = vunpack.c.h.b16 %v3279
    %v3447 = vunpack.c.l.b16 %v3280
    %v3448 = vunpack.c.h.b16 %v3280
    %v3449 = vunpack.c.l.b16 %v3281
    %v3450 = vunpack.c.h.b16 %v3281
    %v3451 = vunpack.c.l.b16 %v3282
    %v3452 = vunpack.c.h.b16 %v3282
    %v3453 = vunpack.c.l.b16 %v3283
    %v3454 = vunpack.c.h.b16 %v3283
    %v3455 = vunpack.c.l.b16 %v3284
    %v3456 = vunpack.c.h.b16 %v3284
    %v3457 = vunpack.c.l.b16 %v3285
    %v3458 = vunpack.c.h.b16 %v3285
    %v3459 = vunpack.c.l.b16 %v3286
    %v3460 = vunpack.c.h.b16 %v3286
    %v3461 = vunpack.c.l.b16 %v3287
    %v3462 = vunpack.c.h.b16 %v3287
    %v3463 = vunpack.c.l.b16 %v3288
    %v3464 = vunpack.c.h.b16 %v3288
    %v3465 = vunpack.c.l.b16 %v3289
    %v3466 = vunpack.c.h.b16 %v3289
    %v3467 = vunpack.c.l.b16 %v3290
    %v3468 = vunpack.c.h.b16 %v3290
    %v3469 = vunpack.c.l.b16 %v3291
    %v3470 = vunpack.c.h.b16 %v3291
    %v3471 = vunpack.c.l.b16 %v3292
    %v3472 = vunpack.c.h.b16 %v3292
    %v3473 = vunpack.c.l.b16 %v3293
    %v3474 = vunpack.c.h.b16 %v3293
    %v3475 = vunpack.c.l.b16 %v3294
    %v3476 = vunpack.c.h.b16 %v3294
    %v3477 = vunpack.c.l.b16 %v3295
    %v3478 = vunpack.c.h.b16 %v3295
    %v3479 = vunpack.c.l.b16 %v3296
    %v3480 = vunpack.c.h.b16 %v3296
    %v3481 = vunpack.c.l.b16 %v3297
    %v3482 = vunpack.c.h.b16 %v3297
    %v3483 = vunpack.c.l.b16 %v3298
    %v3484 = vunpack.c.h.b16 %v3298
    %v3485 = vunpack.c.l.b16 %v3299
    %v3486 = vunpack.c.h.b16 %v3299
    %v3487 = vunpack.c.l.b16 %v3300
    %v3488 = vunpack.c.h.b16 %v3300
    %v3489 = vunpack.c.l.b16 %v3301
    %v3490 = vunpack.c.h.b16 %v3301
    %v3491 = vunpack.c.l.b16 %v3302
    %v3492 = vunpack.c.h.b16 %v3302
    %v3493 = vunpack.c.l.b16 %v3303
    %v3494 = vunpack.c.h.b16 %v3303
    %v3495 = vunpack.c.l.b16 %v3304
    %v3496 = vunpack.c.h.b16 %v3304
    %v3497 = vunpack.c.l.b16 %v3305
    %v3498 = vunpack.c.h.b16 %v3305
    %v3499 = vunpack.c.l.b16 %v3306
    %v3500 = vunpack.c.h.b16 %v3306
    %v3501 = vunpack.c.l.b16 %v3307
    %v3502 = vunpack.c.h.b16 %v3307
    %v3503 = vunpack.c.l.b16 %v3308
    %v3504 = vunpack.c.h.b16 %v3308
    %v3505 = vpack.c.b16 %v3381, %v3377
    %v3506 = vpack.c.b16 %v3382, %v3378
    %v3507 = vpack.c.b16 %v3383, %v3379
    %v3508 = vpack.c.b16 %v3384, %v3380
    %v3509 = vpack.c.b16 %v3389, %v3385
    %v3510 = vpack.c.b16 %v3390, %v3386
    %v3511 = vpack.c.b16 %v3391, %v3387
    %v3512 = vpack.c.b16 %v3392, %v3388
    %v3513 = vpack.c.b16 %v3397, %v3393
    %v3514 = vpack.c.b16 %v3398, %v3394
    %v3515 = vpack.c.b16 %v3399, %v3395
    %v3516 = vpack.c.b16 %v3400, %v3396
    %v3517 = vpack.c.b16 %v3405, %v3401
    %v3518 = vpack.c.b16 %v3406, %v3402
    %v3519 = vpack.c.b16 %v3407, %v3403
    %v3520 = vpack.c.b16 %v3408, %v3404
    %v3521 = vpack.c.b16 %v3413, %v3409
    %v3522 = vpack.c.b16 %v3414, %v3410
    %v3523 = vpack.c.b16 %v3415, %v3411
    %v3524 = vpack.c.b16 %v3416, %v3412
    %v3525 = vpack.c.b16 %v3421, %v3417
    %v3526 = vpack.c.b16 %v3422, %v3418
    %v3527 = vpack.c.b16 %v3423, %v3419
    %v3528 = vpack.c.b16 %v3424, %v3420
    %v3529 = vpack.c.b16 %v3429, %v3425
    %v3530 = vpack.c.b16 %v3430, %v3426
    %v3531 = vpack.c.b16 %v3431, %v3427
    %v3532 = vpack.c.b16 %v3432, %v3428
    %v3533 = vpack.c.b16 %v3437, %v3433
    %v3534 = vpack.c.b16 %v3438, %v3434
    %v3535 = vpack.c.b16 %v3439, %v3435
    %v3536 = vpack.c.b16 %v3440, %v3436
    %v3537 = vpack.c.b16 %v3445, %v3441
    %v3538 = vpack.c.b16 %v3446, %v3442
    %v3539 = vpack.c.b16 %v3447, %v3443
    %v3540 = vpack.c.b16 %v3448, %v3444
    %v3541 = vpack.c.b16 %v3453, %v3449
    %v3542 = vpack.c.b16 %v3454, %v3450
    %v3543 = vpack.c.b16 %v3455, %v3451
    %v3544 = vpack.c.b16 %v3456, %v3452
    %v3545 = vpack.c.b16 %v3461, %v3457
    %v3546 = vpack.c.b16 %v3462, %v3458
    %v3547 = vpack.c.b16 %v3463, %v3459
    %v3548 = vpack.c.b16 %v3464, %v3460
    %v3549 = vpack.c.b16 %v3469, %v3465
    %v3550 = vpack.c.b16 %v3470, %v3466
    %v3551 = vpack.c.b16 %v3471, %v3467
    %v3552 = vpack.c.b16 %v3472, %v3468
    %v3553 = vpack.c.b16 %v3477, %v3473
    %v3554 = vpack.c.b16 %v3478, %v3474
    %v3555 = vpack.c.b16 %v3479, %v3475
    %v3556 = vpack.c.b16 %v3480, %v3476
    %v3557 = vpack.c.b16 %v3485, %v3481
    %v3558 = vpack.c.b16 %v3486, %v3482
    %v3559 = vpack.c.b16 %v3487, %v3483
    %v3560 = vpack.c.b16 %v3488, %v3484
    %v3561 = vpack.c.b16 %v3493, %v3489
    %v3562 = vpack.c.b16 %v3494, %v3490
    %v3563 = vpack.c.b16 %v3495, %v3491
    %v3564 = vpack.c.b16 %v3496, %v3492
    %v3565 = vpack.c.b16 %v3501, %v3497
    %v3566 = vpack.c.b16 %v3502, %v3498
    %v3567 = vpack.c.b16 %v3503, %v3499
    %v3568 = vpack.c.b16 %v3504, %v3500
    %3633 = vmatpush.bf16.msra.mxu0 %v3533
    %3634 = vmatpush.bf16.msra.mxu0 %v3529
    %3635 = vmatpush.bf16.msra.mxu0 %v3525
    %3636 = vmatpush.bf16.msra.mxu0 %v3521
    %3637 = vmatpush.bf16.msra.mxu0 %v3517
    %3638 = vmatpush.bf16.msra.mxu0 %v3513
    %3639 = vmatpush.bf16.msra.mxu0 %v3509
    %3640 = vmatpush.bf16.msra.mxu0 %v3505
    %3641 = vmatmul.bf16.gmra.mxu0 %v3244
    %v3642 = vpop.f32.mrf.mxu0
    %v3643 = vadd.f32 %v3309, %v3642
    %v3644 = vpop.f32.mrf.mxu0
    %3645 = vdwg.mxu0
    %3646 = vmatpush.bf16.msra.mxu0 %v3565
    %3647 = vmatpush.bf16.msra.mxu0 %v3561
    %3648 = vmatpush.bf16.msra.mxu0 %v3557
    %3649 = vmatpush.bf16.msra.mxu0 %v3553
    %3650 = vmatpush.bf16.msra.mxu0 %v3549
    %3651 = vmatpush.bf16.msra.mxu0 %v3545
    %3652 = vmatpush.bf16.msra.mxu0 %v3541
    %3653 = vmatpush.bf16.msra.mxu0 %v3537
    %3654 = vmatmul.bf16.gmra.mxu0 %v2501
    %v3655 = vpop.f32.mrf.mxu0
    %v3656 = vadd.f32 %v3643, %v3655
    %v3657 = vpop.f32.mrf.mxu0
    %3658 = vdwg.mxu0
    %3659 = vmatpush.bf16.msra.mxu0 %v3534
    %3660 = vmatpush.bf16.msra.mxu0 %v3530
    %3661 = vmatpush.bf16.msra.mxu0 %v3526
    %3662 = vmatpush.bf16.msra.mxu0 %v3522
    %3663 = vmatpush.bf16.msra.mxu0 %v3518
    %3664 = vmatpush.bf16.msra.mxu0 %v3514
    %3665 = vmatpush.bf16.msra.mxu0 %v3510
    %3666 = vmatpush.bf16.msra.mxu0 %v3506
    %3667 = vmatmul.bf16.gmra.mxu0 %v3244
    %v3668 = vpop.f32.mrf.mxu0
    %v3669 = vadd.f32 %v3310, %v3668
    %v3670 = vpop.f32.mrf.mxu0
    %3671 = vdwg.mxu0
    %3672 = vmatpush.bf16.msra.mxu0 %v3566
    %3673 = vmatpush.bf16.msra.mxu0 %v3562
    %3674 = vmatpush.bf16.msra.mxu0 %v3558
    %3675 = vmatpush.bf16.msra.mxu0 %v3554
    %3676 = vmatpush.bf16.msra.mxu0 %v3550
    %3677 = vmatpush.bf16.msra.mxu0 %v3546
    %3678 = vmatpush.bf16.msra.mxu0 %v3542
    %3679 = vmatpush.bf16.msra.mxu0 %v3538
    %3680 = vmatmul.bf16.gmra.mxu0 %v2501
    %v3681 = vpop.f32.mrf.mxu0
    %v3682 = vadd.f32 %v3669, %v3681
    %v3683 = vpop.f32.mrf.mxu0
    %3684 = vdwg.mxu0
    %3685 = vmatpush.bf16.msra.mxu0 %v3535
    %3686 = vmatpush.bf16.msra.mxu0 %v3531
    %3687 = vmatpush.bf16.msra.mxu0 %v3527
    %3688 = vmatpush.bf16.msra.mxu0 %v3523
    %3689 = vmatpush.bf16.msra.mxu0 %v3519
    %3690 = vmatpush.bf16.msra.mxu0 %v3515
    %3691 = vmatpush.bf16.msra.mxu0 %v3511
    %3692 = vmatpush.bf16.msra.mxu0 %v3507
    %3693 = vmatmul.bf16.gmra.mxu0 %v3244
    %v3694 = vpop.f32.mrf.mxu0
    %v3695 = vadd.f32 %v3311, %v3694
    %v3696 = vpop.f32.mrf.mxu0
    %3697 = vdwg.mxu0
    %3698 = vmatpush.bf16.msra.mxu0 %v3567
    %3699 = vmatpush.bf16.msra.mxu0 %v3563
    %3700 = vmatpush.bf16.msra.mxu0 %v3559
    %3701 = vmatpush.bf16.msra.mxu0 %v3555
    %3702 = vmatpush.bf16.msra.mxu0 %v3551
    %3703 = vmatpush.bf16.msra.mxu0 %v3547
    %3704 = vmatpush.bf16.msra.mxu0 %v3543
    %3705 = vmatpush.bf16.msra.mxu0 %v3539
    %3706 = vmatmul.bf16.gmra.mxu0 %v2501
    %v3707 = vpop.f32.mrf.mxu0
    %v3708 = vadd.f32 %v3695, %v3707
    %v3709 = vpop.f32.mrf.mxu0
    %3710 = vdwg.mxu0
    %3711 = vmatpush.bf16.msra.mxu0 %v3536
    %3712 = vmatpush.bf16.msra.mxu0 %v3532
    %3713 = vmatpush.bf16.msra.mxu0 %v3528
    %3714 = vmatpush.bf16.msra.mxu0 %v3524
    %3715 = vmatpush.bf16.msra.mxu0 %v3520
    %3716 = vmatpush.bf16.msra.mxu0 %v3516
    %3717 = vmatpush.bf16.msra.mxu0 %v3512
    %3718 = vmatpush.bf16.msra.mxu0 %v3508
    %3719 = vmatmul.bf16.gmra.mxu0 %v3244
    %v3720 = vpop.f32.mrf.mxu0
    %v3721 = vadd.f32 %v3312, %v3720
    %v3722 = vpop.f32.mrf.mxu0
    %3723 = vdwg.mxu0
    %3724 = vmatpush.bf16.msra.mxu0 %v3568
    %3725 = vmatpush.bf16.msra.mxu0 %v3564
    %3726 = vmatpush.bf16.msra.mxu0 %v3560
    %3727 = vmatpush.bf16.msra.mxu0 %v3556
    %3728 = vmatpush.bf16.msra.mxu0 %v3552
    %3729 = vmatpush.bf16.msra.mxu0 %v3548
    %3730 = vmatpush.bf16.msra.mxu0 %v3544
    %3731 = vmatpush.bf16.msra.mxu0 %v3540
    %3732 = vmatmul.bf16.gmra.mxu0 %v2501
    %v3733 = vpop.f32.mrf.mxu0
    %v3734 = vadd.f32 %v3721, %v3733
    %v3735 = vpop.f32.mrf.mxu0
    %3736 = vdwg.mxu0
    %v3737 = vsub.f32 0.0, %v3656
    %v3738 = vmul.f32 %v3737, 1.442695
    %v3739 = vpow.pop %v3738
    %v3740 = vadd.f32 %v3739, 1.0
    %v3741 = vrcp.pop %v3740
    %v3742 = vmul.f32 %v3740, %v3741
    %v3743 = vsub.f32 1.0, %v3742
    %v3744 = vmul.f32 %v3741, %v3743
    %v3745 = vadd.f32 %v3741, %v3744
    %vm3746 = vweird.f32 %v3740
    %vm3747 = vweird.f32 %v3741
    %vm3748 = vmor %vm3746, %vm3747
    %v3749 = vsel %vm3748, %v3741, %v3745
    %v3750 = vand.u32 2147483647, %v3740
    %vm3751 = vcmp.eq.f32.partialorder %v3750, 8.507059e+37
    %v3752 = vand.u32 %v3740, 2147483648
    %v3753 = vor.u32 1.1754944e-38, %v3752
    %v3754 = vsel %vm3751, %v3753, %v3749
    %v3755 = vsub.f32 0.0, %v3682
    %v3756 = vmul.f32 %v3755, 1.442695
    %v3757 = vpow.pop %v3756
    %v3758 = vadd.f32 %v3757, 1.0
    %v3759 = vrcp.pop %v3758
    %v3760 = vmul.f32 %v3758, %v3759
    %v3761 = vsub.f32 1.0, %v3760
    %v3762 = vmul.f32 %v3759, %v3761
    %v3763 = vadd.f32 %v3759, %v3762
    %vm3764 = vweird.f32 %v3758
    %vm3765 = vweird.f32 %v3759
    %vm3766 = vmor %vm3764, %vm3765
    %v3767 = vsel %vm3766, %v3759, %v3763
    %v3768 = vand.u32 2147483647, %v3758
    %vm3769 = vcmp.eq.f32.partialorder %v3768, 8.507059e+37
    %v3770 = vand.u32 %v3758, 2147483648
    %v3771 = vor.u32 1.1754944e-38, %v3770
    %v3772 = vsel %vm3769, %v3771, %v3767
    %v3773 = vtanh.pop %v3708
    %v3774 = vsub.f32 0.0, %v3734
    %v3775 = vmul.f32 %v3774, 1.442695
    %v3776 = vpow.pop %v3775
    %v3777 = vadd.f32 %v3776, 1.0
    %v3778 = vrcp.pop %v3777
    %v3779 = vmul.f32 %v3777, %v3778
    %v3780 = vsub.f32 1.0, %v3779
    %v3781 = vmul.f32 %v3778, %v3780
    %v3782 = vadd.f32 %v3778, %v3781
    %vm3783 = vweird.f32 %v3777
    %vm3784 = vweird.f32 %v3778
    %vm3785 = vmor %vm3783, %vm3784
    %v3786 = vsel %vm3785, %v3778, %v3782
    %v3787 = vand.u32 2147483647, %v3777
    %vm3788 = vcmp.eq.f32.partialorder %v3787, 8.507059e+37
    %v3789 = vand.u32 %v3777, 2147483648
    %v3790 = vor.u32 1.1754944e-38, %v3789
    %v3791 = vsel %vm3788, %v3790, %v3786
    %v3792 = vmul.f32 %v3772, %v2498
    %v3793 = vmul.f32 %v3754, %v3773
    %v3794 = vadd.f32 %v3792, %v3793
    %v3795 = vtanh.pop %v3794
    %v3796 = vmul.f32 %v3791, %v3795
    %v3797 = vpack.c.bf16 %v3796, %v3796
    %v3798 = vld [vmem:[#allocation13] sm:$0xff]
    %v3799 = vld [vmem:[#allocation13 + $0x8] sm:$0xff]
    %v3800 = vld [vmem:[#allocation13 + $0x10] sm:$0xff]
    %v3801 = vld [vmem:[#allocation13 + $0x18] sm:$0xff]
    %v3802 = vld [vmem:[#allocation13 + $0x20] sm:$0xff]
    %v3803 = vld [vmem:[#allocation13 + $0x28] sm:$0xff]
    %v3804 = vld [vmem:[#allocation13 + $0x30] sm:$0xff]
    %v3805 = vld [vmem:[#allocation13 + $0x38] sm:$0xff]
    %v3806 = vld [vmem:[#allocation13 + $0x40] sm:$0xff]
    %v3807 = vld [vmem:[#allocation13 + $0x48] sm:$0xff]
    %v3808 = vld [vmem:[#allocation13 + $0x50] sm:$0xff]
    %v3809 = vld [vmem:[#allocation13 + $0x58] sm:$0xff]
    %v3810 = vld [vmem:[#allocation13 + $0x60] sm:$0xff]
    %v3811 = vld [vmem:[#allocation13 + $0x68] sm:$0xff]
    %v3812 = vld [vmem:[#allocation13 + $0x70] sm:$0xff]
    %v3813 = vld [vmem:[#allocation13 + $0x78] sm:$0xff]
    %v3814 = vld [vmem:[#allocation13 + $0x80] sm:$0xff]
    %v3815 = vld [vmem:[#allocation13 + $0x88] sm:$0xff]
    %v3816 = vld [vmem:[#allocation13 + $0x90] sm:$0xff]
    %v3817 = vld [vmem:[#allocation13 + $0x98] sm:$0xff]
    %v3818 = vld [vmem:[#allocation13 + $0xa0] sm:$0xff]
    %v3819 = vld [vmem:[#allocation13 + $0xa8] sm:$0xff]
    %v3820 = vld [vmem:[#allocation13 + $0xb0] sm:$0xff]
    %v3821 = vld [vmem:[#allocation13 + $0xb8] sm:$0xff]
    %v3822 = vld [vmem:[#allocation13 + $0xc0] sm:$0xff]
    %v3823 = vld [vmem:[#allocation13 + $0xc8] sm:$0xff]
    %v3824 = vld [vmem:[#allocation13 + $0xd0] sm:$0xff]
    %v3825 = vld [vmem:[#allocation13 + $0xd8] sm:$0xff]
    %v3826 = vld [vmem:[#allocation13 + $0xe0] sm:$0xff]
    %v3827 = vld [vmem:[#allocation13 + $0xe8] sm:$0xff]
    %v3828 = vld [vmem:[#allocation13 + $0xf0] sm:$0xff]
    %v3829 = vld [vmem:[#allocation13 + $0xf8] sm:$0xff]
    %v3830 = vld [vmem:[#allocation13 + $0x100] sm:$0xff]
    %v3831 = vld [vmem:[#allocation13 + $0x108] sm:$0xff]
    %v3832 = vld [vmem:[#allocation13 + $0x110] sm:$0xff]
    %v3833 = vld [vmem:[#allocation13 + $0x118] sm:$0xff]
    %v3834 = vld [vmem:[#allocation13 + $0x120] sm:$0xff]
    %v3835 = vld [vmem:[#allocation13 + $0x128] sm:$0xff]
    %v3836 = vld [vmem:[#allocation13 + $0x130] sm:$0xff]
    %v3837 = vld [vmem:[#allocation13 + $0x138] sm:$0xff]
    %v3838 = vld [vmem:[#allocation13 + $0x140] sm:$0xff]
    %v3839 = vld [vmem:[#allocation13 + $0x148] sm:$0xff]
    %v3840 = vld [vmem:[#allocation13 + $0x150] sm:$0xff]
    %v3841 = vld [vmem:[#allocation13 + $0x158] sm:$0xff]
    %v3842 = vld [vmem:[#allocation13 + $0x160] sm:$0xff]
    %v3843 = vld [vmem:[#allocation13 + $0x168] sm:$0xff]
    %v3844 = vld [vmem:[#allocation13 + $0x170] sm:$0xff]
    %v3845 = vld [vmem:[#allocation13 + $0x178] sm:$0xff]
    %v3846 = vld [vmem:[#allocation13 + $0x180] sm:$0xff]
    %v3847 = vld [vmem:[#allocation13 + $0x188] sm:$0xff]
    %v3848 = vld [vmem:[#allocation13 + $0x190] sm:$0xff]
    %v3849 = vld [vmem:[#allocation13 + $0x198] sm:$0xff]
    %v3850 = vld [vmem:[#allocation13 + $0x1a0] sm:$0xff]
    %v3851 = vld [vmem:[#allocation13 + $0x1a8] sm:$0xff]
    %v3852 = vld [vmem:[#allocation13 + $0x1b0] sm:$0xff]
    %v3853 = vld [vmem:[#allocation13 + $0x1b8] sm:$0xff]
    %v3854 = vld [vmem:[#allocation13 + $0x1c0] sm:$0xff]
    %v3855 = vld [vmem:[#allocation13 + $0x1c8] sm:$0xff]
    %v3856 = vld [vmem:[#allocation13 + $0x1d0] sm:$0xff]
    %v3857 = vld [vmem:[#allocation13 + $0x1d8] sm:$0xff]
    %v3858 = vld [vmem:[#allocation13 + $0x1e0] sm:$0xff]
    %v3859 = vld [vmem:[#allocation13 + $0x1e8] sm:$0xff]
    %v3860 = vld [vmem:[#allocation13 + $0x1f0] sm:$0xff]
    %v3861 = vld [vmem:[#allocation13 + $0x1f8] sm:$0xff]
    %v3862 = vld [vmem:[#allocation15] sm:$0xff]
    %v3863 = vld [vmem:[#allocation15 + $0x8] sm:$0xff]
    %v3864 = vld [vmem:[#allocation15 + $0x10] sm:$0xff]
    %v3865 = vld [vmem:[#allocation15 + $0x18] sm:$0xff]
    %v3930 = vunpack.c.l.b16 %v3798
    %v3931 = vunpack.c.h.b16 %v3798
    %v3932 = vunpack.c.l.b16 %v3799
    %v3933 = vunpack.c.h.b16 %v3799
    %v3934 = vunpack.c.l.b16 %v3800
    %v3935 = vunpack.c.h.b16 %v3800
    %v3936 = vunpack.c.l.b16 %v3801
    %v3937 = vunpack.c.h.b16 %v3801
    %v3938 = vunpack.c.l.b16 %v3802
    %v3939 = vunpack.c.h.b16 %v3802
    %v3940 = vunpack.c.l.b16 %v3803
    %v3941 = vunpack.c.h.b16 %v3803
    %v3942 = vunpack.c.l.b16 %v3804
    %v3943 = vunpack.c.h.b16 %v3804
    %v3944 = vunpack.c.l.b16 %v3805
    %v3945 = vunpack.c.h.b16 %v3805
    %v3946 = vunpack.c.l.b16 %v3806
    %v3947 = vunpack.c.h.b16 %v3806
    %v3948 = vunpack.c.l.b16 %v3807
    %v3949 = vunpack.c.h.b16 %v3807
    %v3950 = vunpack.c.l.b16 %v3808
    %v3951 = vunpack.c.h.b16 %v3808
    %v3952 = vunpack.c.l.b16 %v3809
    %v3953 = vunpack.c.h.b16 %v3809
    %v3954 = vunpack.c.l.b16 %v3810
    %v3955 = vunpack.c.h.b16 %v3810
    %v3956 = vunpack.c.l.b16 %v3811
    %v3957 = vunpack.c.h.b16 %v3811
    %v3958 = vunpack.c.l.b16 %v3812
    %v3959 = vunpack.c.h.b16 %v3812
    %v3960 = vunpack.c.l.b16 %v3813
    %v3961 = vunpack.c.h.b16 %v3813
    %v3962 = vunpack.c.l.b16 %v3814
    %v3963 = vunpack.c.h.b16 %v3814
    %v3964 = vunpack.c.l.b16 %v3815
    %v3965 = vunpack.c.h.b16 %v3815
    %v3966 = vunpack.c.l.b16 %v3816
    %v3967 = vunpack.c.h.b16 %v3816
    %v3968 = vunpack.c.l.b16 %v3817
    %v3969 = vunpack.c.h.b16 %v3817
    %v3970 = vunpack.c.l.b16 %v3818
    %v3971 = vunpack.c.h.b16 %v3818
    %v3972 = vunpack.c.l.b16 %v3819
    %v3973 = vunpack.c.h.b16 %v3819
    %v3974 = vunpack.c.l.b16 %v3820
    %v3975 = vunpack.c.h.b16 %v3820
    %v3976 = vunpack.c.l.b16 %v3821
    %v3977 = vunpack.c.h.b16 %v3821
    %v3978 = vunpack.c.l.b16 %v3822
    %v3979 = vunpack.c.h.b16 %v3822
    %v3980 = vunpack.c.l.b16 %v3823
    %v3981 = vunpack.c.h.b16 %v3823
    %v3982 = vunpack.c.l.b16 %v3824
    %v3983 = vunpack.c.h.b16 %v3824
    %v3984 = vunpack.c.l.b16 %v3825
    %v3985 = vunpack.c.h.b16 %v3825
    %v3986 = vunpack.c.l.b16 %v3826
    %v3987 = vunpack.c.h.b16 %v3826
    %v3988 = vunpack.c.l.b16 %v3827
    %v3989 = vunpack.c.h.b16 %v3827
    %v3990 = vunpack.c.l.b16 %v3828
    %v3991 = vunpack.c.h.b16 %v3828
    %v3992 = vunpack.c.l.b16 %v3829
    %v3993 = vunpack.c.h.b16 %v3829
    %v3994 = vunpack.c.l.b16 %v3830
    %v3995 = vunpack.c.h.b16 %v3830
    %v3996 = vunpack.c.l.b16 %v3831
    %v3997 = vunpack.c.h.b16 %v3831
    %v3998 = vunpack.c.l.b16 %v3832
    %v3999 = vunpack.c.h.b16 %v3832
    %v4000 = vunpack.c.l.b16 %v3833
    %v4001 = vunpack.c.h.b16 %v3833
    %v4002 = vunpack.c.l.b16 %v3834
    %v4003 = vunpack.c.h.b16 %v3834
    %v4004 = vunpack.c.l.b16 %v3835
    %v4005 = vunpack.c.h.b16 %v3835
    %v4006 = vunpack.c.l.b16 %v3836
    %v4007 = vunpack.c.h.b16 %v3836
    %v4008 = vunpack.c.l.b16 %v3837
    %v4009 = vunpack.c.h.b16 %v3837
    %v4010 = vunpack.c.l.b16 %v3838
    %v4011 = vunpack.c.h.b16 %v3838
    %v4012 = vunpack.c.l.b16 %v3839
    %v4013 = vunpack.c.h.b16 %v3839
    %v4014 = vunpack.c.l.b16 %v3840
    %v4015 = vunpack.c.h.b16 %v3840
    %v4016 = vunpack.c.l.b16 %v3841
    %v4017 = vunpack.c.h.b16 %v3841
    %v4018 = vunpack.c.l.b16 %v3842
    %v4019 = vunpack.c.h.b16 %v3842
    %v4020 = vunpack.c.l.b16 %v3843
    %v4021 = vunpack.c.h.b16 %v3843
    %v4022 = vunpack.c.l.b16 %v3844
    %v4023 = vunpack.c.h.b16 %v3844
    %v4024 = vunpack.c.l.b16 %v3845
    %v4025 = vunpack.c.h.b16 %v3845
    %v4026 = vunpack.c.l.b16 %v3846
    %v4027 = vunpack.c.h.b16 %v3846
    %v4028 = vunpack.c.l.b16 %v3847
    %v4029 = vunpack.c.h.b16 %v3847
    %v4030 = vunpack.c.l.b16 %v3848
    %v4031 = vunpack.c.h.b16 %v3848
    %v4032 = vunpack.c.l.b16 %v3849
    %v4033 = vunpack.c.h.b16 %v3849
    %v4034 = vunpack.c.l.b16 %v3850
    %v4035 = vunpack.c.h.b16 %v3850
    %v4036 = vunpack.c.l.b16 %v3851
    %v4037 = vunpack.c.h.b16 %v3851
    %v4038 = vunpack.c.l.b16 %v3852
    %v4039 = vunpack.c.h.b16 %v3852
    %v4040 = vunpack.c.l.b16 %v3853
    %v4041 = vunpack.c.h.b16 %v3853
    %v4042 = vunpack.c.l.b16 %v3854
    %v4043 = vunpack.c.h.b16 %v3854
    %v4044 = vunpack.c.l.b16 %v3855
    %v4045 = vunpack.c.h.b16 %v3855
    %v4046 = vunpack.c.l.b16 %v3856
    %v4047 = vunpack.c.h.b16 %v3856
    %v4048 = vunpack.c.l.b16 %v3857
    %v4049 = vunpack.c.h.b16 %v3857
    %v4050 = vunpack.c.l.b16 %v3858
    %v4051 = vunpack.c.h.b16 %v3858
    %v4052 = vunpack.c.l.b16 %v3859
    %v4053 = vunpack.c.h.b16 %v3859
    %v4054 = vunpack.c.l.b16 %v3860
    %v4055 = vunpack.c.h.b16 %v3860
    %v4056 = vunpack.c.l.b16 %v3861
    %v4057 = vunpack.c.h.b16 %v3861
    %v4058 = vpack.c.b16 %v3934, %v3930
    %v4059 = vpack.c.b16 %v3935, %v3931
    %v4060 = vpack.c.b16 %v3936, %v3932
    %v4061 = vpack.c.b16 %v3937, %v3933
    %v4062 = vpack.c.b16 %v3942, %v3938
    %v4063 = vpack.c.b16 %v3943, %v3939
    %v4064 = vpack.c.b16 %v3944, %v3940
    %v4065 = vpack.c.b16 %v3945, %v3941
    %v4066 = vpack.c.b16 %v3950, %v3946
    %v4067 = vpack.c.b16 %v3951, %v3947
    %v4068 = vpack.c.b16 %v3952, %v3948
    %v4069 = vpack.c.b16 %v3953, %v3949
    %v4070 = vpack.c.b16 %v3958, %v3954
    %v4071 = vpack.c.b16 %v3959, %v3955
    %v4072 = vpack.c.b16 %v3960, %v3956
    %v4073 = vpack.c.b16 %v3961, %v3957
    %v4074 = vpack.c.b16 %v3966, %v3962
    %v4075 = vpack.c.b16 %v3967, %v3963
    %v4076 = vpack.c.b16 %v3968, %v3964
    %v4077 = vpack.c.b16 %v3969, %v3965
    %v4078 = vpack.c.b16 %v3974, %v3970
    %v4079 = vpack.c.b16 %v3975, %v3971
    %v4080 = vpack.c.b16 %v3976, %v3972
    %v4081 = vpack.c.b16 %v3977, %v3973
    %v4082 = vpack.c.b16 %v3982, %v3978
    %v4083 = vpack.c.b16 %v3983, %v3979
    %v4084 = vpack.c.b16 %v3984, %v3980
    %v4085 = vpack.c.b16 %v3985, %v3981
    %v4086 = vpack.c.b16 %v3990, %v3986
    %v4087 = vpack.c.b16 %v3991, %v3987
    %v4088 = vpack.c.b16 %v3992, %v3988
    %v4089 = vpack.c.b16 %v3993, %v3989
    %v4090 = vpack.c.b16 %v3998, %v3994
    %v4091 = vpack.c.b16 %v3999, %v3995
    %v4092 = vpack.c.b16 %v4000, %v3996
    %v4093 = vpack.c.b16 %v4001, %v3997
    %v4094 = vpack.c.b16 %v4006, %v4002
    %v4095 = vpack.c.b16 %v4007, %v4003
    %v4096 = vpack.c.b16 %v4008, %v4004
    %v4097 = vpack.c.b16 %v4009, %v4005
    %v4098 = vpack.c.b16 %v4014, %v4010
    %v4099 = vpack.c.b16 %v4015, %v4011
    %v4100 = vpack.c.b16 %v4016, %v4012
    %v4101 = vpack.c.b16 %v4017, %v4013
    %v4102 = vpack.c.b16 %v4022, %v4018
    %v4103 = vpack.c.b16 %v4023, %v4019
    %v4104 = vpack.c.b16 %v4024, %v4020
    %v4105 = vpack.c.b16 %v4025, %v4021
    %v4106 = vpack.c.b16 %v4030, %v4026
    %v4107 = vpack.c.b16 %v4031, %v4027
    %v4108 = vpack.c.b16 %v4032, %v4028
    %v4109 = vpack.c.b16 %v4033, %v4029
    %v4110 = vpack.c.b16 %v4038, %v4034
    %v4111 = vpack.c.b16 %v4039, %v4035
    %v4112 = vpack.c.b16 %v4040, %v4036
    %v4113 = vpack.c.b16 %v4041, %v4037
    %v4114 = vpack.c.b16 %v4046, %v4042
    %v4115 = vpack.c.b16 %v4047, %v4043
    %v4116 = vpack.c.b16 %v4048, %v4044
    %v4117 = vpack.c.b16 %v4049, %v4045
    %v4118 = vpack.c.b16 %v4054, %v4050
    %v4119 = vpack.c.b16 %v4055, %v4051
    %v4120 = vpack.c.b16 %v4056, %v4052
    %v4121 = vpack.c.b16 %v4057, %v4053
    %4186 = vmatpush.bf16.msra.mxu0 %v4086
    %4187 = vmatpush.bf16.msra.mxu0 %v4082
    %4188 = vmatpush.bf16.msra.mxu0 %v4078
    %4189 = vmatpush.bf16.msra.mxu0 %v4074
    %4190 = vmatpush.bf16.msra.mxu0 %v4070
    %4191 = vmatpush.bf16.msra.mxu0 %v4066
    %4192 = vmatpush.bf16.msra.mxu0 %v4062
    %4193 = vmatpush.bf16.msra.mxu0 %v4058
    %4194 = vmatmul.bf16.gmra.mxu0 %v3797
    %v4195 = vpop.f32.mrf.mxu0
    %v4196 = vadd.f32 %v3862, %v4195
    %v4197 = vpop.f32.mrf.mxu0
    %4198 = vdwg.mxu0
    %4199 = vmatpush.bf16.msra.mxu0 %v4118
    %4200 = vmatpush.bf16.msra.mxu0 %v4114
    %4201 = vmatpush.bf16.msra.mxu0 %v4110
    %4202 = vmatpush.bf16.msra.mxu0 %v4106
    %4203 = vmatpush.bf16.msra.mxu0 %v4102
    %4204 = vmatpush.bf16.msra.mxu0 %v4098
    %4205 = vmatpush.bf16.msra.mxu0 %v4094
    %4206 = vmatpush.bf16.msra.mxu0 %v4090
    %4207 = vmatmul.bf16.gmra.mxu0 %v3054
    %v4208 = vpop.f32.mrf.mxu0
    %v4209 = vadd.f32 %v4196, %v4208
    %v4210 = vpop.f32.mrf.mxu0
    %4211 = vdwg.mxu0
    %4212 = vmatpush.bf16.msra.mxu0 %v4087
    %4213 = vmatpush.bf16.msra.mxu0 %v4083
    %4214 = vmatpush.bf16.msra.mxu0 %v4079
    %4215 = vmatpush.bf16.msra.mxu0 %v4075
    %4216 = vmatpush.bf16.msra.mxu0 %v4071
    %4217 = vmatpush.bf16.msra.mxu0 %v4067
    %4218 = vmatpush.bf16.msra.mxu0 %v4063
    %4219 = vmatpush.bf16.msra.mxu0 %v4059
    %4220 = vmatmul.bf16.gmra.mxu0 %v3797
    %v4221 = vpop.f32.mrf.mxu0
    %v4222 = vadd.f32 %v3863, %v4221
    %v4223 = vpop.f32.mrf.mxu0
    %4224 = vdwg.mxu0
    %4225 = vmatpush.bf16.msra.mxu0 %v4119
    %4226 = vmatpush.bf16.msra.mxu0 %v4115
    %4227 = vmatpush.bf16.msra.mxu0 %v4111
    %4228 = vmatpush.bf16.msra.mxu0 %v4107
    %4229 = vmatpush.bf16.msra.mxu0 %v4103
    %4230 = vmatpush.bf16.msra.mxu0 %v4099
    %4231 = vmatpush.bf16.msra.mxu0 %v4095
    %4232 = vmatpush.bf16.msra.mxu0 %v4091
    %4233 = vmatmul.bf16.gmra.mxu0 %v3054
    %v4234 = vpop.f32.mrf.mxu0
    %v4235 = vadd.f32 %v4222, %v4234
    %v4236 = vpop.f32.mrf.mxu0
    %4237 = vdwg.mxu0
    %4238 = vmatpush.bf16.msra.mxu0 %v4088
    %4239 = vmatpush.bf16.msra.mxu0 %v4084
    %4240 = vmatpush.bf16.msra.mxu0 %v4080
    %4241 = vmatpush.bf16.msra.mxu0 %v4076
    %4242 = vmatpush.bf16.msra.mxu0 %v4072
    %4243 = vmatpush.bf16.msra.mxu0 %v4068
    %4244 = vmatpush.bf16.msra.mxu0 %v4064
    %4245 = vmatpush.bf16.msra.mxu0 %v4060
    %4246 = vmatmul.bf16.gmra.mxu0 %v3797
    %v4247 = vpop.f32.mrf.mxu0
    %v4248 = vadd.f32 %v3864, %v4247
    %v4249 = vpop.f32.mrf.mxu0
    %4250 = vdwg.mxu0
    %4251 = vmatpush.bf16.msra.mxu0 %v4120
    %4252 = vmatpush.bf16.msra.mxu0 %v4116
    %4253 = vmatpush.bf16.msra.mxu0 %v4112
    %4254 = vmatpush.bf16.msra.mxu0 %v4108
    %4255 = vmatpush.bf16.msra.mxu0 %v4104
    %4256 = vmatpush.bf16.msra.mxu0 %v4100
    %4257 = vmatpush.bf16.msra.mxu0 %v4096
    %4258 = vmatpush.bf16.msra.mxu0 %v4092
    %4259 = vmatmul.bf16.gmra.mxu0 %v3054
    %v4260 = vpop.f32.mrf.mxu0
    %v4261 = vadd.f32 %v4248, %v4260
    %v4262 = vpop.f32.mrf.mxu0
    %4263 = vdwg.mxu0
    %4264 = vmatpush.bf16.msra.mxu0 %v4089
    %4265 = vmatpush.bf16.msra.mxu0 %v4085
    %4266 = vmatpush.bf16.msra.mxu0 %v4081
    %4267 = vmatpush.bf16.msra.mxu0 %v4077
    %4268 = vmatpush.bf16.msra.mxu0 %v4073
    %4269 = vmatpush.bf16.msra.mxu0 %v4069
    %4270 = vmatpush.bf16.msra.mxu0 %v4065
    %4271 = vmatpush.bf16.msra.mxu0 %v4061
    %4272 = vmatmul.bf16.gmra.mxu0 %v3797
    %v4273 = vpop.f32.mrf.mxu0
    %v4274 = vadd.f32 %v3865, %v4273
    %v4275 = vpop.f32.mrf.mxu0
    %4276 = vdwg.mxu0
    %4277 = vmatpush.bf16.msra.mxu0 %v4121
    %4278 = vmatpush.bf16.msra.mxu0 %v4117
    %4279 = vmatpush.bf16.msra.mxu0 %v4113
    %4280 = vmatpush.bf16.msra.mxu0 %v4109
    %4281 = vmatpush.bf16.msra.mxu0 %v4105
    %4282 = vmatpush.bf16.msra.mxu0 %v4101
    %4283 = vmatpush.bf16.msra.mxu0 %v4097
    %4284 = vmatpush.bf16.msra.mxu0 %v4093
    %4285 = vmatmul.bf16.gmra.mxu0 %v3054
    %v4286 = vpop.f32.mrf.mxu0
    %v4287 = vadd.f32 %v4274, %v4286
    %v4288 = vpop.f32.mrf.mxu0
    %4289 = vdwg.mxu0
    %v4290 = vsub.f32 0.0, %v4209
    %v4291 = vmul.f32 %v4290, 1.442695
    %v4292 = vpow.pop %v4291
    %v4293 = vadd.f32 %v4292, 1.0
    %v4294 = vrcp.pop %v4293
    %v4295 = vmul.f32 %v4293, %v4294
    %v4296 = vsub.f32 1.0, %v4295
    %v4297 = vmul.f32 %v4294, %v4296
    %v4298 = vadd.f32 %v4294, %v4297
    %vm4299 = vweird.f32 %v4293
    %vm4300 = vweird.f32 %v4294
    %vm4301 = vmor %vm4299, %vm4300
    %v4302 = vsel %vm4301, %v4294, %v4298
    %v4303 = vand.u32 2147483647, %v4293
    %vm4304 = vcmp.eq.f32.partialorder %v4303, 8.507059e+37
    %v4305 = vand.u32 %v4293, 2147483648
    %v4306 = vor.u32 1.1754944e-38, %v4305
    %v4307 = vsel %vm4304, %v4306, %v4302
    %v4308 = vsub.f32 0.0, %v4235
    %v4309 = vmul.f32 %v4308, 1.442695
    %v4310 = vpow.pop %v4309
    %v4311 = vadd.f32 %v4310, 1.0
    %v4312 = vrcp.pop %v4311
    %v4313 = vmul.f32 %v4311, %v4312
    %v4314 = vsub.f32 1.0, %v4313
    %v4315 = vmul.f32 %v4312, %v4314
    %v4316 = vadd.f32 %v4312, %v4315
    %vm4317 = vweird.f32 %v4311
    %vm4318 = vweird.f32 %v4312
    %vm4319 = vmor %vm4317, %vm4318
    %v4320 = vsel %vm4319, %v4312, %v4316
    %v4321 = vand.u32 2147483647, %v4311
    %vm4322 = vcmp.eq.f32.partialorder %v4321, 8.507059e+37
    %v4323 = vand.u32 %v4311, 2147483648
    %v4324 = vor.u32 1.1754944e-38, %v4323
    %v4325 = vsel %vm4322, %v4324, %v4320
    %v4326 = vtanh.pop %v4261
    %v4327 = vsub.f32 0.0, %v4287
    %v4328 = vmul.f32 %v4327, 1.442695
    %v4329 = vpow.pop %v4328
    %v4330 = vadd.f32 %v4329, 1.0
    %v4331 = vrcp.pop %v4330
    %v4332 = vmul.f32 %v4330, %v4331
    %v4333 = vsub.f32 1.0, %v4332
    %v4334 = vmul.f32 %v4331, %v4333
    %v4335 = vadd.f32 %v4331, %v4334
    %vm4336 = vweird.f32 %v4330
    %vm4337 = vweird.f32 %v4331
    %vm4338 = vmor %vm4336, %vm4337
    %v4339 = vsel %vm4338, %v4331, %v4335
    %v4340 = vand.u32 2147483647, %v4330
    %vm4341 = vcmp.eq.f32.partialorder %v4340, 8.507059e+37
    %v4342 = vand.u32 %v4330, 2147483648
    %v4343 = vor.u32 1.1754944e-38, %v4342
    %v4344 = vsel %vm4341, %v4343, %v4339
    %v4345 = vmul.f32 %v4325, %v3051
    %v4346 = vmul.f32 %v4307, %v4326
    %v4347 = vadd.f32 %v4345, %v4346
    %v4348 = vtanh.pop %v4347
    %v4349 = vmul.f32 %v4344, %v4348
    %v4350 = vpack.c.bf16 %v4349, %v4349
    %v4351 = vld [vmem:[#allocation16] sm:$0xf]
    %v4352 = vld [vmem:[#allocation16 + $0x4] sm:$0xf]
    %v4353 = vld [vmem:[#allocation16 + $0x8] sm:$0xf]
    %v4354 = vld [vmem:[#allocation16 + $0xc] sm:$0xf]
    %v4355 = vld [vmem:[#allocation16 + $0x10] sm:$0xf]
    %v4356 = vld [vmem:[#allocation16 + $0x14] sm:$0xf]
    %v4357 = vld [vmem:[#allocation16 + $0x18] sm:$0xf]
    %v4358 = vld [vmem:[#allocation16 + $0x1c] sm:$0xf]
    %v4359 = vld [vmem:[#allocation16 + $0x20] sm:$0xf]
    %v4360 = vld [vmem:[#allocation16 + $0x24] sm:$0xf]
    %v4361 = vld [vmem:[#allocation16 + $0x28] sm:$0xf]
    %v4362 = vld [vmem:[#allocation16 + $0x2c] sm:$0xf]
    %v4363 = vld [vmem:[#allocation16 + $0x30] sm:$0xf]
    %v4364 = vld [vmem:[#allocation16 + $0x34] sm:$0xf]
    %v4365 = vld [vmem:[#allocation16 + $0x38] sm:$0xf]
    %v4366 = vld [vmem:[#allocation16 + $0x3c] sm:$0xf]
    %v4367 = vld [vmem:[%s9] sm:$0xff]
    %v4384 = vunpack.c.l.b16 %v4351
    %v4385 = vunpack.c.l.b16 %v4352
    %v4386 = vunpack.c.l.b16 %v4353
    %v4387 = vunpack.c.l.b16 %v4354
    %v4388 = vunpack.c.l.b16 %v4355
    %v4389 = vunpack.c.l.b16 %v4356
    %v4390 = vunpack.c.l.b16 %v4357
    %v4391 = vunpack.c.l.b16 %v4358
    %v4392 = vunpack.c.l.b16 %v4359
    %v4393 = vunpack.c.l.b16 %v4360
    %v4394 = vunpack.c.l.b16 %v4361
    %v4395 = vunpack.c.l.b16 %v4362
    %v4396 = vunpack.c.l.b16 %v4363
    %v4397 = vunpack.c.l.b16 %v4364
    %v4398 = vunpack.c.l.b16 %v4365
    %v4399 = vunpack.c.l.b16 %v4366
    %v4400 = vpack.c.b16 %v4385, %v4384
    %v4401 = vpack.c.b16 %v4387, %v4386
    %v4402 = vpack.c.b16 %v4389, %v4388
    %v4403 = vpack.c.b16 %v4391, %v4390
    %v4404 = vpack.c.b16 %v4393, %v4392
    %v4405 = vpack.c.b16 %v4395, %v4394
    %v4406 = vpack.c.b16 %v4397, %v4396
    %v4407 = vpack.c.b16 %v4399, %v4398
    %4416 = vmatpush.bf16.msra.mxu0 %v4407
    %4417 = vmatpush.bf16.msra.mxu0 %v4406
    %4418 = vmatpush.bf16.msra.mxu0 %v4405
    %4419 = vmatpush.bf16.msra.mxu0 %v4404
    %4420 = vmatpush.bf16.msra.mxu0 %v4403
    %4421 = vmatpush.bf16.msra.mxu0 %v4402
    %4422 = vmatpush.bf16.msra.mxu0 %v4401
    %4423 = vmatpush.bf16.msra.mxu0 %v4400
    %4424 = vmatmul.bf16.gmra.mxu0 %v4350
    %v4425 = vpop.f32.mrf.mxu0
    %v4426 = vadd.f32 %v4367, %v4425
    %v4427 = vpop.f32.mrf.mxu0
    %4428 = vdwg.mxu0
    %s4429 = scalar_lea.vmem [#allocation18], 16
    %4430 = vst [vmem:[%s4429] sm:$0xff] %v4426
    %s4431 = scalar_lea.vmem [#allocation7], 24
    %v4432 = vld [vmem:[%s4431] sm:$0xff]
    %4433 = vmax.xlane.f32.xlu0 %v4426
    %v4434 = vpop.xlane.xlu0 %4433
    %vm4435 = vcmp.eq.f32.partialorder %v4426, %v4434
    %v4436 = vsel %vm4435, %v658, 128
    %v4437 = vand.u32 %v4436, 65535
    %v4438 = vshra.s32 %v4436, 16
    %v4439 = vcvt.s32.f32 %v4437
    %v4440 = vcvt.s32.f32 %v4438
    %4441 = vmin.xlane.f32.xlu0 %v4440
    %v4442 = vpop.xlane.xlu0 %4441
    %vm4443 = vcmp.eq.f32.partialorder %v4440, %v4442
    %v4444 = vsel %vm4443, %v4439, inf
    %4445 = vmin.xlane.f32.xlu0 %v4444
    %v4446 = vpop.xlane.xlu0 %4445
    %v4447 = vcvt.f32.s32 %v4446
    %v4448 = vcvt.f32.s32 %v4442
    %v4449 = vshll.u32 %v4448, 16
    %v4450 = vadd.s32 %v4449, %v4447
    %vm4451 = vcmp.eq.s32.totalorder %v658, %v4450
    %v4452 = vsel %vm4451, 1, 0
    %v4453 = vcvt.s32.f32 %v4452
    %v4454 = vpack.c.bf16 %v4453, %v4453
    %v4455 = vld [vmem:[#allocation9] sm:$0xf]
    %v4456 = vld [vmem:[#allocation9 + $0x4] sm:$0xf]
    %v4457 = vld [vmem:[#allocation9 + $0x8] sm:$0xf]
    %v4458 = vld [vmem:[#allocation9 + $0xc] sm:$0xf]
    %v4459 = vld [vmem:[#allocation9 + $0x10] sm:$0xf]
    %v4460 = vld [vmem:[#allocation9 + $0x14] sm:$0xf]
    %v4461 = vld [vmem:[#allocation9 + $0x18] sm:$0xf]
    %v4462 = vld [vmem:[#allocation9 + $0x1c] sm:$0xf]
    %v4463 = vld [vmem:[#allocation9 + $0x20] sm:$0xf]
    %v4464 = vld [vmem:[#allocation9 + $0x24] sm:$0xf]
    %v4465 = vld [vmem:[#allocation9 + $0x28] sm:$0xf]
    %v4466 = vld [vmem:[#allocation9 + $0x2c] sm:$0xf]
    %v4467 = vld [vmem:[#allocation9 + $0x30] sm:$0xf]
    %v4468 = vld [vmem:[#allocation9 + $0x34] sm:$0xf]
    %v4469 = vld [vmem:[#allocation9 + $0x38] sm:$0xf]
    %v4470 = vld [vmem:[#allocation9 + $0x3c] sm:$0xf]
    %v4487 = vunpack.c.l.b16 %v4455
    %v4488 = vunpack.c.l.b16 %v4456
    %v4489 = vunpack.c.l.b16 %v4457
    %v4490 = vunpack.c.l.b16 %v4458
    %v4491 = vunpack.c.l.b16 %v4459
    %v4492 = vunpack.c.l.b16 %v4460
    %v4493 = vunpack.c.l.b16 %v4461
    %v4494 = vunpack.c.l.b16 %v4462
    %v4495 = vunpack.c.l.b16 %v4463
    %v4496 = vunpack.c.l.b16 %v4464
    %v4497 = vunpack.c.l.b16 %v4465
    %v4498 = vunpack.c.l.b16 %v4466
    %v4499 = vunpack.c.l.b16 %v4467
    %v4500 = vunpack.c.l.b16 %v4468
    %v4501 = vunpack.c.l.b16 %v4469
    %v4502 = vunpack.c.l.b16 %v4470
    %v4503 = vpack.c.b16 %v4488, %v4487
    %v4504 = vpack.c.b16 %v4490, %v4489
    %v4505 = vpack.c.b16 %v4492, %v4491
    %v4506 = vpack.c.b16 %v4494, %v4493
    %v4507 = vpack.c.b16 %v4496, %v4495
    %v4508 = vpack.c.b16 %v4498, %v4497
    %v4509 = vpack.c.b16 %v4500, %v4499
    %v4510 = vpack.c.b16 %v4502, %v4501
    %4519 = vmatpush.bf16.msra.mxu0 %v4510
    %4520 = vmatpush.bf16.msra.mxu0 %v4509
    %4521 = vmatpush.bf16.msra.mxu0 %v4508
    %4522 = vmatpush.bf16.msra.mxu0 %v4507
    %4523 = vmatpush.bf16.msra.mxu0 %v4506
    %4524 = vmatpush.bf16.msra.mxu0 %v4505
    %4525 = vmatpush.bf16.msra.mxu0 %v4504
    %4526 = vmatpush.bf16.msra.mxu0 %v4503
    %4527 = vmatmul.bf16.gmra.mxu0 %v4454
    %v4528 = vpop.f32.mrf.mxu0
    %v4529 = vadd.f32 0.0, %v4528
    %v4530 = vpop.f32.mrf.mxu0
    %4531 = vdwg.mxu0
    %s4532 = sld [smem:[#allocation2 + $0x2]]
    %s4533 = scvt.s32.f32 %s4532
    %v4534 = vstv %s4533
    %v4535 = vmul.f32 %v4534, %v4432
    %s4536 = ssub.f32 1.0, %s4533
    %v4537 = vstv %s4536
    %v4538 = vmul.f32 %v4537, %v4529
    %v4539 = vadd.f32 %v4535, %v4538
    %v4540 = vpack.c.bf16 %v4539, %v4539
    %v4541 = vld [vmem:[#allocation10] sm:$0xff]
    %v4542 = vld [vmem:[#allocation10 + $0x8] sm:$0xff]
    %v4543 = vld [vmem:[#allocation10 + $0x10] sm:$0xff]
    %v4544 = vld [vmem:[#allocation10 + $0x18] sm:$0xff]
    %v4545 = vld [vmem:[#allocation10 + $0x20] sm:$0xff]
    %v4546 = vld [vmem:[#allocation10 + $0x28] sm:$0xff]
    %v4547 = vld [vmem:[#allocation10 + $0x30] sm:$0xff]
    %v4548 = vld [vmem:[#allocation10 + $0x38] sm:$0xff]
    %v4549 = vld [vmem:[#allocation10 + $0x40] sm:$0xff]
    %v4550 = vld [vmem:[#allocation10 + $0x48] sm:$0xff]
    %v4551 = vld [vmem:[#allocation10 + $0x50] sm:$0xff]
    %v4552 = vld [vmem:[#allocation10 + $0x58] sm:$0xff]
    %v4553 = vld [vmem:[#allocation10 + $0x60] sm:$0xff]
    %v4554 = vld [vmem:[#allocation10 + $0x68] sm:$0xff]
    %v4555 = vld [vmem:[#allocation10 + $0x70] sm:$0xff]
    %v4556 = vld [vmem:[#allocation10 + $0x78] sm:$0xff]
    %v4557 = vld [vmem:[#allocation10 + $0x80] sm:$0xff]
    %v4558 = vld [vmem:[#allocation10 + $0x88] sm:$0xff]
    %v4559 = vld [vmem:[#allocation10 + $0x90] sm:$0xff]
    %v4560 = vld [vmem:[#allocation10 + $0x98] sm:$0xff]
    %v4561 = vld [vmem:[#allocation10 + $0xa0] sm:$0xff]
    %v4562 = vld [vmem:[#allocation10 + $0xa8] sm:$0xff]
    %v4563 = vld [vmem:[#allocation10 + $0xb0] sm:$0xff]
    %v4564 = vld [vmem:[#allocation10 + $0xb8] sm:$0xff]
    %v4565 = vld [vmem:[#allocation10 + $0xc0] sm:$0xff]
    %v4566 = vld [vmem:[#allocation10 + $0xc8] sm:$0xff]
    %v4567 = vld [vmem:[#allocation10 + $0xd0] sm:$0xff]
    %v4568 = vld [vmem:[#allocation10 + $0xd8] sm:$0xff]
    %v4569 = vld [vmem:[#allocation10 + $0xe0] sm:$0xff]
    %v4570 = vld [vmem:[#allocation10 + $0xe8] sm:$0xff]
    %v4571 = vld [vmem:[#allocation10 + $0xf0] sm:$0xff]
    %v4572 = vld [vmem:[#allocation10 + $0xf8] sm:$0xff]
    %v4573 = vld [vmem:[#allocation10 + $0x100] sm:$0xff]
    %v4574 = vld [vmem:[#allocation10 + $0x108] sm:$0xff]
    %v4575 = vld [vmem:[#allocation10 + $0x110] sm:$0xff]
    %v4576 = vld [vmem:[#allocation10 + $0x118] sm:$0xff]
    %v4577 = vld [vmem:[#allocation10 + $0x120] sm:$0xff]
    %v4578 = vld [vmem:[#allocation10 + $0x128] sm:$0xff]
    %v4579 = vld [vmem:[#allocation10 + $0x130] sm:$0xff]
    %v4580 = vld [vmem:[#allocation10 + $0x138] sm:$0xff]
    %v4581 = vld [vmem:[#allocation10 + $0x140] sm:$0xff]
    %v4582 = vld [vmem:[#allocation10 + $0x148] sm:$0xff]
    %v4583 = vld [vmem:[#allocation10 + $0x150] sm:$0xff]
    %v4584 = vld [vmem:[#allocation10 + $0x158] sm:$0xff]
    %v4585 = vld [vmem:[#allocation10 + $0x160] sm:$0xff]
    %v4586 = vld [vmem:[#allocation10 + $0x168] sm:$0xff]
    %v4587 = vld [vmem:[#allocation10 + $0x170] sm:$0xff]
    %v4588 = vld [vmem:[#allocation10 + $0x178] sm:$0xff]
    %v4589 = vld [vmem:[#allocation10 + $0x180] sm:$0xff]
    %v4590 = vld [vmem:[#allocation10 + $0x188] sm:$0xff]
    %v4591 = vld [vmem:[#allocation10 + $0x190] sm:$0xff]
    %v4592 = vld [vmem:[#allocation10 + $0x198] sm:$0xff]
    %v4593 = vld [vmem:[#allocation10 + $0x1a0] sm:$0xff]
    %v4594 = vld [vmem:[#allocation10 + $0x1a8] sm:$0xff]
    %v4595 = vld [vmem:[#allocation10 + $0x1b0] sm:$0xff]
    %v4596 = vld [vmem:[#allocation10 + $0x1b8] sm:$0xff]
    %v4597 = vld [vmem:[#allocation10 + $0x1c0] sm:$0xff]
    %v4598 = vld [vmem:[#allocation10 + $0x1c8] sm:$0xff]
    %v4599 = vld [vmem:[#allocation10 + $0x1d0] sm:$0xff]
    %v4600 = vld [vmem:[#allocation10 + $0x1d8] sm:$0xff]
    %v4601 = vld [vmem:[#allocation10 + $0x1e0] sm:$0xff]
    %v4602 = vld [vmem:[#allocation10 + $0x1e8] sm:$0xff]
    %v4603 = vld [vmem:[#allocation10 + $0x1f0] sm:$0xff]
    %v4604 = vld [vmem:[#allocation10 + $0x1f8] sm:$0xff]
    %v4605 = vld [vmem:[#allocation12] sm:$0xff]
    %v4606 = vld [vmem:[#allocation12 + $0x8] sm:$0xff]
    %v4607 = vld [vmem:[#allocation12 + $0x10] sm:$0xff]
    %v4608 = vld [vmem:[#allocation12 + $0x18] sm:$0xff]
    %v4673 = vunpack.c.l.b16 %v4541
    %v4674 = vunpack.c.h.b16 %v4541
    %v4675 = vunpack.c.l.b16 %v4542
    %v4676 = vunpack.c.h.b16 %v4542
    %v4677 = vunpack.c.l.b16 %v4543
    %v4678 = vunpack.c.h.b16 %v4543
    %v4679 = vunpack.c.l.b16 %v4544
    %v4680 = vunpack.c.h.b16 %v4544
    %v4681 = vunpack.c.l.b16 %v4545
    %v4682 = vunpack.c.h.b16 %v4545
    %v4683 = vunpack.c.l.b16 %v4546
    %v4684 = vunpack.c.h.b16 %v4546
    %v4685 = vunpack.c.l.b16 %v4547
    %v4686 = vunpack.c.h.b16 %v4547
    %v4687 = vunpack.c.l.b16 %v4548
    %v4688 = vunpack.c.h.b16 %v4548
    %v4689 = vunpack.c.l.b16 %v4549
    %v4690 = vunpack.c.h.b16 %v4549
    %v4691 = vunpack.c.l.b16 %v4550
    %v4692 = vunpack.c.h.b16 %v4550
    %v4693 = vunpack.c.l.b16 %v4551
    %v4694 = vunpack.c.h.b16 %v4551
    %v4695 = vunpack.c.l.b16 %v4552
    %v4696 = vunpack.c.h.b16 %v4552
    %v4697 = vunpack.c.l.b16 %v4553
    %v4698 = vunpack.c.h.b16 %v4553
    %v4699 = vunpack.c.l.b16 %v4554
    %v4700 = vunpack.c.h.b16 %v4554
    %v4701 = vunpack.c.l.b16 %v4555
    %v4702 = vunpack.c.h.b16 %v4555
    %v4703 = vunpack.c.l.b16 %v4556
    %v4704 = vunpack.c.h.b16 %v4556
    %v4705 = vunpack.c.l.b16 %v4557
    %v4706 = vunpack.c.h.b16 %v4557
    %v4707 = vunpack.c.l.b16 %v4558
    %v4708 = vunpack.c.h.b16 %v4558
    %v4709 = vunpack.c.l.b16 %v4559
    %v4710 = vunpack.c.h.b16 %v4559
    %v4711 = vunpack.c.l.b16 %v4560
    %v4712 = vunpack.c.h.b16 %v4560
    %v4713 = vunpack.c.l.b16 %v4561
    %v4714 = vunpack.c.h.b16 %v4561
    %v4715 = vunpack.c.l.b16 %v4562
    %v4716 = vunpack.c.h.b16 %v4562
    %v4717 = vunpack.c.l.b16 %v4563
    %v4718 = vunpack.c.h.b16 %v4563
    %v4719 = vunpack.c.l.b16 %v4564
    %v4720 = vunpack.c.h.b16 %v4564
    %v4721 = vunpack.c.l.b16 %v4565
    %v4722 = vunpack.c.h.b16 %v4565
    %v4723 = vunpack.c.l.b16 %v4566
    %v4724 = vunpack.c.h.b16 %v4566
    %v4725 = vunpack.c.l.b16 %v4567
    %v4726 = vunpack.c.h.b16 %v4567
    %v4727 = vunpack.c.l.b16 %v4568
    %v4728 = vunpack.c.h.b16 %v4568
    %v4729 = vunpack.c.l.b16 %v4569
    %v4730 = vunpack.c.h.b16 %v4569
    %v4731 = vunpack.c.l.b16 %v4570
    %v4732 = vunpack.c.h.b16 %v4570
    %v4733 = vunpack.c.l.b16 %v4571
    %v4734 = vunpack.c.h.b16 %v4571
    %v4735 = vunpack.c.l.b16 %v4572
    %v4736 = vunpack.c.h.b16 %v4572
    %v4737 = vunpack.c.l.b16 %v4573
    %v4738 = vunpack.c.h.b16 %v4573
    %v4739 = vunpack.c.l.b16 %v4574
    %v4740 = vunpack.c.h.b16 %v4574
    %v4741 = vunpack.c.l.b16 %v4575
    %v4742 = vunpack.c.h.b16 %v4575
    %v4743 = vunpack.c.l.b16 %v4576
    %v4744 = vunpack.c.h.b16 %v4576
    %v4745 = vunpack.c.l.b16 %v4577
    %v4746 = vunpack.c.h.b16 %v4577
    %v4747 = vunpack.c.l.b16 %v4578
    %v4748 = vunpack.c.h.b16 %v4578
    %v4749 = vunpack.c.l.b16 %v4579
    %v4750 = vunpack.c.h.b16 %v4579
    %v4751 = vunpack.c.l.b16 %v4580
    %v4752 = vunpack.c.h.b16 %v4580
    %v4753 = vunpack.c.l.b16 %v4581
    %v4754 = vunpack.c.h.b16 %v4581
    %v4755 = vunpack.c.l.b16 %v4582
    %v4756 = vunpack.c.h.b16 %v4582
    %v4757 = vunpack.c.l.b16 %v4583
    %v4758 = vunpack.c.h.b16 %v4583
    %v4759 = vunpack.c.l.b16 %v4584
    %v4760 = vunpack.c.h.b16 %v4584
    %v4761 = vunpack.c.l.b16 %v4585
    %v4762 = vunpack.c.h.b16 %v4585
    %v4763 = vunpack.c.l.b16 %v4586
    %v4764 = vunpack.c.h.b16 %v4586
    %v4765 = vunpack.c.l.b16 %v4587
    %v4766 = vunpack.c.h.b16 %v4587
    %v4767 = vunpack.c.l.b16 %v4588
    %v4768 = vunpack.c.h.b16 %v4588
    %v4769 = vunpack.c.l.b16 %v4589
    %v4770 = vunpack.c.h.b16 %v4589
    %v4771 = vunpack.c.l.b16 %v4590
    %v4772 = vunpack.c.h.b16 %v4590
    %v4773 = vunpack.c.l.b16 %v4591
    %v4774 = vunpack.c.h.b16 %v4591
    %v4775 = vunpack.c.l.b16 %v4592
    %v4776 = vunpack.c.h.b16 %v4592
    %v4777 = vunpack.c.l.b16 %v4593
    %v4778 = vunpack.c.h.b16 %v4593
    %v4779 = vunpack.c.l.b16 %v4594
    %v4780 = vunpack.c.h.b16 %v4594
    %v4781 = vunpack.c.l.b16 %v4595
    %v4782 = vunpack.c.h.b16 %v4595
    %v4783 = vunpack.c.l.b16 %v4596
    %v4784 = vunpack.c.h.b16 %v4596
    %v4785 = vunpack.c.l.b16 %v4597
    %v4786 = vunpack.c.h.b16 %v4597
    %v4787 = vunpack.c.l.b16 %v4598
    %v4788 = vunpack.c.h.b16 %v4598
    %v4789 = vunpack.c.l.b16 %v4599
    %v4790 = vunpack.c.h.b16 %v4599
    %v4791 = vunpack.c.l.b16 %v4600
    %v4792 = vunpack.c.h.b16 %v4600
    %v4793 = vunpack.c.l.b16 %v4601
    %v4794 = vunpack.c.h.b16 %v4601
    %v4795 = vunpack.c.l.b16 %v4602
    %v4796 = vunpack.c.h.b16 %v4602
    %v4797 = vunpack.c.l.b16 %v4603
    %v4798 = vunpack.c.h.b16 %v4603
    %v4799 = vunpack.c.l.b16 %v4604
    %v4800 = vunpack.c.h.b16 %v4604
    %v4801 = vpack.c.b16 %v4677, %v4673
    %v4802 = vpack.c.b16 %v4678, %v4674
    %v4803 = vpack.c.b16 %v4679, %v4675
    %v4804 = vpack.c.b16 %v4680, %v4676
    %v4805 = vpack.c.b16 %v4685, %v4681
    %v4806 = vpack.c.b16 %v4686, %v4682
    %v4807 = vpack.c.b16 %v4687, %v4683
    %v4808 = vpack.c.b16 %v4688, %v4684
    %v4809 = vpack.c.b16 %v4693, %v4689
    %v4810 = vpack.c.b16 %v4694, %v4690
    %v4811 = vpack.c.b16 %v4695, %v4691
    %v4812 = vpack.c.b16 %v4696, %v4692
    %v4813 = vpack.c.b16 %v4701, %v4697
    %v4814 = vpack.c.b16 %v4702, %v4698
    %v4815 = vpack.c.b16 %v4703, %v4699
    %v4816 = vpack.c.b16 %v4704, %v4700
    %v4817 = vpack.c.b16 %v4709, %v4705
    %v4818 = vpack.c.b16 %v4710, %v4706
    %v4819 = vpack.c.b16 %v4711, %v4707
    %v4820 = vpack.c.b16 %v4712, %v4708
    %v4821 = vpack.c.b16 %v4717, %v4713
    %v4822 = vpack.c.b16 %v4718, %v4714
    %v4823 = vpack.c.b16 %v4719, %v4715
    %v4824 = vpack.c.b16 %v4720, %v4716
    %v4825 = vpack.c.b16 %v4725, %v4721
    %v4826 = vpack.c.b16 %v4726, %v4722
    %v4827 = vpack.c.b16 %v4727, %v4723
    %v4828 = vpack.c.b16 %v4728, %v4724
    %v4829 = vpack.c.b16 %v4733, %v4729
    %v4830 = vpack.c.b16 %v4734, %v4730
    %v4831 = vpack.c.b16 %v4735, %v4731
    %v4832 = vpack.c.b16 %v4736, %v4732
    %v4833 = vpack.c.b16 %v4741, %v4737
    %v4834 = vpack.c.b16 %v4742, %v4738
    %v4835 = vpack.c.b16 %v4743, %v4739
    %v4836 = vpack.c.b16 %v4744, %v4740
    %v4837 = vpack.c.b16 %v4749, %v4745
    %v4838 = vpack.c.b16 %v4750, %v4746
    %v4839 = vpack.c.b16 %v4751, %v4747
    %v4840 = vpack.c.b16 %v4752, %v4748
    %v4841 = vpack.c.b16 %v4757, %v4753
    %v4842 = vpack.c.b16 %v4758, %v4754
    %v4843 = vpack.c.b16 %v4759, %v4755
    %v4844 = vpack.c.b16 %v4760, %v4756
    %v4845 = vpack.c.b16 %v4765, %v4761
    %v4846 = vpack.c.b16 %v4766, %v4762
    %v4847 = vpack.c.b16 %v4767, %v4763
    %v4848 = vpack.c.b16 %v4768, %v4764
    %v4849 = vpack.c.b16 %v4773, %v4769
    %v4850 = vpack.c.b16 %v4774, %v4770
    %v4851 = vpack.c.b16 %v4775, %v4771
    %v4852 = vpack.c.b16 %v4776, %v4772
    %v4853 = vpack.c.b16 %v4781, %v4777
    %v4854 = vpack.c.b16 %v4782, %v4778
    %v4855 = vpack.c.b16 %v4783, %v4779
    %v4856 = vpack.c.b16 %v4784, %v4780
    %v4857 = vpack.c.b16 %v4789, %v4785
    %v4858 = vpack.c.b16 %v4790, %v4786
    %v4859 = vpack.c.b16 %v4791, %v4787
    %v4860 = vpack.c.b16 %v4792, %v4788
    %v4861 = vpack.c.b16 %v4797, %v4793
    %v4862 = vpack.c.b16 %v4798, %v4794
    %v4863 = vpack.c.b16 %v4799, %v4795
    %v4864 = vpack.c.b16 %v4800, %v4796
    %4929 = vmatpush.bf16.msra.mxu0 %v4829
    %4930 = vmatpush.bf16.msra.mxu0 %v4825
    %4931 = vmatpush.bf16.msra.mxu0 %v4821
    %4932 = vmatpush.bf16.msra.mxu0 %v4817
    %4933 = vmatpush.bf16.msra.mxu0 %v4813
    %4934 = vmatpush.bf16.msra.mxu0 %v4809
    %4935 = vmatpush.bf16.msra.mxu0 %v4805
    %4936 = vmatpush.bf16.msra.mxu0 %v4801
    %4937 = vmatmul.bf16.gmra.mxu0 %v4540
    %v4938 = vpop.f32.mrf.mxu0
    %v4939 = vadd.f32 %v4605, %v4938
    %v4940 = vpop.f32.mrf.mxu0
    %4941 = vdwg.mxu0
    %4942 = vmatpush.bf16.msra.mxu0 %v4861
    %4943 = vmatpush.bf16.msra.mxu0 %v4857
    %4944 = vmatpush.bf16.msra.mxu0 %v4853
    %4945 = vmatpush.bf16.msra.mxu0 %v4849
    %4946 = vmatpush.bf16.msra.mxu0 %v4845
    %4947 = vmatpush.bf16.msra.mxu0 %v4841
    %4948 = vmatpush.bf16.msra.mxu0 %v4837
    %4949 = vmatpush.bf16.msra.mxu0 %v4833
    %4950 = vmatmul.bf16.gmra.mxu0 %v3797
    %v4951 = vpop.f32.mrf.mxu0
    %v4952 = vadd.f32 %v4939, %v4951
    %v4953 = vpop.f32.mrf.mxu0
    %4954 = vdwg.mxu0
    %4955 = vmatpush.bf16.msra.mxu0 %v4830
    %4956 = vmatpush.bf16.msra.mxu0 %v4826
    %4957 = vmatpush.bf16.msra.mxu0 %v4822
    %4958 = vmatpush.bf16.msra.mxu0 %v4818
    %4959 = vmatpush.bf16.msra.mxu0 %v4814
    %4960 = vmatpush.bf16.msra.mxu0 %v4810
    %4961 = vmatpush.bf16.msra.mxu0 %v4806
    %4962 = vmatpush.bf16.msra.mxu0 %v4802
    %4963 = vmatmul.bf16.gmra.mxu0 %v4540
    %v4964 = vpop.f32.mrf.mxu0
    %v4965 = vadd.f32 %v4606, %v4964
    %v4966 = vpop.f32.mrf.mxu0
    %4967 = vdwg.mxu0
    %4968 = vmatpush.bf16.msra.mxu0 %v4862
    %4969 = vmatpush.bf16.msra.mxu0 %v4858
    %4970 = vmatpush.bf16.msra.mxu0 %v4854
    %4971 = vmatpush.bf16.msra.mxu0 %v4850
    %4972 = vmatpush.bf16.msra.mxu0 %v4846
    %4973 = vmatpush.bf16.msra.mxu0 %v4842
    %4974 = vmatpush.bf16.msra.mxu0 %v4838
    %4975 = vmatpush.bf16.msra.mxu0 %v4834
    %4976 = vmatmul.bf16.gmra.mxu0 %v3797
    %v4977 = vpop.f32.mrf.mxu0
    %v4978 = vadd.f32 %v4965, %v4977
    %v4979 = vpop.f32.mrf.mxu0
    %4980 = vdwg.mxu0
    %4981 = vmatpush.bf16.msra.mxu0 %v4831
    %4982 = vmatpush.bf16.msra.mxu0 %v4827
    %4983 = vmatpush.bf16.msra.mxu0 %v4823
    %4984 = vmatpush.bf16.msra.mxu0 %v4819
    %4985 = vmatpush.bf16.msra.mxu0 %v4815
    %4986 = vmatpush.bf16.msra.mxu0 %v4811
    %4987 = vmatpush.bf16.msra.mxu0 %v4807
    %4988 = vmatpush.bf16.msra.mxu0 %v4803
    %4989 = vmatmul.bf16.gmra.mxu0 %v4540
    %v4990 = vpop.f32.mrf.mxu0
    %v4991 = vadd.f32 %v4607, %v4990
    %v4992 = vpop.f32.mrf.mxu0
    %4993 = vdwg.mxu0
    %4994 = vmatpush.bf16.msra.mxu0 %v4863
    %4995 = vmatpush.bf16.msra.mxu0 %v4859
    %4996 = vmatpush.bf16.msra.mxu0 %v4855
    %4997 = vmatpush.bf16.msra.mxu0 %v4851
    %4998 = vmatpush.bf16.msra.mxu0 %v4847
    %4999 = vmatpush.bf16.msra.mxu0 %v4843
    %5000 = vmatpush.bf16.msra.mxu0 %v4839
    %5001 = vmatpush.bf16.msra.mxu0 %v4835
    %5002 = vmatmul.bf16.gmra.mxu0 %v3797
    %v5003 = vpop.f32.mrf.mxu0
    %v5004 = vadd.f32 %v4991, %v5003
    %v5005 = vpop.f32.mrf.mxu0
    %5006 = vdwg.mxu0
    %5007 = vmatpush.bf16.msra.mxu0 %v4832
    %5008 = vmatpush.bf16.msra.mxu0 %v4828
    %5009 = vmatpush.bf16.msra.mxu0 %v4824
    %5010 = vmatpush.bf16.msra.mxu0 %v4820
    %5011 = vmatpush.bf16.msra.mxu0 %v4816
    %5012 = vmatpush.bf16.msra.mxu0 %v4812
    %5013 = vmatpush.bf16.msra.mxu0 %v4808
    %5014 = vmatpush.bf16.msra.mxu0 %v4804
    %5015 = vmatmul.bf16.gmra.mxu0 %v4540
    %v5016 = vpop.f32.mrf.mxu0
    %v5017 = vadd.f32 %v4608, %v5016
    %v5018 = vpop.f32.mrf.mxu0
    %5019 = vdwg.mxu0
    %5020 = vmatpush.bf16.msra.mxu0 %v4864
    %5021 = vmatpush.bf16.msra.mxu0 %v4860
    %5022 = vmatpush.bf16.msra.mxu0 %v4856
    %5023 = vmatpush.bf16.msra.mxu0 %v4852
    %5024 = vmatpush.bf16.msra.mxu0 %v4848
    %5025 = vmatpush.bf16.msra.mxu0 %v4844
    %5026 = vmatpush.bf16.msra.mxu0 %v4840
    %5027 = vmatpush.bf16.msra.mxu0 %v4836
    %5028 = vmatmul.bf16.gmra.mxu0 %v3797
    %v5029 = vpop.f32.mrf.mxu0
    %v5030 = vadd.f32 %v5017, %v5029
    %v5031 = vpop.f32.mrf.mxu0
    %5032 = vdwg.mxu0
    %v5033 = vsub.f32 0.0, %v4952
    %v5034 = vmul.f32 %v5033, 1.442695
    %v5035 = vpow.pop %v5034
    %v5036 = vadd.f32 %v5035, 1.0
    %v5037 = vrcp.pop %v5036
    %v5038 = vmul.f32 %v5036, %v5037
    %v5039 = vsub.f32 1.0, %v5038
    %v5040 = vmul.f32 %v5037, %v5039
    %v5041 = vadd.f32 %v5037, %v5040
    %vm5042 = vweird.f32 %v5036
    %vm5043 = vweird.f32 %v5037
    %vm5044 = vmor %vm5042, %vm5043
    %v5045 = vsel %vm5044, %v5037, %v5041
    %v5046 = vand.u32 2147483647, %v5036
    %vm5047 = vcmp.eq.f32.partialorder %v5046, 8.507059e+37
    %v5048 = vand.u32 %v5036, 2147483648
    %v5049 = vor.u32 1.1754944e-38, %v5048
    %v5050 = vsel %vm5047, %v5049, %v5045
    %v5051 = vsub.f32 0.0, %v4978
    %v5052 = vmul.f32 %v5051, 1.442695
    %v5053 = vpow.pop %v5052
    %v5054 = vadd.f32 %v5053, 1.0
    %v5055 = vrcp.pop %v5054
    %v5056 = vmul.f32 %v5054, %v5055
    %v5057 = vsub.f32 1.0, %v5056
    %v5058 = vmul.f32 %v5055, %v5057
    %v5059 = vadd.f32 %v5055, %v5058
    %vm5060 = vweird.f32 %v5054
    %vm5061 = vweird.f32 %v5055
    %vm5062 = vmor %vm5060, %vm5061
    %v5063 = vsel %vm5062, %v5055, %v5059
    %v5064 = vand.u32 2147483647, %v5054
    %vm5065 = vcmp.eq.f32.partialorder %v5064, 8.507059e+37
    %v5066 = vand.u32 %v5054, 2147483648
    %v5067 = vor.u32 1.1754944e-38, %v5066
    %v5068 = vsel %vm5065, %v5067, %v5063
    %v5069 = vtanh.pop %v5004
    %v5070 = vsub.f32 0.0, %v5030
    %v5071 = vmul.f32 %v5070, 1.442695
    %v5072 = vpow.pop %v5071
    %v5073 = vadd.f32 %v5072, 1.0
    %v5074 = vrcp.pop %v5073
    %v5075 = vmul.f32 %v5073, %v5074
    %v5076 = vsub.f32 1.0, %v5075
    %v5077 = vmul.f32 %v5074, %v5076
    %v5078 = vadd.f32 %v5074, %v5077
    %vm5079 = vweird.f32 %v5073
    %vm5080 = vweird.f32 %v5074
    %vm5081 = vmor %vm5079, %vm5080
    %v5082 = vsel %vm5081, %v5074, %v5078
    %v5083 = vand.u32 2147483647, %v5073
    %vm5084 = vcmp.eq.f32.partialorder %v5083, 8.507059e+37
    %v5085 = vand.u32 %v5073, 2147483648
    %v5086 = vor.u32 1.1754944e-38, %v5085
    %v5087 = vsel %vm5084, %v5086, %v5082
    %v5088 = vmul.f32 %v5068, %v3794
    %v5089 = vmul.f32 %v5050, %v5069
    %v5090 = vadd.f32 %v5088, %v5089
    %v5091 = vtanh.pop %v5090
    %v5092 = vmul.f32 %v5087, %v5091
    %v5093 = vpack.c.bf16 %v5092, %v5092
    %v5094 = vld [vmem:[#allocation13] sm:$0xff]
    %v5095 = vld [vmem:[#allocation13 + $0x8] sm:$0xff]
    %v5096 = vld [vmem:[#allocation13 + $0x10] sm:$0xff]
    %v5097 = vld [vmem:[#allocation13 + $0x18] sm:$0xff]
    %v5098 = vld [vmem:[#allocation13 + $0x20] sm:$0xff]
    %v5099 = vld [vmem:[#allocation13 + $0x28] sm:$0xff]
    %v5100 = vld [vmem:[#allocation13 + $0x30] sm:$0xff]
    %v5101 = vld [vmem:[#allocation13 + $0x38] sm:$0xff]
    %v5102 = vld [vmem:[#allocation13 + $0x40] sm:$0xff]
    %v5103 = vld [vmem:[#allocation13 + $0x48] sm:$0xff]
    %v5104 = vld [vmem:[#allocation13 + $0x50] sm:$0xff]
    %v5105 = vld [vmem:[#allocation13 + $0x58] sm:$0xff]
    %v5106 = vld [vmem:[#allocation13 + $0x60] sm:$0xff]
    %v5107 = vld [vmem:[#allocation13 + $0x68] sm:$0xff]
    %v5108 = vld [vmem:[#allocation13 + $0x70] sm:$0xff]
    %v5109 = vld [vmem:[#allocation13 + $0x78] sm:$0xff]
    %v5110 = vld [vmem:[#allocation13 + $0x80] sm:$0xff]
    %v5111 = vld [vmem:[#allocation13 + $0x88] sm:$0xff]
    %v5112 = vld [vmem:[#allocation13 + $0x90] sm:$0xff]
    %v5113 = vld [vmem:[#allocation13 + $0x98] sm:$0xff]
    %v5114 = vld [vmem:[#allocation13 + $0xa0] sm:$0xff]
    %v5115 = vld [vmem:[#allocation13 + $0xa8] sm:$0xff]
    %v5116 = vld [vmem:[#allocation13 + $0xb0] sm:$0xff]
    %v5117 = vld [vmem:[#allocation13 + $0xb8] sm:$0xff]
    %v5118 = vld [vmem:[#allocation13 + $0xc0] sm:$0xff]
    %v5119 = vld [vmem:[#allocation13 + $0xc8] sm:$0xff]
    %v5120 = vld [vmem:[#allocation13 + $0xd0] sm:$0xff]
    %v5121 = vld [vmem:[#allocation13 + $0xd8] sm:$0xff]
    %v5122 = vld [vmem:[#allocation13 + $0xe0] sm:$0xff]
    %v5123 = vld [vmem:[#allocation13 + $0xe8] sm:$0xff]
    %v5124 = vld [vmem:[#allocation13 + $0xf0] sm:$0xff]
    %v5125 = vld [vmem:[#allocation13 + $0xf8] sm:$0xff]
    %v5126 = vld [vmem:[#allocation13 + $0x100] sm:$0xff]
    %v5127 = vld [vmem:[#allocation13 + $0x108] sm:$0xff]
    %v5128 = vld [vmem:[#allocation13 + $0x110] sm:$0xff]
    %v5129 = vld [vmem:[#allocation13 + $0x118] sm:$0xff]
    %v5130 = vld [vmem:[#allocation13 + $0x120] sm:$0xff]
    %v5131 = vld [vmem:[#allocation13 + $0x128] sm:$0xff]
    %v5132 = vld [vmem:[#allocation13 + $0x130] sm:$0xff]
    %v5133 = vld [vmem:[#allocation13 + $0x138] sm:$0xff]
    %v5134 = vld [vmem:[#allocation13 + $0x140] sm:$0xff]
    %v5135 = vld [vmem:[#allocation13 + $0x148] sm:$0xff]
    %v5136 = vld [vmem:[#allocation13 + $0x150] sm:$0xff]
    %v5137 = vld [vmem:[#allocation13 + $0x158] sm:$0xff]
    %v5138 = vld [vmem:[#allocation13 + $0x160] sm:$0xff]
    %v5139 = vld [vmem:[#allocation13 + $0x168] sm:$0xff]
    %v5140 = vld [vmem:[#allocation13 + $0x170] sm:$0xff]
    %v5141 = vld [vmem:[#allocation13 + $0x178] sm:$0xff]
    %v5142 = vld [vmem:[#allocation13 + $0x180] sm:$0xff]
    %v5143 = vld [vmem:[#allocation13 + $0x188] sm:$0xff]
    %v5144 = vld [vmem:[#allocation13 + $0x190] sm:$0xff]
    %v5145 = vld [vmem:[#allocation13 + $0x198] sm:$0xff]
    %v5146 = vld [vmem:[#allocation13 + $0x1a0] sm:$0xff]
    %v5147 = vld [vmem:[#allocation13 + $0x1a8] sm:$0xff]
    %v5148 = vld [vmem:[#allocation13 + $0x1b0] sm:$0xff]
    %v5149 = vld [vmem:[#allocation13 + $0x1b8] sm:$0xff]
    %v5150 = vld [vmem:[#allocation13 + $0x1c0] sm:$0xff]
    %v5151 = vld [vmem:[#allocation13 + $0x1c8] sm:$0xff]
    %v5152 = vld [vmem:[#allocation13 + $0x1d0] sm:$0xff]
    %v5153 = vld [vmem:[#allocation13 + $0x1d8] sm:$0xff]
    %v5154 = vld [vmem:[#allocation13 + $0x1e0] sm:$0xff]
    %v5155 = vld [vmem:[#allocation13 + $0x1e8] sm:$0xff]
    %v5156 = vld [vmem:[#allocation13 + $0x1f0] sm:$0xff]
    %v5157 = vld [vmem:[#allocation13 + $0x1f8] sm:$0xff]
    %v5158 = vld [vmem:[#allocation15] sm:$0xff]
    %v5159 = vld [vmem:[#allocation15 + $0x8] sm:$0xff]
    %v5160 = vld [vmem:[#allocation15 + $0x10] sm:$0xff]
    %v5161 = vld [vmem:[#allocation15 + $0x18] sm:$0xff]
    %v5226 = vunpack.c.l.b16 %v5094
    %v5227 = vunpack.c.h.b16 %v5094
    %v5228 = vunpack.c.l.b16 %v5095
    %v5229 = vunpack.c.h.b16 %v5095
    %v5230 = vunpack.c.l.b16 %v5096
    %v5231 = vunpack.c.h.b16 %v5096
    %v5232 = vunpack.c.l.b16 %v5097
    %v5233 = vunpack.c.h.b16 %v5097
    %v5234 = vunpack.c.l.b16 %v5098
    %v5235 = vunpack.c.h.b16 %v5098
    %v5236 = vunpack.c.l.b16 %v5099
    %v5237 = vunpack.c.h.b16 %v5099
    %v5238 = vunpack.c.l.b16 %v5100
    %v5239 = vunpack.c.h.b16 %v5100
    %v5240 = vunpack.c.l.b16 %v5101
    %v5241 = vunpack.c.h.b16 %v5101
    %v5242 = vunpack.c.l.b16 %v5102
    %v5243 = vunpack.c.h.b16 %v5102
    %v5244 = vunpack.c.l.b16 %v5103
    %v5245 = vunpack.c.h.b16 %v5103
    %v5246 = vunpack.c.l.b16 %v5104
    %v5247 = vunpack.c.h.b16 %v5104
    %v5248 = vunpack.c.l.b16 %v5105
    %v5249 = vunpack.c.h.b16 %v5105
    %v5250 = vunpack.c.l.b16 %v5106
    %v5251 = vunpack.c.h.b16 %v5106
    %v5252 = vunpack.c.l.b16 %v5107
    %v5253 = vunpack.c.h.b16 %v5107
    %v5254 = vunpack.c.l.b16 %v5108
    %v5255 = vunpack.c.h.b16 %v5108
    %v5256 = vunpack.c.l.b16 %v5109
    %v5257 = vunpack.c.h.b16 %v5109
    %v5258 = vunpack.c.l.b16 %v5110
    %v5259 = vunpack.c.h.b16 %v5110
    %v5260 = vunpack.c.l.b16 %v5111
    %v5261 = vunpack.c.h.b16 %v5111
    %v5262 = vunpack.c.l.b16 %v5112
    %v5263 = vunpack.c.h.b16 %v5112
    %v5264 = vunpack.c.l.b16 %v5113
    %v5265 = vunpack.c.h.b16 %v5113
    %v5266 = vunpack.c.l.b16 %v5114
    %v5267 = vunpack.c.h.b16 %v5114
    %v5268 = vunpack.c.l.b16 %v5115
    %v5269 = vunpack.c.h.b16 %v5115
    %v5270 = vunpack.c.l.b16 %v5116
    %v5271 = vunpack.c.h.b16 %v5116
    %v5272 = vunpack.c.l.b16 %v5117
    %v5273 = vunpack.c.h.b16 %v5117
    %v5274 = vunpack.c.l.b16 %v5118
    %v5275 = vunpack.c.h.b16 %v5118
    %v5276 = vunpack.c.l.b16 %v5119
    %v5277 = vunpack.c.h.b16 %v5119
    %v5278 = vunpack.c.l.b16 %v5120
    %v5279 = vunpack.c.h.b16 %v5120
    %v5280 = vunpack.c.l.b16 %v5121
    %v5281 = vunpack.c.h.b16 %v5121
    %v5282 = vunpack.c.l.b16 %v5122
    %v5283 = vunpack.c.h.b16 %v5122
    %v5284 = vunpack.c.l.b16 %v5123
    %v5285 = vunpack.c.h.b16 %v5123
    %v5286 = vunpack.c.l.b16 %v5124
    %v5287 = vunpack.c.h.b16 %v5124
    %v5288 = vunpack.c.l.b16 %v5125
    %v5289 = vunpack.c.h.b16 %v5125
    %v5290 = vunpack.c.l.b16 %v5126
    %v5291 = vunpack.c.h.b16 %v5126
    %v5292 = vunpack.c.l.b16 %v5127
    %v5293 = vunpack.c.h.b16 %v5127
    %v5294 = vunpack.c.l.b16 %v5128
    %v5295 = vunpack.c.h.b16 %v5128
    %v5296 = vunpack.c.l.b16 %v5129
    %v5297 = vunpack.c.h.b16 %v5129
    %v5298 = vunpack.c.l.b16 %v5130
    %v5299 = vunpack.c.h.b16 %v5130
    %v5300 = vunpack.c.l.b16 %v5131
    %v5301 = vunpack.c.h.b16 %v5131
    %v5302 = vunpack.c.l.b16 %v5132
    %v5303 = vunpack.c.h.b16 %v5132
    %v5304 = vunpack.c.l.b16 %v5133
    %v5305 = vunpack.c.h.b16 %v5133
    %v5306 = vunpack.c.l.b16 %v5134
    %v5307 = vunpack.c.h.b16 %v5134
    %v5308 = vunpack.c.l.b16 %v5135
    %v5309 = vunpack.c.h.b16 %v5135
    %v5310 = vunpack.c.l.b16 %v5136
    %v5311 = vunpack.c.h.b16 %v5136
    %v5312 = vunpack.c.l.b16 %v5137
    %v5313 = vunpack.c.h.b16 %v5137
    %v5314 = vunpack.c.l.b16 %v5138
    %v5315 = vunpack.c.h.b16 %v5138
    %v5316 = vunpack.c.l.b16 %v5139
    %v5317 = vunpack.c.h.b16 %v5139
    %v5318 = vunpack.c.l.b16 %v5140
    %v5319 = vunpack.c.h.b16 %v5140
    %v5320 = vunpack.c.l.b16 %v5141
    %v5321 = vunpack.c.h.b16 %v5141
    %v5322 = vunpack.c.l.b16 %v5142
    %v5323 = vunpack.c.h.b16 %v5142
    %v5324 = vunpack.c.l.b16 %v5143
    %v5325 = vunpack.c.h.b16 %v5143
    %v5326 = vunpack.c.l.b16 %v5144
    %v5327 = vunpack.c.h.b16 %v5144
    %v5328 = vunpack.c.l.b16 %v5145
    %v5329 = vunpack.c.h.b16 %v5145
    %v5330 = vunpack.c.l.b16 %v5146
    %v5331 = vunpack.c.h.b16 %v5146
    %v5332 = vunpack.c.l.b16 %v5147
    %v5333 = vunpack.c.h.b16 %v5147
    %v5334 = vunpack.c.l.b16 %v5148
    %v5335 = vunpack.c.h.b16 %v5148
    %v5336 = vunpack.c.l.b16 %v5149
    %v5337 = vunpack.c.h.b16 %v5149
    %v5338 = vunpack.c.l.b16 %v5150
    %v5339 = vunpack.c.h.b16 %v5150
    %v5340 = vunpack.c.l.b16 %v5151
    %v5341 = vunpack.c.h.b16 %v5151
    %v5342 = vunpack.c.l.b16 %v5152
    %v5343 = vunpack.c.h.b16 %v5152
    %v5344 = vunpack.c.l.b16 %v5153
    %v5345 = vunpack.c.h.b16 %v5153
    %v5346 = vunpack.c.l.b16 %v5154
    %v5347 = vunpack.c.h.b16 %v5154
    %v5348 = vunpack.c.l.b16 %v5155
    %v5349 = vunpack.c.h.b16 %v5155
    %v5350 = vunpack.c.l.b16 %v5156
    %v5351 = vunpack.c.h.b16 %v5156
    %v5352 = vunpack.c.l.b16 %v5157
    %v5353 = vunpack.c.h.b16 %v5157
    %v5354 = vpack.c.b16 %v5230, %v5226
    %v5355 = vpack.c.b16 %v5231, %v5227
    %v5356 = vpack.c.b16 %v5232, %v5228
    %v5357 = vpack.c.b16 %v5233, %v5229
    %v5358 = vpack.c.b16 %v5238, %v5234
    %v5359 = vpack.c.b16 %v5239, %v5235
    %v5360 = vpack.c.b16 %v5240, %v5236
    %v5361 = vpack.c.b16 %v5241, %v5237
    %v5362 = vpack.c.b16 %v5246, %v5242
    %v5363 = vpack.c.b16 %v5247, %v5243
    %v5364 = vpack.c.b16 %v5248, %v5244
    %v5365 = vpack.c.b16 %v5249, %v5245
    %v5366 = vpack.c.b16 %v5254, %v5250
    %v5367 = vpack.c.b16 %v5255, %v5251
    %v5368 = vpack.c.b16 %v5256, %v5252
    %v5369 = vpack.c.b16 %v5257, %v5253
    %v5370 = vpack.c.b16 %v5262, %v5258
    %v5371 = vpack.c.b16 %v5263, %v5259
    %v5372 = vpack.c.b16 %v5264, %v5260
    %v5373 = vpack.c.b16 %v5265, %v5261
    %v5374 = vpack.c.b16 %v5270, %v5266
    %v5375 = vpack.c.b16 %v5271, %v5267
    %v5376 = vpack.c.b16 %v5272, %v5268
    %v5377 = vpack.c.b16 %v5273, %v5269
    %v5378 = vpack.c.b16 %v5278, %v5274
    %v5379 = vpack.c.b16 %v5279, %v5275
    %v5380 = vpack.c.b16 %v5280, %v5276
    %v5381 = vpack.c.b16 %v5281, %v5277
    %v5382 = vpack.c.b16 %v5286, %v5282
    %v5383 = vpack.c.b16 %v5287, %v5283
    %v5384 = vpack.c.b16 %v5288, %v5284
    %v5385 = vpack.c.b16 %v5289, %v5285
    %v5386 = vpack.c.b16 %v5294, %v5290
    %v5387 = vpack.c.b16 %v5295, %v5291
    %v5388 = vpack.c.b16 %v5296, %v5292
    %v5389 = vpack.c.b16 %v5297, %v5293
    %v5390 = vpack.c.b16 %v5302, %v5298
    %v5391 = vpack.c.b16 %v5303, %v5299
    %v5392 = vpack.c.b16 %v5304, %v5300
    %v5393 = vpack.c.b16 %v5305, %v5301
    %v5394 = vpack.c.b16 %v5310, %v5306
    %v5395 = vpack.c.b16 %v5311, %v5307
    %v5396 = vpack.c.b16 %v5312, %v5308
    %v5397 = vpack.c.b16 %v5313, %v5309
    %v5398 = vpack.c.b16 %v5318, %v5314
    %v5399 = vpack.c.b16 %v5319, %v5315
    %v5400 = vpack.c.b16 %v5320, %v5316
    %v5401 = vpack.c.b16 %v5321, %v5317
    %v5402 = vpack.c.b16 %v5326, %v5322
    %v5403 = vpack.c.b16 %v5327, %v5323
    %v5404 = vpack.c.b16 %v5328, %v5324
    %v5405 = vpack.c.b16 %v5329, %v5325
    %v5406 = vpack.c.b16 %v5334, %v5330
    %v5407 = vpack.c.b16 %v5335, %v5331
    %v5408 = vpack.c.b16 %v5336, %v5332
    %v5409 = vpack.c.b16 %v5337, %v5333
    %v5410 = vpack.c.b16 %v5342, %v5338
    %v5411 = vpack.c.b16 %v5343, %v5339
    %v5412 = vpack.c.b16 %v5344, %v5340
    %v5413 = vpack.c.b16 %v5345, %v5341
    %v5414 = vpack.c.b16 %v5350, %v5346
    %v5415 = vpack.c.b16 %v5351, %v5347
    %v5416 = vpack.c.b16 %v5352, %v5348
    %v5417 = vpack.c.b16 %v5353, %v5349
    %5482 = vmatpush.bf16.msra.mxu0 %v5382
    %5483 = vmatpush.bf16.msra.mxu0 %v5378
    %5484 = vmatpush.bf16.msra.mxu0 %v5374
    %5485 = vmatpush.bf16.msra.mxu0 %v5370
    %5486 = vmatpush.bf16.msra.mxu0 %v5366
    %5487 = vmatpush.bf16.msra.mxu0 %v5362
    %5488 = vmatpush.bf16.msra.mxu0 %v5358
    %5489 = vmatpush.bf16.msra.mxu0 %v5354
    %5490 = vmatmul.bf16.gmra.mxu0 %v5093
    %v5491 = vpop.f32.mrf.mxu0
    %v5492 = vadd.f32 %v5158, %v5491
    %v5493 = vpop.f32.mrf.mxu0
    %5494 = vdwg.mxu0
    %5495 = vmatpush.bf16.msra.mxu0 %v5414
    %5496 = vmatpush.bf16.msra.mxu0 %v5410
    %5497 = vmatpush.bf16.msra.mxu0 %v5406
    %5498 = vmatpush.bf16.msra.mxu0 %v5402
    %5499 = vmatpush.bf16.msra.mxu0 %v5398
    %5500 = vmatpush.bf16.msra.mxu0 %v5394
    %5501 = vmatpush.bf16.msra.mxu0 %v5390
    %5502 = vmatpush.bf16.msra.mxu0 %v5386
    %5503 = vmatmul.bf16.gmra.mxu0 %v4350
    %v5504 = vpop.f32.mrf.mxu0
    %v5505 = vadd.f32 %v5492, %v5504
    %v5506 = vpop.f32.mrf.mxu0
    %5507 = vdwg.mxu0
    %5508 = vmatpush.bf16.msra.mxu0 %v5383
    %5509 = vmatpush.bf16.msra.mxu0 %v5379
    %5510 = vmatpush.bf16.msra.mxu0 %v5375
    %5511 = vmatpush.bf16.msra.mxu0 %v5371
    %5512 = vmatpush.bf16.msra.mxu0 %v5367
    %5513 = vmatpush.bf16.msra.mxu0 %v5363
    %5514 = vmatpush.bf16.msra.mxu0 %v5359
    %5515 = vmatpush.bf16.msra.mxu0 %v5355
    %5516 = vmatmul.bf16.gmra.mxu0 %v5093
    %v5517 = vpop.f32.mrf.mxu0
    %v5518 = vadd.f32 %v5159, %v5517
    %v5519 = vpop.f32.mrf.mxu0
    %5520 = vdwg.mxu0
    %5521 = vmatpush.bf16.msra.mxu0 %v5415
    %5522 = vmatpush.bf16.msra.mxu0 %v5411
    %5523 = vmatpush.bf16.msra.mxu0 %v5407
    %5524 = vmatpush.bf16.msra.mxu0 %v5403
    %5525 = vmatpush.bf16.msra.mxu0 %v5399
    %5526 = vmatpush.bf16.msra.mxu0 %v5395
    %5527 = vmatpush.bf16.msra.mxu0 %v5391
    %5528 = vmatpush.bf16.msra.mxu0 %v5387
    %5529 = vmatmul.bf16.gmra.mxu0 %v4350
    %v5530 = vpop.f32.mrf.mxu0
    %v5531 = vadd.f32 %v5518, %v5530
    %v5532 = vpop.f32.mrf.mxu0
    %5533 = vdwg.mxu0
    %5534 = vmatpush.bf16.msra.mxu0 %v5384
    %5535 = vmatpush.bf16.msra.mxu0 %v5380
    %5536 = vmatpush.bf16.msra.mxu0 %v5376
    %5537 = vmatpush.bf16.msra.mxu0 %v5372
    %5538 = vmatpush.bf16.msra.mxu0 %v5368
    %5539 = vmatpush.bf16.msra.mxu0 %v5364
    %5540 = vmatpush.bf16.msra.mxu0 %v5360
    %5541 = vmatpush.bf16.msra.mxu0 %v5356
    %5542 = vmatmul.bf16.gmra.mxu0 %v5093
    %v5543 = vpop.f32.mrf.mxu0
    %v5544 = vadd.f32 %v5160, %v5543
    %v5545 = vpop.f32.mrf.mxu0
    %5546 = vdwg.mxu0
    %5547 = vmatpush.bf16.msra.mxu0 %v5416
    %5548 = vmatpush.bf16.msra.mxu0 %v5412
    %5549 = vmatpush.bf16.msra.mxu0 %v5408
    %5550 = vmatpush.bf16.msra.mxu0 %v5404
    %5551 = vmatpush.bf16.msra.mxu0 %v5400
    %5552 = vmatpush.bf16.msra.mxu0 %v5396
    %5553 = vmatpush.bf16.msra.mxu0 %v5392
    %5554 = vmatpush.bf16.msra.mxu0 %v5388
    %5555 = vmatmul.bf16.gmra.mxu0 %v4350
    %v5556 = vpop.f32.mrf.mxu0
    %v5557 = vadd.f32 %v5544, %v5556
    %v5558 = vpop.f32.mrf.mxu0
    %5559 = vdwg.mxu0
    %5560 = vmatpush.bf16.msra.mxu0 %v5385
    %5561 = vmatpush.bf16.msra.mxu0 %v5381
    %5562 = vmatpush.bf16.msra.mxu0 %v5377
    %5563 = vmatpush.bf16.msra.mxu0 %v5373
    %5564 = vmatpush.bf16.msra.mxu0 %v5369
    %5565 = vmatpush.bf16.msra.mxu0 %v5365
    %5566 = vmatpush.bf16.msra.mxu0 %v5361
    %5567 = vmatpush.bf16.msra.mxu0 %v5357
    %5568 = vmatmul.bf16.gmra.mxu0 %v5093
    %v5569 = vpop.f32.mrf.mxu0
    %v5570 = vadd.f32 %v5161, %v5569
    %v5571 = vpop.f32.mrf.mxu0
    %5572 = vdwg.mxu0
    %5573 = vmatpush.bf16.msra.mxu0 %v5417
    %5574 = vmatpush.bf16.msra.mxu0 %v5413
    %5575 = vmatpush.bf16.msra.mxu0 %v5409
    %5576 = vmatpush.bf16.msra.mxu0 %v5405
    %5577 = vmatpush.bf16.msra.mxu0 %v5401
    %5578 = vmatpush.bf16.msra.mxu0 %v5397
    %5579 = vmatpush.bf16.msra.mxu0 %v5393
    %5580 = vmatpush.bf16.msra.mxu0 %v5389
    %5581 = vmatmul.bf16.gmra.mxu0 %v4350
    %v5582 = vpop.f32.mrf.mxu0
    %v5583 = vadd.f32 %v5570, %v5582
    %v5584 = vpop.f32.mrf.mxu0
    %5585 = vdwg.mxu0
    %v5586 = vsub.f32 0.0, %v5505
    %v5587 = vmul.f32 %v5586, 1.442695
    %v5588 = vpow.pop %v5587
    %v5589 = vadd.f32 %v5588, 1.0
    %v5590 = vrcp.pop %v5589
    %v5591 = vmul.f32 %v5589, %v5590
    %v5592 = vsub.f32 1.0, %v5591
    %v5593 = vmul.f32 %v5590, %v5592
    %v5594 = vadd.f32 %v5590, %v5593
    %vm5595 = vweird.f32 %v5589
    %vm5596 = vweird.f32 %v5590
    %vm5597 = vmor %vm5595, %vm5596
    %v5598 = vsel %vm5597, %v5590, %v5594
    %v5599 = vand.u32 2147483647, %v5589
    %vm5600 = vcmp.eq.f32.partialorder %v5599, 8.507059e+37
    %v5601 = vand.u32 %v5589, 2147483648
    %v5602 = vor.u32 1.1754944e-38, %v5601
    %v5603 = vsel %vm5600, %v5602, %v5598
    %v5604 = vsub.f32 0.0, %v5531
    %v5605 = vmul.f32 %v5604, 1.442695
    %v5606 = vpow.pop %v5605
    %v5607 = vadd.f32 %v5606, 1.0
    %v5608 = vrcp.pop %v5607
    %v5609 = vmul.f32 %v5607, %v5608
    %v5610 = vsub.f32 1.0, %v5609
    %v5611 = vmul.f32 %v5608, %v5610
    %v5612 = vadd.f32 %v5608, %v5611
    %vm5613 = vweird.f32 %v5607
    %vm5614 = vweird.f32 %v5608
    %vm5615 = vmor %vm5613, %vm5614
    %v5616 = vsel %vm5615, %v5608, %v5612
    %v5617 = vand.u32 2147483647, %v5607
    %vm5618 = vcmp.eq.f32.partialorder %v5617, 8.507059e+37
    %v5619 = vand.u32 %v5607, 2147483648
    %v5620 = vor.u32 1.1754944e-38, %v5619
    %v5621 = vsel %vm5618, %v5620, %v5616
    %v5622 = vtanh.pop %v5557
    %v5623 = vsub.f32 0.0, %v5583
    %v5624 = vmul.f32 %v5623, 1.442695
    %v5625 = vpow.pop %v5624
    %v5626 = vadd.f32 %v5625, 1.0
    %v5627 = vrcp.pop %v5626
    %v5628 = vmul.f32 %v5626, %v5627
    %v5629 = vsub.f32 1.0, %v5628
    %v5630 = vmul.f32 %v5627, %v5629
    %v5631 = vadd.f32 %v5627, %v5630
    %vm5632 = vweird.f32 %v5626
    %vm5633 = vweird.f32 %v5627
    %vm5634 = vmor %vm5632, %vm5633
    %v5635 = vsel %vm5634, %v5627, %v5631
    %v5636 = vand.u32 2147483647, %v5626
    %vm5637 = vcmp.eq.f32.partialorder %v5636, 8.507059e+37
    %v5638 = vand.u32 %v5626, 2147483648
    %v5639 = vor.u32 1.1754944e-38, %v5638
    %v5640 = vsel %vm5637, %v5639, %v5635
    %v5641 = vmul.f32 %v5621, %v4347
    %v5642 = vmul.f32 %v5603, %v5622
    %v5643 = vadd.f32 %v5641, %v5642
    %v5644 = vtanh.pop %v5643
    %v5645 = vmul.f32 %v5640, %v5644
    %v5646 = vpack.c.bf16 %v5645, %v5645
    %v5647 = vld [vmem:[#allocation16] sm:$0xf]
    %v5648 = vld [vmem:[#allocation16 + $0x4] sm:$0xf]
    %v5649 = vld [vmem:[#allocation16 + $0x8] sm:$0xf]
    %v5650 = vld [vmem:[#allocation16 + $0xc] sm:$0xf]
    %v5651 = vld [vmem:[#allocation16 + $0x10] sm:$0xf]
    %v5652 = vld [vmem:[#allocation16 + $0x14] sm:$0xf]
    %v5653 = vld [vmem:[#allocation16 + $0x18] sm:$0xf]
    %v5654 = vld [vmem:[#allocation16 + $0x1c] sm:$0xf]
    %v5655 = vld [vmem:[#allocation16 + $0x20] sm:$0xf]
    %v5656 = vld [vmem:[#allocation16 + $0x24] sm:$0xf]
    %v5657 = vld [vmem:[#allocation16 + $0x28] sm:$0xf]
    %v5658 = vld [vmem:[#allocation16 + $0x2c] sm:$0xf]
    %v5659 = vld [vmem:[#allocation16 + $0x30] sm:$0xf]
    %v5660 = vld [vmem:[#allocation16 + $0x34] sm:$0xf]
    %v5661 = vld [vmem:[#allocation16 + $0x38] sm:$0xf]
    %v5662 = vld [vmem:[#allocation16 + $0x3c] sm:$0xf]
    %v5663 = vld [vmem:[%s9] sm:$0xff]
    %v5680 = vunpack.c.l.b16 %v5647
    %v5681 = vunpack.c.l.b16 %v5648
    %v5682 = vunpack.c.l.b16 %v5649
    %v5683 = vunpack.c.l.b16 %v5650
    %v5684 = vunpack.c.l.b16 %v5651
    %v5685 = vunpack.c.l.b16 %v5652
    %v5686 = vunpack.c.l.b16 %v5653
    %v5687 = vunpack.c.l.b16 %v5654
    %v5688 = vunpack.c.l.b16 %v5655
    %v5689 = vunpack.c.l.b16 %v5656
    %v5690 = vunpack.c.l.b16 %v5657
    %v5691 = vunpack.c.l.b16 %v5658
    %v5692 = vunpack.c.l.b16 %v5659
    %v5693 = vunpack.c.l.b16 %v5660
    %v5694 = vunpack.c.l.b16 %v5661
    %v5695 = vunpack.c.l.b16 %v5662
    %v5696 = vpack.c.b16 %v5681, %v5680
    %v5697 = vpack.c.b16 %v5683, %v5682
    %v5698 = vpack.c.b16 %v5685, %v5684
    %v5699 = vpack.c.b16 %v5687, %v5686
    %v5700 = vpack.c.b16 %v5689, %v5688
    %v5701 = vpack.c.b16 %v5691, %v5690
    %v5702 = vpack.c.b16 %v5693, %v5692
    %v5703 = vpack.c.b16 %v5695, %v5694
    %5712 = vmatpush.bf16.msra.mxu0 %v5703
    %5713 = vmatpush.bf16.msra.mxu0 %v5702
    %5714 = vmatpush.bf16.msra.mxu0 %v5701
    %5715 = vmatpush.bf16.msra.mxu0 %v5700
    %5716 = vmatpush.bf16.msra.mxu0 %v5699
    %5717 = vmatpush.bf16.msra.mxu0 %v5698
    %5718 = vmatpush.bf16.msra.mxu0 %v5697
    %5719 = vmatpush.bf16.msra.mxu0 %v5696
    %5720 = vmatmul.bf16.gmra.mxu0 %v5646
    %v5721 = vpop.f32.mrf.mxu0
    %v5722 = vadd.f32 %v5663, %v5721
    %v5723 = vpop.f32.mrf.mxu0
    %5724 = vdwg.mxu0
    %s5725 = scalar_lea.vmem [#allocation18], 24
    %5726 = vst [vmem:[%s5725] sm:$0xff] %v5722
    %s5727 = scalar_lea.vmem [#allocation7], 32
    %v5728 = vld [vmem:[%s5727] sm:$0xff]
    %5729 = vmax.xlane.f32.xlu0 %v5722
    %v5730 = vpop.xlane.xlu0 %5729
    %vm5731 = vcmp.eq.f32.partialorder %v5722, %v5730
    %v5732 = vsel %vm5731, %v658, 128
    %v5733 = vand.u32 %v5732, 65535
    %v5734 = vshra.s32 %v5732, 16
    %v5735 = vcvt.s32.f32 %v5733
    %v5736 = vcvt.s32.f32 %v5734
    %5737 = vmin.xlane.f32.xlu0 %v5736
    %v5738 = vpop.xlane.xlu0 %5737
    %vm5739 = vcmp.eq.f32.partialorder %v5736, %v5738
    %v5740 = vsel %vm5739, %v5735, inf
    %5741 = vmin.xlane.f32.xlu0 %v5740
    %v5742 = vpop.xlane.xlu0 %5741
    %v5743 = vcvt.f32.s32 %v5742
    %v5744 = vcvt.f32.s32 %v5738
    %v5745 = vshll.u32 %v5744, 16
    %v5746 = vadd.s32 %v5745, %v5743
    %vm5747 = vcmp.eq.s32.totalorder %v658, %v5746
    %v5748 = vsel %vm5747, 1, 0
    %v5749 = vcvt.s32.f32 %v5748
    %v5750 = vpack.c.bf16 %v5749, %v5749
    %v5751 = vld [vmem:[#allocation9] sm:$0xf]
    %v5752 = vld [vmem:[#allocation9 + $0x4] sm:$0xf]
    %v5753 = vld [vmem:[#allocation9 + $0x8] sm:$0xf]
    %v5754 = vld [vmem:[#allocation9 + $0xc] sm:$0xf]
    %v5755 = vld [vmem:[#allocation9 + $0x10] sm:$0xf]
    %v5756 = vld [vmem:[#allocation9 + $0x14] sm:$0xf]
    %v5757 = vld [vmem:[#allocation9 + $0x18] sm:$0xf]
    %v5758 = vld [vmem:[#allocation9 + $0x1c] sm:$0xf]
    %v5759 = vld [vmem:[#allocation9 + $0x20] sm:$0xf]
    %v5760 = vld [vmem:[#allocation9 + $0x24] sm:$0xf]
    %v5761 = vld [vmem:[#allocation9 + $0x28] sm:$0xf]
    %v5762 = vld [vmem:[#allocation9 + $0x2c] sm:$0xf]
    %v5763 = vld [vmem:[#allocation9 + $0x30] sm:$0xf]
    %v5764 = vld [vmem:[#allocation9 + $0x34] sm:$0xf]
    %v5765 = vld [vmem:[#allocation9 + $0x38] sm:$0xf]
    %v5766 = vld [vmem:[#allocation9 + $0x3c] sm:$0xf]
    %v5783 = vunpack.c.l.b16 %v5751
    %v5784 = vunpack.c.l.b16 %v5752
    %v5785 = vunpack.c.l.b16 %v5753
    %v5786 = vunpack.c.l.b16 %v5754
    %v5787 = vunpack.c.l.b16 %v5755
    %v5788 = vunpack.c.l.b16 %v5756
    %v5789 = vunpack.c.l.b16 %v5757
    %v5790 = vunpack.c.l.b16 %v5758
    %v5791 = vunpack.c.l.b16 %v5759
    %v5792 = vunpack.c.l.b16 %v5760
    %v5793 = vunpack.c.l.b16 %v5761
    %v5794 = vunpack.c.l.b16 %v5762
    %v5795 = vunpack.c.l.b16 %v5763
    %v5796 = vunpack.c.l.b16 %v5764
    %v5797 = vunpack.c.l.b16 %v5765
    %v5798 = vunpack.c.l.b16 %v5766
    %v5799 = vpack.c.b16 %v5784, %v5783
    %v5800 = vpack.c.b16 %v5786, %v5785
    %v5801 = vpack.c.b16 %v5788, %v5787
    %v5802 = vpack.c.b16 %v5790, %v5789
    %v5803 = vpack.c.b16 %v5792, %v5791
    %v5804 = vpack.c.b16 %v5794, %v5793
    %v5805 = vpack.c.b16 %v5796, %v5795
    %v5806 = vpack.c.b16 %v5798, %v5797
    %5815 = vmatpush.bf16.msra.mxu0 %v5806
    %5816 = vmatpush.bf16.msra.mxu0 %v5805
    %5817 = vmatpush.bf16.msra.mxu0 %v5804
    %5818 = vmatpush.bf16.msra.mxu0 %v5803
    %5819 = vmatpush.bf16.msra.mxu0 %v5802
    %5820 = vmatpush.bf16.msra.mxu0 %v5801
    %5821 = vmatpush.bf16.msra.mxu0 %v5800
    %5822 = vmatpush.bf16.msra.mxu0 %v5799
    %5823 = vmatmul.bf16.gmra.mxu0 %v5750
    %v5824 = vpop.f32.mrf.mxu0
    %v5825 = vadd.f32 0.0, %v5824
    %v5826 = vpop.f32.mrf.mxu0
    %5827 = vdwg.mxu0
    %s5828 = sld [smem:[#allocation2 + $0x3]]
    %s5829 = scvt.s32.f32 %s5828
    %v5830 = vstv %s5829
    %v5831 = vmul.f32 %v5830, %v5728
    %s5832 = ssub.f32 1.0, %s5829
    %v5833 = vstv %s5832
    %v5834 = vmul.f32 %v5833, %v5825
    %v5835 = vadd.f32 %v5831, %v5834
    %v5836 = vpack.c.bf16 %v5835, %v5835
    %v5837 = vld [vmem:[#allocation10] sm:$0xff]
    %v5838 = vld [vmem:[#allocation10 + $0x8] sm:$0xff]
    %v5839 = vld [vmem:[#allocation10 + $0x10] sm:$0xff]
    %v5840 = vld [vmem:[#allocation10 + $0x18] sm:$0xff]
    %v5841 = vld [vmem:[#allocation10 + $0x20] sm:$0xff]
    %v5842 = vld [vmem:[#allocation10 + $0x28] sm:$0xff]
    %v5843 = vld [vmem:[#allocation10 + $0x30] sm:$0xff]
    %v5844 = vld [vmem:[#allocation10 + $0x38] sm:$0xff]
    %v5845 = vld [vmem:[#allocation10 + $0x40] sm:$0xff]
    %v5846 = vld [vmem:[#allocation10 + $0x48] sm:$0xff]
    %v5847 = vld [vmem:[#allocation10 + $0x50] sm:$0xff]
    %v5848 = vld [vmem:[#allocation10 + $0x58] sm:$0xff]
    %v5849 = vld [vmem:[#allocation10 + $0x60] sm:$0xff]
    %v5850 = vld [vmem:[#allocation10 + $0x68] sm:$0xff]
    %v5851 = vld [vmem:[#allocation10 + $0x70] sm:$0xff]
    %v5852 = vld [vmem:[#allocation10 + $0x78] sm:$0xff]
    %v5853 = vld [vmem:[#allocation10 + $0x80] sm:$0xff]
    %v5854 = vld [vmem:[#allocation10 + $0x88] sm:$0xff]
    %v5855 = vld [vmem:[#allocation10 + $0x90] sm:$0xff]
    %v5856 = vld [vmem:[#allocation10 + $0x98] sm:$0xff]
    %v5857 = vld [vmem:[#allocation10 + $0xa0] sm:$0xff]
    %v5858 = vld [vmem:[#allocation10 + $0xa8] sm:$0xff]
    %v5859 = vld [vmem:[#allocation10 + $0xb0] sm:$0xff]
    %v5860 = vld [vmem:[#allocation10 + $0xb8] sm:$0xff]
    %v5861 = vld [vmem:[#allocation10 + $0xc0] sm:$0xff]
    %v5862 = vld [vmem:[#allocation10 + $0xc8] sm:$0xff]
    %v5863 = vld [vmem:[#allocation10 + $0xd0] sm:$0xff]
    %v5864 = vld [vmem:[#allocation10 + $0xd8] sm:$0xff]
    %v5865 = vld [vmem:[#allocation10 + $0xe0] sm:$0xff]
    %v5866 = vld [vmem:[#allocation10 + $0xe8] sm:$0xff]
    %v5867 = vld [vmem:[#allocation10 + $0xf0] sm:$0xff]
    %v5868 = vld [vmem:[#allocation10 + $0xf8] sm:$0xff]
    %v5869 = vld [vmem:[#allocation10 + $0x100] sm:$0xff]
    %v5870 = vld [vmem:[#allocation10 + $0x108] sm:$0xff]
    %v5871 = vld [vmem:[#allocation10 + $0x110] sm:$0xff]
    %v5872 = vld [vmem:[#allocation10 + $0x118] sm:$0xff]
    %v5873 = vld [vmem:[#allocation10 + $0x120] sm:$0xff]
    %v5874 = vld [vmem:[#allocation10 + $0x128] sm:$0xff]
    %v5875 = vld [vmem:[#allocation10 + $0x130] sm:$0xff]
    %v5876 = vld [vmem:[#allocation10 + $0x138] sm:$0xff]
    %v5877 = vld [vmem:[#allocation10 + $0x140] sm:$0xff]
    %v5878 = vld [vmem:[#allocation10 + $0x148] sm:$0xff]
    %v5879 = vld [vmem:[#allocation10 + $0x150] sm:$0xff]
    %v5880 = vld [vmem:[#allocation10 + $0x158] sm:$0xff]
    %v5881 = vld [vmem:[#allocation10 + $0x160] sm:$0xff]
    %v5882 = vld [vmem:[#allocation10 + $0x168] sm:$0xff]
    %v5883 = vld [vmem:[#allocation10 + $0x170] sm:$0xff]
    %v5884 = vld [vmem:[#allocation10 + $0x178] sm:$0xff]
    %v5885 = vld [vmem:[#allocation10 + $0x180] sm:$0xff]
    %v5886 = vld [vmem:[#allocation10 + $0x188] sm:$0xff]
    %v5887 = vld [vmem:[#allocation10 + $0x190] sm:$0xff]
    %v5888 = vld [vmem:[#allocation10 + $0x198] sm:$0xff]
    %v5889 = vld [vmem:[#allocation10 + $0x1a0] sm:$0xff]
    %v5890 = vld [vmem:[#allocation10 + $0x1a8] sm:$0xff]
    %v5891 = vld [vmem:[#allocation10 + $0x1b0] sm:$0xff]
    %v5892 = vld [vmem:[#allocation10 + $0x1b8] sm:$0xff]
    %v5893 = vld [vmem:[#allocation10 + $0x1c0] sm:$0xff]
    %v5894 = vld [vmem:[#allocation10 + $0x1c8] sm:$0xff]
    %v5895 = vld [vmem:[#allocation10 + $0x1d0] sm:$0xff]
    %v5896 = vld [vmem:[#allocation10 + $0x1d8] sm:$0xff]
    %v5897 = vld [vmem:[#allocation10 + $0x1e0] sm:$0xff]
    %v5898 = vld [vmem:[#allocation10 + $0x1e8] sm:$0xff]
    %v5899 = vld [vmem:[#allocation10 + $0x1f0] sm:$0xff]
    %v5900 = vld [vmem:[#allocation10 + $0x1f8] sm:$0xff]
    %v5901 = vld [vmem:[#allocation12] sm:$0xff]
    %v5902 = vld [vmem:[#allocation12 + $0x8] sm:$0xff]
    %v5903 = vld [vmem:[#allocation12 + $0x10] sm:$0xff]
    %v5904 = vld [vmem:[#allocation12 + $0x18] sm:$0xff]
    %v5969 = vunpack.c.l.b16 %v5837
    %v5970 = vunpack.c.h.b16 %v5837
    %v5971 = vunpack.c.l.b16 %v5838
    %v5972 = vunpack.c.h.b16 %v5838
    %v5973 = vunpack.c.l.b16 %v5839
    %v5974 = vunpack.c.h.b16 %v5839
    %v5975 = vunpack.c.l.b16 %v5840
    %v5976 = vunpack.c.h.b16 %v5840
    %v5977 = vunpack.c.l.b16 %v5841
    %v5978 = vunpack.c.h.b16 %v5841
    %v5979 = vunpack.c.l.b16 %v5842
    %v5980 = vunpack.c.h.b16 %v5842
    %v5981 = vunpack.c.l.b16 %v5843
    %v5982 = vunpack.c.h.b16 %v5843
    %v5983 = vunpack.c.l.b16 %v5844
    %v5984 = vunpack.c.h.b16 %v5844
    %v5985 = vunpack.c.l.b16 %v5845
    %v5986 = vunpack.c.h.b16 %v5845
    %v5987 = vunpack.c.l.b16 %v5846
    %v5988 = vunpack.c.h.b16 %v5846
    %v5989 = vunpack.c.l.b16 %v5847
    %v5990 = vunpack.c.h.b16 %v5847
    %v5991 = vunpack.c.l.b16 %v5848
    %v5992 = vunpack.c.h.b16 %v5848
    %v5993 = vunpack.c.l.b16 %v5849
    %v5994 = vunpack.c.h.b16 %v5849
    %v5995 = vunpack.c.l.b16 %v5850
    %v5996 = vunpack.c.h.b16 %v5850
    %v5997 = vunpack.c.l.b16 %v5851
    %v5998 = vunpack.c.h.b16 %v5851
    %v5999 = vunpack.c.l.b16 %v5852
    %v6000 = vunpack.c.h.b16 %v5852
    %v6001 = vunpack.c.l.b16 %v5853
    %v6002 = vunpack.c.h.b16 %v5853
    %v6003 = vunpack.c.l.b16 %v5854
    %v6004 = vunpack.c.h.b16 %v5854
    %v6005 = vunpack.c.l.b16 %v5855
    %v6006 = vunpack.c.h.b16 %v5855
    %v6007 = vunpack.c.l.b16 %v5856
    %v6008 = vunpack.c.h.b16 %v5856
    %v6009 = vunpack.c.l.b16 %v5857
    %v6010 = vunpack.c.h.b16 %v5857
    %v6011 = vunpack.c.l.b16 %v5858
    %v6012 = vunpack.c.h.b16 %v5858
    %v6013 = vunpack.c.l.b16 %v5859
    %v6014 = vunpack.c.h.b16 %v5859
    %v6015 = vunpack.c.l.b16 %v5860
    %v6016 = vunpack.c.h.b16 %v5860
    %v6017 = vunpack.c.l.b16 %v5861
    %v6018 = vunpack.c.h.b16 %v5861
    %v6019 = vunpack.c.l.b16 %v5862
    %v6020 = vunpack.c.h.b16 %v5862
    %v6021 = vunpack.c.l.b16 %v5863
    %v6022 = vunpack.c.h.b16 %v5863
    %v6023 = vunpack.c.l.b16 %v5864
    %v6024 = vunpack.c.h.b16 %v5864
    %v6025 = vunpack.c.l.b16 %v5865
    %v6026 = vunpack.c.h.b16 %v5865
    %v6027 = vunpack.c.l.b16 %v5866
    %v6028 = vunpack.c.h.b16 %v5866
    %v6029 = vunpack.c.l.b16 %v5867
    %v6030 = vunpack.c.h.b16 %v5867
    %v6031 = vunpack.c.l.b16 %v5868
    %v6032 = vunpack.c.h.b16 %v5868
    %v6033 = vunpack.c.l.b16 %v5869
    %v6034 = vunpack.c.h.b16 %v5869
    %v6035 = vunpack.c.l.b16 %v5870
    %v6036 = vunpack.c.h.b16 %v5870
    %v6037 = vunpack.c.l.b16 %v5871
    %v6038 = vunpack.c.h.b16 %v5871
    %v6039 = vunpack.c.l.b16 %v5872
    %v6040 = vunpack.c.h.b16 %v5872
    %v6041 = vunpack.c.l.b16 %v5873
    %v6042 = vunpack.c.h.b16 %v5873
    %v6043 = vunpack.c.l.b16 %v5874
    %v6044 = vunpack.c.h.b16 %v5874
    %v6045 = vunpack.c.l.b16 %v5875
    %v6046 = vunpack.c.h.b16 %v5875
    %v6047 = vunpack.c.l.b16 %v5876
    %v6048 = vunpack.c.h.b16 %v5876
    %v6049 = vunpack.c.l.b16 %v5877
    %v6050 = vunpack.c.h.b16 %v5877
    %v6051 = vunpack.c.l.b16 %v5878
    %v6052 = vunpack.c.h.b16 %v5878
    %v6053 = vunpack.c.l.b16 %v5879
    %v6054 = vunpack.c.h.b16 %v5879
    %v6055 = vunpack.c.l.b16 %v5880
    %v6056 = vunpack.c.h.b16 %v5880
    %v6057 = vunpack.c.l.b16 %v5881
    %v6058 = vunpack.c.h.b16 %v5881
    %v6059 = vunpack.c.l.b16 %v5882
    %v6060 = vunpack.c.h.b16 %v5882
    %v6061 = vunpack.c.l.b16 %v5883
    %v6062 = vunpack.c.h.b16 %v5883
    %v6063 = vunpack.c.l.b16 %v5884
    %v6064 = vunpack.c.h.b16 %v5884
    %v6065 = vunpack.c.l.b16 %v5885
    %v6066 = vunpack.c.h.b16 %v5885
    %v6067 = vunpack.c.l.b16 %v5886
    %v6068 = vunpack.c.h.b16 %v5886
    %v6069 = vunpack.c.l.b16 %v5887
    %v6070 = vunpack.c.h.b16 %v5887
    %v6071 = vunpack.c.l.b16 %v5888
    %v6072 = vunpack.c.h.b16 %v5888
    %v6073 = vunpack.c.l.b16 %v5889
    %v6074 = vunpack.c.h.b16 %v5889
    %v6075 = vunpack.c.l.b16 %v5890
    %v6076 = vunpack.c.h.b16 %v5890
    %v6077 = vunpack.c.l.b16 %v5891
    %v6078 = vunpack.c.h.b16 %v5891
    %v6079 = vunpack.c.l.b16 %v5892
    %v6080 = vunpack.c.h.b16 %v5892
    %v6081 = vunpack.c.l.b16 %v5893
    %v6082 = vunpack.c.h.b16 %v5893
    %v6083 = vunpack.c.l.b16 %v5894
    %v6084 = vunpack.c.h.b16 %v5894
    %v6085 = vunpack.c.l.b16 %v5895
    %v6086 = vunpack.c.h.b16 %v5895
    %v6087 = vunpack.c.l.b16 %v5896
    %v6088 = vunpack.c.h.b16 %v5896
    %v6089 = vunpack.c.l.b16 %v5897
    %v6090 = vunpack.c.h.b16 %v5897
    %v6091 = vunpack.c.l.b16 %v5898
    %v6092 = vunpack.c.h.b16 %v5898
    %v6093 = vunpack.c.l.b16 %v5899
    %v6094 = vunpack.c.h.b16 %v5899
    %v6095 = vunpack.c.l.b16 %v5900
    %v6096 = vunpack.c.h.b16 %v5900
    %v6097 = vpack.c.b16 %v5973, %v5969
    %v6098 = vpack.c.b16 %v5974, %v5970
    %v6099 = vpack.c.b16 %v5975, %v5971
    %v6100 = vpack.c.b16 %v5976, %v5972
    %v6101 = vpack.c.b16 %v5981, %v5977
    %v6102 = vpack.c.b16 %v5982, %v5978
    %v6103 = vpack.c.b16 %v5983, %v5979
    %v6104 = vpack.c.b16 %v5984, %v5980
    %v6105 = vpack.c.b16 %v5989, %v5985
    %v6106 = vpack.c.b16 %v5990, %v5986
    %v6107 = vpack.c.b16 %v5991, %v5987
    %v6108 = vpack.c.b16 %v5992, %v5988
    %v6109 = vpack.c.b16 %v5997, %v5993
    %v6110 = vpack.c.b16 %v5998, %v5994
    %v6111 = vpack.c.b16 %v5999, %v5995
    %v6112 = vpack.c.b16 %v6000, %v5996
    %v6113 = vpack.c.b16 %v6005, %v6001
    %v6114 = vpack.c.b16 %v6006, %v6002
    %v6115 = vpack.c.b16 %v6007, %v6003
    %v6116 = vpack.c.b16 %v6008, %v6004
    %v6117 = vpack.c.b16 %v6013, %v6009
    %v6118 = vpack.c.b16 %v6014, %v6010
    %v6119 = vpack.c.b16 %v6015, %v6011
    %v6120 = vpack.c.b16 %v6016, %v6012
    %v6121 = vpack.c.b16 %v6021, %v6017
    %v6122 = vpack.c.b16 %v6022, %v6018
    %v6123 = vpack.c.b16 %v6023, %v6019
    %v6124 = vpack.c.b16 %v6024, %v6020
    %v6125 = vpack.c.b16 %v6029, %v6025
    %v6126 = vpack.c.b16 %v6030, %v6026
    %v6127 = vpack.c.b16 %v6031, %v6027
    %v6128 = vpack.c.b16 %v6032, %v6028
    %v6129 = vpack.c.b16 %v6037, %v6033
    %v6130 = vpack.c.b16 %v6038, %v6034
    %v6131 = vpack.c.b16 %v6039, %v6035
    %v6132 = vpack.c.b16 %v6040, %v6036
    %v6133 = vpack.c.b16 %v6045, %v6041
    %v6134 = vpack.c.b16 %v6046, %v6042
    %v6135 = vpack.c.b16 %v6047, %v6043
    %v6136 = vpack.c.b16 %v6048, %v6044
    %v6137 = vpack.c.b16 %v6053, %v6049
    %v6138 = vpack.c.b16 %v6054, %v6050
    %v6139 = vpack.c.b16 %v6055, %v6051
    %v6140 = vpack.c.b16 %v6056, %v6052
    %v6141 = vpack.c.b16 %v6061, %v6057
    %v6142 = vpack.c.b16 %v6062, %v6058
    %v6143 = vpack.c.b16 %v6063, %v6059
    %v6144 = vpack.c.b16 %v6064, %v6060
    %v6145 = vpack.c.b16 %v6069, %v6065
    %v6146 = vpack.c.b16 %v6070, %v6066
    %v6147 = vpack.c.b16 %v6071, %v6067
    %v6148 = vpack.c.b16 %v6072, %v6068
    %v6149 = vpack.c.b16 %v6077, %v6073
    %v6150 = vpack.c.b16 %v6078, %v6074
    %v6151 = vpack.c.b16 %v6079, %v6075
    %v6152 = vpack.c.b16 %v6080, %v6076
    %v6153 = vpack.c.b16 %v6085, %v6081
    %v6154 = vpack.c.b16 %v6086, %v6082
    %v6155 = vpack.c.b16 %v6087, %v6083
    %v6156 = vpack.c.b16 %v6088, %v6084
    %v6157 = vpack.c.b16 %v6093, %v6089
    %v6158 = vpack.c.b16 %v6094, %v6090
    %v6159 = vpack.c.b16 %v6095, %v6091
    %v6160 = vpack.c.b16 %v6096, %v6092
    %6225 = vmatpush.bf16.msra.mxu0 %v6125
    %6226 = vmatpush.bf16.msra.mxu0 %v6121
    %6227 = vmatpush.bf16.msra.mxu0 %v6117
    %6228 = vmatpush.bf16.msra.mxu0 %v6113
    %6229 = vmatpush.bf16.msra.mxu0 %v6109
    %6230 = vmatpush.bf16.msra.mxu0 %v6105
    %6231 = vmatpush.bf16.msra.mxu0 %v6101
    %6232 = vmatpush.bf16.msra.mxu0 %v6097
    %6233 = vmatmul.bf16.gmra.mxu0 %v5836
    %v6234 = vpop.f32.mrf.mxu0
    %v6235 = vadd.f32 %v5901, %v6234
    %v6236 = vpop.f32.mrf.mxu0
    %6237 = vdwg.mxu0
    %6238 = vmatpush.bf16.msra.mxu0 %v6157
    %6239 = vmatpush.bf16.msra.mxu0 %v6153
    %6240 = vmatpush.bf16.msra.mxu0 %v6149
    %6241 = vmatpush.bf16.msra.mxu0 %v6145
    %6242 = vmatpush.bf16.msra.mxu0 %v6141
    %6243 = vmatpush.bf16.msra.mxu0 %v6137
    %6244 = vmatpush.bf16.msra.mxu0 %v6133
    %6245 = vmatpush.bf16.msra.mxu0 %v6129
    %6246 = vmatmul.bf16.gmra.mxu0 %v5093
    %v6247 = vpop.f32.mrf.mxu0
    %v6248 = vadd.f32 %v6235, %v6247
    %v6249 = vpop.f32.mrf.mxu0
    %6250 = vdwg.mxu0
    %6251 = vmatpush.bf16.msra.mxu0 %v6126
    %6252 = vmatpush.bf16.msra.mxu0 %v6122
    %6253 = vmatpush.bf16.msra.mxu0 %v6118
    %6254 = vmatpush.bf16.msra.mxu0 %v6114
    %6255 = vmatpush.bf16.msra.mxu0 %v6110
    %6256 = vmatpush.bf16.msra.mxu0 %v6106
    %6257 = vmatpush.bf16.msra.mxu0 %v6102
    %6258 = vmatpush.bf16.msra.mxu0 %v6098
    %6259 = vmatmul.bf16.gmra.mxu0 %v5836
    %v6260 = vpop.f32.mrf.mxu0
    %v6261 = vadd.f32 %v5902, %v6260
    %v6262 = vpop.f32.mrf.mxu0
    %6263 = vdwg.mxu0
    %6264 = vmatpush.bf16.msra.mxu0 %v6158
    %6265 = vmatpush.bf16.msra.mxu0 %v6154
    %6266 = vmatpush.bf16.msra.mxu0 %v6150
    %6267 = vmatpush.bf16.msra.mxu0 %v6146
    %6268 = vmatpush.bf16.msra.mxu0 %v6142
    %6269 = vmatpush.bf16.msra.mxu0 %v6138
    %6270 = vmatpush.bf16.msra.mxu0 %v6134
    %6271 = vmatpush.bf16.msra.mxu0 %v6130
    %6272 = vmatmul.bf16.gmra.mxu0 %v5093
    %v6273 = vpop.f32.mrf.mxu0
    %v6274 = vadd.f32 %v6261, %v6273
    %v6275 = vpop.f32.mrf.mxu0
    %6276 = vdwg.mxu0
    %6277 = vmatpush.bf16.msra.mxu0 %v6127
    %6278 = vmatpush.bf16.msra.mxu0 %v6123
    %6279 = vmatpush.bf16.msra.mxu0 %v6119
    %6280 = vmatpush.bf16.msra.mxu0 %v6115
    %6281 = vmatpush.bf16.msra.mxu0 %v6111
    %6282 = vmatpush.bf16.msra.mxu0 %v6107
    %6283 = vmatpush.bf16.msra.mxu0 %v6103
    %6284 = vmatpush.bf16.msra.mxu0 %v6099
    %6285 = vmatmul.bf16.gmra.mxu0 %v5836
    %v6286 = vpop.f32.mrf.mxu0
    %v6287 = vadd.f32 %v5903, %v6286
    %v6288 = vpop.f32.mrf.mxu0
    %6289 = vdwg.mxu0
    %6290 = vmatpush.bf16.msra.mxu0 %v6159
    %6291 = vmatpush.bf16.msra.mxu0 %v6155
    %6292 = vmatpush.bf16.msra.mxu0 %v6151
    %6293 = vmatpush.bf16.msra.mxu0 %v6147
    %6294 = vmatpush.bf16.msra.mxu0 %v6143
    %6295 = vmatpush.bf16.msra.mxu0 %v6139
    %6296 = vmatpush.bf16.msra.mxu0 %v6135
    %6297 = vmatpush.bf16.msra.mxu0 %v6131
    %6298 = vmatmul.bf16.gmra.mxu0 %v5093
    %v6299 = vpop.f32.mrf.mxu0
    %v6300 = vadd.f32 %v6287, %v6299
    %v6301 = vpop.f32.mrf.mxu0
    %6302 = vdwg.mxu0
    %6303 = vmatpush.bf16.msra.mxu0 %v6128
    %6304 = vmatpush.bf16.msra.mxu0 %v6124
    %6305 = vmatpush.bf16.msra.mxu0 %v6120
    %6306 = vmatpush.bf16.msra.mxu0 %v6116
    %6307 = vmatpush.bf16.msra.mxu0 %v6112
    %6308 = vmatpush.bf16.msra.mxu0 %v6108
    %6309 = vmatpush.bf16.msra.mxu0 %v6104
    %6310 = vmatpush.bf16.msra.mxu0 %v6100
    %6311 = vmatmul.bf16.gmra.mxu0 %v5836
    %v6312 = vpop.f32.mrf.mxu0
    %v6313 = vadd.f32 %v5904, %v6312
    %v6314 = vpop.f32.mrf.mxu0
    %6315 = vdwg.mxu0
    %6316 = vmatpush.bf16.msra.mxu0 %v6160
    %6317 = vmatpush.bf16.msra.mxu0 %v6156
    %6318 = vmatpush.bf16.msra.mxu0 %v6152
    %6319 = vmatpush.bf16.msra.mxu0 %v6148
    %6320 = vmatpush.bf16.msra.mxu0 %v6144
    %6321 = vmatpush.bf16.msra.mxu0 %v6140
    %6322 = vmatpush.bf16.msra.mxu0 %v6136
    %6323 = vmatpush.bf16.msra.mxu0 %v6132
    %6324 = vmatmul.bf16.gmra.mxu0 %v5093
    %v6325 = vpop.f32.mrf.mxu0
    %v6326 = vadd.f32 %v6313, %v6325
    %v6327 = vpop.f32.mrf.mxu0
    %6328 = vdwg.mxu0
    %v6329 = vsub.f32 0.0, %v6248
    %v6330 = vmul.f32 %v6329, 1.442695
    %v6331 = vpow.pop %v6330
    %v6332 = vadd.f32 %v6331, 1.0
    %v6333 = vrcp.pop %v6332
    %v6334 = vmul.f32 %v6332, %v6333
    %v6335 = vsub.f32 1.0, %v6334
    %v6336 = vmul.f32 %v6333, %v6335
    %v6337 = vadd.f32 %v6333, %v6336
    %vm6338 = vweird.f32 %v6332
    %vm6339 = vweird.f32 %v6333
    %vm6340 = vmor %vm6338, %vm6339
    %v6341 = vsel %vm6340, %v6333, %v6337
    %v6342 = vand.u32 2147483647, %v6332
    %vm6343 = vcmp.eq.f32.partialorder %v6342, 8.507059e+37
    %v6344 = vand.u32 %v6332, 2147483648
    %v6345 = vor.u32 1.1754944e-38, %v6344
    %v6346 = vsel %vm6343, %v6345, %v6341
    %v6347 = vsub.f32 0.0, %v6274
    %v6348 = vmul.f32 %v6347, 1.442695
    %v6349 = vpow.pop %v6348
    %v6350 = vadd.f32 %v6349, 1.0
    %v6351 = vrcp.pop %v6350
    %v6352 = vmul.f32 %v6350, %v6351
    %v6353 = vsub.f32 1.0, %v6352
    %v6354 = vmul.f32 %v6351, %v6353
    %v6355 = vadd.f32 %v6351, %v6354
    %vm6356 = vweird.f32 %v6350
    %vm6357 = vweird.f32 %v6351
    %vm6358 = vmor %vm6356, %vm6357
    %v6359 = vsel %vm6358, %v6351, %v6355
    %v6360 = vand.u32 2147483647, %v6350
    %vm6361 = vcmp.eq.f32.partialorder %v6360, 8.507059e+37
    %v6362 = vand.u32 %v6350, 2147483648
    %v6363 = vor.u32 1.1754944e-38, %v6362
    %v6364 = vsel %vm6361, %v6363, %v6359
    %v6365 = vtanh.pop %v6300
    %v6366 = vsub.f32 0.0, %v6326
    %v6367 = vmul.f32 %v6366, 1.442695
    %v6368 = vpow.pop %v6367
    %v6369 = vadd.f32 %v6368, 1.0
    %v6370 = vrcp.pop %v6369
    %v6371 = vmul.f32 %v6369, %v6370
    %v6372 = vsub.f32 1.0, %v6371
    %v6373 = vmul.f32 %v6370, %v6372
    %v6374 = vadd.f32 %v6370, %v6373
    %vm6375 = vweird.f32 %v6369
    %vm6376 = vweird.f32 %v6370
    %vm6377 = vmor %vm6375, %vm6376
    %v6378 = vsel %vm6377, %v6370, %v6374
    %v6379 = vand.u32 2147483647, %v6369
    %vm6380 = vcmp.eq.f32.partialorder %v6379, 8.507059e+37
    %v6381 = vand.u32 %v6369, 2147483648
    %v6382 = vor.u32 1.1754944e-38, %v6381
    %v6383 = vsel %vm6380, %v6382, %v6378
    %v6384 = vmul.f32 %v6364, %v5090
    %v6385 = vmul.f32 %v6346, %v6365
    %v6386 = vadd.f32 %v6384, %v6385
    %v6387 = vtanh.pop %v6386
    %v6388 = vmul.f32 %v6383, %v6387
    %v6389 = vpack.c.bf16 %v6388, %v6388
    %v6390 = vld [vmem:[#allocation13] sm:$0xff]
    %v6391 = vld [vmem:[#allocation13 + $0x8] sm:$0xff]
    %v6392 = vld [vmem:[#allocation13 + $0x10] sm:$0xff]
    %v6393 = vld [vmem:[#allocation13 + $0x18] sm:$0xff]
    %v6394 = vld [vmem:[#allocation13 + $0x20] sm:$0xff]
    %v6395 = vld [vmem:[#allocation13 + $0x28] sm:$0xff]
    %v6396 = vld [vmem:[#allocation13 + $0x30] sm:$0xff]
    %v6397 = vld [vmem:[#allocation13 + $0x38] sm:$0xff]
    %v6398 = vld [vmem:[#allocation13 + $0x40] sm:$0xff]
    %v6399 = vld [vmem:[#allocation13 + $0x48] sm:$0xff]
    %v6400 = vld [vmem:[#allocation13 + $0x50] sm:$0xff]
    %v6401 = vld [vmem:[#allocation13 + $0x58] sm:$0xff]
    %v6402 = vld [vmem:[#allocation13 + $0x60] sm:$0xff]
    %v6403 = vld [vmem:[#allocation13 + $0x68] sm:$0xff]
    %v6404 = vld [vmem:[#allocation13 + $0x70] sm:$0xff]
    %v6405 = vld [vmem:[#allocation13 + $0x78] sm:$0xff]
    %v6406 = vld [vmem:[#allocation13 + $0x80] sm:$0xff]
    %v6407 = vld [vmem:[#allocation13 + $0x88] sm:$0xff]
    %v6408 = vld [vmem:[#allocation13 + $0x90] sm:$0xff]
    %v6409 = vld [vmem:[#allocation13 + $0x98] sm:$0xff]
    %v6410 = vld [vmem:[#allocation13 + $0xa0] sm:$0xff]
    %v6411 = vld [vmem:[#allocation13 + $0xa8] sm:$0xff]
    %v6412 = vld [vmem:[#allocation13 + $0xb0] sm:$0xff]
    %v6413 = vld [vmem:[#allocation13 + $0xb8] sm:$0xff]
    %v6414 = vld [vmem:[#allocation13 + $0xc0] sm:$0xff]
    %v6415 = vld [vmem:[#allocation13 + $0xc8] sm:$0xff]
    %v6416 = vld [vmem:[#allocation13 + $0xd0] sm:$0xff]
    %v6417 = vld [vmem:[#allocation13 + $0xd8] sm:$0xff]
    %v6418 = vld [vmem:[#allocation13 + $0xe0] sm:$0xff]
    %v6419 = vld [vmem:[#allocation13 + $0xe8] sm:$0xff]
    %v6420 = vld [vmem:[#allocation13 + $0xf0] sm:$0xff]
    %v6421 = vld [vmem:[#allocation13 + $0xf8] sm:$0xff]
    %v6422 = vld [vmem:[#allocation13 + $0x100] sm:$0xff]
    %v6423 = vld [vmem:[#allocation13 + $0x108] sm:$0xff]
    %v6424 = vld [vmem:[#allocation13 + $0x110] sm:$0xff]
    %v6425 = vld [vmem:[#allocation13 + $0x118] sm:$0xff]
    %v6426 = vld [vmem:[#allocation13 + $0x120] sm:$0xff]
    %v6427 = vld [vmem:[#allocation13 + $0x128] sm:$0xff]
    %v6428 = vld [vmem:[#allocation13 + $0x130] sm:$0xff]
    %v6429 = vld [vmem:[#allocation13 + $0x138] sm:$0xff]
    %v6430 = vld [vmem:[#allocation13 + $0x140] sm:$0xff]
    %v6431 = vld [vmem:[#allocation13 + $0x148] sm:$0xff]
    %v6432 = vld [vmem:[#allocation13 + $0x150] sm:$0xff]
    %v6433 = vld [vmem:[#allocation13 + $0x158] sm:$0xff]
    %v6434 = vld [vmem:[#allocation13 + $0x160] sm:$0xff]
    %v6435 = vld [vmem:[#allocation13 + $0x168] sm:$0xff]
    %v6436 = vld [vmem:[#allocation13 + $0x170] sm:$0xff]
    %v6437 = vld [vmem:[#allocation13 + $0x178] sm:$0xff]
    %v6438 = vld [vmem:[#allocation13 + $0x180] sm:$0xff]
    %v6439 = vld [vmem:[#allocation13 + $0x188] sm:$0xff]
    %v6440 = vld [vmem:[#allocation13 + $0x190] sm:$0xff]
    %v6441 = vld [vmem:[#allocation13 + $0x198] sm:$0xff]
    %v6442 = vld [vmem:[#allocation13 + $0x1a0] sm:$0xff]
    %v6443 = vld [vmem:[#allocation13 + $0x1a8] sm:$0xff]
    %v6444 = vld [vmem:[#allocation13 + $0x1b0] sm:$0xff]
    %v6445 = vld [vmem:[#allocation13 + $0x1b8] sm:$0xff]
    %v6446 = vld [vmem:[#allocation13 + $0x1c0] sm:$0xff]
    %v6447 = vld [vmem:[#allocation13 + $0x1c8] sm:$0xff]
    %v6448 = vld [vmem:[#allocation13 + $0x1d0] sm:$0xff]
    %v6449 = vld [vmem:[#allocation13 + $0x1d8] sm:$0xff]
    %v6450 = vld [vmem:[#allocation13 + $0x1e0] sm:$0xff]
    %v6451 = vld [vmem:[#allocation13 + $0x1e8] sm:$0xff]
    %v6452 = vld [vmem:[#allocation13 + $0x1f0] sm:$0xff]
    %v6453 = vld [vmem:[#allocation13 + $0x1f8] sm:$0xff]
    %v6454 = vld [vmem:[#allocation15] sm:$0xff]
    %v6455 = vld [vmem:[#allocation15 + $0x8] sm:$0xff]
    %v6456 = vld [vmem:[#allocation15 + $0x10] sm:$0xff]
    %v6457 = vld [vmem:[#allocation15 + $0x18] sm:$0xff]
    %v6522 = vunpack.c.l.b16 %v6390
    %v6523 = vunpack.c.h.b16 %v6390
    %v6524 = vunpack.c.l.b16 %v6391
    %v6525 = vunpack.c.h.b16 %v6391
    %v6526 = vunpack.c.l.b16 %v6392
    %v6527 = vunpack.c.h.b16 %v6392
    %v6528 = vunpack.c.l.b16 %v6393
    %v6529 = vunpack.c.h.b16 %v6393
    %v6530 = vunpack.c.l.b16 %v6394
    %v6531 = vunpack.c.h.b16 %v6394
    %v6532 = vunpack.c.l.b16 %v6395
    %v6533 = vunpack.c.h.b16 %v6395
    %v6534 = vunpack.c.l.b16 %v6396
    %v6535 = vunpack.c.h.b16 %v6396
    %v6536 = vunpack.c.l.b16 %v6397
    %v6537 = vunpack.c.h.b16 %v6397
    %v6538 = vunpack.c.l.b16 %v6398
    %v6539 = vunpack.c.h.b16 %v6398
    %v6540 = vunpack.c.l.b16 %v6399
    %v6541 = vunpack.c.h.b16 %v6399
    %v6542 = vunpack.c.l.b16 %v6400
    %v6543 = vunpack.c.h.b16 %v6400
    %v6544 = vunpack.c.l.b16 %v6401
    %v6545 = vunpack.c.h.b16 %v6401
    %v6546 = vunpack.c.l.b16 %v6402
    %v6547 = vunpack.c.h.b16 %v6402
    %v6548 = vunpack.c.l.b16 %v6403
    %v6549 = vunpack.c.h.b16 %v6403
    %v6550 = vunpack.c.l.b16 %v6404
    %v6551 = vunpack.c.h.b16 %v6404
    %v6552 = vunpack.c.l.b16 %v6405
    %v6553 = vunpack.c.h.b16 %v6405
    %v6554 = vunpack.c.l.b16 %v6406
    %v6555 = vunpack.c.h.b16 %v6406
    %v6556 = vunpack.c.l.b16 %v6407
    %v6557 = vunpack.c.h.b16 %v6407
    %v6558 = vunpack.c.l.b16 %v6408
    %v6559 = vunpack.c.h.b16 %v6408
    %v6560 = vunpack.c.l.b16 %v6409
    %v6561 = vunpack.c.h.b16 %v6409
    %v6562 = vunpack.c.l.b16 %v6410
    %v6563 = vunpack.c.h.b16 %v6410
    %v6564 = vunpack.c.l.b16 %v6411
    %v6565 = vunpack.c.h.b16 %v6411
    %v6566 = vunpack.c.l.b16 %v6412
    %v6567 = vunpack.c.h.b16 %v6412
    %v6568 = vunpack.c.l.b16 %v6413
    %v6569 = vunpack.c.h.b16 %v6413
    %v6570 = vunpack.c.l.b16 %v6414
    %v6571 = vunpack.c.h.b16 %v6414
    %v6572 = vunpack.c.l.b16 %v6415
    %v6573 = vunpack.c.h.b16 %v6415
    %v6574 = vunpack.c.l.b16 %v6416
    %v6575 = vunpack.c.h.b16 %v6416
    %v6576 = vunpack.c.l.b16 %v6417
    %v6577 = vunpack.c.h.b16 %v6417
    %v6578 = vunpack.c.l.b16 %v6418
    %v6579 = vunpack.c.h.b16 %v6418
    %v6580 = vunpack.c.l.b16 %v6419
    %v6581 = vunpack.c.h.b16 %v6419
    %v6582 = vunpack.c.l.b16 %v6420
    %v6583 = vunpack.c.h.b16 %v6420
    %v6584 = vunpack.c.l.b16 %v6421
    %v6585 = vunpack.c.h.b16 %v6421
    %v6586 = vunpack.c.l.b16 %v6422
    %v6587 = vunpack.c.h.b16 %v6422
    %v6588 = vunpack.c.l.b16 %v6423
    %v6589 = vunpack.c.h.b16 %v6423
    %v6590 = vunpack.c.l.b16 %v6424
    %v6591 = vunpack.c.h.b16 %v6424
    %v6592 = vunpack.c.l.b16 %v6425
    %v6593 = vunpack.c.h.b16 %v6425
    %v6594 = vunpack.c.l.b16 %v6426
    %v6595 = vunpack.c.h.b16 %v6426
    %v6596 = vunpack.c.l.b16 %v6427
    %v6597 = vunpack.c.h.b16 %v6427
    %v6598 = vunpack.c.l.b16 %v6428
    %v6599 = vunpack.c.h.b16 %v6428
    %v6600 = vunpack.c.l.b16 %v6429
    %v6601 = vunpack.c.h.b16 %v6429
    %v6602 = vunpack.c.l.b16 %v6430
    %v6603 = vunpack.c.h.b16 %v6430
    %v6604 = vunpack.c.l.b16 %v6431
    %v6605 = vunpack.c.h.b16 %v6431
    %v6606 = vunpack.c.l.b16 %v6432
    %v6607 = vunpack.c.h.b16 %v6432
    %v6608 = vunpack.c.l.b16 %v6433
    %v6609 = vunpack.c.h.b16 %v6433
    %v6610 = vunpack.c.l.b16 %v6434
    %v6611 = vunpack.c.h.b16 %v6434
    %v6612 = vunpack.c.l.b16 %v6435
    %v6613 = vunpack.c.h.b16 %v6435
    %v6614 = vunpack.c.l.b16 %v6436
    %v6615 = vunpack.c.h.b16 %v6436
    %v6616 = vunpack.c.l.b16 %v6437
    %v6617 = vunpack.c.h.b16 %v6437
    %v6618 = vunpack.c.l.b16 %v6438
    %v6619 = vunpack.c.h.b16 %v6438
    %v6620 = vunpack.c.l.b16 %v6439
    %v6621 = vunpack.c.h.b16 %v6439
    %v6622 = vunpack.c.l.b16 %v6440
    %v6623 = vunpack.c.h.b16 %v6440
    %v6624 = vunpack.c.l.b16 %v6441
    %v6625 = vunpack.c.h.b16 %v6441
    %v6626 = vunpack.c.l.b16 %v6442
    %v6627 = vunpack.c.h.b16 %v6442
    %v6628 = vunpack.c.l.b16 %v6443
    %v6629 = vunpack.c.h.b16 %v6443
    %v6630 = vunpack.c.l.b16 %v6444
    %v6631 = vunpack.c.h.b16 %v6444
    %v6632 = vunpack.c.l.b16 %v6445
    %v6633 = vunpack.c.h.b16 %v6445
    %v6634 = vunpack.c.l.b16 %v6446
    %v6635 = vunpack.c.h.b16 %v6446
    %v6636 = vunpack.c.l.b16 %v6447
    %v6637 = vunpack.c.h.b16 %v6447
    %v6638 = vunpack.c.l.b16 %v6448
    %v6639 = vunpack.c.h.b16 %v6448
    %v6640 = vunpack.c.l.b16 %v6449
    %v6641 = vunpack.c.h.b16 %v6449
    %v6642 = vunpack.c.l.b16 %v6450
    %v6643 = vunpack.c.h.b16 %v6450
    %v6644 = vunpack.c.l.b16 %v6451
    %v6645 = vunpack.c.h.b16 %v6451
    %v6646 = vunpack.c.l.b16 %v6452
    %v6647 = vunpack.c.h.b16 %v6452
    %v6648 = vunpack.c.l.b16 %v6453
    %v6649 = vunpack.c.h.b16 %v6453
    %v6650 = vpack.c.b16 %v6526, %v6522
    %v6651 = vpack.c.b16 %v6527, %v6523
    %v6652 = vpack.c.b16 %v6528, %v6524
    %v6653 = vpack.c.b16 %v6529, %v6525
    %v6654 = vpack.c.b16 %v6534, %v6530
    %v6655 = vpack.c.b16 %v6535, %v6531
    %v6656 = vpack.c.b16 %v6536, %v6532
    %v6657 = vpack.c.b16 %v6537, %v6533
    %v6658 = vpack.c.b16 %v6542, %v6538
    %v6659 = vpack.c.b16 %v6543, %v6539
    %v6660 = vpack.c.b16 %v6544, %v6540
    %v6661 = vpack.c.b16 %v6545, %v6541
    %v6662 = vpack.c.b16 %v6550, %v6546
    %v6663 = vpack.c.b16 %v6551, %v6547
    %v6664 = vpack.c.b16 %v6552, %v6548
    %v6665 = vpack.c.b16 %v6553, %v6549
    %v6666 = vpack.c.b16 %v6558, %v6554
    %v6667 = vpack.c.b16 %v6559, %v6555
    %v6668 = vpack.c.b16 %v6560, %v6556
    %v6669 = vpack.c.b16 %v6561, %v6557
    %v6670 = vpack.c.b16 %v6566, %v6562
    %v6671 = vpack.c.b16 %v6567, %v6563
    %v6672 = vpack.c.b16 %v6568, %v6564
    %v6673 = vpack.c.b16 %v6569, %v6565
    %v6674 = vpack.c.b16 %v6574, %v6570
    %v6675 = vpack.c.b16 %v6575, %v6571
    %v6676 = vpack.c.b16 %v6576, %v6572
    %v6677 = vpack.c.b16 %v6577, %v6573
    %v6678 = vpack.c.b16 %v6582, %v6578
    %v6679 = vpack.c.b16 %v6583, %v6579
    %v6680 = vpack.c.b16 %v6584, %v6580
    %v6681 = vpack.c.b16 %v6585, %v6581
    %v6682 = vpack.c.b16 %v6590, %v6586
    %v6683 = vpack.c.b16 %v6591, %v6587
    %v6684 = vpack.c.b16 %v6592, %v6588
    %v6685 = vpack.c.b16 %v6593, %v6589
    %v6686 = vpack.c.b16 %v6598, %v6594
    %v6687 = vpack.c.b16 %v6599, %v6595
    %v6688 = vpack.c.b16 %v6600, %v6596
    %v6689 = vpack.c.b16 %v6601, %v6597
    %v6690 = vpack.c.b16 %v6606, %v6602
    %v6691 = vpack.c.b16 %v6607, %v6603
    %v6692 = vpack.c.b16 %v6608, %v6604
    %v6693 = vpack.c.b16 %v6609, %v6605
    %v6694 = vpack.c.b16 %v6614, %v6610
    %v6695 = vpack.c.b16 %v6615, %v6611
    %v6696 = vpack.c.b16 %v6616, %v6612
    %v6697 = vpack.c.b16 %v6617, %v6613
    %v6698 = vpack.c.b16 %v6622, %v6618
    %v6699 = vpack.c.b16 %v6623, %v6619
    %v6700 = vpack.c.b16 %v6624, %v6620
    %v6701 = vpack.c.b16 %v6625, %v6621
    %v6702 = vpack.c.b16 %v6630, %v6626
    %v6703 = vpack.c.b16 %v6631, %v6627
    %v6704 = vpack.c.b16 %v6632, %v6628
    %v6705 = vpack.c.b16 %v6633, %v6629
    %v6706 = vpack.c.b16 %v6638, %v6634
    %v6707 = vpack.c.b16 %v6639, %v6635
    %v6708 = vpack.c.b16 %v6640, %v6636
    %v6709 = vpack.c.b16 %v6641, %v6637
    %v6710 = vpack.c.b16 %v6646, %v6642
    %v6711 = vpack.c.b16 %v6647, %v6643
    %v6712 = vpack.c.b16 %v6648, %v6644
    %v6713 = vpack.c.b16 %v6649, %v6645
    %6778 = vmatpush.bf16.msra.mxu0 %v6678
    %6779 = vmatpush.bf16.msra.mxu0 %v6674
    %6780 = vmatpush.bf16.msra.mxu0 %v6670
    %6781 = vmatpush.bf16.msra.mxu0 %v6666
    %6782 = vmatpush.bf16.msra.mxu0 %v6662
    %6783 = vmatpush.bf16.msra.mxu0 %v6658
    %6784 = vmatpush.bf16.msra.mxu0 %v6654
    %6785 = vmatpush.bf16.msra.mxu0 %v6650
    %6786 = vmatmul.bf16.gmra.mxu0 %v6389
    %v6787 = vpop.f32.mrf.mxu0
    %v6788 = vadd.f32 %v6454, %v6787
    %v6789 = vpop.f32.mrf.mxu0
    %6790 = vdwg.mxu0
    %6791 = vmatpush.bf16.msra.mxu0 %v6710
    %6792 = vmatpush.bf16.msra.mxu0 %v6706
    %6793 = vmatpush.bf16.msra.mxu0 %v6702
    %6794 = vmatpush.bf16.msra.mxu0 %v6698
    %6795 = vmatpush.bf16.msra.mxu0 %v6694
    %6796 = vmatpush.bf16.msra.mxu0 %v6690
    %6797 = vmatpush.bf16.msra.mxu0 %v6686
    %6798 = vmatpush.bf16.msra.mxu0 %v6682
    %6799 = vmatmul.bf16.gmra.mxu0 %v5646
    %v6800 = vpop.f32.mrf.mxu0
    %v6801 = vadd.f32 %v6788, %v6800
    %v6802 = vpop.f32.mrf.mxu0
    %6803 = vdwg.mxu0
    %6804 = vmatpush.bf16.msra.mxu0 %v6679
    %6805 = vmatpush.bf16.msra.mxu0 %v6675
    %6806 = vmatpush.bf16.msra.mxu0 %v6671
    %6807 = vmatpush.bf16.msra.mxu0 %v6667
    %6808 = vmatpush.bf16.msra.mxu0 %v6663
    %6809 = vmatpush.bf16.msra.mxu0 %v6659
    %6810 = vmatpush.bf16.msra.mxu0 %v6655
    %6811 = vmatpush.bf16.msra.mxu0 %v6651
    %6812 = vmatmul.bf16.gmra.mxu0 %v6389
    %v6813 = vpop.f32.mrf.mxu0
    %v6814 = vadd.f32 %v6455, %v6813
    %v6815 = vpop.f32.mrf.mxu0
    %6816 = vdwg.mxu0
    %6817 = vmatpush.bf16.msra.mxu0 %v6711
    %6818 = vmatpush.bf16.msra.mxu0 %v6707
    %6819 = vmatpush.bf16.msra.mxu0 %v6703
    %6820 = vmatpush.bf16.msra.mxu0 %v6699
    %6821 = vmatpush.bf16.msra.mxu0 %v6695
    %6822 = vmatpush.bf16.msra.mxu0 %v6691
    %6823 = vmatpush.bf16.msra.mxu0 %v6687
    %6824 = vmatpush.bf16.msra.mxu0 %v6683
    %6825 = vmatmul.bf16.gmra.mxu0 %v5646
    %v6826 = vpop.f32.mrf.mxu0
    %v6827 = vadd.f32 %v6814, %v6826
    %v6828 = vpop.f32.mrf.mxu0
    %6829 = vdwg.mxu0
    %6830 = vmatpush.bf16.msra.mxu0 %v6680
    %6831 = vmatpush.bf16.msra.mxu0 %v6676
    %6832 = vmatpush.bf16.msra.mxu0 %v6672
    %6833 = vmatpush.bf16.msra.mxu0 %v6668
    %6834 = vmatpush.bf16.msra.mxu0 %v6664
    %6835 = vmatpush.bf16.msra.mxu0 %v6660
    %6836 = vmatpush.bf16.msra.mxu0 %v6656
    %6837 = vmatpush.bf16.msra.mxu0 %v6652
    %6838 = vmatmul.bf16.gmra.mxu0 %v6389
    %v6839 = vpop.f32.mrf.mxu0
    %v6840 = vadd.f32 %v6456, %v6839
    %v6841 = vpop.f32.mrf.mxu0
    %6842 = vdwg.mxu0
    %6843 = vmatpush.bf16.msra.mxu0 %v6712
    %6844 = vmatpush.bf16.msra.mxu0 %v6708
    %6845 = vmatpush.bf16.msra.mxu0 %v6704
    %6846 = vmatpush.bf16.msra.mxu0 %v6700
    %6847 = vmatpush.bf16.msra.mxu0 %v6696
    %6848 = vmatpush.bf16.msra.mxu0 %v6692
    %6849 = vmatpush.bf16.msra.mxu0 %v6688
    %6850 = vmatpush.bf16.msra.mxu0 %v6684
    %6851 = vmatmul.bf16.gmra.mxu0 %v5646
    %v6852 = vpop.f32.mrf.mxu0
    %v6853 = vadd.f32 %v6840, %v6852
    %v6854 = vpop.f32.mrf.mxu0
    %6855 = vdwg.mxu0
    %6856 = vmatpush.bf16.msra.mxu0 %v6681
    %6857 = vmatpush.bf16.msra.mxu0 %v6677
    %6858 = vmatpush.bf16.msra.mxu0 %v6673
    %6859 = vmatpush.bf16.msra.mxu0 %v6669
    %6860 = vmatpush.bf16.msra.mxu0 %v6665
    %6861 = vmatpush.bf16.msra.mxu0 %v6661
    %6862 = vmatpush.bf16.msra.mxu0 %v6657
    %6863 = vmatpush.bf16.msra.mxu0 %v6653
    %6864 = vmatmul.bf16.gmra.mxu0 %v6389
    %v6865 = vpop.f32.mrf.mxu0
    %v6866 = vadd.f32 %v6457, %v6865
    %v6867 = vpop.f32.mrf.mxu0
    %6868 = vdwg.mxu0
    %6869 = vmatpush.bf16.msra.mxu0 %v6713
    %6870 = vmatpush.bf16.msra.mxu0 %v6709
    %6871 = vmatpush.bf16.msra.mxu0 %v6705
    %6872 = vmatpush.bf16.msra.mxu0 %v6701
    %6873 = vmatpush.bf16.msra.mxu0 %v6697
    %6874 = vmatpush.bf16.msra.mxu0 %v6693
    %6875 = vmatpush.bf16.msra.mxu0 %v6689
    %6876 = vmatpush.bf16.msra.mxu0 %v6685
    %6877 = vmatmul.bf16.gmra.mxu0 %v5646
    %v6878 = vpop.f32.mrf.mxu0
    %v6879 = vadd.f32 %v6866, %v6878
    %v6880 = vpop.f32.mrf.mxu0
    %6881 = vdwg.mxu0
    %v6882 = vsub.f32 0.0, %v6801
    %v6883 = vmul.f32 %v6882, 1.442695
    %v6884 = vpow.pop %v6883
    %v6885 = vadd.f32 %v6884, 1.0
    %v6886 = vrcp.pop %v6885
    %v6887 = vmul.f32 %v6885, %v6886
    %v6888 = vsub.f32 1.0, %v6887
    %v6889 = vmul.f32 %v6886, %v6888
    %v6890 = vadd.f32 %v6886, %v6889
    %vm6891 = vweird.f32 %v6885
    %vm6892 = vweird.f32 %v6886
    %vm6893 = vmor %vm6891, %vm6892
    %v6894 = vsel %vm6893, %v6886, %v6890
    %v6895 = vand.u32 2147483647, %v6885
    %vm6896 = vcmp.eq.f32.partialorder %v6895, 8.507059e+37
    %v6897 = vand.u32 %v6885, 2147483648
    %v6898 = vor.u32 1.1754944e-38, %v6897
    %v6899 = vsel %vm6896, %v6898, %v6894
    %v6900 = vsub.f32 0.0, %v6827
    %v6901 = vmul.f32 %v6900, 1.442695
    %v6902 = vpow.pop %v6901
    %v6903 = vadd.f32 %v6902, 1.0
    %v6904 = vrcp.pop %v6903
    %v6905 = vmul.f32 %v6903, %v6904
    %v6906 = vsub.f32 1.0, %v6905
    %v6907 = vmul.f32 %v6904, %v6906
    %v6908 = vadd.f32 %v6904, %v6907
    %vm6909 = vweird.f32 %v6903
    %vm6910 = vweird.f32 %v6904
    %vm6911 = vmor %vm6909, %vm6910
    %v6912 = vsel %vm6911, %v6904, %v6908
    %v6913 = vand.u32 2147483647, %v6903
    %vm6914 = vcmp.eq.f32.partialorder %v6913, 8.507059e+37
    %v6915 = vand.u32 %v6903, 2147483648
    %v6916 = vor.u32 1.1754944e-38, %v6915
    %v6917 = vsel %vm6914, %v6916, %v6912
    %v6918 = vtanh.pop %v6853
    %v6919 = vsub.f32 0.0, %v6879
    %v6920 = vmul.f32 %v6919, 1.442695
    %v6921 = vpow.pop %v6920
    %v6922 = vadd.f32 %v6921, 1.0
    %v6923 = vrcp.pop %v6922
    %v6924 = vmul.f32 %v6922, %v6923
    %v6925 = vsub.f32 1.0, %v6924
    %v6926 = vmul.f32 %v6923, %v6925
    %v6927 = vadd.f32 %v6923, %v6926
    %vm6928 = vweird.f32 %v6922
    %vm6929 = vweird.f32 %v6923
    %vm6930 = vmor %vm6928, %vm6929
    %v6931 = vsel %vm6930, %v6923, %v6927
    %v6932 = vand.u32 2147483647, %v6922
    %vm6933 = vcmp.eq.f32.partialorder %v6932, 8.507059e+37
    %v6934 = vand.u32 %v6922, 2147483648
    %v6935 = vor.u32 1.1754944e-38, %v6934
    %v6936 = vsel %vm6933, %v6935, %v6931
    %v6937 = vmul.f32 %v6917, %v5643
    %v6938 = vmul.f32 %v6899, %v6918
    %v6939 = vadd.f32 %v6937, %v6938
    %v6940 = vtanh.pop %v6939
    %v6941 = vmul.f32 %v6936, %v6940
    %v6942 = vpack.c.bf16 %v6941, %v6941
    %v6943 = vld [vmem:[#allocation16] sm:$0xf]
    %v6944 = vld [vmem:[#allocation16 + $0x4] sm:$0xf]
    %v6945 = vld [vmem:[#allocation16 + $0x8] sm:$0xf]
    %v6946 = vld [vmem:[#allocation16 + $0xc] sm:$0xf]
    %v6947 = vld [vmem:[#allocation16 + $0x10] sm:$0xf]
    %v6948 = vld [vmem:[#allocation16 + $0x14] sm:$0xf]
    %v6949 = vld [vmem:[#allocation16 + $0x18] sm:$0xf]
    %v6950 = vld [vmem:[#allocation16 + $0x1c] sm:$0xf]
    %v6951 = vld [vmem:[#allocation16 + $0x20] sm:$0xf]
    %v6952 = vld [vmem:[#allocation16 + $0x24] sm:$0xf]
    %v6953 = vld [vmem:[#allocation16 + $0x28] sm:$0xf]
    %v6954 = vld [vmem:[#allocation16 + $0x2c] sm:$0xf]
    %v6955 = vld [vmem:[#allocation16 + $0x30] sm:$0xf]
    %v6956 = vld [vmem:[#allocation16 + $0x34] sm:$0xf]
    %v6957 = vld [vmem:[#allocation16 + $0x38] sm:$0xf]
    %v6958 = vld [vmem:[#allocation16 + $0x3c] sm:$0xf]
    %v6959 = vld [vmem:[%s9] sm:$0xff]
    %v6976 = vunpack.c.l.b16 %v6943
    %v6977 = vunpack.c.l.b16 %v6944
    %v6978 = vunpack.c.l.b16 %v6945
    %v6979 = vunpack.c.l.b16 %v6946
    %v6980 = vunpack.c.l.b16 %v6947
    %v6981 = vunpack.c.l.b16 %v6948
    %v6982 = vunpack.c.l.b16 %v6949
    %v6983 = vunpack.c.l.b16 %v6950
    %v6984 = vunpack.c.l.b16 %v6951
    %v6985 = vunpack.c.l.b16 %v6952
    %v6986 = vunpack.c.l.b16 %v6953
    %v6987 = vunpack.c.l.b16 %v6954
    %v6988 = vunpack.c.l.b16 %v6955
    %v6989 = vunpack.c.l.b16 %v6956
    %v6990 = vunpack.c.l.b16 %v6957
    %v6991 = vunpack.c.l.b16 %v6958
    %v6992 = vpack.c.b16 %v6977, %v6976
    %v6993 = vpack.c.b16 %v6979, %v6978
    %v6994 = vpack.c.b16 %v6981, %v6980
    %v6995 = vpack.c.b16 %v6983, %v6982
    %v6996 = vpack.c.b16 %v6985, %v6984
    %v6997 = vpack.c.b16 %v6987, %v6986
    %v6998 = vpack.c.b16 %v6989, %v6988
    %v6999 = vpack.c.b16 %v6991, %v6990
    %7008 = vmatpush.bf16.msra.mxu0 %v6999
    %7009 = vmatpush.bf16.msra.mxu0 %v6998
    %7010 = vmatpush.bf16.msra.mxu0 %v6997
    %7011 = vmatpush.bf16.msra.mxu0 %v6996
    %7012 = vmatpush.bf16.msra.mxu0 %v6995
    %7013 = vmatpush.bf16.msra.mxu0 %v6994
    %7014 = vmatpush.bf16.msra.mxu0 %v6993
    %7015 = vmatpush.bf16.msra.mxu0 %v6992
    %7016 = vmatmul.bf16.gmra.mxu0 %v6942
    %v7017 = vpop.f32.mrf.mxu0
    %v7018 = vadd.f32 %v6959, %v7017
    %v7019 = vpop.f32.mrf.mxu0
    %7020 = vdwg.mxu0
    %s7021 = scalar_lea.vmem [#allocation18], 32
    %7022 = vst [vmem:[%s7021] sm:$0xff] %v7018
    %s7023 = scalar_lea.vmem [#allocation7], 40
    %v7024 = vld [vmem:[%s7023] sm:$0xff]
    %7025 = vmax.xlane.f32.xlu0 %v7018
    %v7026 = vpop.xlane.xlu0 %7025
    %vm7027 = vcmp.eq.f32.partialorder %v7018, %v7026
    %v7028 = vsel %vm7027, %v658, 128
    %v7029 = vand.u32 %v7028, 65535
    %v7030 = vshra.s32 %v7028, 16
    %v7031 = vcvt.s32.f32 %v7029
    %v7032 = vcvt.s32.f32 %v7030
    %7033 = vmin.xlane.f32.xlu0 %v7032
    %v7034 = vpop.xlane.xlu0 %7033
    %vm7035 = vcmp.eq.f32.partialorder %v7032, %v7034
    %v7036 = vsel %vm7035, %v7031, inf
    %7037 = vmin.xlane.f32.xlu0 %v7036
    %v7038 = vpop.xlane.xlu0 %7037
    %v7039 = vcvt.f32.s32 %v7038
    %v7040 = vcvt.f32.s32 %v7034
    %v7041 = vshll.u32 %v7040, 16
    %v7042 = vadd.s32 %v7041, %v7039
    %vm7043 = vcmp.eq.s32.totalorder %v658, %v7042
    %v7044 = vsel %vm7043, 1, 0
    %v7045 = vcvt.s32.f32 %v7044
    %v7046 = vpack.c.bf16 %v7045, %v7045
    %v7047 = vld [vmem:[#allocation9] sm:$0xf]
    %v7048 = vld [vmem:[#allocation9 + $0x4] sm:$0xf]
    %v7049 = vld [vmem:[#allocation9 + $0x8] sm:$0xf]
    %v7050 = vld [vmem:[#allocation9 + $0xc] sm:$0xf]
    %v7051 = vld [vmem:[#allocation9 + $0x10] sm:$0xf]
    %v7052 = vld [vmem:[#allocation9 + $0x14] sm:$0xf]
    %v7053 = vld [vmem:[#allocation9 + $0x18] sm:$0xf]
    %v7054 = vld [vmem:[#allocation9 + $0x1c] sm:$0xf]
    %v7055 = vld [vmem:[#allocation9 + $0x20] sm:$0xf]
    %v7056 = vld [vmem:[#allocation9 + $0x24] sm:$0xf]
    %v7057 = vld [vmem:[#allocation9 + $0x28] sm:$0xf]
    %v7058 = vld [vmem:[#allocation9 + $0x2c] sm:$0xf]
    %v7059 = vld [vmem:[#allocation9 + $0x30] sm:$0xf]
    %v7060 = vld [vmem:[#allocation9 + $0x34] sm:$0xf]
    %v7061 = vld [vmem:[#allocation9 + $0x38] sm:$0xf]
    %v7062 = vld [vmem:[#allocation9 + $0x3c] sm:$0xf]
    %v7079 = vunpack.c.l.b16 %v7047
    %v7080 = vunpack.c.l.b16 %v7048
    %v7081 = vunpack.c.l.b16 %v7049
    %v7082 = vunpack.c.l.b16 %v7050
    %v7083 = vunpack.c.l.b16 %v7051
    %v7084 = vunpack.c.l.b16 %v7052
    %v7085 = vunpack.c.l.b16 %v7053
    %v7086 = vunpack.c.l.b16 %v7054
    %v7087 = vunpack.c.l.b16 %v7055
    %v7088 = vunpack.c.l.b16 %v7056
    %v7089 = vunpack.c.l.b16 %v7057
    %v7090 = vunpack.c.l.b16 %v7058
    %v7091 = vunpack.c.l.b16 %v7059
    %v7092 = vunpack.c.l.b16 %v7060
    %v7093 = vunpack.c.l.b16 %v7061
    %v7094 = vunpack.c.l.b16 %v7062
    %v7095 = vpack.c.b16 %v7080, %v7079
    %v7096 = vpack.c.b16 %v7082, %v7081
    %v7097 = vpack.c.b16 %v7084, %v7083
    %v7098 = vpack.c.b16 %v7086, %v7085
    %v7099 = vpack.c.b16 %v7088, %v7087
    %v7100 = vpack.c.b16 %v7090, %v7089
    %v7101 = vpack.c.b16 %v7092, %v7091
    %v7102 = vpack.c.b16 %v7094, %v7093
    %7111 = vmatpush.bf16.msra.mxu0 %v7102
    %7112 = vmatpush.bf16.msra.mxu0 %v7101
    %7113 = vmatpush.bf16.msra.mxu0 %v7100
    %7114 = vmatpush.bf16.msra.mxu0 %v7099
    %7115 = vmatpush.bf16.msra.mxu0 %v7098
    %7116 = vmatpush.bf16.msra.mxu0 %v7097
    %7117 = vmatpush.bf16.msra.mxu0 %v7096
    %7118 = vmatpush.bf16.msra.mxu0 %v7095
    %7119 = vmatmul.bf16.gmra.mxu0 %v7046
    %v7120 = vpop.f32.mrf.mxu0
    %v7121 = vadd.f32 0.0, %v7120
    %v7122 = vpop.f32.mrf.mxu0
    %7123 = vdwg.mxu0
    %s7124 = sld [smem:[#allocation2 + $0x4]]
    %s7125 = scvt.s32.f32 %s7124
    %v7126 = vstv %s7125
    %v7127 = vmul.f32 %v7126, %v7024
    %s7128 = ssub.f32 1.0, %s7125
    %v7129 = vstv %s7128
    %v7130 = vmul.f32 %v7129, %v7121
    %v7131 = vadd.f32 %v7127, %v7130
    %v7132 = vpack.c.bf16 %v7131, %v7131
    %v7133 = vld [vmem:[#allocation10] sm:$0xff]
    %v7134 = vld [vmem:[#allocation10 + $0x8] sm:$0xff]
    %v7135 = vld [vmem:[#allocation10 + $0x10] sm:$0xff]
    %v7136 = vld [vmem:[#allocation10 + $0x18] sm:$0xff]
    %v7137 = vld [vmem:[#allocation10 + $0x20] sm:$0xff]
    %v7138 = vld [vmem:[#allocation10 + $0x28] sm:$0xff]
    %v7139 = vld [vmem:[#allocation10 + $0x30] sm:$0xff]
    %v7140 = vld [vmem:[#allocation10 + $0x38] sm:$0xff]
    %v7141 = vld [vmem:[#allocation10 + $0x40] sm:$0xff]
    %v7142 = vld [vmem:[#allocation10 + $0x48] sm:$0xff]
    %v7143 = vld [vmem:[#allocation10 + $0x50] sm:$0xff]
    %v7144 = vld [vmem:[#allocation10 + $0x58] sm:$0xff]
    %v7145 = vld [vmem:[#allocation10 + $0x60] sm:$0xff]
    %v7146 = vld [vmem:[#allocation10 + $0x68] sm:$0xff]
    %v7147 = vld [vmem:[#allocation10 + $0x70] sm:$0xff]
    %v7148 = vld [vmem:[#allocation10 + $0x78] sm:$0xff]
    %v7149 = vld [vmem:[#allocation10 + $0x80] sm:$0xff]
    %v7150 = vld [vmem:[#allocation10 + $0x88] sm:$0xff]
    %v7151 = vld [vmem:[#allocation10 + $0x90] sm:$0xff]
    %v7152 = vld [vmem:[#allocation10 + $0x98] sm:$0xff]
    %v7153 = vld [vmem:[#allocation10 + $0xa0] sm:$0xff]
    %v7154 = vld [vmem:[#allocation10 + $0xa8] sm:$0xff]
    %v7155 = vld [vmem:[#allocation10 + $0xb0] sm:$0xff]
    %v7156 = vld [vmem:[#allocation10 + $0xb8] sm:$0xff]
    %v7157 = vld [vmem:[#allocation10 + $0xc0] sm:$0xff]
    %v7158 = vld [vmem:[#allocation10 + $0xc8] sm:$0xff]
    %v7159 = vld [vmem:[#allocation10 + $0xd0] sm:$0xff]
    %v7160 = vld [vmem:[#allocation10 + $0xd8] sm:$0xff]
    %v7161 = vld [vmem:[#allocation10 + $0xe0] sm:$0xff]
    %v7162 = vld [vmem:[#allocation10 + $0xe8] sm:$0xff]
    %v7163 = vld [vmem:[#allocation10 + $0xf0] sm:$0xff]
    %v7164 = vld [vmem:[#allocation10 + $0xf8] sm:$0xff]
    %v7165 = vld [vmem:[#allocation10 + $0x100] sm:$0xff]
    %v7166 = vld [vmem:[#allocation10 + $0x108] sm:$0xff]
    %v7167 = vld [vmem:[#allocation10 + $0x110] sm:$0xff]
    %v7168 = vld [vmem:[#allocation10 + $0x118] sm:$0xff]
    %v7169 = vld [vmem:[#allocation10 + $0x120] sm:$0xff]
    %v7170 = vld [vmem:[#allocation10 + $0x128] sm:$0xff]
    %v7171 = vld [vmem:[#allocation10 + $0x130] sm:$0xff]
    %v7172 = vld [vmem:[#allocation10 + $0x138] sm:$0xff]
    %v7173 = vld [vmem:[#allocation10 + $0x140] sm:$0xff]
    %v7174 = vld [vmem:[#allocation10 + $0x148] sm:$0xff]
    %v7175 = vld [vmem:[#allocation10 + $0x150] sm:$0xff]
    %v7176 = vld [vmem:[#allocation10 + $0x158] sm:$0xff]
    %v7177 = vld [vmem:[#allocation10 + $0x160] sm:$0xff]
    %v7178 = vld [vmem:[#allocation10 + $0x168] sm:$0xff]
    %v7179 = vld [vmem:[#allocation10 + $0x170] sm:$0xff]
    %v7180 = vld [vmem:[#allocation10 + $0x178] sm:$0xff]
    %v7181 = vld [vmem:[#allocation10 + $0x180] sm:$0xff]
    %v7182 = vld [vmem:[#allocation10 + $0x188] sm:$0xff]
    %v7183 = vld [vmem:[#allocation10 + $0x190] sm:$0xff]
    %v7184 = vld [vmem:[#allocation10 + $0x198] sm:$0xff]
    %v7185 = vld [vmem:[#allocation10 + $0x1a0] sm:$0xff]
    %v7186 = vld [vmem:[#allocation10 + $0x1a8] sm:$0xff]
    %v7187 = vld [vmem:[#allocation10 + $0x1b0] sm:$0xff]
    %v7188 = vld [vmem:[#allocation10 + $0x1b8] sm:$0xff]
    %v7189 = vld [vmem:[#allocation10 + $0x1c0] sm:$0xff]
    %v7190 = vld [vmem:[#allocation10 + $0x1c8] sm:$0xff]
    %v7191 = vld [vmem:[#allocation10 + $0x1d0] sm:$0xff]
    %v7192 = vld [vmem:[#allocation10 + $0x1d8] sm:$0xff]
    %v7193 = vld [vmem:[#allocation10 + $0x1e0] sm:$0xff]
    %v7194 = vld [vmem:[#allocation10 + $0x1e8] sm:$0xff]
    %v7195 = vld [vmem:[#allocation10 + $0x1f0] sm:$0xff]
    %v7196 = vld [vmem:[#allocation10 + $0x1f8] sm:$0xff]
    %v7197 = vld [vmem:[#allocation12] sm:$0xff]
    %v7198 = vld [vmem:[#allocation12 + $0x8] sm:$0xff]
    %v7199 = vld [vmem:[#allocation12 + $0x10] sm:$0xff]
    %v7200 = vld [vmem:[#allocation12 + $0x18] sm:$0xff]
    %v7265 = vunpack.c.l.b16 %v7133
    %v7266 = vunpack.c.h.b16 %v7133
    %v7267 = vunpack.c.l.b16 %v7134
    %v7268 = vunpack.c.h.b16 %v7134
    %v7269 = vunpack.c.l.b16 %v7135
    %v7270 = vunpack.c.h.b16 %v7135
    %v7271 = vunpack.c.l.b16 %v7136
    %v7272 = vunpack.c.h.b16 %v7136
    %v7273 = vunpack.c.l.b16 %v7137
    %v7274 = vunpack.c.h.b16 %v7137
    %v7275 = vunpack.c.l.b16 %v7138
    %v7276 = vunpack.c.h.b16 %v7138
    %v7277 = vunpack.c.l.b16 %v7139
    %v7278 = vunpack.c.h.b16 %v7139
    %v7279 = vunpack.c.l.b16 %v7140
    %v7280 = vunpack.c.h.b16 %v7140
    %v7281 = vunpack.c.l.b16 %v7141
    %v7282 = vunpack.c.h.b16 %v7141
    %v7283 = vunpack.c.l.b16 %v7142
    %v7284 = vunpack.c.h.b16 %v7142
    %v7285 = vunpack.c.l.b16 %v7143
    %v7286 = vunpack.c.h.b16 %v7143
    %v7287 = vunpack.c.l.b16 %v7144
    %v7288 = vunpack.c.h.b16 %v7144
    %v7289 = vunpack.c.l.b16 %v7145
    %v7290 = vunpack.c.h.b16 %v7145
    %v7291 = vunpack.c.l.b16 %v7146
    %v7292 = vunpack.c.h.b16 %v7146
    %v7293 = vunpack.c.l.b16 %v7147
    %v7294 = vunpack.c.h.b16 %v7147
    %v7295 = vunpack.c.l.b16 %v7148
    %v7296 = vunpack.c.h.b16 %v7148
    %v7297 = vunpack.c.l.b16 %v7149
    %v7298 = vunpack.c.h.b16 %v7149
    %v7299 = vunpack.c.l.b16 %v7150
    %v7300 = vunpack.c.h.b16 %v7150
    %v7301 = vunpack.c.l.b16 %v7151
    %v7302 = vunpack.c.h.b16 %v7151
    %v7303 = vunpack.c.l.b16 %v7152
    %v7304 = vunpack.c.h.b16 %v7152
    %v7305 = vunpack.c.l.b16 %v7153
    %v7306 = vunpack.c.h.b16 %v7153
    %v7307 = vunpack.c.l.b16 %v7154
    %v7308 = vunpack.c.h.b16 %v7154
    %v7309 = vunpack.c.l.b16 %v7155
    %v7310 = vunpack.c.h.b16 %v7155
    %v7311 = vunpack.c.l.b16 %v7156
    %v7312 = vunpack.c.h.b16 %v7156
    %v7313 = vunpack.c.l.b16 %v7157
    %v7314 = vunpack.c.h.b16 %v7157
    %v7315 = vunpack.c.l.b16 %v7158
    %v7316 = vunpack.c.h.b16 %v7158
    %v7317 = vunpack.c.l.b16 %v7159
    %v7318 = vunpack.c.h.b16 %v7159
    %v7319 = vunpack.c.l.b16 %v7160
    %v7320 = vunpack.c.h.b16 %v7160
    %v7321 = vunpack.c.l.b16 %v7161
    %v7322 = vunpack.c.h.b16 %v7161
    %v7323 = vunpack.c.l.b16 %v7162
    %v7324 = vunpack.c.h.b16 %v7162
    %v7325 = vunpack.c.l.b16 %v7163
    %v7326 = vunpack.c.h.b16 %v7163
    %v7327 = vunpack.c.l.b16 %v7164
    %v7328 = vunpack.c.h.b16 %v7164
    %v7329 = vunpack.c.l.b16 %v7165
    %v7330 = vunpack.c.h.b16 %v7165
    %v7331 = vunpack.c.l.b16 %v7166
    %v7332 = vunpack.c.h.b16 %v7166
    %v7333 = vunpack.c.l.b16 %v7167
    %v7334 = vunpack.c.h.b16 %v7167
    %v7335 = vunpack.c.l.b16 %v7168
    %v7336 = vunpack.c.h.b16 %v7168
    %v7337 = vunpack.c.l.b16 %v7169
    %v7338 = vunpack.c.h.b16 %v7169
    %v7339 = vunpack.c.l.b16 %v7170
    %v7340 = vunpack.c.h.b16 %v7170
    %v7341 = vunpack.c.l.b16 %v7171
    %v7342 = vunpack.c.h.b16 %v7171
    %v7343 = vunpack.c.l.b16 %v7172
    %v7344 = vunpack.c.h.b16 %v7172
    %v7345 = vunpack.c.l.b16 %v7173
    %v7346 = vunpack.c.h.b16 %v7173
    %v7347 = vunpack.c.l.b16 %v7174
    %v7348 = vunpack.c.h.b16 %v7174
    %v7349 = vunpack.c.l.b16 %v7175
    %v7350 = vunpack.c.h.b16 %v7175
    %v7351 = vunpack.c.l.b16 %v7176
    %v7352 = vunpack.c.h.b16 %v7176
    %v7353 = vunpack.c.l.b16 %v7177
    %v7354 = vunpack.c.h.b16 %v7177
    %v7355 = vunpack.c.l.b16 %v7178
    %v7356 = vunpack.c.h.b16 %v7178
    %v7357 = vunpack.c.l.b16 %v7179
    %v7358 = vunpack.c.h.b16 %v7179
    %v7359 = vunpack.c.l.b16 %v7180
    %v7360 = vunpack.c.h.b16 %v7180
    %v7361 = vunpack.c.l.b16 %v7181
    %v7362 = vunpack.c.h.b16 %v7181
    %v7363 = vunpack.c.l.b16 %v7182
    %v7364 = vunpack.c.h.b16 %v7182
    %v7365 = vunpack.c.l.b16 %v7183
    %v7366 = vunpack.c.h.b16 %v7183
    %v7367 = vunpack.c.l.b16 %v7184
    %v7368 = vunpack.c.h.b16 %v7184
    %v7369 = vunpack.c.l.b16 %v7185
    %v7370 = vunpack.c.h.b16 %v7185
    %v7371 = vunpack.c.l.b16 %v7186
    %v7372 = vunpack.c.h.b16 %v7186
    %v7373 = vunpack.c.l.b16 %v7187
    %v7374 = vunpack.c.h.b16 %v7187
    %v7375 = vunpack.c.l.b16 %v7188
    %v7376 = vunpack.c.h.b16 %v7188
    %v7377 = vunpack.c.l.b16 %v7189
    %v7378 = vunpack.c.h.b16 %v7189
    %v7379 = vunpack.c.l.b16 %v7190
    %v7380 = vunpack.c.h.b16 %v7190
    %v7381 = vunpack.c.l.b16 %v7191
    %v7382 = vunpack.c.h.b16 %v7191
    %v7383 = vunpack.c.l.b16 %v7192
    %v7384 = vunpack.c.h.b16 %v7192
    %v7385 = vunpack.c.l.b16 %v7193
    %v7386 = vunpack.c.h.b16 %v7193
    %v7387 = vunpack.c.l.b16 %v7194
    %v7388 = vunpack.c.h.b16 %v7194
    %v7389 = vunpack.c.l.b16 %v7195
    %v7390 = vunpack.c.h.b16 %v7195
    %v7391 = vunpack.c.l.b16 %v7196
    %v7392 = vunpack.c.h.b16 %v7196
    %v7393 = vpack.c.b16 %v7269, %v7265
    %v7394 = vpack.c.b16 %v7270, %v7266
    %v7395 = vpack.c.b16 %v7271, %v7267
    %v7396 = vpack.c.b16 %v7272, %v7268
    %v7397 = vpack.c.b16 %v7277, %v7273
    %v7398 = vpack.c.b16 %v7278, %v7274
    %v7399 = vpack.c.b16 %v7279, %v7275
    %v7400 = vpack.c.b16 %v7280, %v7276
    %v7401 = vpack.c.b16 %v7285, %v7281
    %v7402 = vpack.c.b16 %v7286, %v7282
    %v7403 = vpack.c.b16 %v7287, %v7283
    %v7404 = vpack.c.b16 %v7288, %v7284
    %v7405 = vpack.c.b16 %v7293, %v7289
    %v7406 = vpack.c.b16 %v7294, %v7290
    %v7407 = vpack.c.b16 %v7295, %v7291
    %v7408 = vpack.c.b16 %v7296, %v7292
    %v7409 = vpack.c.b16 %v7301, %v7297
    %v7410 = vpack.c.b16 %v7302, %v7298
    %v7411 = vpack.c.b16 %v7303, %v7299
    %v7412 = vpack.c.b16 %v7304, %v7300
    %v7413 = vpack.c.b16 %v7309, %v7305
    %v7414 = vpack.c.b16 %v7310, %v7306
    %v7415 = vpack.c.b16 %v7311, %v7307
    %v7416 = vpack.c.b16 %v7312, %v7308
    %v7417 = vpack.c.b16 %v7317, %v7313
    %v7418 = vpack.c.b16 %v7318, %v7314
    %v7419 = vpack.c.b16 %v7319, %v7315
    %v7420 = vpack.c.b16 %v7320, %v7316
    %v7421 = vpack.c.b16 %v7325, %v7321
    %v7422 = vpack.c.b16 %v7326, %v7322
    %v7423 = vpack.c.b16 %v7327, %v7323
    %v7424 = vpack.c.b16 %v7328, %v7324
    %v7425 = vpack.c.b16 %v7333, %v7329
    %v7426 = vpack.c.b16 %v7334, %v7330
    %v7427 = vpack.c.b16 %v7335, %v7331
    %v7428 = vpack.c.b16 %v7336, %v7332
    %v7429 = vpack.c.b16 %v7341, %v7337
    %v7430 = vpack.c.b16 %v7342, %v7338
    %v7431 = vpack.c.b16 %v7343, %v7339
    %v7432 = vpack.c.b16 %v7344, %v7340
    %v7433 = vpack.c.b16 %v7349, %v7345
    %v7434 = vpack.c.b16 %v7350, %v7346
    %v7435 = vpack.c.b16 %v7351, %v7347
    %v7436 = vpack.c.b16 %v7352, %v7348
    %v7437 = vpack.c.b16 %v7357, %v7353
    %v7438 = vpack.c.b16 %v7358, %v7354
    %v7439 = vpack.c.b16 %v7359, %v7355
    %v7440 = vpack.c.b16 %v7360, %v7356
    %v7441 = vpack.c.b16 %v7365, %v7361
    %v7442 = vpack.c.b16 %v7366, %v7362
    %v7443 = vpack.c.b16 %v7367, %v7363
    %v7444 = vpack.c.b16 %v7368, %v7364
    %v7445 = vpack.c.b16 %v7373, %v7369
    %v7446 = vpack.c.b16 %v7374, %v7370
    %v7447 = vpack.c.b16 %v7375, %v7371
    %v7448 = vpack.c.b16 %v7376, %v7372
    %v7449 = vpack.c.b16 %v7381, %v7377
    %v7450 = vpack.c.b16 %v7382, %v7378
    %v7451 = vpack.c.b16 %v7383, %v7379
    %v7452 = vpack.c.b16 %v7384, %v7380
    %v7453 = vpack.c.b16 %v7389, %v7385
    %v7454 = vpack.c.b16 %v7390, %v7386
    %v7455 = vpack.c.b16 %v7391, %v7387
    %v7456 = vpack.c.b16 %v7392, %v7388
    %7521 = vmatpush.bf16.msra.mxu0 %v7421
    %7522 = vmatpush.bf16.msra.mxu0 %v7417
    %7523 = vmatpush.bf16.msra.mxu0 %v7413
    %7524 = vmatpush.bf16.msra.mxu0 %v7409
    %7525 = vmatpush.bf16.msra.mxu0 %v7405
    %7526 = vmatpush.bf16.msra.mxu0 %v7401
    %7527 = vmatpush.bf16.msra.mxu0 %v7397
    %7528 = vmatpush.bf16.msra.mxu0 %v7393
    %7529 = vmatmul.bf16.gmra.mxu0 %v7132
    %v7530 = vpop.f32.mrf.mxu0
    %v7531 = vadd.f32 %v7197, %v7530
    %v7532 = vpop.f32.mrf.mxu0
    %7533 = vdwg.mxu0
    %7534 = vmatpush.bf16.msra.mxu0 %v7453
    %7535 = vmatpush.bf16.msra.mxu0 %v7449
    %7536 = vmatpush.bf16.msra.mxu0 %v7445
    %7537 = vmatpush.bf16.msra.mxu0 %v7441
    %7538 = vmatpush.bf16.msra.mxu0 %v7437
    %7539 = vmatpush.bf16.msra.mxu0 %v7433
    %7540 = vmatpush.bf16.msra.mxu0 %v7429
    %7541 = vmatpush.bf16.msra.mxu0 %v7425
    %7542 = vmatmul.bf16.gmra.mxu0 %v6389
    %v7543 = vpop.f32.mrf.mxu0
    %v7544 = vadd.f32 %v7531, %v7543
    %v7545 = vpop.f32.mrf.mxu0
    %7546 = vdwg.mxu0
    %7547 = vmatpush.bf16.msra.mxu0 %v7422
    %7548 = vmatpush.bf16.msra.mxu0 %v7418
    %7549 = vmatpush.bf16.msra.mxu0 %v7414
    %7550 = vmatpush.bf16.msra.mxu0 %v7410
    %7551 = vmatpush.bf16.msra.mxu0 %v7406
    %7552 = vmatpush.bf16.msra.mxu0 %v7402
    %7553 = vmatpush.bf16.msra.mxu0 %v7398
    %7554 = vmatpush.bf16.msra.mxu0 %v7394
    %7555 = vmatmul.bf16.gmra.mxu0 %v7132
    %v7556 = vpop.f32.mrf.mxu0
    %v7557 = vadd.f32 %v7198, %v7556
    %v7558 = vpop.f32.mrf.mxu0
    %7559 = vdwg.mxu0
    %7560 = vmatpush.bf16.msra.mxu0 %v7454
    %7561 = vmatpush.bf16.msra.mxu0 %v7450
    %7562 = vmatpush.bf16.msra.mxu0 %v7446
    %7563 = vmatpush.bf16.msra.mxu0 %v7442
    %7564 = vmatpush.bf16.msra.mxu0 %v7438
    %7565 = vmatpush.bf16.msra.mxu0 %v7434
    %7566 = vmatpush.bf16.msra.mxu0 %v7430
    %7567 = vmatpush.bf16.msra.mxu0 %v7426
    %7568 = vmatmul.bf16.gmra.mxu0 %v6389
    %v7569 = vpop.f32.mrf.mxu0
    %v7570 = vadd.f32 %v7557, %v7569
    %v7571 = vpop.f32.mrf.mxu0
    %7572 = vdwg.mxu0
    %7573 = vmatpush.bf16.msra.mxu0 %v7423
    %7574 = vmatpush.bf16.msra.mxu0 %v7419
    %7575 = vmatpush.bf16.msra.mxu0 %v7415
    %7576 = vmatpush.bf16.msra.mxu0 %v7411
    %7577 = vmatpush.bf16.msra.mxu0 %v7407
    %7578 = vmatpush.bf16.msra.mxu0 %v7403
    %7579 = vmatpush.bf16.msra.mxu0 %v7399
    %7580 = vmatpush.bf16.msra.mxu0 %v7395
    %7581 = vmatmul.bf16.gmra.mxu0 %v7132
    %v7582 = vpop.f32.mrf.mxu0
    %v7583 = vadd.f32 %v7199, %v7582
    %v7584 = vpop.f32.mrf.mxu0
    %7585 = vdwg.mxu0
    %7586 = vmatpush.bf16.msra.mxu0 %v7455
    %7587 = vmatpush.bf16.msra.mxu0 %v7451
    %7588 = vmatpush.bf16.msra.mxu0 %v7447
    %7589 = vmatpush.bf16.msra.mxu0 %v7443
    %7590 = vmatpush.bf16.msra.mxu0 %v7439
    %7591 = vmatpush.bf16.msra.mxu0 %v7435
    %7592 = vmatpush.bf16.msra.mxu0 %v7431
    %7593 = vmatpush.bf16.msra.mxu0 %v7427
    %7594 = vmatmul.bf16.gmra.mxu0 %v6389
    %v7595 = vpop.f32.mrf.mxu0
    %v7596 = vadd.f32 %v7583, %v7595
    %v7597 = vpop.f32.mrf.mxu0
    %7598 = vdwg.mxu0
    %7599 = vmatpush.bf16.msra.mxu0 %v7424
    %7600 = vmatpush.bf16.msra.mxu0 %v7420
    %7601 = vmatpush.bf16.msra.mxu0 %v7416
    %7602 = vmatpush.bf16.msra.mxu0 %v7412
    %7603 = vmatpush.bf16.msra.mxu0 %v7408
    %7604 = vmatpush.bf16.msra.mxu0 %v7404
    %7605 = vmatpush.bf16.msra.mxu0 %v7400
    %7606 = vmatpush.bf16.msra.mxu0 %v7396
    %7607 = vmatmul.bf16.gmra.mxu0 %v7132
    %v7608 = vpop.f32.mrf.mxu0
    %v7609 = vadd.f32 %v7200, %v7608
    %v7610 = vpop.f32.mrf.mxu0
    %7611 = vdwg.mxu0
    %7612 = vmatpush.bf16.msra.mxu0 %v7456
    %7613 = vmatpush.bf16.msra.mxu0 %v7452
    %7614 = vmatpush.bf16.msra.mxu0 %v7448
    %7615 = vmatpush.bf16.msra.mxu0 %v7444
    %7616 = vmatpush.bf16.msra.mxu0 %v7440
    %7617 = vmatpush.bf16.msra.mxu0 %v7436
    %7618 = vmatpush.bf16.msra.mxu0 %v7432
    %7619 = vmatpush.bf16.msra.mxu0 %v7428
    %7620 = vmatmul.bf16.gmra.mxu0 %v6389
    %v7621 = vpop.f32.mrf.mxu0
    %v7622 = vadd.f32 %v7609, %v7621
    %v7623 = vpop.f32.mrf.mxu0
    %7624 = vdwg.mxu0
    %v7625 = vsub.f32 0.0, %v7544
    %v7626 = vmul.f32 %v7625, 1.442695
    %v7627 = vpow.pop %v7626
    %v7628 = vadd.f32 %v7627, 1.0
    %v7629 = vrcp.pop %v7628
    %v7630 = vmul.f32 %v7628, %v7629
    %v7631 = vsub.f32 1.0, %v7630
    %v7632 = vmul.f32 %v7629, %v7631
    %v7633 = vadd.f32 %v7629, %v7632
    %vm7634 = vweird.f32 %v7628
    %vm7635 = vweird.f32 %v7629
    %vm7636 = vmor %vm7634, %vm7635
    %v7637 = vsel %vm7636, %v7629, %v7633
    %v7638 = vand.u32 2147483647, %v7628
    %vm7639 = vcmp.eq.f32.partialorder %v7638, 8.507059e+37
    %v7640 = vand.u32 %v7628, 2147483648
    %v7641 = vor.u32 1.1754944e-38, %v7640
    %v7642 = vsel %vm7639, %v7641, %v7637
    %v7643 = vsub.f32 0.0, %v7570
    %v7644 = vmul.f32 %v7643, 1.442695
    %v7645 = vpow.pop %v7644
    %v7646 = vadd.f32 %v7645, 1.0
    %v7647 = vrcp.pop %v7646
    %v7648 = vmul.f32 %v7646, %v7647
    %v7649 = vsub.f32 1.0, %v7648
    %v7650 = vmul.f32 %v7647, %v7649
    %v7651 = vadd.f32 %v7647, %v7650
    %vm7652 = vweird.f32 %v7646
    %vm7653 = vweird.f32 %v7647
    %vm7654 = vmor %vm7652, %vm7653
    %v7655 = vsel %vm7654, %v7647, %v7651
    %v7656 = vand.u32 2147483647, %v7646
    %vm7657 = vcmp.eq.f32.partialorder %v7656, 8.507059e+37
    %v7658 = vand.u32 %v7646, 2147483648
    %v7659 = vor.u32 1.1754944e-38, %v7658
    %v7660 = vsel %vm7657, %v7659, %v7655
    %v7661 = vtanh.pop %v7596
    %v7662 = vsub.f32 0.0, %v7622
    %v7663 = vmul.f32 %v7662, 1.442695
    %v7664 = vpow.pop %v7663
    %v7665 = vadd.f32 %v7664, 1.0
    %v7666 = vrcp.pop %v7665
    %v7667 = vmul.f32 %v7665, %v7666
    %v7668 = vsub.f32 1.0, %v7667
    %v7669 = vmul.f32 %v7666, %v7668
    %v7670 = vadd.f32 %v7666, %v7669
    %vm7671 = vweird.f32 %v7665
    %vm7672 = vweird.f32 %v7666
    %vm7673 = vmor %vm7671, %vm7672
    %v7674 = vsel %vm7673, %v7666, %v7670
    %v7675 = vand.u32 2147483647, %v7665
    %vm7676 = vcmp.eq.f32.partialorder %v7675, 8.507059e+37
    %v7677 = vand.u32 %v7665, 2147483648
    %v7678 = vor.u32 1.1754944e-38, %v7677
    %v7679 = vsel %vm7676, %v7678, %v7674
    %v7680 = vmul.f32 %v7660, %v6386
    %v7681 = vmul.f32 %v7642, %v7661
    %v7682 = vadd.f32 %v7680, %v7681
    %v7683 = vtanh.pop %v7682
    %v7684 = vmul.f32 %v7679, %v7683
    %v7685 = vpack.c.bf16 %v7684, %v7684
    %v7686 = vld [vmem:[#allocation13] sm:$0xff]
    %v7687 = vld [vmem:[#allocation13 + $0x8] sm:$0xff]
    %v7688 = vld [vmem:[#allocation13 + $0x10] sm:$0xff]
    %v7689 = vld [vmem:[#allocation13 + $0x18] sm:$0xff]
    %v7690 = vld [vmem:[#allocation13 + $0x20] sm:$0xff]
    %v7691 = vld [vmem:[#allocation13 + $0x28] sm:$0xff]
    %v7692 = vld [vmem:[#allocation13 + $0x30] sm:$0xff]
    %v7693 = vld [vmem:[#allocation13 + $0x38] sm:$0xff]
    %v7694 = vld [vmem:[#allocation13 + $0x40] sm:$0xff]
    %v7695 = vld [vmem:[#allocation13 + $0x48] sm:$0xff]
    %v7696 = vld [vmem:[#allocation13 + $0x50] sm:$0xff]
    %v7697 = vld [vmem:[#allocation13 + $0x58] sm:$0xff]
    %v7698 = vld [vmem:[#allocation13 + $0x60] sm:$0xff]
    %v7699 = vld [vmem:[#allocation13 + $0x68] sm:$0xff]
    %v7700 = vld [vmem:[#allocation13 + $0x70] sm:$0xff]
    %v7701 = vld [vmem:[#allocation13 + $0x78] sm:$0xff]
    %v7702 = vld [vmem:[#allocation13 + $0x80] sm:$0xff]
    %v7703 = vld [vmem:[#allocation13 + $0x88] sm:$0xff]
    %v7704 = vld [vmem:[#allocation13 + $0x90] sm:$0xff]
    %v7705 = vld [vmem:[#allocation13 + $0x98] sm:$0xff]
    %v7706 = vld [vmem:[#allocation13 + $0xa0] sm:$0xff]
    %v7707 = vld [vmem:[#allocation13 + $0xa8] sm:$0xff]
    %v7708 = vld [vmem:[#allocation13 + $0xb0] sm:$0xff]
    %v7709 = vld [vmem:[#allocation13 + $0xb8] sm:$0xff]
    %v7710 = vld [vmem:[#allocation13 + $0xc0] sm:$0xff]
    %v7711 = vld [vmem:[#allocation13 + $0xc8] sm:$0xff]
    %v7712 = vld [vmem:[#allocation13 + $0xd0] sm:$0xff]
    %v7713 = vld [vmem:[#allocation13 + $0xd8] sm:$0xff]
    %v7714 = vld [vmem:[#allocation13 + $0xe0] sm:$0xff]
    %v7715 = vld [vmem:[#allocation13 + $0xe8] sm:$0xff]
    %v7716 = vld [vmem:[#allocation13 + $0xf0] sm:$0xff]
    %v7717 = vld [vmem:[#allocation13 + $0xf8] sm:$0xff]
    %v7718 = vld [vmem:[#allocation13 + $0x100] sm:$0xff]
    %v7719 = vld [vmem:[#allocation13 + $0x108] sm:$0xff]
    %v7720 = vld [vmem:[#allocation13 + $0x110] sm:$0xff]
    %v7721 = vld [vmem:[#allocation13 + $0x118] sm:$0xff]
    %v7722 = vld [vmem:[#allocation13 + $0x120] sm:$0xff]
    %v7723 = vld [vmem:[#allocation13 + $0x128] sm:$0xff]
    %v7724 = vld [vmem:[#allocation13 + $0x130] sm:$0xff]
    %v7725 = vld [vmem:[#allocation13 + $0x138] sm:$0xff]
    %v7726 = vld [vmem:[#allocation13 + $0x140] sm:$0xff]
    %v7727 = vld [vmem:[#allocation13 + $0x148] sm:$0xff]
    %v7728 = vld [vmem:[#allocation13 + $0x150] sm:$0xff]
    %v7729 = vld [vmem:[#allocation13 + $0x158] sm:$0xff]
    %v7730 = vld [vmem:[#allocation13 + $0x160] sm:$0xff]
    %v7731 = vld [vmem:[#allocation13 + $0x168] sm:$0xff]
    %v7732 = vld [vmem:[#allocation13 + $0x170] sm:$0xff]
    %v7733 = vld [vmem:[#allocation13 + $0x178] sm:$0xff]
    %v7734 = vld [vmem:[#allocation13 + $0x180] sm:$0xff]
    %v7735 = vld [vmem:[#allocation13 + $0x188] sm:$0xff]
    %v7736 = vld [vmem:[#allocation13 + $0x190] sm:$0xff]
    %v7737 = vld [vmem:[#allocation13 + $0x198] sm:$0xff]
    %v7738 = vld [vmem:[#allocation13 + $0x1a0] sm:$0xff]
    %v7739 = vld [vmem:[#allocation13 + $0x1a8] sm:$0xff]
    %v7740 = vld [vmem:[#allocation13 + $0x1b0] sm:$0xff]
    %v7741 = vld [vmem:[#allocation13 + $0x1b8] sm:$0xff]
    %v7742 = vld [vmem:[#allocation13 + $0x1c0] sm:$0xff]
    %v7743 = vld [vmem:[#allocation13 + $0x1c8] sm:$0xff]
    %v7744 = vld [vmem:[#allocation13 + $0x1d0] sm:$0xff]
    %v7745 = vld [vmem:[#allocation13 + $0x1d8] sm:$0xff]
    %v7746 = vld [vmem:[#allocation13 + $0x1e0] sm:$0xff]
    %v7747 = vld [vmem:[#allocation13 + $0x1e8] sm:$0xff]
    %v7748 = vld [vmem:[#allocation13 + $0x1f0] sm:$0xff]
    %v7749 = vld [vmem:[#allocation13 + $0x1f8] sm:$0xff]
    %v7750 = vld [vmem:[#allocation15] sm:$0xff]
    %v7751 = vld [vmem:[#allocation15 + $0x8] sm:$0xff]
    %v7752 = vld [vmem:[#allocation15 + $0x10] sm:$0xff]
    %v7753 = vld [vmem:[#allocation15 + $0x18] sm:$0xff]
    %v7818 = vunpack.c.l.b16 %v7686
    %v7819 = vunpack.c.h.b16 %v7686
    %v7820 = vunpack.c.l.b16 %v7687
    %v7821 = vunpack.c.h.b16 %v7687
    %v7822 = vunpack.c.l.b16 %v7688
    %v7823 = vunpack.c.h.b16 %v7688
    %v7824 = vunpack.c.l.b16 %v7689
    %v7825 = vunpack.c.h.b16 %v7689
    %v7826 = vunpack.c.l.b16 %v7690
    %v7827 = vunpack.c.h.b16 %v7690
    %v7828 = vunpack.c.l.b16 %v7691
    %v7829 = vunpack.c.h.b16 %v7691
    %v7830 = vunpack.c.l.b16 %v7692
    %v7831 = vunpack.c.h.b16 %v7692
    %v7832 = vunpack.c.l.b16 %v7693
    %v7833 = vunpack.c.h.b16 %v7693
    %v7834 = vunpack.c.l.b16 %v7694
    %v7835 = vunpack.c.h.b16 %v7694
    %v7836 = vunpack.c.l.b16 %v7695
    %v7837 = vunpack.c.h.b16 %v7695
    %v7838 = vunpack.c.l.b16 %v7696
    %v7839 = vunpack.c.h.b16 %v7696
    %v7840 = vunpack.c.l.b16 %v7697
    %v7841 = vunpack.c.h.b16 %v7697
    %v7842 = vunpack.c.l.b16 %v7698
    %v7843 = vunpack.c.h.b16 %v7698
    %v7844 = vunpack.c.l.b16 %v7699
    %v7845 = vunpack.c.h.b16 %v7699
    %v7846 = vunpack.c.l.b16 %v7700
    %v7847 = vunpack.c.h.b16 %v7700
    %v7848 = vunpack.c.l.b16 %v7701
    %v7849 = vunpack.c.h.b16 %v7701
    %v7850 = vunpack.c.l.b16 %v7702
    %v7851 = vunpack.c.h.b16 %v7702
    %v7852 = vunpack.c.l.b16 %v7703
    %v7853 = vunpack.c.h.b16 %v7703
    %v7854 = vunpack.c.l.b16 %v7704
    %v7855 = vunpack.c.h.b16 %v7704
    %v7856 = vunpack.c.l.b16 %v7705
    %v7857 = vunpack.c.h.b16 %v7705
    %v7858 = vunpack.c.l.b16 %v7706
    %v7859 = vunpack.c.h.b16 %v7706
    %v7860 = vunpack.c.l.b16 %v7707
    %v7861 = vunpack.c.h.b16 %v7707
    %v7862 = vunpack.c.l.b16 %v7708
    %v7863 = vunpack.c.h.b16 %v7708
    %v7864 = vunpack.c.l.b16 %v7709
    %v7865 = vunpack.c.h.b16 %v7709
    %v7866 = vunpack.c.l.b16 %v7710
    %v7867 = vunpack.c.h.b16 %v7710
    %v7868 = vunpack.c.l.b16 %v7711
    %v7869 = vunpack.c.h.b16 %v7711
    %v7870 = vunpack.c.l.b16 %v7712
    %v7871 = vunpack.c.h.b16 %v7712
    %v7872 = vunpack.c.l.b16 %v7713
    %v7873 = vunpack.c.h.b16 %v7713
    %v7874 = vunpack.c.l.b16 %v7714
    %v7875 = vunpack.c.h.b16 %v7714
    %v7876 = vunpack.c.l.b16 %v7715
    %v7877 = vunpack.c.h.b16 %v7715
    %v7878 = vunpack.c.l.b16 %v7716
    %v7879 = vunpack.c.h.b16 %v7716
    %v7880 = vunpack.c.l.b16 %v7717
    %v7881 = vunpack.c.h.b16 %v7717
    %v7882 = vunpack.c.l.b16 %v7718
    %v7883 = vunpack.c.h.b16 %v7718
    %v7884 = vunpack.c.l.b16 %v7719
    %v7885 = vunpack.c.h.b16 %v7719
    %v7886 = vunpack.c.l.b16 %v7720
    %v7887 = vunpack.c.h.b16 %v7720
    %v7888 = vunpack.c.l.b16 %v7721
    %v7889 = vunpack.c.h.b16 %v7721
    %v7890 = vunpack.c.l.b16 %v7722
    %v7891 = vunpack.c.h.b16 %v7722
    %v7892 = vunpack.c.l.b16 %v7723
    %v7893 = vunpack.c.h.b16 %v7723
    %v7894 = vunpack.c.l.b16 %v7724
    %v7895 = vunpack.c.h.b16 %v7724
    %v7896 = vunpack.c.l.b16 %v7725
    %v7897 = vunpack.c.h.b16 %v7725
    %v7898 = vunpack.c.l.b16 %v7726
    %v7899 = vunpack.c.h.b16 %v7726
    %v7900 = vunpack.c.l.b16 %v7727
    %v7901 = vunpack.c.h.b16 %v7727
    %v7902 = vunpack.c.l.b16 %v7728
    %v7903 = vunpack.c.h.b16 %v7728
    %v7904 = vunpack.c.l.b16 %v7729
    %v7905 = vunpack.c.h.b16 %v7729
    %v7906 = vunpack.c.l.b16 %v7730
    %v7907 = vunpack.c.h.b16 %v7730
    %v7908 = vunpack.c.l.b16 %v7731
    %v7909 = vunpack.c.h.b16 %v7731
    %v7910 = vunpack.c.l.b16 %v7732
    %v7911 = vunpack.c.h.b16 %v7732
    %v7912 = vunpack.c.l.b16 %v7733
    %v7913 = vunpack.c.h.b16 %v7733
    %v7914 = vunpack.c.l.b16 %v7734
    %v7915 = vunpack.c.h.b16 %v7734
    %v7916 = vunpack.c.l.b16 %v7735
    %v7917 = vunpack.c.h.b16 %v7735
    %v7918 = vunpack.c.l.b16 %v7736
    %v7919 = vunpack.c.h.b16 %v7736
    %v7920 = vunpack.c.l.b16 %v7737
    %v7921 = vunpack.c.h.b16 %v7737
    %v7922 = vunpack.c.l.b16 %v7738
    %v7923 = vunpack.c.h.b16 %v7738
    %v7924 = vunpack.c.l.b16 %v7739
    %v7925 = vunpack.c.h.b16 %v7739
    %v7926 = vunpack.c.l.b16 %v7740
    %v7927 = vunpack.c.h.b16 %v7740
    %v7928 = vunpack.c.l.b16 %v7741
    %v7929 = vunpack.c.h.b16 %v7741
    %v7930 = vunpack.c.l.b16 %v7742
    %v7931 = vunpack.c.h.b16 %v7742
    %v7932 = vunpack.c.l.b16 %v7743
    %v7933 = vunpack.c.h.b16 %v7743
    %v7934 = vunpack.c.l.b16 %v7744
    %v7935 = vunpack.c.h.b16 %v7744
    %v7936 = vunpack.c.l.b16 %v7745
    %v7937 = vunpack.c.h.b16 %v7745
    %v7938 = vunpack.c.l.b16 %v7746
    %v7939 = vunpack.c.h.b16 %v7746
    %v7940 = vunpack.c.l.b16 %v7747
    %v7941 = vunpack.c.h.b16 %v7747
    %v7942 = vunpack.c.l.b16 %v7748
    %v7943 = vunpack.c.h.b16 %v7748
    %v7944 = vunpack.c.l.b16 %v7749
    %v7945 = vunpack.c.h.b16 %v7749
    %v7946 = vpack.c.b16 %v7822, %v7818
    %v7947 = vpack.c.b16 %v7823, %v7819
    %v7948 = vpack.c.b16 %v7824, %v7820
    %v7949 = vpack.c.b16 %v7825, %v7821
    %v7950 = vpack.c.b16 %v7830, %v7826
    %v7951 = vpack.c.b16 %v7831, %v7827
    %v7952 = vpack.c.b16 %v7832, %v7828
    %v7953 = vpack.c.b16 %v7833, %v7829
    %v7954 = vpack.c.b16 %v7838, %v7834
    %v7955 = vpack.c.b16 %v7839, %v7835
    %v7956 = vpack.c.b16 %v7840, %v7836
    %v7957 = vpack.c.b16 %v7841, %v7837
    %v7958 = vpack.c.b16 %v7846, %v7842
    %v7959 = vpack.c.b16 %v7847, %v7843
    %v7960 = vpack.c.b16 %v7848, %v7844
    %v7961 = vpack.c.b16 %v7849, %v7845
    %v7962 = vpack.c.b16 %v7854, %v7850
    %v7963 = vpack.c.b16 %v7855, %v7851
    %v7964 = vpack.c.b16 %v7856, %v7852
    %v7965 = vpack.c.b16 %v7857, %v7853
    %v7966 = vpack.c.b16 %v7862, %v7858
    %v7967 = vpack.c.b16 %v7863, %v7859
    %v7968 = vpack.c.b16 %v7864, %v7860
    %v7969 = vpack.c.b16 %v7865, %v7861
    %v7970 = vpack.c.b16 %v7870, %v7866
    %v7971 = vpack.c.b16 %v7871, %v7867
    %v7972 = vpack.c.b16 %v7872, %v7868
    %v7973 = vpack.c.b16 %v7873, %v7869
    %v7974 = vpack.c.b16 %v7878, %v7874
    %v7975 = vpack.c.b16 %v7879, %v7875
    %v7976 = vpack.c.b16 %v7880, %v7876
    %v7977 = vpack.c.b16 %v7881, %v7877
    %v7978 = vpack.c.b16 %v7886, %v7882
    %v7979 = vpack.c.b16 %v7887, %v7883
    %v7980 = vpack.c.b16 %v7888, %v7884
    %v7981 = vpack.c.b16 %v7889, %v7885
    %v7982 = vpack.c.b16 %v7894, %v7890
    %v7983 = vpack.c.b16 %v7895, %v7891
    %v7984 = vpack.c.b16 %v7896, %v7892
    %v7985 = vpack.c.b16 %v7897, %v7893
    %v7986 = vpack.c.b16 %v7902, %v7898
    %v7987 = vpack.c.b16 %v7903, %v7899
    %v7988 = vpack.c.b16 %v7904, %v7900
    %v7989 = vpack.c.b16 %v7905, %v7901
    %v7990 = vpack.c.b16 %v7910, %v7906
    %v7991 = vpack.c.b16 %v7911, %v7907
    %v7992 = vpack.c.b16 %v7912, %v7908
    %v7993 = vpack.c.b16 %v7913, %v7909
    %v7994 = vpack.c.b16 %v7918, %v7914
    %v7995 = vpack.c.b16 %v7919, %v7915
    %v7996 = vpack.c.b16 %v7920, %v7916
    %v7997 = vpack.c.b16 %v7921, %v7917
    %v7998 = vpack.c.b16 %v7926, %v7922
    %v7999 = vpack.c.b16 %v7927, %v7923
    %v8000 = vpack.c.b16 %v7928, %v7924
    %v8001 = vpack.c.b16 %v7929, %v7925
    %v8002 = vpack.c.b16 %v7934, %v7930
    %v8003 = vpack.c.b16 %v7935, %v7931
    %v8004 = vpack.c.b16 %v7936, %v7932
    %v8005 = vpack.c.b16 %v7937, %v7933
    %v8006 = vpack.c.b16 %v7942, %v7938
    %v8007 = vpack.c.b16 %v7943, %v7939
    %v8008 = vpack.c.b16 %v7944, %v7940
    %v8009 = vpack.c.b16 %v7945, %v7941
    %8074 = vmatpush.bf16.msra.mxu0 %v7974
    %8075 = vmatpush.bf16.msra.mxu0 %v7970
    %8076 = vmatpush.bf16.msra.mxu0 %v7966
    %8077 = vmatpush.bf16.msra.mxu0 %v7962
    %8078 = vmatpush.bf16.msra.mxu0 %v7958
    %8079 = vmatpush.bf16.msra.mxu0 %v7954
    %8080 = vmatpush.bf16.msra.mxu0 %v7950
    %8081 = vmatpush.bf16.msra.mxu0 %v7946
    %8082 = vmatmul.bf16.gmra.mxu0 %v7685
    %v8083 = vpop.f32.mrf.mxu0
    %v8084 = vadd.f32 %v7750, %v8083
    %v8085 = vpop.f32.mrf.mxu0
    %8086 = vdwg.mxu0
    %8087 = vmatpush.bf16.msra.mxu0 %v8006
    %8088 = vmatpush.bf16.msra.mxu0 %v8002
    %8089 = vmatpush.bf16.msra.mxu0 %v7998
    %8090 = vmatpush.bf16.msra.mxu0 %v7994
    %8091 = vmatpush.bf16.msra.mxu0 %v7990
    %8092 = vmatpush.bf16.msra.mxu0 %v7986
    %8093 = vmatpush.bf16.msra.mxu0 %v7982
    %8094 = vmatpush.bf16.msra.mxu0 %v7978
    %8095 = vmatmul.bf16.gmra.mxu0 %v6942
    %v8096 = vpop.f32.mrf.mxu0
    %v8097 = vadd.f32 %v8084, %v8096
    %v8098 = vpop.f32.mrf.mxu0
    %8099 = vdwg.mxu0
    %8100 = vmatpush.bf16.msra.mxu0 %v7975
    %8101 = vmatpush.bf16.msra.mxu0 %v7971
    %8102 = vmatpush.bf16.msra.mxu0 %v7967
    %8103 = vmatpush.bf16.msra.mxu0 %v7963
    %8104 = vmatpush.bf16.msra.mxu0 %v7959
    %8105 = vmatpush.bf16.msra.mxu0 %v7955
    %8106 = vmatpush.bf16.msra.mxu0 %v7951
    %8107 = vmatpush.bf16.msra.mxu0 %v7947
    %8108 = vmatmul.bf16.gmra.mxu0 %v7685
    %v8109 = vpop.f32.mrf.mxu0
    %v8110 = vadd.f32 %v7751, %v8109
    %v8111 = vpop.f32.mrf.mxu0
    %8112 = vdwg.mxu0
    %8113 = vmatpush.bf16.msra.mxu0 %v8007
    %8114 = vmatpush.bf16.msra.mxu0 %v8003
    %8115 = vmatpush.bf16.msra.mxu0 %v7999
    %8116 = vmatpush.bf16.msra.mxu0 %v7995
    %8117 = vmatpush.bf16.msra.mxu0 %v7991
    %8118 = vmatpush.bf16.msra.mxu0 %v7987
    %8119 = vmatpush.bf16.msra.mxu0 %v7983
    %8120 = vmatpush.bf16.msra.mxu0 %v7979
    %8121 = vmatmul.bf16.gmra.mxu0 %v6942
    %v8122 = vpop.f32.mrf.mxu0
    %v8123 = vadd.f32 %v8110, %v8122
    %v8124 = vpop.f32.mrf.mxu0
    %8125 = vdwg.mxu0
    %8126 = vmatpush.bf16.msra.mxu0 %v7976
    %8127 = vmatpush.bf16.msra.mxu0 %v7972
    %8128 = vmatpush.bf16.msra.mxu0 %v7968
    %8129 = vmatpush.bf16.msra.mxu0 %v7964
    %8130 = vmatpush.bf16.msra.mxu0 %v7960
    %8131 = vmatpush.bf16.msra.mxu0 %v7956
    %8132 = vmatpush.bf16.msra.mxu0 %v7952
    %8133 = vmatpush.bf16.msra.mxu0 %v7948
    %8134 = vmatmul.bf16.gmra.mxu0 %v7685
    %v8135 = vpop.f32.mrf.mxu0
    %v8136 = vadd.f32 %v7752, %v8135
    %v8137 = vpop.f32.mrf.mxu0
    %8138 = vdwg.mxu0
    %8139 = vmatpush.bf16.msra.mxu0 %v8008
    %8140 = vmatpush.bf16.msra.mxu0 %v8004
    %8141 = vmatpush.bf16.msra.mxu0 %v8000
    %8142 = vmatpush.bf16.msra.mxu0 %v7996
    %8143 = vmatpush.bf16.msra.mxu0 %v7992
    %8144 = vmatpush.bf16.msra.mxu0 %v7988
    %8145 = vmatpush.bf16.msra.mxu0 %v7984
    %8146 = vmatpush.bf16.msra.mxu0 %v7980
    %8147 = vmatmul.bf16.gmra.mxu0 %v6942
    %v8148 = vpop.f32.mrf.mxu0
    %v8149 = vadd.f32 %v8136, %v8148
    %v8150 = vpop.f32.mrf.mxu0
    %8151 = vdwg.mxu0
    %8152 = vmatpush.bf16.msra.mxu0 %v7977
    %8153 = vmatpush.bf16.msra.mxu0 %v7973
    %8154 = vmatpush.bf16.msra.mxu0 %v7969
    %8155 = vmatpush.bf16.msra.mxu0 %v7965
    %8156 = vmatpush.bf16.msra.mxu0 %v7961
    %8157 = vmatpush.bf16.msra.mxu0 %v7957
    %8158 = vmatpush.bf16.msra.mxu0 %v7953
    %8159 = vmatpush.bf16.msra.mxu0 %v7949
    %8160 = vmatmul.bf16.gmra.mxu0 %v7685
    %v8161 = vpop.f32.mrf.mxu0
    %v8162 = vadd.f32 %v7753, %v8161
    %v8163 = vpop.f32.mrf.mxu0
    %8164 = vdwg.mxu0
    %8165 = vmatpush.bf16.msra.mxu0 %v8009
    %8166 = vmatpush.bf16.msra.mxu0 %v8005
    %8167 = vmatpush.bf16.msra.mxu0 %v8001
    %8168 = vmatpush.bf16.msra.mxu0 %v7997
    %8169 = vmatpush.bf16.msra.mxu0 %v7993
    %8170 = vmatpush.bf16.msra.mxu0 %v7989
    %8171 = vmatpush.bf16.msra.mxu0 %v7985
    %8172 = vmatpush.bf16.msra.mxu0 %v7981
    %8173 = vmatmul.bf16.gmra.mxu0 %v6942
    %v8174 = vpop.f32.mrf.mxu0
    %v8175 = vadd.f32 %v8162, %v8174
    %v8176 = vpop.f32.mrf.mxu0
    %8177 = vdwg.mxu0
    %v8178 = vsub.f32 0.0, %v8097
    %v8179 = vmul.f32 %v8178, 1.442695
    %v8180 = vpow.pop %v8179
    %v8181 = vadd.f32 %v8180, 1.0
    %v8182 = vrcp.pop %v8181
    %v8183 = vmul.f32 %v8181, %v8182
    %v8184 = vsub.f32 1.0, %v8183
    %v8185 = vmul.f32 %v8182, %v8184
    %v8186 = vadd.f32 %v8182, %v8185
    %vm8187 = vweird.f32 %v8181
    %vm8188 = vweird.f32 %v8182
    %vm8189 = vmor %vm8187, %vm8188
    %v8190 = vsel %vm8189, %v8182, %v8186
    %v8191 = vand.u32 2147483647, %v8181
    %vm8192 = vcmp.eq.f32.partialorder %v8191, 8.507059e+37
    %v8193 = vand.u32 %v8181, 2147483648
    %v8194 = vor.u32 1.1754944e-38, %v8193
    %v8195 = vsel %vm8192, %v8194, %v8190
    %v8196 = vsub.f32 0.0, %v8123
    %v8197 = vmul.f32 %v8196, 1.442695
    %v8198 = vpow.pop %v8197
    %v8199 = vadd.f32 %v8198, 1.0
    %v8200 = vrcp.pop %v8199
    %v8201 = vmul.f32 %v8199, %v8200
    %v8202 = vsub.f32 1.0, %v8201
    %v8203 = vmul.f32 %v8200, %v8202
    %v8204 = vadd.f32 %v8200, %v8203
    %vm8205 = vweird.f32 %v8199
    %vm8206 = vweird.f32 %v8200
    %vm8207 = vmor %vm8205, %vm8206
    %v8208 = vsel %vm8207, %v8200, %v8204
    %v8209 = vand.u32 2147483647, %v8199
    %vm8210 = vcmp.eq.f32.partialorder %v8209, 8.507059e+37
    %v8211 = vand.u32 %v8199, 2147483648
    %v8212 = vor.u32 1.1754944e-38, %v8211
    %v8213 = vsel %vm8210, %v8212, %v8208
    %v8214 = vtanh.pop %v8149
    %v8215 = vsub.f32 0.0, %v8175
    %v8216 = vmul.f32 %v8215, 1.442695
    %v8217 = vpow.pop %v8216
    %v8218 = vadd.f32 %v8217, 1.0
    %v8219 = vrcp.pop %v8218
    %v8220 = vmul.f32 %v8218, %v8219
    %v8221 = vsub.f32 1.0, %v8220
    %v8222 = vmul.f32 %v8219, %v8221
    %v8223 = vadd.f32 %v8219, %v8222
    %vm8224 = vweird.f32 %v8218
    %vm8225 = vweird.f32 %v8219
    %vm8226 = vmor %vm8224, %vm8225
    %v8227 = vsel %vm8226, %v8219, %v8223
    %v8228 = vand.u32 2147483647, %v8218
    %vm8229 = vcmp.eq.f32.partialorder %v8228, 8.507059e+37
    %v8230 = vand.u32 %v8218, 2147483648
    %v8231 = vor.u32 1.1754944e-38, %v8230
    %v8232 = vsel %vm8229, %v8231, %v8227
    %v8233 = vmul.f32 %v8213, %v6939
    %v8234 = vmul.f32 %v8195, %v8214
    %v8235 = vadd.f32 %v8233, %v8234
    %v8236 = vtanh.pop %v8235
    %v8237 = vmul.f32 %v8232, %v8236
    %v8238 = vpack.c.bf16 %v8237, %v8237
    %v8239 = vld [vmem:[#allocation16] sm:$0xf]
    %v8240 = vld [vmem:[#allocation16 + $0x4] sm:$0xf]
    %v8241 = vld [vmem:[#allocation16 + $0x8] sm:$0xf]
    %v8242 = vld [vmem:[#allocation16 + $0xc] sm:$0xf]
    %v8243 = vld [vmem:[#allocation16 + $0x10] sm:$0xf]
    %v8244 = vld [vmem:[#allocation16 + $0x14] sm:$0xf]
    %v8245 = vld [vmem:[#allocation16 + $0x18] sm:$0xf]
    %v8246 = vld [vmem:[#allocation16 + $0x1c] sm:$0xf]
    %v8247 = vld [vmem:[#allocation16 + $0x20] sm:$0xf]
    %v8248 = vld [vmem:[#allocation16 + $0x24] sm:$0xf]
    %v8249 = vld [vmem:[#allocation16 + $0x28] sm:$0xf]
    %v8250 = vld [vmem:[#allocation16 + $0x2c] sm:$0xf]
    %v8251 = vld [vmem:[#allocation16 + $0x30] sm:$0xf]
    %v8252 = vld [vmem:[#allocation16 + $0x34] sm:$0xf]
    %v8253 = vld [vmem:[#allocation16 + $0x38] sm:$0xf]
    %v8254 = vld [vmem:[#allocation16 + $0x3c] sm:$0xf]
    %v8255 = vld [vmem:[%s9] sm:$0xff]
    %v8272 = vunpack.c.l.b16 %v8239
    %v8273 = vunpack.c.l.b16 %v8240
    %v8274 = vunpack.c.l.b16 %v8241
    %v8275 = vunpack.c.l.b16 %v8242
    %v8276 = vunpack.c.l.b16 %v8243
    %v8277 = vunpack.c.l.b16 %v8244
    %v8278 = vunpack.c.l.b16 %v8245
    %v8279 = vunpack.c.l.b16 %v8246
    %v8280 = vunpack.c.l.b16 %v8247
    %v8281 = vunpack.c.l.b16 %v8248
    %v8282 = vunpack.c.l.b16 %v8249
    %v8283 = vunpack.c.l.b16 %v8250
    %v8284 = vunpack.c.l.b16 %v8251
    %v8285 = vunpack.c.l.b16 %v8252
    %v8286 = vunpack.c.l.b16 %v8253
    %v8287 = vunpack.c.l.b16 %v8254
    %v8288 = vpack.c.b16 %v8273, %v8272
    %v8289 = vpack.c.b16 %v8275, %v8274
    %v8290 = vpack.c.b16 %v8277, %v8276
    %v8291 = vpack.c.b16 %v8279, %v8278
    %v8292 = vpack.c.b16 %v8281, %v8280
    %v8293 = vpack.c.b16 %v8283, %v8282
    %v8294 = vpack.c.b16 %v8285, %v8284
    %v8295 = vpack.c.b16 %v8287, %v8286
    %8304 = vmatpush.bf16.msra.mxu0 %v8295
    %8305 = vmatpush.bf16.msra.mxu0 %v8294
    %8306 = vmatpush.bf16.msra.mxu0 %v8293
    %8307 = vmatpush.bf16.msra.mxu0 %v8292
    %8308 = vmatpush.bf16.msra.mxu0 %v8291
    %8309 = vmatpush.bf16.msra.mxu0 %v8290
    %8310 = vmatpush.bf16.msra.mxu0 %v8289
    %8311 = vmatpush.bf16.msra.mxu0 %v8288
    %8312 = vmatmul.bf16.gmra.mxu0 %v8238
    %v8313 = vpop.f32.mrf.mxu0
    %v8314 = vadd.f32 %v8255, %v8313
    %v8315 = vpop.f32.mrf.mxu0
    %8316 = vdwg.mxu0
    %s8317 = scalar_lea.vmem [#allocation18], 40
    %8318 = vst [vmem:[%s8317] sm:$0xff] %v8314
    %s8319 = scalar_lea.vmem [#allocation7], 48
    %v8320 = vld [vmem:[%s8319] sm:$0xff]
    %8321 = vmax.xlane.f32.xlu0 %v8314
    %v8322 = vpop.xlane.xlu0 %8321
    %vm8323 = vcmp.eq.f32.partialorder %v8314, %v8322
    %v8324 = vsel %vm8323, %v658, 128
    %v8325 = vand.u32 %v8324, 65535
    %v8326 = vshra.s32 %v8324, 16
    %v8327 = vcvt.s32.f32 %v8325
    %v8328 = vcvt.s32.f32 %v8326
    %8329 = vmin.xlane.f32.xlu0 %v8328
    %v8330 = vpop.xlane.xlu0 %8329
    %vm8331 = vcmp.eq.f32.partialorder %v8328, %v8330
    %v8332 = vsel %vm8331, %v8327, inf
    %8333 = vmin.xlane.f32.xlu0 %v8332
    %v8334 = vpop.xlane.xlu0 %8333
    %v8335 = vcvt.f32.s32 %v8334
    %v8336 = vcvt.f32.s32 %v8330
    %v8337 = vshll.u32 %v8336, 16
    %v8338 = vadd.s32 %v8337, %v8335
    %vm8339 = vcmp.eq.s32.totalorder %v658, %v8338
    %v8340 = vsel %vm8339, 1, 0
    %v8341 = vcvt.s32.f32 %v8340
    %v8342 = vpack.c.bf16 %v8341, %v8341
    %v8343 = vld [vmem:[#allocation9] sm:$0xf]
    %v8344 = vld [vmem:[#allocation9 + $0x4] sm:$0xf]
    %v8345 = vld [vmem:[#allocation9 + $0x8] sm:$0xf]
    %v8346 = vld [vmem:[#allocation9 + $0xc] sm:$0xf]
    %v8347 = vld [vmem:[#allocation9 + $0x10] sm:$0xf]
    %v8348 = vld [vmem:[#allocation9 + $0x14] sm:$0xf]
    %v8349 = vld [vmem:[#allocation9 + $0x18] sm:$0xf]
    %v8350 = vld [vmem:[#allocation9 + $0x1c] sm:$0xf]
    %v8351 = vld [vmem:[#allocation9 + $0x20] sm:$0xf]
    %v8352 = vld [vmem:[#allocation9 + $0x24] sm:$0xf]
    %v8353 = vld [vmem:[#allocation9 + $0x28] sm:$0xf]
    %v8354 = vld [vmem:[#allocation9 + $0x2c] sm:$0xf]
    %v8355 = vld [vmem:[#allocation9 + $0x30] sm:$0xf]
    %v8356 = vld [vmem:[#allocation9 + $0x34] sm:$0xf]
    %v8357 = vld [vmem:[#allocation9 + $0x38] sm:$0xf]
    %v8358 = vld [vmem:[#allocation9 + $0x3c] sm:$0xf]
    %v8375 = vunpack.c.l.b16 %v8343
    %v8376 = vunpack.c.l.b16 %v8344
    %v8377 = vunpack.c.l.b16 %v8345
    %v8378 = vunpack.c.l.b16 %v8346
    %v8379 = vunpack.c.l.b16 %v8347
    %v8380 = vunpack.c.l.b16 %v8348
    %v8381 = vunpack.c.l.b16 %v8349
    %v8382 = vunpack.c.l.b16 %v8350
    %v8383 = vunpack.c.l.b16 %v8351
    %v8384 = vunpack.c.l.b16 %v8352
    %v8385 = vunpack.c.l.b16 %v8353
    %v8386 = vunpack.c.l.b16 %v8354
    %v8387 = vunpack.c.l.b16 %v8355
    %v8388 = vunpack.c.l.b16 %v8356
    %v8389 = vunpack.c.l.b16 %v8357
    %v8390 = vunpack.c.l.b16 %v8358
    %v8391 = vpack.c.b16 %v8376, %v8375
    %v8392 = vpack.c.b16 %v8378, %v8377
    %v8393 = vpack.c.b16 %v8380, %v8379
    %v8394 = vpack.c.b16 %v8382, %v8381
    %v8395 = vpack.c.b16 %v8384, %v8383
    %v8396 = vpack.c.b16 %v8386, %v8385
    %v8397 = vpack.c.b16 %v8388, %v8387
    %v8398 = vpack.c.b16 %v8390, %v8389
    %8407 = vmatpush.bf16.msra.mxu0 %v8398
    %8408 = vmatpush.bf16.msra.mxu0 %v8397
    %8409 = vmatpush.bf16.msra.mxu0 %v8396
    %8410 = vmatpush.bf16.msra.mxu0 %v8395
    %8411 = vmatpush.bf16.msra.mxu0 %v8394
    %8412 = vmatpush.bf16.msra.mxu0 %v8393
    %8413 = vmatpush.bf16.msra.mxu0 %v8392
    %8414 = vmatpush.bf16.msra.mxu0 %v8391
    %8415 = vmatmul.bf16.gmra.mxu0 %v8342
    %v8416 = vpop.f32.mrf.mxu0
    %v8417 = vadd.f32 0.0, %v8416
    %v8418 = vpop.f32.mrf.mxu0
    %8419 = vdwg.mxu0
    %s8420 = sld [smem:[#allocation2 + $0x5]]
    %s8421 = scvt.s32.f32 %s8420
    %v8422 = vstv %s8421
    %v8423 = vmul.f32 %v8422, %v8320
    %s8424 = ssub.f32 1.0, %s8421
    %v8425 = vstv %s8424
    %v8426 = vmul.f32 %v8425, %v8417
    %v8427 = vadd.f32 %v8423, %v8426
    %v8428 = vpack.c.bf16 %v8427, %v8427
    %v8429 = vld [vmem:[#allocation10] sm:$0xff]
    %v8430 = vld [vmem:[#allocation10 + $0x8] sm:$0xff]
    %v8431 = vld [vmem:[#allocation10 + $0x10] sm:$0xff]
    %v8432 = vld [vmem:[#allocation10 + $0x18] sm:$0xff]
    %v8433 = vld [vmem:[#allocation10 + $0x20] sm:$0xff]
    %v8434 = vld [vmem:[#allocation10 + $0x28] sm:$0xff]
    %v8435 = vld [vmem:[#allocation10 + $0x30] sm:$0xff]
    %v8436 = vld [vmem:[#allocation10 + $0x38] sm:$0xff]
    %v8437 = vld [vmem:[#allocation10 + $0x40] sm:$0xff]
    %v8438 = vld [vmem:[#allocation10 + $0x48] sm:$0xff]
    %v8439 = vld [vmem:[#allocation10 + $0x50] sm:$0xff]
    %v8440 = vld [vmem:[#allocation10 + $0x58] sm:$0xff]
    %v8441 = vld [vmem:[#allocation10 + $0x60] sm:$0xff]
    %v8442 = vld [vmem:[#allocation10 + $0x68] sm:$0xff]
    %v8443 = vld [vmem:[#allocation10 + $0x70] sm:$0xff]
    %v8444 = vld [vmem:[#allocation10 + $0x78] sm:$0xff]
    %v8445 = vld [vmem:[#allocation10 + $0x80] sm:$0xff]
    %v8446 = vld [vmem:[#allocation10 + $0x88] sm:$0xff]
    %v8447 = vld [vmem:[#allocation10 + $0x90] sm:$0xff]
    %v8448 = vld [vmem:[#allocation10 + $0x98] sm:$0xff]
    %v8449 = vld [vmem:[#allocation10 + $0xa0] sm:$0xff]
    %v8450 = vld [vmem:[#allocation10 + $0xa8] sm:$0xff]
    %v8451 = vld [vmem:[#allocation10 + $0xb0] sm:$0xff]
    %v8452 = vld [vmem:[#allocation10 + $0xb8] sm:$0xff]
    %v8453 = vld [vmem:[#allocation10 + $0xc0] sm:$0xff]
    %v8454 = vld [vmem:[#allocation10 + $0xc8] sm:$0xff]
    %v8455 = vld [vmem:[#allocation10 + $0xd0] sm:$0xff]
    %v8456 = vld [vmem:[#allocation10 + $0xd8] sm:$0xff]
    %v8457 = vld [vmem:[#allocation10 + $0xe0] sm:$0xff]
    %v8458 = vld [vmem:[#allocation10 + $0xe8] sm:$0xff]
    %v8459 = vld [vmem:[#allocation10 + $0xf0] sm:$0xff]
    %v8460 = vld [vmem:[#allocation10 + $0xf8] sm:$0xff]
    %v8461 = vld [vmem:[#allocation10 + $0x100] sm:$0xff]
    %v8462 = vld [vmem:[#allocation10 + $0x108] sm:$0xff]
    %v8463 = vld [vmem:[#allocation10 + $0x110] sm:$0xff]
    %v8464 = vld [vmem:[#allocation10 + $0x118] sm:$0xff]
    %v8465 = vld [vmem:[#allocation10 + $0x120] sm:$0xff]
    %v8466 = vld [vmem:[#allocation10 + $0x128] sm:$0xff]
    %v8467 = vld [vmem:[#allocation10 + $0x130] sm:$0xff]
    %v8468 = vld [vmem:[#allocation10 + $0x138] sm:$0xff]
    %v8469 = vld [vmem:[#allocation10 + $0x140] sm:$0xff]
    %v8470 = vld [vmem:[#allocation10 + $0x148] sm:$0xff]
    %v8471 = vld [vmem:[#allocation10 + $0x150] sm:$0xff]
    %v8472 = vld [vmem:[#allocation10 + $0x158] sm:$0xff]
    %v8473 = vld [vmem:[#allocation10 + $0x160] sm:$0xff]
    %v8474 = vld [vmem:[#allocation10 + $0x168] sm:$0xff]
    %v8475 = vld [vmem:[#allocation10 + $0x170] sm:$0xff]
    %v8476 = vld [vmem:[#allocation10 + $0x178] sm:$0xff]
    %v8477 = vld [vmem:[#allocation10 + $0x180] sm:$0xff]
    %v8478 = vld [vmem:[#allocation10 + $0x188] sm:$0xff]
    %v8479 = vld [vmem:[#allocation10 + $0x190] sm:$0xff]
    %v8480 = vld [vmem:[#allocation10 + $0x198] sm:$0xff]
    %v8481 = vld [vmem:[#allocation10 + $0x1a0] sm:$0xff]
    %v8482 = vld [vmem:[#allocation10 + $0x1a8] sm:$0xff]
    %v8483 = vld [vmem:[#allocation10 + $0x1b0] sm:$0xff]
    %v8484 = vld [vmem:[#allocation10 + $0x1b8] sm:$0xff]
    %v8485 = vld [vmem:[#allocation10 + $0x1c0] sm:$0xff]
    %v8486 = vld [vmem:[#allocation10 + $0x1c8] sm:$0xff]
    %v8487 = vld [vmem:[#allocation10 + $0x1d0] sm:$0xff]
    %v8488 = vld [vmem:[#allocation10 + $0x1d8] sm:$0xff]
    %v8489 = vld [vmem:[#allocation10 + $0x1e0] sm:$0xff]
    %v8490 = vld [vmem:[#allocation10 + $0x1e8] sm:$0xff]
    %v8491 = vld [vmem:[#allocation10 + $0x1f0] sm:$0xff]
    %v8492 = vld [vmem:[#allocation10 + $0x1f8] sm:$0xff]
    %v8493 = vld [vmem:[#allocation12] sm:$0xff]
    %v8494 = vld [vmem:[#allocation12 + $0x8] sm:$0xff]
    %v8495 = vld [vmem:[#allocation12 + $0x10] sm:$0xff]
    %v8496 = vld [vmem:[#allocation12 + $0x18] sm:$0xff]
    %v8561 = vunpack.c.l.b16 %v8429
    %v8562 = vunpack.c.h.b16 %v8429
    %v8563 = vunpack.c.l.b16 %v8430
    %v8564 = vunpack.c.h.b16 %v8430
    %v8565 = vunpack.c.l.b16 %v8431
    %v8566 = vunpack.c.h.b16 %v8431
    %v8567 = vunpack.c.l.b16 %v8432
    %v8568 = vunpack.c.h.b16 %v8432
    %v8569 = vunpack.c.l.b16 %v8433
    %v8570 = vunpack.c.h.b16 %v8433
    %v8571 = vunpack.c.l.b16 %v8434
    %v8572 = vunpack.c.h.b16 %v8434
    %v8573 = vunpack.c.l.b16 %v8435
    %v8574 = vunpack.c.h.b16 %v8435
    %v8575 = vunpack.c.l.b16 %v8436
    %v8576 = vunpack.c.h.b16 %v8436
    %v8577 = vunpack.c.l.b16 %v8437
    %v8578 = vunpack.c.h.b16 %v8437
    %v8579 = vunpack.c.l.b16 %v8438
    %v8580 = vunpack.c.h.b16 %v8438
    %v8581 = vunpack.c.l.b16 %v8439
    %v8582 = vunpack.c.h.b16 %v8439
    %v8583 = vunpack.c.l.b16 %v8440
    %v8584 = vunpack.c.h.b16 %v8440
    %v8585 = vunpack.c.l.b16 %v8441
    %v8586 = vunpack.c.h.b16 %v8441
    %v8587 = vunpack.c.l.b16 %v8442
    %v8588 = vunpack.c.h.b16 %v8442
    %v8589 = vunpack.c.l.b16 %v8443
    %v8590 = vunpack.c.h.b16 %v8443
    %v8591 = vunpack.c.l.b16 %v8444
    %v8592 = vunpack.c.h.b16 %v8444
    %v8593 = vunpack.c.l.b16 %v8445
    %v8594 = vunpack.c.h.b16 %v8445
    %v8595 = vunpack.c.l.b16 %v8446
    %v8596 = vunpack.c.h.b16 %v8446
    %v8597 = vunpack.c.l.b16 %v8447
    %v8598 = vunpack.c.h.b16 %v8447
    %v8599 = vunpack.c.l.b16 %v8448
    %v8600 = vunpack.c.h.b16 %v8448
    %v8601 = vunpack.c.l.b16 %v8449
    %v8602 = vunpack.c.h.b16 %v8449
    %v8603 = vunpack.c.l.b16 %v8450
    %v8604 = vunpack.c.h.b16 %v8450
    %v8605 = vunpack.c.l.b16 %v8451
    %v8606 = vunpack.c.h.b16 %v8451
    %v8607 = vunpack.c.l.b16 %v8452
    %v8608 = vunpack.c.h.b16 %v8452
    %v8609 = vunpack.c.l.b16 %v8453
    %v8610 = vunpack.c.h.b16 %v8453
    %v8611 = vunpack.c.l.b16 %v8454
    %v8612 = vunpack.c.h.b16 %v8454
    %v8613 = vunpack.c.l.b16 %v8455
    %v8614 = vunpack.c.h.b16 %v8455
    %v8615 = vunpack.c.l.b16 %v8456
    %v8616 = vunpack.c.h.b16 %v8456
    %v8617 = vunpack.c.l.b16 %v8457
    %v8618 = vunpack.c.h.b16 %v8457
    %v8619 = vunpack.c.l.b16 %v8458
    %v8620 = vunpack.c.h.b16 %v8458
    %v8621 = vunpack.c.l.b16 %v8459
    %v8622 = vunpack.c.h.b16 %v8459
    %v8623 = vunpack.c.l.b16 %v8460
    %v8624 = vunpack.c.h.b16 %v8460
    %v8625 = vunpack.c.l.b16 %v8461
    %v8626 = vunpack.c.h.b16 %v8461
    %v8627 = vunpack.c.l.b16 %v8462
    %v8628 = vunpack.c.h.b16 %v8462
    %v8629 = vunpack.c.l.b16 %v8463
    %v8630 = vunpack.c.h.b16 %v8463
    %v8631 = vunpack.c.l.b16 %v8464
    %v8632 = vunpack.c.h.b16 %v8464
    %v8633 = vunpack.c.l.b16 %v8465
    %v8634 = vunpack.c.h.b16 %v8465
    %v8635 = vunpack.c.l.b16 %v8466
    %v8636 = vunpack.c.h.b16 %v8466
    %v8637 = vunpack.c.l.b16 %v8467
    %v8638 = vunpack.c.h.b16 %v8467
    %v8639 = vunpack.c.l.b16 %v8468
    %v8640 = vunpack.c.h.b16 %v8468
    %v8641 = vunpack.c.l.b16 %v8469
    %v8642 = vunpack.c.h.b16 %v8469
    %v8643 = vunpack.c.l.b16 %v8470
    %v8644 = vunpack.c.h.b16 %v8470
    %v8645 = vunpack.c.l.b16 %v8471
    %v8646 = vunpack.c.h.b16 %v8471
    %v8647 = vunpack.c.l.b16 %v8472
    %v8648 = vunpack.c.h.b16 %v8472
    %v8649 = vunpack.c.l.b16 %v8473
    %v8650 = vunpack.c.h.b16 %v8473
    %v8651 = vunpack.c.l.b16 %v8474
    %v8652 = vunpack.c.h.b16 %v8474
    %v8653 = vunpack.c.l.b16 %v8475
    %v8654 = vunpack.c.h.b16 %v8475
    %v8655 = vunpack.c.l.b16 %v8476
    %v8656 = vunpack.c.h.b16 %v8476
    %v8657 = vunpack.c.l.b16 %v8477
    %v8658 = vunpack.c.h.b16 %v8477
    %v8659 = vunpack.c.l.b16 %v8478
    %v8660 = vunpack.c.h.b16 %v8478
    %v8661 = vunpack.c.l.b16 %v8479
    %v8662 = vunpack.c.h.b16 %v8479
    %v8663 = vunpack.c.l.b16 %v8480
    %v8664 = vunpack.c.h.b16 %v8480
    %v8665 = vunpack.c.l.b16 %v8481
    %v8666 = vunpack.c.h.b16 %v8481
    %v8667 = vunpack.c.l.b16 %v8482
    %v8668 = vunpack.c.h.b16 %v8482
    %v8669 = vunpack.c.l.b16 %v8483
    %v8670 = vunpack.c.h.b16 %v8483
    %v8671 = vunpack.c.l.b16 %v8484
    %v8672 = vunpack.c.h.b16 %v8484
    %v8673 = vunpack.c.l.b16 %v8485
    %v8674 = vunpack.c.h.b16 %v8485
    %v8675 = vunpack.c.l.b16 %v8486
    %v8676 = vunpack.c.h.b16 %v8486
    %v8677 = vunpack.c.l.b16 %v8487
    %v8678 = vunpack.c.h.b16 %v8487
    %v8679 = vunpack.c.l.b16 %v8488
    %v8680 = vunpack.c.h.b16 %v8488
    %v8681 = vunpack.c.l.b16 %v8489
    %v8682 = vunpack.c.h.b16 %v8489
    %v8683 = vunpack.c.l.b16 %v8490
    %v8684 = vunpack.c.h.b16 %v8490
    %v8685 = vunpack.c.l.b16 %v8491
    %v8686 = vunpack.c.h.b16 %v8491
    %v8687 = vunpack.c.l.b16 %v8492
    %v8688 = vunpack.c.h.b16 %v8492
    %v8689 = vpack.c.b16 %v8565, %v8561
    %v8690 = vpack.c.b16 %v8566, %v8562
    %v8691 = vpack.c.b16 %v8567, %v8563
    %v8692 = vpack.c.b16 %v8568, %v8564
    %v8693 = vpack.c.b16 %v8573, %v8569
    %v8694 = vpack.c.b16 %v8574, %v8570
    %v8695 = vpack.c.b16 %v8575, %v8571
    %v8696 = vpack.c.b16 %v8576, %v8572
    %v8697 = vpack.c.b16 %v8581, %v8577
    %v8698 = vpack.c.b16 %v8582, %v8578
    %v8699 = vpack.c.b16 %v8583, %v8579
    %v8700 = vpack.c.b16 %v8584, %v8580
    %v8701 = vpack.c.b16 %v8589, %v8585
    %v8702 = vpack.c.b16 %v8590, %v8586
    %v8703 = vpack.c.b16 %v8591, %v8587
    %v8704 = vpack.c.b16 %v8592, %v8588
    %v8705 = vpack.c.b16 %v8597, %v8593
    %v8706 = vpack.c.b16 %v8598, %v8594
    %v8707 = vpack.c.b16 %v8599, %v8595
    %v8708 = vpack.c.b16 %v8600, %v8596
    %v8709 = vpack.c.b16 %v8605, %v8601
    %v8710 = vpack.c.b16 %v8606, %v8602
    %v8711 = vpack.c.b16 %v8607, %v8603
    %v8712 = vpack.c.b16 %v8608, %v8604
    %v8713 = vpack.c.b16 %v8613, %v8609
    %v8714 = vpack.c.b16 %v8614, %v8610
    %v8715 = vpack.c.b16 %v8615, %v8611
    %v8716 = vpack.c.b16 %v8616, %v8612
    %v8717 = vpack.c.b16 %v8621, %v8617
    %v8718 = vpack.c.b16 %v8622, %v8618
    %v8719 = vpack.c.b16 %v8623, %v8619
    %v8720 = vpack.c.b16 %v8624, %v8620
    %v8721 = vpack.c.b16 %v8629, %v8625
    %v8722 = vpack.c.b16 %v8630, %v8626
    %v8723 = vpack.c.b16 %v8631, %v8627
    %v8724 = vpack.c.b16 %v8632, %v8628
    %v8725 = vpack.c.b16 %v8637, %v8633
    %v8726 = vpack.c.b16 %v8638, %v8634
    %v8727 = vpack.c.b16 %v8639, %v8635
    %v8728 = vpack.c.b16 %v8640, %v8636
    %v8729 = vpack.c.b16 %v8645, %v8641
    %v8730 = vpack.c.b16 %v8646, %v8642
    %v8731 = vpack.c.b16 %v8647, %v8643
    %v8732 = vpack.c.b16 %v8648, %v8644
    %v8733 = vpack.c.b16 %v8653, %v8649
    %v8734 = vpack.c.b16 %v8654, %v8650
    %v8735 = vpack.c.b16 %v8655, %v8651
    %v8736 = vpack.c.b16 %v8656, %v8652
    %v8737 = vpack.c.b16 %v8661, %v8657
    %v8738 = vpack.c.b16 %v8662, %v8658
    %v8739 = vpack.c.b16 %v8663, %v8659
    %v8740 = vpack.c.b16 %v8664, %v8660
    %v8741 = vpack.c.b16 %v8669, %v8665
    %v8742 = vpack.c.b16 %v8670, %v8666
    %v8743 = vpack.c.b16 %v8671, %v8667
    %v8744 = vpack.c.b16 %v8672, %v8668
    %v8745 = vpack.c.b16 %v8677, %v8673
    %v8746 = vpack.c.b16 %v8678, %v8674
    %v8747 = vpack.c.b16 %v8679, %v8675
    %v8748 = vpack.c.b16 %v8680, %v8676
    %v8749 = vpack.c.b16 %v8685, %v8681
    %v8750 = vpack.c.b16 %v8686, %v8682
    %v8751 = vpack.c.b16 %v8687, %v8683
    %v8752 = vpack.c.b16 %v8688, %v8684
    %8817 = vmatpush.bf16.msra.mxu0 %v8717
    %8818 = vmatpush.bf16.msra.mxu0 %v8713
    %8819 = vmatpush.bf16.msra.mxu0 %v8709
    %8820 = vmatpush.bf16.msra.mxu0 %v8705
    %8821 = vmatpush.bf16.msra.mxu0 %v8701
    %8822 = vmatpush.bf16.msra.mxu0 %v8697
    %8823 = vmatpush.bf16.msra.mxu0 %v8693
    %8824 = vmatpush.bf16.msra.mxu0 %v8689
    %8825 = vmatmul.bf16.gmra.mxu0 %v8428
    %v8826 = vpop.f32.mrf.mxu0
    %v8827 = vadd.f32 %v8493, %v8826
    %v8828 = vpop.f32.mrf.mxu0
    %8829 = vdwg.mxu0
    %8830 = vmatpush.bf16.msra.mxu0 %v8749
    %8831 = vmatpush.bf16.msra.mxu0 %v8745
    %8832 = vmatpush.bf16.msra.mxu0 %v8741
    %8833 = vmatpush.bf16.msra.mxu0 %v8737
    %8834 = vmatpush.bf16.msra.mxu0 %v8733
    %8835 = vmatpush.bf16.msra.mxu0 %v8729
    %8836 = vmatpush.bf16.msra.mxu0 %v8725
    %8837 = vmatpush.bf16.msra.mxu0 %v8721
    %8838 = vmatmul.bf16.gmra.mxu0 %v7685
    %v8839 = vpop.f32.mrf.mxu0
    %v8840 = vadd.f32 %v8827, %v8839
    %v8841 = vpop.f32.mrf.mxu0
    %8842 = vdwg.mxu0
    %8843 = vmatpush.bf16.msra.mxu0 %v8718
    %8844 = vmatpush.bf16.msra.mxu0 %v8714
    %8845 = vmatpush.bf16.msra.mxu0 %v8710
    %8846 = vmatpush.bf16.msra.mxu0 %v8706
    %8847 = vmatpush.bf16.msra.mxu0 %v8702
    %8848 = vmatpush.bf16.msra.mxu0 %v8698
    %8849 = vmatpush.bf16.msra.mxu0 %v8694
    %8850 = vmatpush.bf16.msra.mxu0 %v8690
    %8851 = vmatmul.bf16.gmra.mxu0 %v8428
    %v8852 = vpop.f32.mrf.mxu0
    %v8853 = vadd.f32 %v8494, %v8852
    %v8854 = vpop.f32.mrf.mxu0
    %8855 = vdwg.mxu0
    %8856 = vmatpush.bf16.msra.mxu0 %v8750
    %8857 = vmatpush.bf16.msra.mxu0 %v8746
    %8858 = vmatpush.bf16.msra.mxu0 %v8742
    %8859 = vmatpush.bf16.msra.mxu0 %v8738
    %8860 = vmatpush.bf16.msra.mxu0 %v8734
    %8861 = vmatpush.bf16.msra.mxu0 %v8730
    %8862 = vmatpush.bf16.msra.mxu0 %v8726
    %8863 = vmatpush.bf16.msra.mxu0 %v8722
    %8864 = vmatmul.bf16.gmra.mxu0 %v7685
    %v8865 = vpop.f32.mrf.mxu0
    %v8866 = vadd.f32 %v8853, %v8865
    %v8867 = vpop.f32.mrf.mxu0
    %8868 = vdwg.mxu0
    %8869 = vmatpush.bf16.msra.mxu0 %v8719
    %8870 = vmatpush.bf16.msra.mxu0 %v8715
    %8871 = vmatpush.bf16.msra.mxu0 %v8711
    %8872 = vmatpush.bf16.msra.mxu0 %v8707
    %8873 = vmatpush.bf16.msra.mxu0 %v8703
    %8874 = vmatpush.bf16.msra.mxu0 %v8699
    %8875 = vmatpush.bf16.msra.mxu0 %v8695
    %8876 = vmatpush.bf16.msra.mxu0 %v8691
    %8877 = vmatmul.bf16.gmra.mxu0 %v8428
    %v8878 = vpop.f32.mrf.mxu0
    %v8879 = vadd.f32 %v8495, %v8878
    %v8880 = vpop.f32.mrf.mxu0
    %8881 = vdwg.mxu0
    %8882 = vmatpush.bf16.msra.mxu0 %v8751
    %8883 = vmatpush.bf16.msra.mxu0 %v8747
    %8884 = vmatpush.bf16.msra.mxu0 %v8743
    %8885 = vmatpush.bf16.msra.mxu0 %v8739
    %8886 = vmatpush.bf16.msra.mxu0 %v8735
    %8887 = vmatpush.bf16.msra.mxu0 %v8731
    %8888 = vmatpush.bf16.msra.mxu0 %v8727
    %8889 = vmatpush.bf16.msra.mxu0 %v8723
    %8890 = vmatmul.bf16.gmra.mxu0 %v7685
    %v8891 = vpop.f32.mrf.mxu0
    %v8892 = vadd.f32 %v8879, %v8891
    %v8893 = vpop.f32.mrf.mxu0
    %8894 = vdwg.mxu0
    %8895 = vmatpush.bf16.msra.mxu0 %v8720
    %8896 = vmatpush.bf16.msra.mxu0 %v8716
    %8897 = vmatpush.bf16.msra.mxu0 %v8712
    %8898 = vmatpush.bf16.msra.mxu0 %v8708
    %8899 = vmatpush.bf16.msra.mxu0 %v8704
    %8900 = vmatpush.bf16.msra.mxu0 %v8700
    %8901 = vmatpush.bf16.msra.mxu0 %v8696
    %8902 = vmatpush.bf16.msra.mxu0 %v8692
    %8903 = vmatmul.bf16.gmra.mxu0 %v8428
    %v8904 = vpop.f32.mrf.mxu0
    %v8905 = vadd.f32 %v8496, %v8904
    %v8906 = vpop.f32.mrf.mxu0
    %8907 = vdwg.mxu0
    %8908 = vmatpush.bf16.msra.mxu0 %v8752
    %8909 = vmatpush.bf16.msra.mxu0 %v8748
    %8910 = vmatpush.bf16.msra.mxu0 %v8744
    %8911 = vmatpush.bf16.msra.mxu0 %v8740
    %8912 = vmatpush.bf16.msra.mxu0 %v8736
    %8913 = vmatpush.bf16.msra.mxu0 %v8732
    %8914 = vmatpush.bf16.msra.mxu0 %v8728
    %8915 = vmatpush.bf16.msra.mxu0 %v8724
    %8916 = vmatmul.bf16.gmra.mxu0 %v7685
    %v8917 = vpop.f32.mrf.mxu0
    %v8918 = vadd.f32 %v8905, %v8917
    %v8919 = vpop.f32.mrf.mxu0
    %8920 = vdwg.mxu0
    %v8921 = vsub.f32 0.0, %v8840
    %v8922 = vmul.f32 %v8921, 1.442695
    %v8923 = vpow.pop %v8922
    %v8924 = vadd.f32 %v8923, 1.0
    %v8925 = vrcp.pop %v8924
    %v8926 = vmul.f32 %v8924, %v8925
    %v8927 = vsub.f32 1.0, %v8926
    %v8928 = vmul.f32 %v8925, %v8927
    %v8929 = vadd.f32 %v8925, %v8928
    %vm8930 = vweird.f32 %v8924
    %vm8931 = vweird.f32 %v8925
    %vm8932 = vmor %vm8930, %vm8931
    %v8933 = vsel %vm8932, %v8925, %v8929
    %v8934 = vand.u32 2147483647, %v8924
    %vm8935 = vcmp.eq.f32.partialorder %v8934, 8.507059e+37
    %v8936 = vand.u32 %v8924, 2147483648
    %v8937 = vor.u32 1.1754944e-38, %v8936
    %v8938 = vsel %vm8935, %v8937, %v8933
    %v8939 = vsub.f32 0.0, %v8866
    %v8940 = vmul.f32 %v8939, 1.442695
    %v8941 = vpow.pop %v8940
    %v8942 = vadd.f32 %v8941, 1.0
    %v8943 = vrcp.pop %v8942
    %v8944 = vmul.f32 %v8942, %v8943
    %v8945 = vsub.f32 1.0, %v8944
    %v8946 = vmul.f32 %v8943, %v8945
    %v8947 = vadd.f32 %v8943, %v8946
    %vm8948 = vweird.f32 %v8942
    %vm8949 = vweird.f32 %v8943
    %vm8950 = vmor %vm8948, %vm8949
    %v8951 = vsel %vm8950, %v8943, %v8947
    %v8952 = vand.u32 2147483647, %v8942
    %vm8953 = vcmp.eq.f32.partialorder %v8952, 8.507059e+37
    %v8954 = vand.u32 %v8942, 2147483648
    %v8955 = vor.u32 1.1754944e-38, %v8954
    %v8956 = vsel %vm8953, %v8955, %v8951
    %v8957 = vtanh.pop %v8892
    %v8958 = vsub.f32 0.0, %v8918
    %v8959 = vmul.f32 %v8958, 1.442695
    %v8960 = vpow.pop %v8959
    %v8961 = vadd.f32 %v8960, 1.0
    %v8962 = vrcp.pop %v8961
    %v8963 = vmul.f32 %v8961, %v8962
    %v8964 = vsub.f32 1.0, %v8963
    %v8965 = vmul.f32 %v8962, %v8964
    %v8966 = vadd.f32 %v8962, %v8965
    %vm8967 = vweird.f32 %v8961
    %vm8968 = vweird.f32 %v8962
    %vm8969 = vmor %vm8967, %vm8968
    %v8970 = vsel %vm8969, %v8962, %v8966
    %v8971 = vand.u32 2147483647, %v8961
    %vm8972 = vcmp.eq.f32.partialorder %v8971, 8.507059e+37
    %v8973 = vand.u32 %v8961, 2147483648
    %v8974 = vor.u32 1.1754944e-38, %v8973
    %v8975 = vsel %vm8972, %v8974, %v8970
    %v8976 = vmul.f32 %v8956, %v7682
    %v8977 = vmul.f32 %v8938, %v8957
    %v8978 = vadd.f32 %v8976, %v8977
    %v8979 = vtanh.pop %v8978
    %v8980 = vmul.f32 %v8975, %v8979
    %v8981 = vpack.c.bf16 %v8980, %v8980
    %v8982 = vld [vmem:[#allocation13] sm:$0xff]
    %v8983 = vld [vmem:[#allocation13 + $0x8] sm:$0xff]
    %v8984 = vld [vmem:[#allocation13 + $0x10] sm:$0xff]
    %v8985 = vld [vmem:[#allocation13 + $0x18] sm:$0xff]
    %v8986 = vld [vmem:[#allocation13 + $0x20] sm:$0xff]
    %v8987 = vld [vmem:[#allocation13 + $0x28] sm:$0xff]
    %v8988 = vld [vmem:[#allocation13 + $0x30] sm:$0xff]
    %v8989 = vld [vmem:[#allocation13 + $0x38] sm:$0xff]
    %v8990 = vld [vmem:[#allocation13 + $0x40] sm:$0xff]
    %v8991 = vld [vmem:[#allocation13 + $0x48] sm:$0xff]
    %v8992 = vld [vmem:[#allocation13 + $0x50] sm:$0xff]
    %v8993 = vld [vmem:[#allocation13 + $0x58] sm:$0xff]
    %v8994 = vld [vmem:[#allocation13 + $0x60] sm:$0xff]
    %v8995 = vld [vmem:[#allocation13 + $0x68] sm:$0xff]
    %v8996 = vld [vmem:[#allocation13 + $0x70] sm:$0xff]
    %v8997 = vld [vmem:[#allocation13 + $0x78] sm:$0xff]
    %v8998 = vld [vmem:[#allocation13 + $0x80] sm:$0xff]
    %v8999 = vld [vmem:[#allocation13 + $0x88] sm:$0xff]
    %v9000 = vld [vmem:[#allocation13 + $0x90] sm:$0xff]
    %v9001 = vld [vmem:[#allocation13 + $0x98] sm:$0xff]
    %v9002 = vld [vmem:[#allocation13 + $0xa0] sm:$0xff]
    %v9003 = vld [vmem:[#allocation13 + $0xa8] sm:$0xff]
    %v9004 = vld [vmem:[#allocation13 + $0xb0] sm:$0xff]
    %v9005 = vld [vmem:[#allocation13 + $0xb8] sm:$0xff]
    %v9006 = vld [vmem:[#allocation13 + $0xc0] sm:$0xff]
    %v9007 = vld [vmem:[#allocation13 + $0xc8] sm:$0xff]
    %v9008 = vld [vmem:[#allocation13 + $0xd0] sm:$0xff]
    %v9009 = vld [vmem:[#allocation13 + $0xd8] sm:$0xff]
    %v9010 = vld [vmem:[#allocation13 + $0xe0] sm:$0xff]
    %v9011 = vld [vmem:[#allocation13 + $0xe8] sm:$0xff]
    %v9012 = vld [vmem:[#allocation13 + $0xf0] sm:$0xff]
    %v9013 = vld [vmem:[#allocation13 + $0xf8] sm:$0xff]
    %v9014 = vld [vmem:[#allocation13 + $0x100] sm:$0xff]
    %v9015 = vld [vmem:[#allocation13 + $0x108] sm:$0xff]
    %v9016 = vld [vmem:[#allocation13 + $0x110] sm:$0xff]
    %v9017 = vld [vmem:[#allocation13 + $0x118] sm:$0xff]
    %v9018 = vld [vmem:[#allocation13 + $0x120] sm:$0xff]
    %v9019 = vld [vmem:[#allocation13 + $0x128] sm:$0xff]
    %v9020 = vld [vmem:[#allocation13 + $0x130] sm:$0xff]
    %v9021 = vld [vmem:[#allocation13 + $0x138] sm:$0xff]
    %v9022 = vld [vmem:[#allocation13 + $0x140] sm:$0xff]
    %v9023 = vld [vmem:[#allocation13 + $0x148] sm:$0xff]
    %v9024 = vld [vmem:[#allocation13 + $0x150] sm:$0xff]
    %v9025 = vld [vmem:[#allocation13 + $0x158] sm:$0xff]
    %v9026 = vld [vmem:[#allocation13 + $0x160] sm:$0xff]
    %v9027 = vld [vmem:[#allocation13 + $0x168] sm:$0xff]
    %v9028 = vld [vmem:[#allocation13 + $0x170] sm:$0xff]
    %v9029 = vld [vmem:[#allocation13 + $0x178] sm:$0xff]
    %v9030 = vld [vmem:[#allocation13 + $0x180] sm:$0xff]
    %v9031 = vld [vmem:[#allocation13 + $0x188] sm:$0xff]
    %v9032 = vld [vmem:[#allocation13 + $0x190] sm:$0xff]
    %v9033 = vld [vmem:[#allocation13 + $0x198] sm:$0xff]
    %v9034 = vld [vmem:[#allocation13 + $0x1a0] sm:$0xff]
    %v9035 = vld [vmem:[#allocation13 + $0x1a8] sm:$0xff]
    %v9036 = vld [vmem:[#allocation13 + $0x1b0] sm:$0xff]
    %v9037 = vld [vmem:[#allocation13 + $0x1b8] sm:$0xff]
    %v9038 = vld [vmem:[#allocation13 + $0x1c0] sm:$0xff]
    %v9039 = vld [vmem:[#allocation13 + $0x1c8] sm:$0xff]
    %v9040 = vld [vmem:[#allocation13 + $0x1d0] sm:$0xff]
    %v9041 = vld [vmem:[#allocation13 + $0x1d8] sm:$0xff]
    %v9042 = vld [vmem:[#allocation13 + $0x1e0] sm:$0xff]
    %v9043 = vld [vmem:[#allocation13 + $0x1e8] sm:$0xff]
    %v9044 = vld [vmem:[#allocation13 + $0x1f0] sm:$0xff]
    %v9045 = vld [vmem:[#allocation13 + $0x1f8] sm:$0xff]
    %v9046 = vld [vmem:[#allocation15] sm:$0xff]
    %v9047 = vld [vmem:[#allocation15 + $0x8] sm:$0xff]
    %v9048 = vld [vmem:[#allocation15 + $0x10] sm:$0xff]
    %v9049 = vld [vmem:[#allocation15 + $0x18] sm:$0xff]
    %v9114 = vunpack.c.l.b16 %v8982
    %v9115 = vunpack.c.h.b16 %v8982
    %v9116 = vunpack.c.l.b16 %v8983
    %v9117 = vunpack.c.h.b16 %v8983
    %v9118 = vunpack.c.l.b16 %v8984
    %v9119 = vunpack.c.h.b16 %v8984
    %v9120 = vunpack.c.l.b16 %v8985
    %v9121 = vunpack.c.h.b16 %v8985
    %v9122 = vunpack.c.l.b16 %v8986
    %v9123 = vunpack.c.h.b16 %v8986
    %v9124 = vunpack.c.l.b16 %v8987
    %v9125 = vunpack.c.h.b16 %v8987
    %v9126 = vunpack.c.l.b16 %v8988
    %v9127 = vunpack.c.h.b16 %v8988
    %v9128 = vunpack.c.l.b16 %v8989
    %v9129 = vunpack.c.h.b16 %v8989
    %v9130 = vunpack.c.l.b16 %v8990
    %v9131 = vunpack.c.h.b16 %v8990
    %v9132 = vunpack.c.l.b16 %v8991
    %v9133 = vunpack.c.h.b16 %v8991
    %v9134 = vunpack.c.l.b16 %v8992
    %v9135 = vunpack.c.h.b16 %v8992
    %v9136 = vunpack.c.l.b16 %v8993
    %v9137 = vunpack.c.h.b16 %v8993
    %v9138 = vunpack.c.l.b16 %v8994
    %v9139 = vunpack.c.h.b16 %v8994
    %v9140 = vunpack.c.l.b16 %v8995
    %v9141 = vunpack.c.h.b16 %v8995
    %v9142 = vunpack.c.l.b16 %v8996
    %v9143 = vunpack.c.h.b16 %v8996
    %v9144 = vunpack.c.l.b16 %v8997
    %v9145 = vunpack.c.h.b16 %v8997
    %v9146 = vunpack.c.l.b16 %v8998
    %v9147 = vunpack.c.h.b16 %v8998
    %v9148 = vunpack.c.l.b16 %v8999
    %v9149 = vunpack.c.h.b16 %v8999
    %v9150 = vunpack.c.l.b16 %v9000
    %v9151 = vunpack.c.h.b16 %v9000
    %v9152 = vunpack.c.l.b16 %v9001
    %v9153 = vunpack.c.h.b16 %v9001
    %v9154 = vunpack.c.l.b16 %v9002
    %v9155 = vunpack.c.h.b16 %v9002
    %v9156 = vunpack.c.l.b16 %v9003
    %v9157 = vunpack.c.h.b16 %v9003
    %v9158 = vunpack.c.l.b16 %v9004
    %v9159 = vunpack.c.h.b16 %v9004
    %v9160 = vunpack.c.l.b16 %v9005
    %v9161 = vunpack.c.h.b16 %v9005
    %v9162 = vunpack.c.l.b16 %v9006
    %v9163 = vunpack.c.h.b16 %v9006
    %v9164 = vunpack.c.l.b16 %v9007
    %v9165 = vunpack.c.h.b16 %v9007
    %v9166 = vunpack.c.l.b16 %v9008
    %v9167 = vunpack.c.h.b16 %v9008
    %v9168 = vunpack.c.l.b16 %v9009
    %v9169 = vunpack.c.h.b16 %v9009
    %v9170 = vunpack.c.l.b16 %v9010
    %v9171 = vunpack.c.h.b16 %v9010
    %v9172 = vunpack.c.l.b16 %v9011
    %v9173 = vunpack.c.h.b16 %v9011
    %v9174 = vunpack.c.l.b16 %v9012
    %v9175 = vunpack.c.h.b16 %v9012
    %v9176 = vunpack.c.l.b16 %v9013
    %v9177 = vunpack.c.h.b16 %v9013
    %v9178 = vunpack.c.l.b16 %v9014
    %v9179 = vunpack.c.h.b16 %v9014
    %v9180 = vunpack.c.l.b16 %v9015
    %v9181 = vunpack.c.h.b16 %v9015
    %v9182 = vunpack.c.l.b16 %v9016
    %v9183 = vunpack.c.h.b16 %v9016
    %v9184 = vunpack.c.l.b16 %v9017
    %v9185 = vunpack.c.h.b16 %v9017
    %v9186 = vunpack.c.l.b16 %v9018
    %v9187 = vunpack.c.h.b16 %v9018
    %v9188 = vunpack.c.l.b16 %v9019
    %v9189 = vunpack.c.h.b16 %v9019
    %v9190 = vunpack.c.l.b16 %v9020
    %v9191 = vunpack.c.h.b16 %v9020
    %v9192 = vunpack.c.l.b16 %v9021
    %v9193 = vunpack.c.h.b16 %v9021
    %v9194 = vunpack.c.l.b16 %v9022
    %v9195 = vunpack.c.h.b16 %v9022
    %v9196 = vunpack.c.l.b16 %v9023
    %v9197 = vunpack.c.h.b16 %v9023
    %v9198 = vunpack.c.l.b16 %v9024
    %v9199 = vunpack.c.h.b16 %v9024
    %v9200 = vunpack.c.l.b16 %v9025
    %v9201 = vunpack.c.h.b16 %v9025
    %v9202 = vunpack.c.l.b16 %v9026
    %v9203 = vunpack.c.h.b16 %v9026
    %v9204 = vunpack.c.l.b16 %v9027
    %v9205 = vunpack.c.h.b16 %v9027
    %v9206 = vunpack.c.l.b16 %v9028
    %v9207 = vunpack.c.h.b16 %v9028
    %v9208 = vunpack.c.l.b16 %v9029
    %v9209 = vunpack.c.h.b16 %v9029
    %v9210 = vunpack.c.l.b16 %v9030
    %v9211 = vunpack.c.h.b16 %v9030
    %v9212 = vunpack.c.l.b16 %v9031
    %v9213 = vunpack.c.h.b16 %v9031
    %v9214 = vunpack.c.l.b16 %v9032
    %v9215 = vunpack.c.h.b16 %v9032
    %v9216 = vunpack.c.l.b16 %v9033
    %v9217 = vunpack.c.h.b16 %v9033
    %v9218 = vunpack.c.l.b16 %v9034
    %v9219 = vunpack.c.h.b16 %v9034
    %v9220 = vunpack.c.l.b16 %v9035
    %v9221 = vunpack.c.h.b16 %v9035
    %v9222 = vunpack.c.l.b16 %v9036
    %v9223 = vunpack.c.h.b16 %v9036
    %v9224 = vunpack.c.l.b16 %v9037
    %v9225 = vunpack.c.h.b16 %v9037
    %v9226 = vunpack.c.l.b16 %v9038
    %v9227 = vunpack.c.h.b16 %v9038
    %v9228 = vunpack.c.l.b16 %v9039
    %v9229 = vunpack.c.h.b16 %v9039
    %v9230 = vunpack.c.l.b16 %v9040
    %v9231 = vunpack.c.h.b16 %v9040
    %v9232 = vunpack.c.l.b16 %v9041
    %v9233 = vunpack.c.h.b16 %v9041
    %v9234 = vunpack.c.l.b16 %v9042
    %v9235 = vunpack.c.h.b16 %v9042
    %v9236 = vunpack.c.l.b16 %v9043
    %v9237 = vunpack.c.h.b16 %v9043
    %v9238 = vunpack.c.l.b16 %v9044
    %v9239 = vunpack.c.h.b16 %v9044
    %v9240 = vunpack.c.l.b16 %v9045
    %v9241 = vunpack.c.h.b16 %v9045
    %v9242 = vpack.c.b16 %v9118, %v9114
    %v9243 = vpack.c.b16 %v9119, %v9115
    %v9244 = vpack.c.b16 %v9120, %v9116
    %v9245 = vpack.c.b16 %v9121, %v9117
    %v9246 = vpack.c.b16 %v9126, %v9122
    %v9247 = vpack.c.b16 %v9127, %v9123
    %v9248 = vpack.c.b16 %v9128, %v9124
    %v9249 = vpack.c.b16 %v9129, %v9125
    %v9250 = vpack.c.b16 %v9134, %v9130
    %v9251 = vpack.c.b16 %v9135, %v9131
    %v9252 = vpack.c.b16 %v9136, %v9132
    %v9253 = vpack.c.b16 %v9137, %v9133
    %v9254 = vpack.c.b16 %v9142, %v9138
    %v9255 = vpack.c.b16 %v9143, %v9139
    %v9256 = vpack.c.b16 %v9144, %v9140
    %v9257 = vpack.c.b16 %v9145, %v9141
    %v9258 = vpack.c.b16 %v9150, %v9146
    %v9259 = vpack.c.b16 %v9151, %v9147
    %v9260 = vpack.c.b16 %v9152, %v9148
    %v9261 = vpack.c.b16 %v9153, %v9149
    %v9262 = vpack.c.b16 %v9158, %v9154
    %v9263 = vpack.c.b16 %v9159, %v9155
    %v9264 = vpack.c.b16 %v9160, %v9156
    %v9265 = vpack.c.b16 %v9161, %v9157
    %v9266 = vpack.c.b16 %v9166, %v9162
    %v9267 = vpack.c.b16 %v9167, %v9163
    %v9268 = vpack.c.b16 %v9168, %v9164
    %v9269 = vpack.c.b16 %v9169, %v9165
    %v9270 = vpack.c.b16 %v9174, %v9170
    %v9271 = vpack.c.b16 %v9175, %v9171
    %v9272 = vpack.c.b16 %v9176, %v9172
    %v9273 = vpack.c.b16 %v9177, %v9173
    %v9274 = vpack.c.b16 %v9182, %v9178
    %v9275 = vpack.c.b16 %v9183, %v9179
    %v9276 = vpack.c.b16 %v9184, %v9180
    %v9277 = vpack.c.b16 %v9185, %v9181
    %v9278 = vpack.c.b16 %v9190, %v9186
    %v9279 = vpack.c.b16 %v9191, %v9187
    %v9280 = vpack.c.b16 %v9192, %v9188
    %v9281 = vpack.c.b16 %v9193, %v9189
    %v9282 = vpack.c.b16 %v9198, %v9194
    %v9283 = vpack.c.b16 %v9199, %v9195
    %v9284 = vpack.c.b16 %v9200, %v9196
    %v9285 = vpack.c.b16 %v9201, %v9197
    %v9286 = vpack.c.b16 %v9206, %v9202
    %v9287 = vpack.c.b16 %v9207, %v9203
    %v9288 = vpack.c.b16 %v9208, %v9204
    %v9289 = vpack.c.b16 %v9209, %v9205
    %v9290 = vpack.c.b16 %v9214, %v9210
    %v9291 = vpack.c.b16 %v9215, %v9211
    %v9292 = vpack.c.b16 %v9216, %v9212
    %v9293 = vpack.c.b16 %v9217, %v9213
    %v9294 = vpack.c.b16 %v9222, %v9218
    %v9295 = vpack.c.b16 %v9223, %v9219
    %v9296 = vpack.c.b16 %v9224, %v9220
    %v9297 = vpack.c.b16 %v9225, %v9221
    %v9298 = vpack.c.b16 %v9230, %v9226
    %v9299 = vpack.c.b16 %v9231, %v9227
    %v9300 = vpack.c.b16 %v9232, %v9228
    %v9301 = vpack.c.b16 %v9233, %v9229
    %v9302 = vpack.c.b16 %v9238, %v9234
    %v9303 = vpack.c.b16 %v9239, %v9235
    %v9304 = vpack.c.b16 %v9240, %v9236
    %v9305 = vpack.c.b16 %v9241, %v9237
    %9370 = vmatpush.bf16.msra.mxu0 %v9270
    %9371 = vmatpush.bf16.msra.mxu0 %v9266
    %9372 = vmatpush.bf16.msra.mxu0 %v9262
    %9373 = vmatpush.bf16.msra.mxu0 %v9258
    %9374 = vmatpush.bf16.msra.mxu0 %v9254
    %9375 = vmatpush.bf16.msra.mxu0 %v9250
    %9376 = vmatpush.bf16.msra.mxu0 %v9246
    %9377 = vmatpush.bf16.msra.mxu0 %v9242
    %9378 = vmatmul.bf16.gmra.mxu0 %v8981
    %v9379 = vpop.f32.mrf.mxu0
    %v9380 = vadd.f32 %v9046, %v9379
    %v9381 = vpop.f32.mrf.mxu0
    %9382 = vdwg.mxu0
    %9383 = vmatpush.bf16.msra.mxu0 %v9302
    %9384 = vmatpush.bf16.msra.mxu0 %v9298
    %9385 = vmatpush.bf16.msra.mxu0 %v9294
    %9386 = vmatpush.bf16.msra.mxu0 %v9290
    %9387 = vmatpush.bf16.msra.mxu0 %v9286
    %9388 = vmatpush.bf16.msra.mxu0 %v9282
    %9389 = vmatpush.bf16.msra.mxu0 %v9278
    %9390 = vmatpush.bf16.msra.mxu0 %v9274
    %9391 = vmatmul.bf16.gmra.mxu0 %v8238
    %v9392 = vpop.f32.mrf.mxu0
    %v9393 = vadd.f32 %v9380, %v9392
    %v9394 = vpop.f32.mrf.mxu0
    %9395 = vdwg.mxu0
    %9396 = vmatpush.bf16.msra.mxu0 %v9271
    %9397 = vmatpush.bf16.msra.mxu0 %v9267
    %9398 = vmatpush.bf16.msra.mxu0 %v9263
    %9399 = vmatpush.bf16.msra.mxu0 %v9259
    %9400 = vmatpush.bf16.msra.mxu0 %v9255
    %9401 = vmatpush.bf16.msra.mxu0 %v9251
    %9402 = vmatpush.bf16.msra.mxu0 %v9247
    %9403 = vmatpush.bf16.msra.mxu0 %v9243
    %9404 = vmatmul.bf16.gmra.mxu0 %v8981
    %v9405 = vpop.f32.mrf.mxu0
    %v9406 = vadd.f32 %v9047, %v9405
    %v9407 = vpop.f32.mrf.mxu0
    %9408 = vdwg.mxu0
    %9409 = vmatpush.bf16.msra.mxu0 %v9303
    %9410 = vmatpush.bf16.msra.mxu0 %v9299
    %9411 = vmatpush.bf16.msra.mxu0 %v9295
    %9412 = vmatpush.bf16.msra.mxu0 %v9291
    %9413 = vmatpush.bf16.msra.mxu0 %v9287
    %9414 = vmatpush.bf16.msra.mxu0 %v9283
    %9415 = vmatpush.bf16.msra.mxu0 %v9279
    %9416 = vmatpush.bf16.msra.mxu0 %v9275
    %9417 = vmatmul.bf16.gmra.mxu0 %v8238
    %v9418 = vpop.f32.mrf.mxu0
    %v9419 = vadd.f32 %v9406, %v9418
    %v9420 = vpop.f32.mrf.mxu0
    %9421 = vdwg.mxu0
    %9422 = vmatpush.bf16.msra.mxu0 %v9272
    %9423 = vmatpush.bf16.msra.mxu0 %v9268
    %9424 = vmatpush.bf16.msra.mxu0 %v9264
    %9425 = vmatpush.bf16.msra.mxu0 %v9260
    %9426 = vmatpush.bf16.msra.mxu0 %v9256
    %9427 = vmatpush.bf16.msra.mxu0 %v9252
    %9428 = vmatpush.bf16.msra.mxu0 %v9248
    %9429 = vmatpush.bf16.msra.mxu0 %v9244
    %9430 = vmatmul.bf16.gmra.mxu0 %v8981
    %v9431 = vpop.f32.mrf.mxu0
    %v9432 = vadd.f32 %v9048, %v9431
    %v9433 = vpop.f32.mrf.mxu0
    %9434 = vdwg.mxu0
    %9435 = vmatpush.bf16.msra.mxu0 %v9304
    %9436 = vmatpush.bf16.msra.mxu0 %v9300
    %9437 = vmatpush.bf16.msra.mxu0 %v9296
    %9438 = vmatpush.bf16.msra.mxu0 %v9292
    %9439 = vmatpush.bf16.msra.mxu0 %v9288
    %9440 = vmatpush.bf16.msra.mxu0 %v9284
    %9441 = vmatpush.bf16.msra.mxu0 %v9280
    %9442 = vmatpush.bf16.msra.mxu0 %v9276
    %9443 = vmatmul.bf16.gmra.mxu0 %v8238
    %v9444 = vpop.f32.mrf.mxu0
    %v9445 = vadd.f32 %v9432, %v9444
    %v9446 = vpop.f32.mrf.mxu0
    %9447 = vdwg.mxu0
    %9448 = vmatpush.bf16.msra.mxu0 %v9273
    %9449 = vmatpush.bf16.msra.mxu0 %v9269
    %9450 = vmatpush.bf16.msra.mxu0 %v9265
    %9451 = vmatpush.bf16.msra.mxu0 %v9261
    %9452 = vmatpush.bf16.msra.mxu0 %v9257
    %9453 = vmatpush.bf16.msra.mxu0 %v9253
    %9454 = vmatpush.bf16.msra.mxu0 %v9249
    %9455 = vmatpush.bf16.msra.mxu0 %v9245
    %9456 = vmatmul.bf16.gmra.mxu0 %v8981
    %v9457 = vpop.f32.mrf.mxu0
    %v9458 = vadd.f32 %v9049, %v9457
    %v9459 = vpop.f32.mrf.mxu0
    %9460 = vdwg.mxu0
    %9461 = vmatpush.bf16.msra.mxu0 %v9305
    %9462 = vmatpush.bf16.msra.mxu0 %v9301
    %9463 = vmatpush.bf16.msra.mxu0 %v9297
    %9464 = vmatpush.bf16.msra.mxu0 %v9293
    %9465 = vmatpush.bf16.msra.mxu0 %v9289
    %9466 = vmatpush.bf16.msra.mxu0 %v9285
    %9467 = vmatpush.bf16.msra.mxu0 %v9281
    %9468 = vmatpush.bf16.msra.mxu0 %v9277
    %9469 = vmatmul.bf16.gmra.mxu0 %v8238
    %v9470 = vpop.f32.mrf.mxu0
    %v9471 = vadd.f32 %v9458, %v9470
    %v9472 = vpop.f32.mrf.mxu0
    %9473 = vdwg.mxu0
    %v9474 = vsub.f32 0.0, %v9393
    %v9475 = vmul.f32 %v9474, 1.442695
    %v9476 = vpow.pop %v9475
    %v9477 = vadd.f32 %v9476, 1.0
    %v9478 = vrcp.pop %v9477
    %v9479 = vmul.f32 %v9477, %v9478
    %v9480 = vsub.f32 1.0, %v9479
    %v9481 = vmul.f32 %v9478, %v9480
    %v9482 = vadd.f32 %v9478, %v9481
    %vm9483 = vweird.f32 %v9477
    %vm9484 = vweird.f32 %v9478
    %vm9485 = vmor %vm9483, %vm9484
    %v9486 = vsel %vm9485, %v9478, %v9482
    %v9487 = vand.u32 2147483647, %v9477
    %vm9488 = vcmp.eq.f32.partialorder %v9487, 8.507059e+37
    %v9489 = vand.u32 %v9477, 2147483648
    %v9490 = vor.u32 1.1754944e-38, %v9489
    %v9491 = vsel %vm9488, %v9490, %v9486
    %v9492 = vsub.f32 0.0, %v9419
    %v9493 = vmul.f32 %v9492, 1.442695
    %v9494 = vpow.pop %v9493
    %v9495 = vadd.f32 %v9494, 1.0
    %v9496 = vrcp.pop %v9495
    %v9497 = vmul.f32 %v9495, %v9496
    %v9498 = vsub.f32 1.0, %v9497
    %v9499 = vmul.f32 %v9496, %v9498
    %v9500 = vadd.f32 %v9496, %v9499
    %vm9501 = vweird.f32 %v9495
    %vm9502 = vweird.f32 %v9496
    %vm9503 = vmor %vm9501, %vm9502
    %v9504 = vsel %vm9503, %v9496, %v9500
    %v9505 = vand.u32 2147483647, %v9495
    %vm9506 = vcmp.eq.f32.partialorder %v9505, 8.507059e+37
    %v9507 = vand.u32 %v9495, 2147483648
    %v9508 = vor.u32 1.1754944e-38, %v9507
    %v9509 = vsel %vm9506, %v9508, %v9504
    %v9510 = vtanh.pop %v9445
    %v9511 = vsub.f32 0.0, %v9471
    %v9512 = vmul.f32 %v9511, 1.442695
    %v9513 = vpow.pop %v9512
    %v9514 = vadd.f32 %v9513, 1.0
    %v9515 = vrcp.pop %v9514
    %v9516 = vmul.f32 %v9514, %v9515
    %v9517 = vsub.f32 1.0, %v9516
    %v9518 = vmul.f32 %v9515, %v9517
    %v9519 = vadd.f32 %v9515, %v9518
    %vm9520 = vweird.f32 %v9514
    %vm9521 = vweird.f32 %v9515
    %vm9522 = vmor %vm9520, %vm9521
    %v9523 = vsel %vm9522, %v9515, %v9519
    %v9524 = vand.u32 2147483647, %v9514
    %vm9525 = vcmp.eq.f32.partialorder %v9524, 8.507059e+37
    %v9526 = vand.u32 %v9514, 2147483648
    %v9527 = vor.u32 1.1754944e-38, %v9526
    %v9528 = vsel %vm9525, %v9527, %v9523
    %v9529 = vmul.f32 %v9509, %v8235
    %v9530 = vmul.f32 %v9491, %v9510
    %v9531 = vadd.f32 %v9529, %v9530
    %v9532 = vtanh.pop %v9531
    %v9533 = vmul.f32 %v9528, %v9532
    %v9534 = vpack.c.bf16 %v9533, %v9533
    %v9535 = vld [vmem:[#allocation16] sm:$0xf]
    %v9536 = vld [vmem:[#allocation16 + $0x4] sm:$0xf]
    %v9537 = vld [vmem:[#allocation16 + $0x8] sm:$0xf]
    %v9538 = vld [vmem:[#allocation16 + $0xc] sm:$0xf]
    %v9539 = vld [vmem:[#allocation16 + $0x10] sm:$0xf]
    %v9540 = vld [vmem:[#allocation16 + $0x14] sm:$0xf]
    %v9541 = vld [vmem:[#allocation16 + $0x18] sm:$0xf]
    %v9542 = vld [vmem:[#allocation16 + $0x1c] sm:$0xf]
    %v9543 = vld [vmem:[#allocation16 + $0x20] sm:$0xf]
    %v9544 = vld [vmem:[#allocation16 + $0x24] sm:$0xf]
    %v9545 = vld [vmem:[#allocation16 + $0x28] sm:$0xf]
    %v9546 = vld [vmem:[#allocation16 + $0x2c] sm:$0xf]
    %v9547 = vld [vmem:[#allocation16 + $0x30] sm:$0xf]
    %v9548 = vld [vmem:[#allocation16 + $0x34] sm:$0xf]
    %v9549 = vld [vmem:[#allocation16 + $0x38] sm:$0xf]
    %v9550 = vld [vmem:[#allocation16 + $0x3c] sm:$0xf]
    %v9551 = vld [vmem:[%s9] sm:$0xff]
    %v9568 = vunpack.c.l.b16 %v9535
    %v9569 = vunpack.c.l.b16 %v9536
    %v9570 = vunpack.c.l.b16 %v9537
    %v9571 = vunpack.c.l.b16 %v9538
    %v9572 = vunpack.c.l.b16 %v9539
    %v9573 = vunpack.c.l.b16 %v9540
    %v9574 = vunpack.c.l.b16 %v9541
    %v9575 = vunpack.c.l.b16 %v9542
    %v9576 = vunpack.c.l.b16 %v9543
    %v9577 = vunpack.c.l.b16 %v9544
    %v9578 = vunpack.c.l.b16 %v9545
    %v9579 = vunpack.c.l.b16 %v9546
    %v9580 = vunpack.c.l.b16 %v9547
    %v9581 = vunpack.c.l.b16 %v9548
    %v9582 = vunpack.c.l.b16 %v9549
    %v9583 = vunpack.c.l.b16 %v9550
    %v9584 = vpack.c.b16 %v9569, %v9568
    %v9585 = vpack.c.b16 %v9571, %v9570
    %v9586 = vpack.c.b16 %v9573, %v9572
    %v9587 = vpack.c.b16 %v9575, %v9574
    %v9588 = vpack.c.b16 %v9577, %v9576
    %v9589 = vpack.c.b16 %v9579, %v9578
    %v9590 = vpack.c.b16 %v9581, %v9580
    %v9591 = vpack.c.b16 %v9583, %v9582
    %9600 = vmatpush.bf16.msra.mxu0 %v9591
    %9601 = vmatpush.bf16.msra.mxu0 %v9590
    %9602 = vmatpush.bf16.msra.mxu0 %v9589
    %9603 = vmatpush.bf16.msra.mxu0 %v9588
    %9604 = vmatpush.bf16.msra.mxu0 %v9587
    %9605 = vmatpush.bf16.msra.mxu0 %v9586
    %9606 = vmatpush.bf16.msra.mxu0 %v9585
    %9607 = vmatpush.bf16.msra.mxu0 %v9584
    %9608 = vmatmul.bf16.gmra.mxu0 %v9534
    %v9609 = vpop.f32.mrf.mxu0
    %v9610 = vadd.f32 %v9551, %v9609
    %v9611 = vpop.f32.mrf.mxu0
    %9612 = vdwg.mxu0
    %s9613 = scalar_lea.vmem [#allocation18], 48
    %9614 = vst [vmem:[%s9613] sm:$0xff] %v9610
    %s9615 = scalar_lea.vmem [#allocation7], 56
    %v9616 = vld [vmem:[%s9615] sm:$0xff]
    %9617 = vmax.xlane.f32.xlu0 %v9610
    %v9618 = vpop.xlane.xlu0 %9617
    %vm9619 = vcmp.eq.f32.partialorder %v9610, %v9618
    %v9620 = vsel %vm9619, %v658, 128
    %v9621 = vand.u32 %v9620, 65535
    %v9622 = vshra.s32 %v9620, 16
    %v9623 = vcvt.s32.f32 %v9621
    %v9624 = vcvt.s32.f32 %v9622
    %9625 = vmin.xlane.f32.xlu0 %v9624
    %v9626 = vpop.xlane.xlu0 %9625
    %vm9627 = vcmp.eq.f32.partialorder %v9624, %v9626
    %v9628 = vsel %vm9627, %v9623, inf
    %9629 = vmin.xlane.f32.xlu0 %v9628
    %v9630 = vpop.xlane.xlu0 %9629
    %v9631 = vcvt.f32.s32 %v9630
    %v9632 = vcvt.f32.s32 %v9626
    %v9633 = vshll.u32 %v9632, 16
    %v9634 = vadd.s32 %v9633, %v9631
    %vm9635 = vcmp.eq.s32.totalorder %v658, %v9634
    %v9636 = vsel %vm9635, 1, 0
    %v9637 = vcvt.s32.f32 %v9636
    %v9638 = vpack.c.bf16 %v9637, %v9637
    %v9639 = vld [vmem:[#allocation9] sm:$0xf]
    %v9640 = vld [vmem:[#allocation9 + $0x4] sm:$0xf]
    %v9641 = vld [vmem:[#allocation9 + $0x8] sm:$0xf]
    %v9642 = vld [vmem:[#allocation9 + $0xc] sm:$0xf]
    %v9643 = vld [vmem:[#allocation9 + $0x10] sm:$0xf]
    %v9644 = vld [vmem:[#allocation9 + $0x14] sm:$0xf]
    %v9645 = vld [vmem:[#allocation9 + $0x18] sm:$0xf]
    %v9646 = vld [vmem:[#allocation9 + $0x1c] sm:$0xf]
    %v9647 = vld [vmem:[#allocation9 + $0x20] sm:$0xf]
    %v9648 = vld [vmem:[#allocation9 + $0x24] sm:$0xf]
    %v9649 = vld [vmem:[#allocation9 + $0x28] sm:$0xf]
    %v9650 = vld [vmem:[#allocation9 + $0x2c] sm:$0xf]
    %v9651 = vld [vmem:[#allocation9 + $0x30] sm:$0xf]
    %v9652 = vld [vmem:[#allocation9 + $0x34] sm:$0xf]
    %v9653 = vld [vmem:[#allocation9 + $0x38] sm:$0xf]
    %v9654 = vld [vmem:[#allocation9 + $0x3c] sm:$0xf]
    %v9671 = vunpack.c.l.b16 %v9639
    %v9672 = vunpack.c.l.b16 %v9640
    %v9673 = vunpack.c.l.b16 %v9641
    %v9674 = vunpack.c.l.b16 %v9642
    %v9675 = vunpack.c.l.b16 %v9643
    %v9676 = vunpack.c.l.b16 %v9644
    %v9677 = vunpack.c.l.b16 %v9645
    %v9678 = vunpack.c.l.b16 %v9646
    %v9679 = vunpack.c.l.b16 %v9647
    %v9680 = vunpack.c.l.b16 %v9648
    %v9681 = vunpack.c.l.b16 %v9649
    %v9682 = vunpack.c.l.b16 %v9650
    %v9683 = vunpack.c.l.b16 %v9651
    %v9684 = vunpack.c.l.b16 %v9652
    %v9685 = vunpack.c.l.b16 %v9653
    %v9686 = vunpack.c.l.b16 %v9654
    %v9687 = vpack.c.b16 %v9672, %v9671
    %v9688 = vpack.c.b16 %v9674, %v9673
    %v9689 = vpack.c.b16 %v9676, %v9675
    %v9690 = vpack.c.b16 %v9678, %v9677
    %v9691 = vpack.c.b16 %v9680, %v9679
    %v9692 = vpack.c.b16 %v9682, %v9681
    %v9693 = vpack.c.b16 %v9684, %v9683
    %v9694 = vpack.c.b16 %v9686, %v9685
    %9703 = vmatpush.bf16.msra.mxu0 %v9694
    %9704 = vmatpush.bf16.msra.mxu0 %v9693
    %9705 = vmatpush.bf16.msra.mxu0 %v9692
    %9706 = vmatpush.bf16.msra.mxu0 %v9691
    %9707 = vmatpush.bf16.msra.mxu0 %v9690
    %9708 = vmatpush.bf16.msra.mxu0 %v9689
    %9709 = vmatpush.bf16.msra.mxu0 %v9688
    %9710 = vmatpush.bf16.msra.mxu0 %v9687
    %9711 = vmatmul.bf16.gmra.mxu0 %v9638
    %v9712 = vpop.f32.mrf.mxu0
    %v9713 = vadd.f32 0.0, %v9712
    %v9714 = vpop.f32.mrf.mxu0
    %9715 = vdwg.mxu0
    %s9716 = sld [smem:[#allocation2 + $0x6]]
    %s9717 = scvt.s32.f32 %s9716
    %v9718 = vstv %s9717
    %v9719 = vmul.f32 %v9718, %v9616
    %s9720 = ssub.f32 1.0, %s9717
    %v9721 = vstv %s9720
    %v9722 = vmul.f32 %v9721, %v9713
    %v9723 = vadd.f32 %v9719, %v9722
    %v9724 = vpack.c.bf16 %v9723, %v9723
    %v9725 = vld [vmem:[#allocation10] sm:$0xff]
    %v9726 = vld [vmem:[#allocation10 + $0x8] sm:$0xff]
    %v9727 = vld [vmem:[#allocation10 + $0x10] sm:$0xff]
    %v9728 = vld [vmem:[#allocation10 + $0x18] sm:$0xff]
    %v9729 = vld [vmem:[#allocation10 + $0x20] sm:$0xff]
    %v9730 = vld [vmem:[#allocation10 + $0x28] sm:$0xff]
    %v9731 = vld [vmem:[#allocation10 + $0x30] sm:$0xff]
    %v9732 = vld [vmem:[#allocation10 + $0x38] sm:$0xff]
    %v9733 = vld [vmem:[#allocation10 + $0x40] sm:$0xff]
    %v9734 = vld [vmem:[#allocation10 + $0x48] sm:$0xff]
    %v9735 = vld [vmem:[#allocation10 + $0x50] sm:$0xff]
    %v9736 = vld [vmem:[#allocation10 + $0x58] sm:$0xff]
    %v9737 = vld [vmem:[#allocation10 + $0x60] sm:$0xff]
    %v9738 = vld [vmem:[#allocation10 + $0x68] sm:$0xff]
    %v9739 = vld [vmem:[#allocation10 + $0x70] sm:$0xff]
    %v9740 = vld [vmem:[#allocation10 + $0x78] sm:$0xff]
    %v9741 = vld [vmem:[#allocation10 + $0x80] sm:$0xff]
    %v9742 = vld [vmem:[#allocation10 + $0x88] sm:$0xff]
    %v9743 = vld [vmem:[#allocation10 + $0x90] sm:$0xff]
    %v9744 = vld [vmem:[#allocation10 + $0x98] sm:$0xff]
    %v9745 = vld [vmem:[#allocation10 + $0xa0] sm:$0xff]
    %v9746 = vld [vmem:[#allocation10 + $0xa8] sm:$0xff]
    %v9747 = vld [vmem:[#allocation10 + $0xb0] sm:$0xff]
    %v9748 = vld [vmem:[#allocation10 + $0xb8] sm:$0xff]
    %v9749 = vld [vmem:[#allocation10 + $0xc0] sm:$0xff]
    %v9750 = vld [vmem:[#allocation10 + $0xc8] sm:$0xff]
    %v9751 = vld [vmem:[#allocation10 + $0xd0] sm:$0xff]
    %v9752 = vld [vmem:[#allocation10 + $0xd8] sm:$0xff]
    %v9753 = vld [vmem:[#allocation10 + $0xe0] sm:$0xff]
    %v9754 = vld [vmem:[#allocation10 + $0xe8] sm:$0xff]
    %v9755 = vld [vmem:[#allocation10 + $0xf0] sm:$0xff]
    %v9756 = vld [vmem:[#allocation10 + $0xf8] sm:$0xff]
    %v9757 = vld [vmem:[#allocation10 + $0x100] sm:$0xff]
    %v9758 = vld [vmem:[#allocation10 + $0x108] sm:$0xff]
    %v9759 = vld [vmem:[#allocation10 + $0x110] sm:$0xff]
    %v9760 = vld [vmem:[#allocation10 + $0x118] sm:$0xff]
    %v9761 = vld [vmem:[#allocation10 + $0x120] sm:$0xff]
    %v9762 = vld [vmem:[#allocation10 + $0x128] sm:$0xff]
    %v9763 = vld [vmem:[#allocation10 + $0x130] sm:$0xff]
    %v9764 = vld [vmem:[#allocation10 + $0x138] sm:$0xff]
    %v9765 = vld [vmem:[#allocation10 + $0x140] sm:$0xff]
    %v9766 = vld [vmem:[#allocation10 + $0x148] sm:$0xff]
    %v9767 = vld [vmem:[#allocation10 + $0x150] sm:$0xff]
    %v9768 = vld [vmem:[#allocation10 + $0x158] sm:$0xff]
    %v9769 = vld [vmem:[#allocation10 + $0x160] sm:$0xff]
    %v9770 = vld [vmem:[#allocation10 + $0x168] sm:$0xff]
    %v9771 = vld [vmem:[#allocation10 + $0x170] sm:$0xff]
    %v9772 = vld [vmem:[#allocation10 + $0x178] sm:$0xff]
    %v9773 = vld [vmem:[#allocation10 + $0x180] sm:$0xff]
    %v9774 = vld [vmem:[#allocation10 + $0x188] sm:$0xff]
    %v9775 = vld [vmem:[#allocation10 + $0x190] sm:$0xff]
    %v9776 = vld [vmem:[#allocation10 + $0x198] sm:$0xff]
    %v9777 = vld [vmem:[#allocation10 + $0x1a0] sm:$0xff]
    %v9778 = vld [vmem:[#allocation10 + $0x1a8] sm:$0xff]
    %v9779 = vld [vmem:[#allocation10 + $0x1b0] sm:$0xff]
    %v9780 = vld [vmem:[#allocation10 + $0x1b8] sm:$0xff]
    %v9781 = vld [vmem:[#allocation10 + $0x1c0] sm:$0xff]
    %v9782 = vld [vmem:[#allocation10 + $0x1c8] sm:$0xff]
    %v9783 = vld [vmem:[#allocation10 + $0x1d0] sm:$0xff]
    %v9784 = vld [vmem:[#allocation10 + $0x1d8] sm:$0xff]
    %v9785 = vld [vmem:[#allocation10 + $0x1e0] sm:$0xff]
    %v9786 = vld [vmem:[#allocation10 + $0x1e8] sm:$0xff]
    %v9787 = vld [vmem:[#allocation10 + $0x1f0] sm:$0xff]
    %v9788 = vld [vmem:[#allocation10 + $0x1f8] sm:$0xff]
    %v9789 = vld [vmem:[#allocation12] sm:$0xff]
    %v9790 = vld [vmem:[#allocation12 + $0x8] sm:$0xff]
    %v9791 = vld [vmem:[#allocation12 + $0x10] sm:$0xff]
    %v9792 = vld [vmem:[#allocation12 + $0x18] sm:$0xff]
    %v9857 = vunpack.c.l.b16 %v9725
    %v9858 = vunpack.c.h.b16 %v9725
    %v9859 = vunpack.c.l.b16 %v9726
    %v9860 = vunpack.c.h.b16 %v9726
    %v9861 = vunpack.c.l.b16 %v9727
    %v9862 = vunpack.c.h.b16 %v9727
    %v9863 = vunpack.c.l.b16 %v9728
    %v9864 = vunpack.c.h.b16 %v9728
    %v9865 = vunpack.c.l.b16 %v9729
    %v9866 = vunpack.c.h.b16 %v9729
    %v9867 = vunpack.c.l.b16 %v9730
    %v9868 = vunpack.c.h.b16 %v9730
    %v9869 = vunpack.c.l.b16 %v9731
    %v9870 = vunpack.c.h.b16 %v9731
    %v9871 = vunpack.c.l.b16 %v9732
    %v9872 = vunpack.c.h.b16 %v9732
    %v9873 = vunpack.c.l.b16 %v9733
    %v9874 = vunpack.c.h.b16 %v9733
    %v9875 = vunpack.c.l.b16 %v9734
    %v9876 = vunpack.c.h.b16 %v9734
    %v9877 = vunpack.c.l.b16 %v9735
    %v9878 = vunpack.c.h.b16 %v9735
    %v9879 = vunpack.c.l.b16 %v9736
    %v9880 = vunpack.c.h.b16 %v9736
    %v9881 = vunpack.c.l.b16 %v9737
    %v9882 = vunpack.c.h.b16 %v9737
    %v9883 = vunpack.c.l.b16 %v9738
    %v9884 = vunpack.c.h.b16 %v9738
    %v9885 = vunpack.c.l.b16 %v9739
    %v9886 = vunpack.c.h.b16 %v9739
    %v9887 = vunpack.c.l.b16 %v9740
    %v9888 = vunpack.c.h.b16 %v9740
    %v9889 = vunpack.c.l.b16 %v9741
    %v9890 = vunpack.c.h.b16 %v9741
    %v9891 = vunpack.c.l.b16 %v9742
    %v9892 = vunpack.c.h.b16 %v9742
    %v9893 = vunpack.c.l.b16 %v9743
    %v9894 = vunpack.c.h.b16 %v9743
    %v9895 = vunpack.c.l.b16 %v9744
    %v9896 = vunpack.c.h.b16 %v9744
    %v9897 = vunpack.c.l.b16 %v9745
    %v9898 = vunpack.c.h.b16 %v9745
    %v9899 = vunpack.c.l.b16 %v9746
    %v9900 = vunpack.c.h.b16 %v9746
    %v9901 = vunpack.c.l.b16 %v9747
    %v9902 = vunpack.c.h.b16 %v9747
    %v9903 = vunpack.c.l.b16 %v9748
    %v9904 = vunpack.c.h.b16 %v9748
    %v9905 = vunpack.c.l.b16 %v9749
    %v9906 = vunpack.c.h.b16 %v9749
    %v9907 = vunpack.c.l.b16 %v9750
    %v9908 = vunpack.c.h.b16 %v9750
    %v9909 = vunpack.c.l.b16 %v9751
    %v9910 = vunpack.c.h.b16 %v9751
    %v9911 = vunpack.c.l.b16 %v9752
    %v9912 = vunpack.c.h.b16 %v9752
    %v9913 = vunpack.c.l.b16 %v9753
    %v9914 = vunpack.c.h.b16 %v9753
    %v9915 = vunpack.c.l.b16 %v9754
    %v9916 = vunpack.c.h.b16 %v9754
    %v9917 = vunpack.c.l.b16 %v9755
    %v9918 = vunpack.c.h.b16 %v9755
    %v9919 = vunpack.c.l.b16 %v9756
    %v9920 = vunpack.c.h.b16 %v9756
    %v9921 = vunpack.c.l.b16 %v9757
    %v9922 = vunpack.c.h.b16 %v9757
    %v9923 = vunpack.c.l.b16 %v9758
    %v9924 = vunpack.c.h.b16 %v9758
    %v9925 = vunpack.c.l.b16 %v9759
    %v9926 = vunpack.c.h.b16 %v9759
    %v9927 = vunpack.c.l.b16 %v9760
    %v9928 = vunpack.c.h.b16 %v9760
    %v9929 = vunpack.c.l.b16 %v9761
    %v9930 = vunpack.c.h.b16 %v9761
    %v9931 = vunpack.c.l.b16 %v9762
    %v9932 = vunpack.c.h.b16 %v9762
    %v9933 = vunpack.c.l.b16 %v9763
    %v9934 = vunpack.c.h.b16 %v9763
    %v9935 = vunpack.c.l.b16 %v9764
    %v9936 = vunpack.c.h.b16 %v9764
    %v9937 = vunpack.c.l.b16 %v9765
    %v9938 = vunpack.c.h.b16 %v9765
    %v9939 = vunpack.c.l.b16 %v9766
    %v9940 = vunpack.c.h.b16 %v9766
    %v9941 = vunpack.c.l.b16 %v9767
    %v9942 = vunpack.c.h.b16 %v9767
    %v9943 = vunpack.c.l.b16 %v9768
    %v9944 = vunpack.c.h.b16 %v9768
    %v9945 = vunpack.c.l.b16 %v9769
    %v9946 = vunpack.c.h.b16 %v9769
    %v9947 = vunpack.c.l.b16 %v9770
    %v9948 = vunpack.c.h.b16 %v9770
    %v9949 = vunpack.c.l.b16 %v9771
    %v9950 = vunpack.c.h.b16 %v9771
    %v9951 = vunpack.c.l.b16 %v9772
    %v9952 = vunpack.c.h.b16 %v9772
    %v9953 = vunpack.c.l.b16 %v9773
    %v9954 = vunpack.c.h.b16 %v9773
    %v9955 = vunpack.c.l.b16 %v9774
    %v9956 = vunpack.c.h.b16 %v9774
    %v9957 = vunpack.c.l.b16 %v9775
    %v9958 = vunpack.c.h.b16 %v9775
    %v9959 = vunpack.c.l.b16 %v9776
    %v9960 = vunpack.c.h.b16 %v9776
    %v9961 = vunpack.c.l.b16 %v9777
    %v9962 = vunpack.c.h.b16 %v9777
    %v9963 = vunpack.c.l.b16 %v9778
    %v9964 = vunpack.c.h.b16 %v9778
    %v9965 = vunpack.c.l.b16 %v9779
    %v9966 = vunpack.c.h.b16 %v9779
    %v9967 = vunpack.c.l.b16 %v9780
    %v9968 = vunpack.c.h.b16 %v9780
    %v9969 = vunpack.c.l.b16 %v9781
    %v9970 = vunpack.c.h.b16 %v9781
    %v9971 = vunpack.c.l.b16 %v9782
    %v9972 = vunpack.c.h.b16 %v9782
    %v9973 = vunpack.c.l.b16 %v9783
    %v9974 = vunpack.c.h.b16 %v9783
    %v9975 = vunpack.c.l.b16 %v9784
    %v9976 = vunpack.c.h.b16 %v9784
    %v9977 = vunpack.c.l.b16 %v9785
    %v9978 = vunpack.c.h.b16 %v9785
    %v9979 = vunpack.c.l.b16 %v9786
    %v9980 = vunpack.c.h.b16 %v9786
    %v9981 = vunpack.c.l.b16 %v9787
    %v9982 = vunpack.c.h.b16 %v9787
    %v9983 = vunpack.c.l.b16 %v9788
    %v9984 = vunpack.c.h.b16 %v9788
    %v9985 = vpack.c.b16 %v9861, %v9857
    %v9986 = vpack.c.b16 %v9862, %v9858
    %v9987 = vpack.c.b16 %v9863, %v9859
    %v9988 = vpack.c.b16 %v9864, %v9860
    %v9989 = vpack.c.b16 %v9869, %v9865
    %v9990 = vpack.c.b16 %v9870, %v9866
    %v9991 = vpack.c.b16 %v9871, %v9867
    %v9992 = vpack.c.b16 %v9872, %v9868
    %v9993 = vpack.c.b16 %v9877, %v9873
    %v9994 = vpack.c.b16 %v9878, %v9874
    %v9995 = vpack.c.b16 %v9879, %v9875
    %v9996 = vpack.c.b16 %v9880, %v9876
    %v9997 = vpack.c.b16 %v9885, %v9881
    %v9998 = vpack.c.b16 %v9886, %v9882
    %v9999 = vpack.c.b16 %v9887, %v9883
    %v10000 = vpack.c.b16 %v9888, %v9884
    %v10001 = vpack.c.b16 %v9893, %v9889
    %v10002 = vpack.c.b16 %v9894, %v9890
    %v10003 = vpack.c.b16 %v9895, %v9891
    %v10004 = vpack.c.b16 %v9896, %v9892
    %v10005 = vpack.c.b16 %v9901, %v9897
    %v10006 = vpack.c.b16 %v9902, %v9898
    %v10007 = vpack.c.b16 %v9903, %v9899
    %v10008 = vpack.c.b16 %v9904, %v9900
    %v10009 = vpack.c.b16 %v9909, %v9905
    %v10010 = vpack.c.b16 %v9910, %v9906
    %v10011 = vpack.c.b16 %v9911, %v9907
    %v10012 = vpack.c.b16 %v9912, %v9908
    %v10013 = vpack.c.b16 %v9917, %v9913
    %v10014 = vpack.c.b16 %v9918, %v9914
    %v10015 = vpack.c.b16 %v9919, %v9915
    %v10016 = vpack.c.b16 %v9920, %v9916
    %v10017 = vpack.c.b16 %v9925, %v9921
    %v10018 = vpack.c.b16 %v9926, %v9922
    %v10019 = vpack.c.b16 %v9927, %v9923
    %v10020 = vpack.c.b16 %v9928, %v9924
    %v10021 = vpack.c.b16 %v9933, %v9929
    %v10022 = vpack.c.b16 %v9934, %v9930
    %v10023 = vpack.c.b16 %v9935, %v9931
    %v10024 = vpack.c.b16 %v9936, %v9932
    %v10025 = vpack.c.b16 %v9941, %v9937
    %v10026 = vpack.c.b16 %v9942, %v9938
    %v10027 = vpack.c.b16 %v9943, %v9939
    %v10028 = vpack.c.b16 %v9944, %v9940
    %v10029 = vpack.c.b16 %v9949, %v9945
    %v10030 = vpack.c.b16 %v9950, %v9946
    %v10031 = vpack.c.b16 %v9951, %v9947
    %v10032 = vpack.c.b16 %v9952, %v9948
    %v10033 = vpack.c.b16 %v9957, %v9953
    %v10034 = vpack.c.b16 %v9958, %v9954
    %v10035 = vpack.c.b16 %v9959, %v9955
    %v10036 = vpack.c.b16 %v9960, %v9956
    %v10037 = vpack.c.b16 %v9965, %v9961
    %v10038 = vpack.c.b16 %v9966, %v9962
    %v10039 = vpack.c.b16 %v9967, %v9963
    %v10040 = vpack.c.b16 %v9968, %v9964
    %v10041 = vpack.c.b16 %v9973, %v9969
    %v10042 = vpack.c.b16 %v9974, %v9970
    %v10043 = vpack.c.b16 %v9975, %v9971
    %v10044 = vpack.c.b16 %v9976, %v9972
    %v10045 = vpack.c.b16 %v9981, %v9977
    %v10046 = vpack.c.b16 %v9982, %v9978
    %v10047 = vpack.c.b16 %v9983, %v9979
    %v10048 = vpack.c.b16 %v9984, %v9980
    %10113 = vmatpush.bf16.msra.mxu0 %v10013
    %10114 = vmatpush.bf16.msra.mxu0 %v10009
    %10115 = vmatpush.bf16.msra.mxu0 %v10005
    %10116 = vmatpush.bf16.msra.mxu0 %v10001
    %10117 = vmatpush.bf16.msra.mxu0 %v9997
    %10118 = vmatpush.bf16.msra.mxu0 %v9993
    %10119 = vmatpush.bf16.msra.mxu0 %v9989
    %10120 = vmatpush.bf16.msra.mxu0 %v9985
    %10121 = vmatmul.bf16.gmra.mxu0 %v9724
    %v10122 = vpop.f32.mrf.mxu0
    %v10123 = vadd.f32 %v9789, %v10122
    %v10124 = vpop.f32.mrf.mxu0
    %10125 = vdwg.mxu0
    %10126 = vmatpush.bf16.msra.mxu0 %v10045
    %10127 = vmatpush.bf16.msra.mxu0 %v10041
    %10128 = vmatpush.bf16.msra.mxu0 %v10037
    %10129 = vmatpush.bf16.msra.mxu0 %v10033
    %10130 = vmatpush.bf16.msra.mxu0 %v10029
    %10131 = vmatpush.bf16.msra.mxu0 %v10025
    %10132 = vmatpush.bf16.msra.mxu0 %v10021
    %10133 = vmatpush.bf16.msra.mxu0 %v10017
    %10134 = vmatmul.bf16.gmra.mxu0 %v8981
    %v10135 = vpop.f32.mrf.mxu0
    %v10136 = vadd.f32 %v10123, %v10135
    %v10137 = vpop.f32.mrf.mxu0
    %10138 = vdwg.mxu0
    %10139 = vmatpush.bf16.msra.mxu0 %v10014
    %10140 = vmatpush.bf16.msra.mxu0 %v10010
    %10141 = vmatpush.bf16.msra.mxu0 %v10006
    %10142 = vmatpush.bf16.msra.mxu0 %v10002
    %10143 = vmatpush.bf16.msra.mxu0 %v9998
    %10144 = vmatpush.bf16.msra.mxu0 %v9994
    %10145 = vmatpush.bf16.msra.mxu0 %v9990
    %10146 = vmatpush.bf16.msra.mxu0 %v9986
    %10147 = vmatmul.bf16.gmra.mxu0 %v9724
    %v10148 = vpop.f32.mrf.mxu0
    %v10149 = vadd.f32 %v9790, %v10148
    %v10150 = vpop.f32.mrf.mxu0
    %10151 = vdwg.mxu0
    %10152 = vmatpush.bf16.msra.mxu0 %v10046
    %10153 = vmatpush.bf16.msra.mxu0 %v10042
    %10154 = vmatpush.bf16.msra.mxu0 %v10038
    %10155 = vmatpush.bf16.msra.mxu0 %v10034
    %10156 = vmatpush.bf16.msra.mxu0 %v10030
    %10157 = vmatpush.bf16.msra.mxu0 %v10026
    %10158 = vmatpush.bf16.msra.mxu0 %v10022
    %10159 = vmatpush.bf16.msra.mxu0 %v10018
    %10160 = vmatmul.bf16.gmra.mxu0 %v8981
    %v10161 = vpop.f32.mrf.mxu0
    %v10162 = vadd.f32 %v10149, %v10161
    %v10163 = vpop.f32.mrf.mxu0
    %10164 = vdwg.mxu0
    %10165 = vmatpush.bf16.msra.mxu0 %v10015
    %10166 = vmatpush.bf16.msra.mxu0 %v10011
    %10167 = vmatpush.bf16.msra.mxu0 %v10007
    %10168 = vmatpush.bf16.msra.mxu0 %v10003
    %10169 = vmatpush.bf16.msra.mxu0 %v9999
    %10170 = vmatpush.bf16.msra.mxu0 %v9995
    %10171 = vmatpush.bf16.msra.mxu0 %v9991
    %10172 = vmatpush.bf16.msra.mxu0 %v9987
    %10173 = vmatmul.bf16.gmra.mxu0 %v9724
    %v10174 = vpop.f32.mrf.mxu0
    %v10175 = vadd.f32 %v9791, %v10174
    %v10176 = vpop.f32.mrf.mxu0
    %10177 = vdwg.mxu0
    %10178 = vmatpush.bf16.msra.mxu0 %v10047
    %10179 = vmatpush.bf16.msra.mxu0 %v10043
    %10180 = vmatpush.bf16.msra.mxu0 %v10039
    %10181 = vmatpush.bf16.msra.mxu0 %v10035
    %10182 = vmatpush.bf16.msra.mxu0 %v10031
    %10183 = vmatpush.bf16.msra.mxu0 %v10027
    %10184 = vmatpush.bf16.msra.mxu0 %v10023
    %10185 = vmatpush.bf16.msra.mxu0 %v10019
    %10186 = vmatmul.bf16.gmra.mxu0 %v8981
    %v10187 = vpop.f32.mrf.mxu0
    %v10188 = vadd.f32 %v10175, %v10187
    %v10189 = vpop.f32.mrf.mxu0
    %10190 = vdwg.mxu0
    %10191 = vmatpush.bf16.msra.mxu0 %v10016
    %10192 = vmatpush.bf16.msra.mxu0 %v10012
    %10193 = vmatpush.bf16.msra.mxu0 %v10008
    %10194 = vmatpush.bf16.msra.mxu0 %v10004
    %10195 = vmatpush.bf16.msra.mxu0 %v10000
    %10196 = vmatpush.bf16.msra.mxu0 %v9996
    %10197 = vmatpush.bf16.msra.mxu0 %v9992
    %10198 = vmatpush.bf16.msra.mxu0 %v9988
    %10199 = vmatmul.bf16.gmra.mxu0 %v9724
    %v10200 = vpop.f32.mrf.mxu0
    %v10201 = vadd.f32 %v9792, %v10200
    %v10202 = vpop.f32.mrf.mxu0
    %10203 = vdwg.mxu0
    %10204 = vmatpush.bf16.msra.mxu0 %v10048
    %10205 = vmatpush.bf16.msra.mxu0 %v10044
    %10206 = vmatpush.bf16.msra.mxu0 %v10040
    %10207 = vmatpush.bf16.msra.mxu0 %v10036
    %10208 = vmatpush.bf16.msra.mxu0 %v10032
    %10209 = vmatpush.bf16.msra.mxu0 %v10028
    %10210 = vmatpush.bf16.msra.mxu0 %v10024
    %10211 = vmatpush.bf16.msra.mxu0 %v10020
    %10212 = vmatmul.bf16.gmra.mxu0 %v8981
    %v10213 = vpop.f32.mrf.mxu0
    %v10214 = vadd.f32 %v10201, %v10213
    %v10215 = vpop.f32.mrf.mxu0
    %10216 = vdwg.mxu0
    %v10217 = vsub.f32 0.0, %v10136
    %v10218 = vmul.f32 %v10217, 1.442695
    %v10219 = vpow.pop %v10218
    %v10220 = vadd.f32 %v10219, 1.0
    %v10221 = vrcp.pop %v10220
    %v10222 = vmul.f32 %v10220, %v10221
    %v10223 = vsub.f32 1.0, %v10222
    %v10224 = vmul.f32 %v10221, %v10223
    %v10225 = vadd.f32 %v10221, %v10224
    %vm10226 = vweird.f32 %v10220
    %vm10227 = vweird.f32 %v10221
    %vm10228 = vmor %vm10226, %vm10227
    %v10229 = vsel %vm10228, %v10221, %v10225
    %v10230 = vand.u32 2147483647, %v10220
    %vm10231 = vcmp.eq.f32.partialorder %v10230, 8.507059e+37
    %v10232 = vand.u32 %v10220, 2147483648
    %v10233 = vor.u32 1.1754944e-38, %v10232
    %v10234 = vsel %vm10231, %v10233, %v10229
    %v10235 = vsub.f32 0.0, %v10162
    %v10236 = vmul.f32 %v10235, 1.442695
    %v10237 = vpow.pop %v10236
    %v10238 = vadd.f32 %v10237, 1.0
    %v10239 = vrcp.pop %v10238
    %v10240 = vmul.f32 %v10238, %v10239
    %v10241 = vsub.f32 1.0, %v10240
    %v10242 = vmul.f32 %v10239, %v10241
    %v10243 = vadd.f32 %v10239, %v10242
    %vm10244 = vweird.f32 %v10238
    %vm10245 = vweird.f32 %v10239
    %vm10246 = vmor %vm10244, %vm10245
    %v10247 = vsel %vm10246, %v10239, %v10243
    %v10248 = vand.u32 2147483647, %v10238
    %vm10249 = vcmp.eq.f32.partialorder %v10248, 8.507059e+37
    %v10250 = vand.u32 %v10238, 2147483648
    %v10251 = vor.u32 1.1754944e-38, %v10250
    %v10252 = vsel %vm10249, %v10251, %v10247
    %v10253 = vtanh.pop %v10188
    %v10254 = vsub.f32 0.0, %v10214
    %v10255 = vmul.f32 %v10254, 1.442695
    %v10256 = vpow.pop %v10255
    %v10257 = vadd.f32 %v10256, 1.0
    %v10258 = vrcp.pop %v10257
    %v10259 = vmul.f32 %v10257, %v10258
    %v10260 = vsub.f32 1.0, %v10259
    %v10261 = vmul.f32 %v10258, %v10260
    %v10262 = vadd.f32 %v10258, %v10261
    %vm10263 = vweird.f32 %v10257
    %vm10264 = vweird.f32 %v10258
    %vm10265 = vmor %vm10263, %vm10264
    %v10266 = vsel %vm10265, %v10258, %v10262
    %v10267 = vand.u32 2147483647, %v10257
    %vm10268 = vcmp.eq.f32.partialorder %v10267, 8.507059e+37
    %v10269 = vand.u32 %v10257, 2147483648
    %v10270 = vor.u32 1.1754944e-38, %v10269
    %v10271 = vsel %vm10268, %v10270, %v10266
    %v10272 = vmul.f32 %v10252, %v8978
    %v10273 = vmul.f32 %v10234, %v10253
    %v10274 = vadd.f32 %v10272, %v10273
    %v10275 = vtanh.pop %v10274
    %v10276 = vmul.f32 %v10271, %v10275
    %v10277 = vpack.c.bf16 %v10276, %v10276
    %v10278 = vld [vmem:[#allocation13] sm:$0xff]
    %v10279 = vld [vmem:[#allocation13 + $0x8] sm:$0xff]
    %v10280 = vld [vmem:[#allocation13 + $0x10] sm:$0xff]
    %v10281 = vld [vmem:[#allocation13 + $0x18] sm:$0xff]
    %v10282 = vld [vmem:[#allocation13 + $0x20] sm:$0xff]
    %v10283 = vld [vmem:[#allocation13 + $0x28] sm:$0xff]
    %v10284 = vld [vmem:[#allocation13 + $0x30] sm:$0xff]
    %v10285 = vld [vmem:[#allocation13 + $0x38] sm:$0xff]
    %v10286 = vld [vmem:[#allocation13 + $0x40] sm:$0xff]
    %v10287 = vld [vmem:[#allocation13 + $0x48] sm:$0xff]
    %v10288 = vld [vmem:[#allocation13 + $0x50] sm:$0xff]
    %v10289 = vld [vmem:[#allocation13 + $0x58] sm:$0xff]
    %v10290 = vld [vmem:[#allocation13 + $0x60] sm:$0xff]
    %v10291 = vld [vmem:[#allocation13 + $0x68] sm:$0xff]
    %v10292 = vld [vmem:[#allocation13 + $0x70] sm:$0xff]
    %v10293 = vld [vmem:[#allocation13 + $0x78] sm:$0xff]
    %v10294 = vld [vmem:[#allocation13 + $0x80] sm:$0xff]
    %v10295 = vld [vmem:[#allocation13 + $0x88] sm:$0xff]
    %v10296 = vld [vmem:[#allocation13 + $0x90] sm:$0xff]
    %v10297 = vld [vmem:[#allocation13 + $0x98] sm:$0xff]
    %v10298 = vld [vmem:[#allocation13 + $0xa0] sm:$0xff]
    %v10299 = vld [vmem:[#allocation13 + $0xa8] sm:$0xff]
    %v10300 = vld [vmem:[#allocation13 + $0xb0] sm:$0xff]
    %v10301 = vld [vmem:[#allocation13 + $0xb8] sm:$0xff]
    %v10302 = vld [vmem:[#allocation13 + $0xc0] sm:$0xff]
    %v10303 = vld [vmem:[#allocation13 + $0xc8] sm:$0xff]
    %v10304 = vld [vmem:[#allocation13 + $0xd0] sm:$0xff]
    %v10305 = vld [vmem:[#allocation13 + $0xd8] sm:$0xff]
    %v10306 = vld [vmem:[#allocation13 + $0xe0] sm:$0xff]
    %v10307 = vld [vmem:[#allocation13 + $0xe8] sm:$0xff]
    %v10308 = vld [vmem:[#allocation13 + $0xf0] sm:$0xff]
    %v10309 = vld [vmem:[#allocation13 + $0xf8] sm:$0xff]
    %v10310 = vld [vmem:[#allocation13 + $0x100] sm:$0xff]
    %v10311 = vld [vmem:[#allocation13 + $0x108] sm:$0xff]
    %v10312 = vld [vmem:[#allocation13 + $0x110] sm:$0xff]
    %v10313 = vld [vmem:[#allocation13 + $0x118] sm:$0xff]
    %v10314 = vld [vmem:[#allocation13 + $0x120] sm:$0xff]
    %v10315 = vld [vmem:[#allocation13 + $0x128] sm:$0xff]
    %v10316 = vld [vmem:[#allocation13 + $0x130] sm:$0xff]
    %v10317 = vld [vmem:[#allocation13 + $0x138] sm:$0xff]
    %v10318 = vld [vmem:[#allocation13 + $0x140] sm:$0xff]
    %v10319 = vld [vmem:[#allocation13 + $0x148] sm:$0xff]
    %v10320 = vld [vmem:[#allocation13 + $0x150] sm:$0xff]
    %v10321 = vld [vmem:[#allocation13 + $0x158] sm:$0xff]
    %v10322 = vld [vmem:[#allocation13 + $0x160] sm:$0xff]
    %v10323 = vld [vmem:[#allocation13 + $0x168] sm:$0xff]
    %v10324 = vld [vmem:[#allocation13 + $0x170] sm:$0xff]
    %v10325 = vld [vmem:[#allocation13 + $0x178] sm:$0xff]
    %v10326 = vld [vmem:[#allocation13 + $0x180] sm:$0xff]
    %v10327 = vld [vmem:[#allocation13 + $0x188] sm:$0xff]
    %v10328 = vld [vmem:[#allocation13 + $0x190] sm:$0xff]
    %v10329 = vld [vmem:[#allocation13 + $0x198] sm:$0xff]
    %v10330 = vld [vmem:[#allocation13 + $0x1a0] sm:$0xff]
    %v10331 = vld [vmem:[#allocation13 + $0x1a8] sm:$0xff]
    %v10332 = vld [vmem:[#allocation13 + $0x1b0] sm:$0xff]
    %v10333 = vld [vmem:[#allocation13 + $0x1b8] sm:$0xff]
    %v10334 = vld [vmem:[#allocation13 + $0x1c0] sm:$0xff]
    %v10335 = vld [vmem:[#allocation13 + $0x1c8] sm:$0xff]
    %v10336 = vld [vmem:[#allocation13 + $0x1d0] sm:$0xff]
    %v10337 = vld [vmem:[#allocation13 + $0x1d8] sm:$0xff]
    %v10338 = vld [vmem:[#allocation13 + $0x1e0] sm:$0xff]
    %v10339 = vld [vmem:[#allocation13 + $0x1e8] sm:$0xff]
    %v10340 = vld [vmem:[#allocation13 + $0x1f0] sm:$0xff]
    %v10341 = vld [vmem:[#allocation13 + $0x1f8] sm:$0xff]
    %v10342 = vld [vmem:[#allocation15] sm:$0xff]
    %v10343 = vld [vmem:[#allocation15 + $0x8] sm:$0xff]
    %v10344 = vld [vmem:[#allocation15 + $0x10] sm:$0xff]
    %v10345 = vld [vmem:[#allocation15 + $0x18] sm:$0xff]
    %v10410 = vunpack.c.l.b16 %v10278
    %v10411 = vunpack.c.h.b16 %v10278
    %v10412 = vunpack.c.l.b16 %v10279
    %v10413 = vunpack.c.h.b16 %v10279
    %v10414 = vunpack.c.l.b16 %v10280
    %v10415 = vunpack.c.h.b16 %v10280
    %v10416 = vunpack.c.l.b16 %v10281
    %v10417 = vunpack.c.h.b16 %v10281
    %v10418 = vunpack.c.l.b16 %v10282
    %v10419 = vunpack.c.h.b16 %v10282
    %v10420 = vunpack.c.l.b16 %v10283
    %v10421 = vunpack.c.h.b16 %v10283
    %v10422 = vunpack.c.l.b16 %v10284
    %v10423 = vunpack.c.h.b16 %v10284
    %v10424 = vunpack.c.l.b16 %v10285
    %v10425 = vunpack.c.h.b16 %v10285
    %v10426 = vunpack.c.l.b16 %v10286
    %v10427 = vunpack.c.h.b16 %v10286
    %v10428 = vunpack.c.l.b16 %v10287
    %v10429 = vunpack.c.h.b16 %v10287
    %v10430 = vunpack.c.l.b16 %v10288
    %v10431 = vunpack.c.h.b16 %v10288
    %v10432 = vunpack.c.l.b16 %v10289
    %v10433 = vunpack.c.h.b16 %v10289
    %v10434 = vunpack.c.l.b16 %v10290
    %v10435 = vunpack.c.h.b16 %v10290
    %v10436 = vunpack.c.l.b16 %v10291
    %v10437 = vunpack.c.h.b16 %v10291
    %v10438 = vunpack.c.l.b16 %v10292
    %v10439 = vunpack.c.h.b16 %v10292
    %v10440 = vunpack.c.l.b16 %v10293
    %v10441 = vunpack.c.h.b16 %v10293
    %v10442 = vunpack.c.l.b16 %v10294
    %v10443 = vunpack.c.h.b16 %v10294
    %v10444 = vunpack.c.l.b16 %v10295
    %v10445 = vunpack.c.h.b16 %v10295
    %v10446 = vunpack.c.l.b16 %v10296
    %v10447 = vunpack.c.h.b16 %v10296
    %v10448 = vunpack.c.l.b16 %v10297
    %v10449 = vunpack.c.h.b16 %v10297
    %v10450 = vunpack.c.l.b16 %v10298
    %v10451 = vunpack.c.h.b16 %v10298
    %v10452 = vunpack.c.l.b16 %v10299
    %v10453 = vunpack.c.h.b16 %v10299
    %v10454 = vunpack.c.l.b16 %v10300
    %v10455 = vunpack.c.h.b16 %v10300
    %v10456 = vunpack.c.l.b16 %v10301
    %v10457 = vunpack.c.h.b16 %v10301
    %v10458 = vunpack.c.l.b16 %v10302
    %v10459 = vunpack.c.h.b16 %v10302
    %v10460 = vunpack.c.l.b16 %v10303
    %v10461 = vunpack.c.h.b16 %v10303
    %v10462 = vunpack.c.l.b16 %v10304
    %v10463 = vunpack.c.h.b16 %v10304
    %v10464 = vunpack.c.l.b16 %v10305
    %v10465 = vunpack.c.h.b16 %v10305
    %v10466 = vunpack.c.l.b16 %v10306
    %v10467 = vunpack.c.h.b16 %v10306
    %v10468 = vunpack.c.l.b16 %v10307
    %v10469 = vunpack.c.h.b16 %v10307
    %v10470 = vunpack.c.l.b16 %v10308
    %v10471 = vunpack.c.h.b16 %v10308
    %v10472 = vunpack.c.l.b16 %v10309
    %v10473 = vunpack.c.h.b16 %v10309
    %v10474 = vunpack.c.l.b16 %v10310
    %v10475 = vunpack.c.h.b16 %v10310
    %v10476 = vunpack.c.l.b16 %v10311
    %v10477 = vunpack.c.h.b16 %v10311
    %v10478 = vunpack.c.l.b16 %v10312
    %v10479 = vunpack.c.h.b16 %v10312
    %v10480 = vunpack.c.l.b16 %v10313
    %v10481 = vunpack.c.h.b16 %v10313
    %v10482 = vunpack.c.l.b16 %v10314
    %v10483 = vunpack.c.h.b16 %v10314
    %v10484 = vunpack.c.l.b16 %v10315
    %v10485 = vunpack.c.h.b16 %v10315
    %v10486 = vunpack.c.l.b16 %v10316
    %v10487 = vunpack.c.h.b16 %v10316
    %v10488 = vunpack.c.l.b16 %v10317
    %v10489 = vunpack.c.h.b16 %v10317
    %v10490 = vunpack.c.l.b16 %v10318
    %v10491 = vunpack.c.h.b16 %v10318
    %v10492 = vunpack.c.l.b16 %v10319
    %v10493 = vunpack.c.h.b16 %v10319
    %v10494 = vunpack.c.l.b16 %v10320
    %v10495 = vunpack.c.h.b16 %v10320
    %v10496 = vunpack.c.l.b16 %v10321
    %v10497 = vunpack.c.h.b16 %v10321
    %v10498 = vunpack.c.l.b16 %v10322
    %v10499 = vunpack.c.h.b16 %v10322
    %v10500 = vunpack.c.l.b16 %v10323
    %v10501 = vunpack.c.h.b16 %v10323
    %v10502 = vunpack.c.l.b16 %v10324
    %v10503 = vunpack.c.h.b16 %v10324
    %v10504 = vunpack.c.l.b16 %v10325
    %v10505 = vunpack.c.h.b16 %v10325
    %v10506 = vunpack.c.l.b16 %v10326
    %v10507 = vunpack.c.h.b16 %v10326
    %v10508 = vunpack.c.l.b16 %v10327
    %v10509 = vunpack.c.h.b16 %v10327
    %v10510 = vunpack.c.l.b16 %v10328
    %v10511 = vunpack.c.h.b16 %v10328
    %v10512 = vunpack.c.l.b16 %v10329
    %v10513 = vunpack.c.h.b16 %v10329
    %v10514 = vunpack.c.l.b16 %v10330
    %v10515 = vunpack.c.h.b16 %v10330
    %v10516 = vunpack.c.l.b16 %v10331
    %v10517 = vunpack.c.h.b16 %v10331
    %v10518 = vunpack.c.l.b16 %v10332
    %v10519 = vunpack.c.h.b16 %v10332
    %v10520 = vunpack.c.l.b16 %v10333
    %v10521 = vunpack.c.h.b16 %v10333
    %v10522 = vunpack.c.l.b16 %v10334
    %v10523 = vunpack.c.h.b16 %v10334
    %v10524 = vunpack.c.l.b16 %v10335
    %v10525 = vunpack.c.h.b16 %v10335
    %v10526 = vunpack.c.l.b16 %v10336
    %v10527 = vunpack.c.h.b16 %v10336
    %v10528 = vunpack.c.l.b16 %v10337
    %v10529 = vunpack.c.h.b16 %v10337
    %v10530 = vunpack.c.l.b16 %v10338
    %v10531 = vunpack.c.h.b16 %v10338
    %v10532 = vunpack.c.l.b16 %v10339
    %v10533 = vunpack.c.h.b16 %v10339
    %v10534 = vunpack.c.l.b16 %v10340
    %v10535 = vunpack.c.h.b16 %v10340
    %v10536 = vunpack.c.l.b16 %v10341
    %v10537 = vunpack.c.h.b16 %v10341
    %v10538 = vpack.c.b16 %v10414, %v10410
    %v10539 = vpack.c.b16 %v10415, %v10411
    %v10540 = vpack.c.b16 %v10416, %v10412
    %v10541 = vpack.c.b16 %v10417, %v10413
    %v10542 = vpack.c.b16 %v10422, %v10418
    %v10543 = vpack.c.b16 %v10423, %v10419
    %v10544 = vpack.c.b16 %v10424, %v10420
    %v10545 = vpack.c.b16 %v10425, %v10421
    %v10546 = vpack.c.b16 %v10430, %v10426
    %v10547 = vpack.c.b16 %v10431, %v10427
    %v10548 = vpack.c.b16 %v10432, %v10428
    %v10549 = vpack.c.b16 %v10433, %v10429
    %v10550 = vpack.c.b16 %v10438, %v10434
    %v10551 = vpack.c.b16 %v10439, %v10435
    %v10552 = vpack.c.b16 %v10440, %v10436
    %v10553 = vpack.c.b16 %v10441, %v10437
    %v10554 = vpack.c.b16 %v10446, %v10442
    %v10555 = vpack.c.b16 %v10447, %v10443
    %v10556 = vpack.c.b16 %v10448, %v10444
    %v10557 = vpack.c.b16 %v10449, %v10445
    %v10558 = vpack.c.b16 %v10454, %v10450
    %v10559 = vpack.c.b16 %v10455, %v10451
    %v10560 = vpack.c.b16 %v10456, %v10452
    %v10561 = vpack.c.b16 %v10457, %v10453
    %v10562 = vpack.c.b16 %v10462, %v10458
    %v10563 = vpack.c.b16 %v10463, %v10459
    %v10564 = vpack.c.b16 %v10464, %v10460
    %v10565 = vpack.c.b16 %v10465, %v10461
    %v10566 = vpack.c.b16 %v10470, %v10466
    %v10567 = vpack.c.b16 %v10471, %v10467
    %v10568 = vpack.c.b16 %v10472, %v10468
    %v10569 = vpack.c.b16 %v10473, %v10469
    %v10570 = vpack.c.b16 %v10478, %v10474
    %v10571 = vpack.c.b16 %v10479, %v10475
    %v10572 = vpack.c.b16 %v10480, %v10476
    %v10573 = vpack.c.b16 %v10481, %v10477
    %v10574 = vpack.c.b16 %v10486, %v10482
    %v10575 = vpack.c.b16 %v10487, %v10483
    %v10576 = vpack.c.b16 %v10488, %v10484
    %v10577 = vpack.c.b16 %v10489, %v10485
    %v10578 = vpack.c.b16 %v10494, %v10490
    %v10579 = vpack.c.b16 %v10495, %v10491
    %v10580 = vpack.c.b16 %v10496, %v10492
    %v10581 = vpack.c.b16 %v10497, %v10493
    %v10582 = vpack.c.b16 %v10502, %v10498
    %v10583 = vpack.c.b16 %v10503, %v10499
    %v10584 = vpack.c.b16 %v10504, %v10500
    %v10585 = vpack.c.b16 %v10505, %v10501
    %v10586 = vpack.c.b16 %v10510, %v10506
    %v10587 = vpack.c.b16 %v10511, %v10507
    %v10588 = vpack.c.b16 %v10512, %v10508
    %v10589 = vpack.c.b16 %v10513, %v10509
    %v10590 = vpack.c.b16 %v10518, %v10514
    %v10591 = vpack.c.b16 %v10519, %v10515
    %v10592 = vpack.c.b16 %v10520, %v10516
    %v10593 = vpack.c.b16 %v10521, %v10517
    %v10594 = vpack.c.b16 %v10526, %v10522
    %v10595 = vpack.c.b16 %v10527, %v10523
    %v10596 = vpack.c.b16 %v10528, %v10524
    %v10597 = vpack.c.b16 %v10529, %v10525
    %v10598 = vpack.c.b16 %v10534, %v10530
    %v10599 = vpack.c.b16 %v10535, %v10531
    %v10600 = vpack.c.b16 %v10536, %v10532
    %v10601 = vpack.c.b16 %v10537, %v10533
    %10666 = vmatpush.bf16.msra.mxu0 %v10566
    %10667 = vmatpush.bf16.msra.mxu0 %v10562
    %10668 = vmatpush.bf16.msra.mxu0 %v10558
    %10669 = vmatpush.bf16.msra.mxu0 %v10554
    %10670 = vmatpush.bf16.msra.mxu0 %v10550
    %10671 = vmatpush.bf16.msra.mxu0 %v10546
    %10672 = vmatpush.bf16.msra.mxu0 %v10542
    %10673 = vmatpush.bf16.msra.mxu0 %v10538
    %10674 = vmatmul.bf16.gmra.mxu0 %v10277
    %v10675 = vpop.f32.mrf.mxu0
    %v10676 = vadd.f32 %v10342, %v10675
    %v10677 = vpop.f32.mrf.mxu0
    %10678 = vdwg.mxu0
    %10679 = vmatpush.bf16.msra.mxu0 %v10598
    %10680 = vmatpush.bf16.msra.mxu0 %v10594
    %10681 = vmatpush.bf16.msra.mxu0 %v10590
    %10682 = vmatpush.bf16.msra.mxu0 %v10586
    %10683 = vmatpush.bf16.msra.mxu0 %v10582
    %10684 = vmatpush.bf16.msra.mxu0 %v10578
    %10685 = vmatpush.bf16.msra.mxu0 %v10574
    %10686 = vmatpush.bf16.msra.mxu0 %v10570
    %10687 = vmatmul.bf16.gmra.mxu0 %v9534
    %v10688 = vpop.f32.mrf.mxu0
    %v10689 = vadd.f32 %v10676, %v10688
    %v10690 = vpop.f32.mrf.mxu0
    %10691 = vdwg.mxu0
    %10692 = vmatpush.bf16.msra.mxu0 %v10567
    %10693 = vmatpush.bf16.msra.mxu0 %v10563
    %10694 = vmatpush.bf16.msra.mxu0 %v10559
    %10695 = vmatpush.bf16.msra.mxu0 %v10555
    %10696 = vmatpush.bf16.msra.mxu0 %v10551
    %10697 = vmatpush.bf16.msra.mxu0 %v10547
    %10698 = vmatpush.bf16.msra.mxu0 %v10543
    %10699 = vmatpush.bf16.msra.mxu0 %v10539
    %10700 = vmatmul.bf16.gmra.mxu0 %v10277
    %v10701 = vpop.f32.mrf.mxu0
    %v10702 = vadd.f32 %v10343, %v10701
    %v10703 = vpop.f32.mrf.mxu0
    %10704 = vdwg.mxu0
    %10705 = vmatpush.bf16.msra.mxu0 %v10599
    %10706 = vmatpush.bf16.msra.mxu0 %v10595
    %10707 = vmatpush.bf16.msra.mxu0 %v10591
    %10708 = vmatpush.bf16.msra.mxu0 %v10587
    %10709 = vmatpush.bf16.msra.mxu0 %v10583
    %10710 = vmatpush.bf16.msra.mxu0 %v10579
    %10711 = vmatpush.bf16.msra.mxu0 %v10575
    %10712 = vmatpush.bf16.msra.mxu0 %v10571
    %10713 = vmatmul.bf16.gmra.mxu0 %v9534
    %v10714 = vpop.f32.mrf.mxu0
    %v10715 = vadd.f32 %v10702, %v10714
    %v10716 = vpop.f32.mrf.mxu0
    %10717 = vdwg.mxu0
    %10718 = vmatpush.bf16.msra.mxu0 %v10568
    %10719 = vmatpush.bf16.msra.mxu0 %v10564
    %10720 = vmatpush.bf16.msra.mxu0 %v10560
    %10721 = vmatpush.bf16.msra.mxu0 %v10556
    %10722 = vmatpush.bf16.msra.mxu0 %v10552
    %10723 = vmatpush.bf16.msra.mxu0 %v10548
    %10724 = vmatpush.bf16.msra.mxu0 %v10544
    %10725 = vmatpush.bf16.msra.mxu0 %v10540
    %10726 = vmatmul.bf16.gmra.mxu0 %v10277
    %v10727 = vpop.f32.mrf.mxu0
    %v10728 = vadd.f32 %v10344, %v10727
    %v10729 = vpop.f32.mrf.mxu0
    %10730 = vdwg.mxu0
    %10731 = vmatpush.bf16.msra.mxu0 %v10600
    %10732 = vmatpush.bf16.msra.mxu0 %v10596
    %10733 = vmatpush.bf16.msra.mxu0 %v10592
    %10734 = vmatpush.bf16.msra.mxu0 %v10588
    %10735 = vmatpush.bf16.msra.mxu0 %v10584
    %10736 = vmatpush.bf16.msra.mxu0 %v10580
    %10737 = vmatpush.bf16.msra.mxu0 %v10576
    %10738 = vmatpush.bf16.msra.mxu0 %v10572
    %10739 = vmatmul.bf16.gmra.mxu0 %v9534
    %v10740 = vpop.f32.mrf.mxu0
    %v10741 = vadd.f32 %v10728, %v10740
    %v10742 = vpop.f32.mrf.mxu0
    %10743 = vdwg.mxu0
    %10744 = vmatpush.bf16.msra.mxu0 %v10569
    %10745 = vmatpush.bf16.msra.mxu0 %v10565
    %10746 = vmatpush.bf16.msra.mxu0 %v10561
    %10747 = vmatpush.bf16.msra.mxu0 %v10557
    %10748 = vmatpush.bf16.msra.mxu0 %v10553
    %10749 = vmatpush.bf16.msra.mxu0 %v10549
    %10750 = vmatpush.bf16.msra.mxu0 %v10545
    %10751 = vmatpush.bf16.msra.mxu0 %v10541
    %10752 = vmatmul.bf16.gmra.mxu0 %v10277
    %v10753 = vpop.f32.mrf.mxu0
    %v10754 = vadd.f32 %v10345, %v10753
    %v10755 = vpop.f32.mrf.mxu0
    %10756 = vdwg.mxu0
    %10757 = vmatpush.bf16.msra.mxu0 %v10601
    %10758 = vmatpush.bf16.msra.mxu0 %v10597
    %10759 = vmatpush.bf16.msra.mxu0 %v10593
    %10760 = vmatpush.bf16.msra.mxu0 %v10589
    %10761 = vmatpush.bf16.msra.mxu0 %v10585
    %10762 = vmatpush.bf16.msra.mxu0 %v10581
    %10763 = vmatpush.bf16.msra.mxu0 %v10577
    %10764 = vmatpush.bf16.msra.mxu0 %v10573
    %10765 = vmatmul.bf16.gmra.mxu0 %v9534
    %v10766 = vpop.f32.mrf.mxu0
    %v10767 = vadd.f32 %v10754, %v10766
    %v10768 = vpop.f32.mrf.mxu0
    %10769 = vdwg.mxu0
    %v10770 = vsub.f32 0.0, %v10689
    %v10771 = vmul.f32 %v10770, 1.442695
    %v10772 = vpow.pop %v10771
    %v10773 = vadd.f32 %v10772, 1.0
    %v10774 = vrcp.pop %v10773
    %v10775 = vmul.f32 %v10773, %v10774
    %v10776 = vsub.f32 1.0, %v10775
    %v10777 = vmul.f32 %v10774, %v10776
    %v10778 = vadd.f32 %v10774, %v10777
    %vm10779 = vweird.f32 %v10773
    %vm10780 = vweird.f32 %v10774
    %vm10781 = vmor %vm10779, %vm10780
    %v10782 = vsel %vm10781, %v10774, %v10778
    %v10783 = vand.u32 2147483647, %v10773
    %vm10784 = vcmp.eq.f32.partialorder %v10783, 8.507059e+37
    %v10785 = vand.u32 %v10773, 2147483648
    %v10786 = vor.u32 1.1754944e-38, %v10785
    %v10787 = vsel %vm10784, %v10786, %v10782
    %v10788 = vsub.f32 0.0, %v10715
    %v10789 = vmul.f32 %v10788, 1.442695
    %v10790 = vpow.pop %v10789
    %v10791 = vadd.f32 %v10790, 1.0
    %v10792 = vrcp.pop %v10791
    %v10793 = vmul.f32 %v10791, %v10792
    %v10794 = vsub.f32 1.0, %v10793
    %v10795 = vmul.f32 %v10792, %v10794
    %v10796 = vadd.f32 %v10792, %v10795
    %vm10797 = vweird.f32 %v10791
    %vm10798 = vweird.f32 %v10792
    %vm10799 = vmor %vm10797, %vm10798
    %v10800 = vsel %vm10799, %v10792, %v10796
    %v10801 = vand.u32 2147483647, %v10791
    %vm10802 = vcmp.eq.f32.partialorder %v10801, 8.507059e+37
    %v10803 = vand.u32 %v10791, 2147483648
    %v10804 = vor.u32 1.1754944e-38, %v10803
    %v10805 = vsel %vm10802, %v10804, %v10800
    %v10806 = vtanh.pop %v10741
    %v10807 = vsub.f32 0.0, %v10767
    %v10808 = vmul.f32 %v10807, 1.442695
    %v10809 = vpow.pop %v10808
    %v10810 = vadd.f32 %v10809, 1.0
    %v10811 = vrcp.pop %v10810
    %v10812 = vmul.f32 %v10810, %v10811
    %v10813 = vsub.f32 1.0, %v10812
    %v10814 = vmul.f32 %v10811, %v10813
    %v10815 = vadd.f32 %v10811, %v10814
    %vm10816 = vweird.f32 %v10810
    %vm10817 = vweird.f32 %v10811
    %vm10818 = vmor %vm10816, %vm10817
    %v10819 = vsel %vm10818, %v10811, %v10815
    %v10820 = vand.u32 2147483647, %v10810
    %vm10821 = vcmp.eq.f32.partialorder %v10820, 8.507059e+37
    %v10822 = vand.u32 %v10810, 2147483648
    %v10823 = vor.u32 1.1754944e-38, %v10822
    %v10824 = vsel %vm10821, %v10823, %v10819
    %v10825 = vmul.f32 %v10805, %v9531
    %v10826 = vmul.f32 %v10787, %v10806
    %v10827 = vadd.f32 %v10825, %v10826
    %v10828 = vtanh.pop %v10827
    %v10829 = vmul.f32 %v10824, %v10828
    %v10830 = vpack.c.bf16 %v10829, %v10829
    %v10831 = vld [vmem:[#allocation16] sm:$0xf]
    %v10832 = vld [vmem:[#allocation16 + $0x4] sm:$0xf]
    %v10833 = vld [vmem:[#allocation16 + $0x8] sm:$0xf]
    %v10834 = vld [vmem:[#allocation16 + $0xc] sm:$0xf]
    %v10835 = vld [vmem:[#allocation16 + $0x10] sm:$0xf]
    %v10836 = vld [vmem:[#allocation16 + $0x14] sm:$0xf]
    %v10837 = vld [vmem:[#allocation16 + $0x18] sm:$0xf]
    %v10838 = vld [vmem:[#allocation16 + $0x1c] sm:$0xf]
    %v10839 = vld [vmem:[#allocation16 + $0x20] sm:$0xf]
    %v10840 = vld [vmem:[#allocation16 + $0x24] sm:$0xf]
    %v10841 = vld [vmem:[#allocation16 + $0x28] sm:$0xf]
    %v10842 = vld [vmem:[#allocation16 + $0x2c] sm:$0xf]
    %v10843 = vld [vmem:[#allocation16 + $0x30] sm:$0xf]
    %v10844 = vld [vmem:[#allocation16 + $0x34] sm:$0xf]
    %v10845 = vld [vmem:[#allocation16 + $0x38] sm:$0xf]
    %v10846 = vld [vmem:[#allocation16 + $0x3c] sm:$0xf]
    %v10847 = vld [vmem:[%s9] sm:$0xff]
    %v10864 = vunpack.c.l.b16 %v10831
    %v10865 = vunpack.c.l.b16 %v10832
    %v10866 = vunpack.c.l.b16 %v10833
    %v10867 = vunpack.c.l.b16 %v10834
    %v10868 = vunpack.c.l.b16 %v10835
    %v10869 = vunpack.c.l.b16 %v10836
    %v10870 = vunpack.c.l.b16 %v10837
    %v10871 = vunpack.c.l.b16 %v10838
    %v10872 = vunpack.c.l.b16 %v10839
    %v10873 = vunpack.c.l.b16 %v10840
    %v10874 = vunpack.c.l.b16 %v10841
    %v10875 = vunpack.c.l.b16 %v10842
    %v10876 = vunpack.c.l.b16 %v10843
    %v10877 = vunpack.c.l.b16 %v10844
    %v10878 = vunpack.c.l.b16 %v10845
    %v10879 = vunpack.c.l.b16 %v10846
    %v10880 = vpack.c.b16 %v10865, %v10864
    %v10881 = vpack.c.b16 %v10867, %v10866
    %v10882 = vpack.c.b16 %v10869, %v10868
    %v10883 = vpack.c.b16 %v10871, %v10870
    %v10884 = vpack.c.b16 %v10873, %v10872
    %v10885 = vpack.c.b16 %v10875, %v10874
    %v10886 = vpack.c.b16 %v10877, %v10876
    %v10887 = vpack.c.b16 %v10879, %v10878
    %10896 = vmatpush.bf16.msra.mxu0 %v10887
    %10897 = vmatpush.bf16.msra.mxu0 %v10886
    %10898 = vmatpush.bf16.msra.mxu0 %v10885
    %10899 = vmatpush.bf16.msra.mxu0 %v10884
    %10900 = vmatpush.bf16.msra.mxu0 %v10883
    %10901 = vmatpush.bf16.msra.mxu0 %v10882
    %10902 = vmatpush.bf16.msra.mxu0 %v10881
    %10903 = vmatpush.bf16.msra.mxu0 %v10880
    %10904 = vmatmul.bf16.gmra.mxu0 %v10830
    %v10905 = vpop.f32.mrf.mxu0
    %v10906 = vadd.f32 %v10847, %v10905
    %v10907 = vpop.f32.mrf.mxu0
    %10908 = vdwg.mxu0
    %s10909 = scalar_lea.vmem [#allocation18], 56
    %10910 = vst [vmem:[%s10909] sm:$0xff] %v10906
    // Predicated region
    $region78: #{tpu_custom_call.1} parent=1 // pred_check
      _
    $region79: #{tpu_custom_call.1} parent=1 // pred_check_branch
      %10912 = sbr.rel (0) target = $region81
    $region80: #{tpu_custom_call.1} parent=1 // pred_region
      %10914 = vsyncadd [#allocation4], 0
      %s10915 = sshll.u32 [#allocation18], 4
      %s10916 = int_to_ptr.vmem [resolvable:$true] %s10915
      %s10917 = sshll.u32 %s10, 4
      %s10918 = int_to_ptr.hbm [resolvable:$true] %s10917
      %10923 = dma.vmem_to_hbm [thread:$0]  %s10916, 1024, %s10918, [#allocation4], 128, 128, 8
    $region81: #{tpu_custom_call.1} parent=1 // pred_fallthru
      _
    // Predicated region
    $region82: #{tpu_custom_call.1} parent=1 // pred_check
      _
    $region83: #{tpu_custom_call.1} parent=1 // pred_check_branch
      %10925 = sbr.rel (0) target = $region85
    $region84: #{tpu_custom_call.1} parent=1 // pred_region
      %10927 = dma.done [#allocation4], 1024
    $region85: #{tpu_custom_call.1} parent=1 // pred_fallthru
      _
    %10928 = vsyncpa [#allocation3], 1
    %10929 = vsyncpa [#allocation8], 1
    %10930 = vsyncpa [#allocation11], 1
    %10931 = vsyncpa [#allocation14], 1
    %10932 = vsyncpa [#allocation17], 1
    %10933 = vsyncpa [#allocation4], 1
    %10934 = vsyncpa [#allocation5], 1

</llo_original>
